<compile_context>
chip_gen: v5e
topology: v5e:2x2
jax: 0.10.0
libtpu: 0.0.40
codegen_flags: <defaults>
</compile_context>

<pallas_src>
import jax
import jax.numpy as jnp
from jax.experimental import pallas as pl
from jax.experimental.pallas import tpu as pltpu

_BN_EPS = 1e-5
_VMEM_LIMIT = 32 * 1024 * 1024  # explicit scoped-VMEM budget, safe on v5e/v6e/v7x

# _KMAP[output_parity][patch_offset] -> ConvTranspose kernel index, -1 = unused
# (derived from  o = 2*i - padding + k  with k=3, stride=2, padding=1, op=1)
_KMAP = ((1, -1), (2, 0))


def _round_up(v, m):
    return ((v + m - 1) // m) * m


def _pick_row_tile(rows, min_tile=8, target=1024):
    """Row tile: pad rows rather than shrink the tile; keep >= 2 grid steps so
    both v7x TensorCores get work; never violate the gather-window (halo)
    requirement `min_tile`; stay a multiple of 8 sublanes."""
    half = _round_up(max((rows + 1) // 2, 8), 8)
    tm = min(target, half)
    tm = max(tm, min_tile, 8)
    return _round_up(tm, 8)


# ---------------------------------------------------------------------------
# Pallas kernels
# ---------------------------------------------------------------------------
def _make_deconv_kernel(shifts, tm, two_stage):
    """relu(sum_t window[s_t:s_t+tm] @ W_t + b1) [ -> relu(. @ W2 + b2) ].

    The 2x2x2 patch gather is realised as the 8 fixed row shifts `shifts`
    of a 2*tm-row window assembled in VMEM scratch from two consecutive
    row blocks of the flattened padded input."""

    def kernel(*refs):
        if two_stage:
            xa_ref, xb_ref, w_ref, b_ref, w2_ref, b2_ref, o_ref, scr_ref = refs
        else:
            xa_ref, xb_ref, w_ref, b_ref, o_ref, scr_ref = refs

        # assemble the row window [i*tm, (i+2)*tm) in VMEM
        scr_ref[0:tm, :] = xa_ref[...]
        scr_ref[tm:2 * tm, :] = xb_ref[...]

        # 8 accumulated MXU matmuls, one per patch tap (f32 accumulation)
        acc = jnp.dot(scr_ref[shifts[0]:shifts[0] + tm, :], w_ref[0],
                      preferred_element_type=jnp.float32)
        for t in range(1, len(shifts)):
            s = shifts[t]
            acc = acc + jnp.dot(scr_ref[s:s + tm, :], w_ref[t],
                                preferred_element_type=jnp.float32)

        h = jnp.maximum(acc + b_ref[...], 0.0)          # BN scale folded into W
        if two_stage:                                   # fused 1x1x1 block
            y = jnp.dot(h.astype(jnp.bfloat16), w2_ref[...],
                        preferred_element_type=jnp.float32)
            h = jnp.maximum(y + b2_ref[...], 0.0)
        o_ref[...] = h.astype(o_ref.dtype)

    return kernel


def _pointwise_matmul_kernel(x_ref, w_ref, b_ref, o_ref):
    a = jnp.dot(x_ref[...], w_ref[...], preferred_element_type=jnp.float32)
    o_ref[...] = jnp.maximum(a + b_ref[...], 0.0).astype(o_ref.dtype)


# ---------------------------------------------------------------------------
# Stride-2 Deconv3dBlock (k=3, s=2, p=1, op=1) via sub-pixel phase
# decomposition with in-kernel patch gather; optionally fuses a trailing
# 1x1x1 Deconv3dBlock (final layer).
# ---------------------------------------------------------------------------
def _deconv_s2_block(x, prm, fused_pointwise=None):
    # x: (N, D, H, W, Cin) channels-last (f32 or bf16)
    w_pt, b_conv, gamma, beta, r_mean, r_var = prm
    cin, cout = w_pt.shape[0], w_pt.shape[1]
    n, d, h, w, _ = x.shape

    # --- combined phase weight: (8 taps, cin, 8*cout), BN scale folded in ---
    zeros = jnp.zeros((cin, cout), jnp.float32)
    tap_blocks = []
    for dd in (0, 1):
        for dh in (0, 1):
            for dw in (0, 1):
                col_blocks = []
                for pd in (0, 1):
                    for ph in (0, 1):
                        for pw in (0, 1):
                            kd = _KMAP[pd][dd]
                            kh = _KMAP[ph][dh]
                            kw = _KMAP[pw][dw]
                            if kd < 0 or kh < 0 or kw < 0:
                                col_blocks.append(zeros)
                            else:
                                col_blocks.append(
                                    w_pt[:, :, kd, kh, kw].astype(jnp.float32))
                tap_blocks.append(jnp.concatenate(col_blocks, axis=1))
    w_comb = jnp.stack(tap_blocks, axis=0)               # (8, cin, 8*cout)

    scale = gamma / jnp.sqrt(r_var + _BN_EPS)
    bias = scale * (b_conv - r_mean) + beta
    s1 = jnp.tile(scale, 8)
    b1 = jnp.tile(bias, 8)
    w_comb = (w_comb * s1[None, None, :]).astype(jnp.bfloat16)
    n1 = 8 * cout

    two_stage = fused_pointwise is not None
    if two_stage:
        w2_pt, b2_conv, g2, bt2, m2, v2 = fused_pointwise
        out_c = w2_pt.shape[1]
        scale2 = g2 / jnp.sqrt(v2 + _BN_EPS)
        bias2 = scale2 * (b2_conv - m2) + bt2
        w2 = w2_pt[:, :, 0, 0, 0] * scale2[None, :]       # scale folded in
        w2_bd = jnp.kron(jnp.eye(8, dtype=jnp.float32), w2).astype(jnp.bfloat16)
        b2 = jnp.tile(bias2, 8)
        n_out = 8 * out_c
        out_dtype = jnp.float32                           # final user-facing layer
    else:
        out_c = cout
        n_out = n1
        out_dtype = jnp.bfloat16                          # next layer consumes bf16

    # --- pad (+1 in D,H,W) and flatten: the 8 taps become fixed row shifts ---
    x_p = jnp.pad(x.astype(jnp.bfloat16),
                  ((0, 0), (0, 1), (0, 1), (0, 1), (0, 0)))
    dp, hp, wp = d + 1, h + 1, w + 1
    rows = n * dp * hp * wp
    s_h, s_d = wp, hp * wp
    shifts = tuple(dd * s_d + dh * s_h + dw
                   for dd in (0, 1) for dh in (0, 1) for dw in (0, 1))

    min_tile = _round_up(max(shifts), 8)                  # window/halo requirement
    target = 2048 if n_out <= 64 else 1024                # bigger tiles for narrow layers
    tm = _pick_row_tile(rows, min_tile=min_tile, target=target)
    nblk = pl.cdiv(rows, tm)
    rows_pad = (nblk + 1) * tm                            # +1 zero block: shifted view never OOBs
    x_flat = jnp.pad(x_p.reshape(rows, cin), ((0, rows_pad - rows), (0, 0)))

    b1 = b1.reshape(1, n1).astype(jnp.float32)
    in_specs = [
        pl.BlockSpec((tm, cin), lambda i: (i, 0)),        # window, first block
        pl.BlockSpec((tm, cin), lambda i: (i + 1, 0)),    # window, second block
        pl.BlockSpec((8, cin, n1), lambda i: (0, 0, 0)),  # per-tap weights (bf16)
        pl.BlockSpec((1, n1), lambda i: (0, 0)),          # bias
    ]
    args = [x_flat, x_flat, w_comb, b1]
    if two_stage:
        in_specs += [pl.BlockSpec((n1, n_out), lambda i: (0, 0)),
                     pl.BlockSpec((1, n_out), lambda i: (0, 0))]
        args += [w2_bd, b2.reshape(1, n_out).astype(jnp.float32)]

    y = pl.pallas_call(
        _make_deconv_kernel(shifts, tm, two_stage),
        out_shape=jax.ShapeDtypeStruct((nblk * tm, n_out), out_dtype),
        grid=(nblk,),
        in_specs=in_specs,
        out_specs=pl.BlockSpec((tm, n_out), lambda i: (i, 0)),
        scratch_shapes=[pltpu.VMEM((2 * tm, cin), jnp.bfloat16)],
        compiler_params=pltpu.CompilerParams(
            dimension_semantics=("parallel",),
            vmem_limit_bytes=_VMEM_LIMIT),
    )(*args)

    # drop padded rows / padded spatial positions (fuses with the consumer
    # transpose in XLA); result stays phase-grouped: (n, d, h, w, 8, out_c)
    y = y[:rows].reshape(n, dp, hp, wp, 8, out_c)[:, :d, :h, :w]
    return y


def _interleave_phases(y):
    # (n, d, h, w, 8, c) phase-grouped -> (n, 2d, 2h, 2w, c) interleaved
    n, d, h, w, _, c = y.shape
    y = y.reshape(n, d, h, w, 2, 2, 2, c)
    y = jnp.transpose(y, (0, 1, 4, 2, 5, 3, 6, 7))
    return y.reshape(n, 2 * d, 2 * h, 2 * w, c)


def _pointwise_block(x, prm):
    # standalone 1x1x1 Deconv3dBlock (only hit when there are no stride-2 blocks)
    w_pt, b_conv, gamma, beta, r_mean, r_var = prm
    cin, cout = w_pt.shape[0], w_pt.shape[1]
    n, d, h, w, _ = x.shape

    scale = gamma / jnp.sqrt(r_var + _BN_EPS)
    bias = (scale * (b_conv - r_mean) + beta).reshape(1, cout).astype(jnp.float32)
    w1 = (w_pt[:, :, 0, 0, 0] * scale[None, :]).astype(jnp.bfloat16)

    rows = n * d * h * w
    tm = _pick_row_tile(rows, min_tile=8, target=1024)
    nblk = pl.cdiv(rows, tm)
    rows_pad = nblk * tm
    x_flat = x.reshape(rows, cin).astype(jnp.bfloat16)
    if rows_pad != rows:
        x_flat = jnp.pad(x_flat, ((0, rows_pad - rows), (0, 0)))

    y = pl.pallas_call(
        _pointwise_matmul_kernel,
        out_shape=jax.ShapeDtypeStruct((rows_pad, cout), jnp.float32),
        grid=(nblk,),
        in_specs=[pl.BlockSpec((tm, cin), lambda i: (i, 0)),
                  pl.BlockSpec((cin, cout), lambda i: (0, 0)),
                  pl.BlockSpec((1, cout), lambda i: (0, 0))],
        out_specs=pl.BlockSpec((tm, cout), lambda i: (i, 0)),
        compiler_params=pltpu.CompilerParams(
            dimension_semantics=("parallel",),
            vmem_limit_bytes=_VMEM_LIMIT),
    )(x_flat, w1, bias)
    if rows_pad != rows:
        y = y[:rows]
    return y.reshape(n, d, h, w, cout)


# ---------------------------------------------------------------------------
# Video3dDecoder: stride-2 deconv blocks (channels halved each time) followed
# by a kernel-1 / stride-1 block to `out_channels`.
# ---------------------------------------------------------------------------
def decoder_layer_configs(in_channels=64, out_channels=3):
    cfgs = []
    channels = in_channels
    while channels // 2 >= out_channels:
        cfgs.append((channels, channels // 2, 3, 2, 1, 1))  # cin,cout,k,s,p,op
        channels //= 2
    cfgs.append((channels, out_channels, 1, 1, 0, 0))
    return cfgs


def init_decoder_params(key, cfgs):
    params = []
    for (cin, cout, k, _, _, _) in cfgs:
        key, kw_, kb_, kg_, kbt_, km_, kv_ = jax.random.split(key, 7)
        w = 0.1 * jax.random.normal(kw_, (cin, cout, k, k, k), jnp.float32)
        b = 0.1 * jax.random.normal(kb_, (cout,), jnp.float32)
        gamma = 1.0 + 0.1 * jax.random.normal(kg_, (cout,), jnp.float32)
        beta = 0.1 * jax.random.normal(kbt_, (cout,), jnp.float32)
        mean = 0.1 * jax.random.normal(km_, (cout,), jnp.float32)
        var = 1.0 + 0.1 * jax.random.uniform(kv_, (cout,), jnp.float32)
        params.append((w, b, gamma, beta, mean, var))
    return params


def video3d_decoder_pallas(x_ncdhw, cfgs, params):
    # accepts PyTorch-style NCDHW; internally NDHWC
    x = jnp.transpose(x_ncdhw, (0, 2, 3, 4, 1))
    n_layers = len(cfgs)
    i = 0
    while i < n_layers:
        _, _, k, s, p, op = cfgs[i]
        if k == 3 and s == 2 and p == 1 and op == 1:
            fuse = (i == n_layers - 2
                    and cfgs[i + 1][2] == 1 and cfgs[i + 1][3] == 1)
            if fuse:
                y8 = _deconv_s2_block(x, params[i],
                                      fused_pointwise=params[i + 1])
                # fold the phase interleave of the final layer into the
                # NDHWC -> NCDHW transpose (single pass, then free reshape)
                n_, d_, h_, w_, _, c_ = y8.shape
                y8 = y8.reshape(n_, d_, h_, w_, 2, 2, 2, c_)
                out = jnp.transpose(y8, (0, 7, 1, 4, 2, 5, 3, 6))
                return out.reshape(n_, c_, 2 * d_, 2 * h_, 2 * w_).astype(
                    jnp.float32)
            x = _interleave_phases(_deconv_s2_block(x, params[i]))
            i += 1
        elif k == 1 and s == 1:
            x = _pointwise_block(x, params[i])
            i += 1
        else:
            raise NotImplementedError(f"unsupported Deconv3dBlock config {cfgs[i]}")
    return jnp.transpose(x, (0, 4, 1, 2, 3)).astype(jnp.float32)   # NCDHW


# ---------------------------------------------------------------------------
# Pure-JAX reference (XLA conv) for correctness checking.
# ---------------------------------------------------------------------------
def _deconv3d_block_ref(x, prm, kernel, stride, padding, output_padding):
    w_pt, b_conv, gamma, beta, r_mean, r_var = prm
    w_conv = jnp.transpose(jnp.flip(w_pt, axis=(2, 3, 4)), (2, 3, 4, 0, 1))
    lo = kernel - 1 - padding
    hi = lo + output_padding
    y = jax.lax.conv_general_dilated(
        x, w_conv, window_strides=(1, 1, 1),
        padding=[(lo, hi)] * 3, lhs_dilation=(stride,) * 3,
        dimension_numbers=("NDHWC", "DHWIO", "NDHWC"))
    scale = gamma / jnp.sqrt(r_var + _BN_EPS)
    y = (y + b_conv) * scale + (beta - r_mean * scale)
    return jnp.maximum(y, 0.0)


def video3d_decoder_ref(x_ncdhw, cfgs, params):
    x = jnp.transpose(x_ncdhw, (0, 2, 3, 4, 1)).astype(jnp.float32)
    for (cin, cout, k, s, p, op), prm in zip(cfgs, params):
        x = _deconv3d_block_ref(x, prm, k, s, p, op)
    return jnp.transpose(x, (0, 4, 1, 2, 3))


if __name__ == "__main__":
    key = jax.random.PRNGKey(0)
    k_params, k_input, k_p2, k_i2 = jax.random.split(key, 4)

    # config 1: channel-halving stride-2 blocks 16 -> 8 -> 4, then a 1x1x1
    # block 4 -> 3 (fused into the last stride-2 block's kernel).
    in_channels, out_channels = 16, 3
    cfgs = decoder_layer_configs(in_channels, out_channels)
    params = init_decoder_params(k_params, cfgs)

    # PyTorch-style NCDHW input: (batch=2, C=16, D=4, H=4, W=4)
    x = jax.random.normal(k_input, (2, in_channels, 4, 4, 4), jnp.float32)

    out = jax.jit(lambda a: video3d_decoder_pallas(a, cfgs, params))(x)
    out = jax.block_until_ready(out)
    ref = video3d_decoder_ref(x, cfgs, params)

    assert out.shape == (2, out_channels, 16, 16, 16), out.shape
    err = float(jnp.max(jnp.abs(out - ref)))
    # bf16 intermediates / bf16 weights vs f32 reference -> slightly looser tol
    assert jnp.allclose(out, ref, rtol=4e-2, atol=4e-2), err

    # config 2: in_channels // 2 < out_channels -> only the 1x1x1 block
    # (exercises the standalone pointwise path).
    cfgs2 = decoder_layer_configs(4, 3)
    params2 = init_decoder_params(k_p2, cfgs2)
    x2 = jax.random.normal(k_i2, (2, 4, 4, 4, 4), jnp.float32)
    out2 = jax.block_until_ready(
        jax.jit(lambda a: video3d_decoder_pallas(a, cfgs2, params2))(x2))
    ref2 = video3d_decoder_ref(x2, cfgs2, params2)
    assert out2.shape == (2, 3, 4, 4, 4), out2.shape
    err2 = float(jnp.max(jnp.abs(out2 - ref2)))
    assert jnp.allclose(out2, ref2, rtol=4e-2, atol=4e-2), err2

    print("KERNEL_OK")
</pallas_src>

<mosaic_0001>
module attributes {stable_mosaic.version = 11 : i64} {
  func.func @kernel(%arg0: i32, %arg1: memref<128x16xbf16, #tpu.memory_space<vmem>>, %arg2: memref<128x16xbf16, #tpu.memory_space<vmem>>, %arg3: memref<8x16x64xbf16, #tpu.memory_space<vmem>>, %arg4: memref<1x64xf32, #tpu.memory_space<vmem>>, %arg5: memref<128x64xbf16, #tpu.memory_space<vmem>>, %arg6: memref<256x16xbf16, #tpu.memory_space<vmem>>) attributes {dimension_semantics = [#tpu.dimension_semantics<parallel>], iteration_bounds = array<i64: 2>, scalar_prefetch = 0 : i64, scratch_operands = 1 : i64, tpu.core_type = #tpu.core_type<tc>, window_params = [{transform_indices = @transform_0, window_bounds = array<i64: 128, 16>}, {transform_indices = @transform_1, window_bounds = array<i64: 128, 16>}, {pipeline_mode = #tpu.pipeline_mode<synchronous>, transform_indices = @transform_2, window_bounds = array<i64: 8, 16, 64>}, {pipeline_mode = #tpu.pipeline_mode<synchronous>, transform_indices = @transform_3, window_bounds = array<i64: 1, 64>}, {transform_indices = @transform_4, window_bounds = array<i64: 128, 64>}]} {
    %c0 = arith.constant 0 : index
    %c0_0 = arith.constant 0 : index
    %0 = vector.load %arg1[%c0, %c0_0] : memref<128x16xbf16, #tpu.memory_space<vmem>>, vector<128x16xbf16>
    %c0_1 = arith.constant 0 : index
    %c0_2 = arith.constant 0 : index
    %1 = vector.load %arg6[%c0_1, %c0_2] : memref<256x16xbf16, #tpu.memory_space<vmem>>, vector<128x16xbf16>
    tpu.vector_store %arg6[%c0_1, %c0_2], %0 {strides = array<i32>} : memref<256x16xbf16, #tpu.memory_space<vmem>>, vector<128x16xbf16>,
    %c0_3 = arith.constant 0 : index
    %c0_4 = arith.constant 0 : index
    %2 = vector.load %arg2[%c0_3, %c0_4] : memref<128x16xbf16, #tpu.memory_space<vmem>>, vector<128x16xbf16>
    %c128 = arith.constant 128 : index
    %c0_5 = arith.constant 0 : index
    %3 = vector.load %arg6[%c128, %c0_5] : memref<256x16xbf16, #tpu.memory_space<vmem>>, vector<128x16xbf16>
    tpu.vector_store %arg6[%c128, %c0_5], %2 {strides = array<i32>} : memref<256x16xbf16, #tpu.memory_space<vmem>>, vector<128x16xbf16>,
    %c0_6 = arith.constant 0 : index
    %c0_7 = arith.constant 0 : index
    %4 = vector.load %arg6[%c0_6, %c0_7] : memref<256x16xbf16, #tpu.memory_space<vmem>>, vector<128x16xbf16>
    %c0_8 = arith.constant 0 : index
    %c0_9 = arith.constant 0 : index
    %c0_10 = arith.constant 0 : index
    %5 = vector.load %arg3[%c0_8, %c0_9, %c0_10] : memref<8x16x64xbf16, #tpu.memory_space<vmem>>, vector<1x16x64xbf16>
    %6 = vector.shape_cast %5 : vector<1x16x64xbf16> to vector<16x64xbf16>
    %cst = arith.constant dense<0.000000e+00> : vector<128x64xf32>
    %7 = tpu.matmul %4, %6, %cst {dimension_numbers = #tpu.dot_dimension_numbers<[1], [0], [0], [1], [0, 0, 1, 1], [], []>} : vector<128x16xbf16>, vector<16x64xbf16>, vector<128x64xf32> -> vector<128x64xf32>
    %c1 = arith.constant 1 : index
    %c0_11 = arith.constant 0 : index
    %8 = vector.load %arg6[%c1, %c0_11] : memref<256x16xbf16, #tpu.memory_space<vmem>>, vector<128x16xbf16>
    %c1_12 = arith.constant 1 : index
    %c0_13 = arith.constant 0 : index
    %c0_14 = arith.constant 0 : index
    %9 = vector.load %arg3[%c1_12, %c0_13, %c0_14] : memref<8x16x64xbf16, #tpu.memory_space<vmem>>, vector<1x16x64xbf16>
    %10 = vector.shape_cast %9 : vector<1x16x64xbf16> to vector<16x64xbf16>
    %cst_15 = arith.constant dense<0.000000e+00> : vector<128x64xf32>
    %11 = tpu.matmul %8, %10, %cst_15 {dimension_numbers = #tpu.dot_dimension_numbers<[1], [0], [0], [1], [0, 0, 1, 1], [], []>} : vector<128x16xbf16>, vector<16x64xbf16>, vector<128x64xf32> -> vector<128x64xf32>
    %12 = arith.addf %7, %11 : vector<128x64xf32>
    %c5 = arith.constant 5 : index
    %c0_16 = arith.constant 0 : index
    %13 = vector.load %arg6[%c5, %c0_16] : memref<256x16xbf16, #tpu.memory_space<vmem>>, vector<128x16xbf16>
    %c2 = arith.constant 2 : index
    %c0_17 = arith.constant 0 : index
    %c0_18 = arith.constant 0 : index
    %14 = vector.load %arg3[%c2, %c0_17, %c0_18] : memref<8x16x64xbf16, #tpu.memory_space<vmem>>, vector<1x16x64xbf16>
    %15 = vector.shape_cast %14 : vector<1x16x64xbf16> to vector<16x64xbf16>
    %cst_19 = arith.constant dense<0.000000e+00> : vector<128x64xf32>
    %16 = tpu.matmul %13, %15, %cst_19 {dimension_numbers = #tpu.dot_dimension_numbers<[1], [0], [0], [1], [0, 0, 1, 1], [], []>} : vector<128x16xbf16>, vector<16x64xbf16>, vector<128x64xf32> -> vector<128x64xf32>
    %17 = arith.addf %12, %16 : vector<128x64xf32>
    %c6 = arith.constant 6 : index
    %c0_20 = arith.constant 0 : index
    %18 = vector.load %arg6[%c6, %c0_20] : memref<256x16xbf16, #tpu.memory_space<vmem>>, vector<128x16xbf16>
    %c3 = arith.constant 3 : index
    %c0_21 = arith.constant 0 : index
    %c0_22 = arith.constant 0 : index
    %19 = vector.load %arg3[%c3, %c0_21, %c0_22] : memref<8x16x64xbf16, #tpu.memory_space<vmem>>, vector<1x16x64xbf16>
    %20 = vector.shape_cast %19 : vector<1x16x64xbf16> to vector<16x64xbf16>
    %cst_23 = arith.constant dense<0.000000e+00> : vector<128x64xf32>
    %21 = tpu.matmul %18, %20, %cst_23 {dimension_numbers = #tpu.dot_dimension_numbers<[1], [0], [0], [1], [0, 0, 1, 1], [], []>} : vector<128x16xbf16>, vector<16x64xbf16>, vector<128x64xf32> -> vector<128x64xf32>
    %22 = arith.addf %17, %21 : vector<128x64xf32>
    %c25 = arith.constant 25 : index
    %c0_24 = arith.constant 0 : index
    %23 = vector.load %arg6[%c25, %c0_24] : memref<256x16xbf16, #tpu.memory_space<vmem>>, vector<128x16xbf16>
    %c4 = arith.constant 4 : index
    %c0_25 = arith.constant 0 : index
    %c0_26 = arith.constant 0 : index
    %24 = vector.load %arg3[%c4, %c0_25, %c0_26] : memref<8x16x64xbf16, #tpu.memory_space<vmem>>, vector<1x16x64xbf16>
    %25 = vector.shape_cast %24 : vector<1x16x64xbf16> to vector<16x64xbf16>
    %cst_27 = arith.constant dense<0.000000e+00> : vector<128x64xf32>
    %26 = tpu.matmul %23, %25, %cst_27 {dimension_numbers = #tpu.dot_dimension_numbers<[1], [0], [0], [1], [0, 0, 1, 1], [], []>} : vector<128x16xbf16>, vector<16x64xbf16>, vector<128x64xf32> -> vector<128x64xf32>
    %27 = arith.addf %22, %26 : vector<128x64xf32>
    %c26 = arith.constant 26 : index
    %c0_28 = arith.constant 0 : index
    %28 = vector.load %arg6[%c26, %c0_28] : memref<256x16xbf16, #tpu.memory_space<vmem>>, vector<128x16xbf16>
    %c5_29 = arith.constant 5 : index
    %c0_30 = arith.constant 0 : index
    %c0_31 = arith.constant 0 : index
    %29 = vector.load %arg3[%c5_29, %c0_30, %c0_31] : memref<8x16x64xbf16, #tpu.memory_space<vmem>>, vector<1x16x64xbf16>
    %30 = vector.shape_cast %29 : vector<1x16x64xbf16> to vector<16x64xbf16>
    %cst_32 = arith.constant dense<0.000000e+00> : vector<128x64xf32>
    %31 = tpu.matmul %28, %30, %cst_32 {dimension_numbers = #tpu.dot_dimension_numbers<[1], [0], [0], [1], [0, 0, 1, 1], [], []>} : vector<128x16xbf16>, vector<16x64xbf16>, vector<128x64xf32> -> vector<128x64xf32>
    %32 = arith.addf %27, %31 : vector<128x64xf32>
    %c30 = arith.constant 30 : index
    %c0_33 = arith.constant 0 : index
    %33 = vector.load %arg6[%c30, %c0_33] : memref<256x16xbf16, #tpu.memory_space<vmem>>, vector<128x16xbf16>
    %c6_34 = arith.constant 6 : index
    %c0_35 = arith.constant 0 : index
    %c0_36 = arith.constant 0 : index
    %34 = vector.load %arg3[%c6_34, %c0_35, %c0_36] : memref<8x16x64xbf16, #tpu.memory_space<vmem>>, vector<1x16x64xbf16>
    %35 = vector.shape_cast %34 : vector<1x16x64xbf16> to vector<16x64xbf16>
    %cst_37 = arith.constant dense<0.000000e+00> : vector<128x64xf32>
    %36 = tpu.matmul %33, %35, %cst_37 {dimension_numbers = #tpu.dot_dimension_numbers<[1], [0], [0], [1], [0, 0, 1, 1], [], []>} : vector<128x16xbf16>, vector<16x64xbf16>, vector<128x64xf32> -> vector<128x64xf32>
    %37 = arith.addf %32, %36 : vector<128x64xf32>
    %c31 = arith.constant 31 : index
    %c0_38 = arith.constant 0 : index
    %38 = vector.load %arg6[%c31, %c0_38] : memref<256x16xbf16, #tpu.memory_space<vmem>>, vector<128x16xbf16>
    %c7 = arith.constant 7 : index
    %c0_39 = arith.constant 0 : index
    %c0_40 = arith.constant 0 : index
    %39 = vector.load %arg3[%c7, %c0_39, %c0_40] : memref<8x16x64xbf16, #tpu.memory_space<vmem>>, vector<1x16x64xbf16>
    %40 = vector.shape_cast %39 : vector<1x16x64xbf16> to vector<16x64xbf16>
    %cst_41 = arith.constant dense<0.000000e+00> : vector<128x64xf32>
    %41 = tpu.matmul %38, %40, %cst_41 {dimension_numbers = #tpu.dot_dimension_numbers<[1], [0], [0], [1], [0, 0, 1, 1], [], []>} : vector<128x16xbf16>, vector<16x64xbf16>, vector<128x64xf32> -> vector<128x64xf32>
    %42 = arith.addf %37, %41 : vector<128x64xf32>
    %c0_42 = arith.constant 0 : index
    %c0_43 = arith.constant 0 : index
    %43 = vector.load %arg4[%c0_42, %c0_43] : memref<1x64xf32, #tpu.memory_space<vmem>>, vector<1x64xf32>
    %44 = vector.broadcast %43 : vector<1x64xf32> to vector<128x64xf32>
    %45 = arith.addf %42, %44 : vector<128x64xf32>
    %cst_44 = arith.constant 0.000000e+00 : f32
    %46 = vector.broadcast %cst_44 : f32 to vector<128x64xf32>
    %47 = arith.maximumf %45, %46 : vector<128x64xf32>
    %48 = arith.truncf %47 : vector<128x64xf32> to vector<128x64xbf16>
    %c0_45 = arith.constant 0 : index
    %c0_46 = arith.constant 0 : index
    %49 = vector.load %arg5[%c0_45, %c0_46] : memref<128x64xbf16, #tpu.memory_space<vmem>>, vector<128x64xbf16>
    tpu.vector_store %arg5[%c0_45, %c0_46], %48 {strides = array<i32>} : memref<128x64xbf16, #tpu.memory_space<vmem>>, vector<128x64xbf16>,
    return
  }
  func.func @transform_0(%arg0: i32) -> (i32, i32) {
    %c0_i32 = arith.constant 0 : i32
    %c0_i32_0 = arith.constant 0 : i32
    return %arg0, %c0_i32 : i32, i32
  }
  func.func @transform_1(%arg0: i32) -> (i32, i32) {
    %c1_i32 = arith.constant 1 : i32
    %0 = arith.addi %arg0, %c1_i32 : i32
    %c0_i32 = arith.constant 0 : i32
    %c0_i32_0 = arith.constant 0 : i32
    return %0, %c0_i32 : i32, i32
  }
  func.func @transform_2(%arg0: i32) -> (i32, i32, i32) {
    %c0_i32 = arith.constant 0 : i32
    %c0_i32_0 = arith.constant 0 : i32
    %c0_i32_1 = arith.constant 0 : i32
    %c0_i32_2 = arith.constant 0 : i32
    return %c0_i32, %c0_i32_0, %c0_i32_1 : i32, i32, i32
  }
  func.func @transform_3(%arg0: i32) -> (i32, i32) {
    %c0_i32 = arith.constant 0 : i32
    %c0_i32_0 = arith.constant 0 : i32
    %c0_i32_1 = arith.constant 0 : i32
    return %c0_i32, %c0_i32_0 : i32, i32
  }
  func.func @transform_4(%arg0: i32) -> (i32, i32) {
    %c0_i32 = arith.constant 0 : i32
    %c0_i32_0 = arith.constant 0 : i32
    return %arg0, %c0_i32 : i32, i32
  }
}

module attributes {stable_mosaic.version = 11 : i64} {
  func.func @kernel(%arg0: i32, %arg1: memref<736x8xbf16, #tpu.memory_space<vmem>>, %arg2: memref<736x8xbf16, #tpu.memory_space<vmem>>, %arg3: memref<8x8x32xbf16, #tpu.memory_space<vmem>>, %arg4: memref<1x32xf32, #tpu.memory_space<vmem>>, %arg5: memref<32x24xbf16, #tpu.memory_space<vmem>>, %arg6: memref<1x24xf32, #tpu.memory_space<vmem>>, %arg7: memref<736x24xf32, #tpu.memory_space<vmem>>, %arg8: memref<1472x8xbf16, #tpu.memory_space<vmem>>) attributes {dimension_semantics = [#tpu.dimension_semantics<parallel>], iteration_bounds = array<i64: 2>, scalar_prefetch = 0 : i64, scratch_operands = 1 : i64, tpu.core_type = #tpu.core_type<tc>, window_params = [{transform_indices = @transform_0, window_bounds = array<i64: 736, 8>}, {transform_indices = @transform_1, window_bounds = array<i64: 736, 8>}, {pipeline_mode = #tpu.pipeline_mode<synchronous>, transform_indices = @transform_2, window_bounds = array<i64: 8, 8, 32>}, {pipeline_mode = #tpu.pipeline_mode<synchronous>, transform_indices = @transform_3, window_bounds = array<i64: 1, 32>}, {pipeline_mode = #tpu.pipeline_mode<synchronous>, transform_indices = @transform_4, window_bounds = array<i64: 32, 24>}, {pipeline_mode = #tpu.pipeline_mode<synchronous>, transform_indices = @transform_5, window_bounds = array<i64: 1, 24>}, {transform_indices = @transform_6, window_bounds = array<i64: 736, 24>}]} {
    %c0 = arith.constant 0 : index
    %c0_0 = arith.constant 0 : index
    %0 = vector.load %arg1[%c0, %c0_0] : memref<736x8xbf16, #tpu.memory_space<vmem>>, vector<736x8xbf16>
    %c0_1 = arith.constant 0 : index
    %c0_2 = arith.constant 0 : index
    %1 = vector.load %arg8[%c0_1, %c0_2] : memref<1472x8xbf16, #tpu.memory_space<vmem>>, vector<736x8xbf16>
    tpu.vector_store %arg8[%c0_1, %c0_2], %0 {strides = array<i32>} : memref<1472x8xbf16, #tpu.memory_space<vmem>>, vector<736x8xbf16>,
    %c0_3 = arith.constant 0 : index
    %c0_4 = arith.constant 0 : index
    %2 = vector.load %arg2[%c0_3, %c0_4] : memref<736x8xbf16, #tpu.memory_space<vmem>>, vector<736x8xbf16>
    %c736 = arith.constant 736 : index
    %c0_5 = arith.constant 0 : index
    %3 = vector.load %arg8[%c736, %c0_5] : memref<1472x8xbf16, #tpu.memory_space<vmem>>, vector<736x8xbf16>
    tpu.vector_store %arg8[%c736, %c0_5], %2 {strides = array<i32>} : memref<1472x8xbf16, #tpu.memory_space<vmem>>, vector<736x8xbf16>,
    %c0_6 = arith.constant 0 : index
    %c0_7 = arith.constant 0 : index
    %4 = vector.load %arg8[%c0_6, %c0_7] : memref<1472x8xbf16, #tpu.memory_space<vmem>>, vector<736x8xbf16>
    %c0_8 = arith.constant 0 : index
    %c0_9 = arith.constant 0 : index
    %c0_10 = arith.constant 0 : index
    %5 = vector.load %arg3[%c0_8, %c0_9, %c0_10] : memref<8x8x32xbf16, #tpu.memory_space<vmem>>, vector<1x8x32xbf16>
    %6 = vector.shape_cast %5 : vector<1x8x32xbf16> to vector<8x32xbf16>
    %cst = arith.constant dense<0.000000e+00> : vector<736x32xf32>
    %7 = tpu.matmul %4, %6, %cst {dimension_numbers = #tpu.dot_dimension_numbers<[1], [0], [0], [1], [0, 0, 1, 1], [], []>} : vector<736x8xbf16>, vector<8x32xbf16>, vector<736x32xf32> -> vector<736x32xf32>
    %c1 = arith.constant 1 : index
    %c0_11 = arith.constant 0 : index
    %8 = vector.load %arg8[%c1, %c0_11] : memref<1472x8xbf16, #tpu.memory_space<vmem>>, vector<736x8xbf16>
    %c1_12 = arith.constant 1 : index
    %c0_13 = arith.constant 0 : index
    %c0_14 = arith.constant 0 : index
    %9 = vector.load %arg3[%c1_12, %c0_13, %c0_14] : memref<8x8x32xbf16, #tpu.memory_space<vmem>>, vector<1x8x32xbf16>
    %10 = vector.shape_cast %9 : vector<1x8x32xbf16> to vector<8x32xbf16>
    %cst_15 = arith.constant dense<0.000000e+00> : vector<736x32xf32>
    %11 = tpu.matmul %8, %10, %cst_15 {dimension_numbers = #tpu.dot_dimension_numbers<[1], [0], [0], [1], [0, 0, 1, 1], [], []>} : vector<736x8xbf16>, vector<8x32xbf16>, vector<736x32xf32> -> vector<736x32xf32>
    %12 = arith.addf %7, %11 : vector<736x32xf32>
    %c9 = arith.constant 9 : index
    %c0_16 = arith.constant 0 : index
    %13 = vector.load %arg8[%c9, %c0_16] : memref<1472x8xbf16, #tpu.memory_space<vmem>>, vector<736x8xbf16>
    %c2 = arith.constant 2 : index
    %c0_17 = arith.constant 0 : index
    %c0_18 = arith.constant 0 : index
    %14 = vector.load %arg3[%c2, %c0_17, %c0_18] : memref<8x8x32xbf16, #tpu.memory_space<vmem>>, vector<1x8x32xbf16>
    %15 = vector.shape_cast %14 : vector<1x8x32xbf16> to vector<8x32xbf16>
    %cst_19 = arith.constant dense<0.000000e+00> : vector<736x32xf32>
    %16 = tpu.matmul %13, %15, %cst_19 {dimension_numbers = #tpu.dot_dimension_numbers<[1], [0], [0], [1], [0, 0, 1, 1], [], []>} : vector<736x8xbf16>, vector<8x32xbf16>, vector<736x32xf32> -> vector<736x32xf32>
    %17 = arith.addf %12, %16 : vector<736x32xf32>
    %c10 = arith.constant 10 : index
    %c0_20 = arith.constant 0 : index
    %18 = vector.load %arg8[%c10, %c0_20] : memref<1472x8xbf16, #tpu.memory_space<vmem>>, vector<736x8xbf16>
    %c3 = arith.constant 3 : index
    %c0_21 = arith.constant 0 : index
    %c0_22 = arith.constant 0 : index
    %19 = vector.load %arg3[%c3, %c0_21, %c0_22] : memref<8x8x32xbf16, #tpu.memory_space<vmem>>, vector<1x8x32xbf16>
    %20 = vector.shape_cast %19 : vector<1x8x32xbf16> to vector<8x32xbf16>
    %cst_23 = arith.constant dense<0.000000e+00> : vector<736x32xf32>
    %21 = tpu.matmul %18, %20, %cst_23 {dimension_numbers = #tpu.dot_dimension_numbers<[1], [0], [0], [1], [0, 0, 1, 1], [], []>} : vector<736x8xbf16>, vector<8x32xbf16>, vector<736x32xf32> -> vector<736x32xf32>
    %22 = arith.addf %17, %21 : vector<736x32xf32>
    %c81 = arith.constant 81 : index
    %c0_24 = arith.constant 0 : index
    %23 = vector.load %arg8[%c81, %c0_24] : memref<1472x8xbf16, #tpu.memory_space<vmem>>, vector<736x8xbf16>
    %c4 = arith.constant 4 : index
    %c0_25 = arith.constant 0 : index
    %c0_26 = arith.constant 0 : index
    %24 = vector.load %arg3[%c4, %c0_25, %c0_26] : memref<8x8x32xbf16, #tpu.memory_space<vmem>>, vector<1x8x32xbf16>
    %25 = vector.shape_cast %24 : vector<1x8x32xbf16> to vector<8x32xbf16>
    %cst_27 = arith.constant dense<0.000000e+00> : vector<736x32xf32>
    %26 = tpu.matmul %23, %25, %cst_27 {dimension_numbers = #tpu.dot_dimension_numbers<[1], [0], [0], [1], [0, 0, 1, 1], [], []>} : vector<736x8xbf16>, vector<8x32xbf16>, vector<736x32xf32> -> vector<736x32xf32>
    %27 = arith.addf %22, %26 : vector<736x32xf32>
    %c82 = arith.constant 82 : index
    %c0_28 = arith.constant 0 : index
    %28 = vector.load %arg8[%c82, %c0_28] : memref<1472x8xbf16, #tpu.memory_space<vmem>>, vector<736x8xbf16>
    %c5 = arith.constant 5 : index
    %c0_29 = arith.constant 0 : index
    %c0_30 = arith.constant 0 : index
    %29 = vector.load %arg3[%c5, %c0_29, %c0_30] : memref<8x8x32xbf16, #tpu.memory_space<vmem>>, vector<1x8x32xbf16>
    %30 = vector.shape_cast %29 : vector<1x8x32xbf16> to vector<8x32xbf16>
    %cst_31 = arith.constant dense<0.000000e+00> : vector<736x32xf32>
    %31 = tpu.matmul %28, %30, %cst_31 {dimension_numbers = #tpu.dot_dimension_numbers<[1], [0], [0], [1], [0, 0, 1, 1], [], []>} : vector<736x8xbf16>, vector<8x32xbf16>, vector<736x32xf32> -> vector<736x32xf32>
    %32 = arith.addf %27, %31 : vector<736x32xf32>
    %c90 = arith.constant 90 : index
    %c0_32 = arith.constant 0 : index
    %33 = vector.load %arg8[%c90, %c0_32] : memref<1472x8xbf16, #tpu.memory_space<vmem>>, vector<736x8xbf16>
    %c6 = arith.constant 6 : index
    %c0_33 = arith.constant 0 : index
    %c0_34 = arith.constant 0 : index
    %34 = vector.load %arg3[%c6, %c0_33, %c0_34] : memref<8x8x32xbf16, #tpu.memory_space<vmem>>, vector<1x8x32xbf16>
    %35 = vector.shape_cast %34 : vector<1x8x32xbf16> to vector<8x32xbf16>
    %cst_35 = arith.constant dense<0.000000e+00> : vector<736x32xf32>
    %36 = tpu.matmul %33, %35, %cst_35 {dimension_numbers = #tpu.dot_dimension_numbers<[1], [0], [0], [1], [0, 0, 1, 1], [], []>} : vector<736x8xbf16>, vector<8x32xbf16>, vector<736x32xf32> -> vector<736x32xf32>
    %37 = arith.addf %32, %36 : vector<736x32xf32>
    %c91 = arith.constant 91 : index
    %c0_36 = arith.constant 0 : index
    %38 = vector.load %arg8[%c91, %c0_36] : memref<1472x8xbf16, #tpu.memory_space<vmem>>, vector<736x8xbf16>
    %c7 = arith.constant 7 : index
    %c0_37 = arith.constant 0 : index
    %c0_38 = arith.constant 0 : index
    %39 = vector.load %arg3[%c7, %c0_37, %c0_38] : memref<8x8x32xbf16, #tpu.memory_space<vmem>>, vector<1x8x32xbf16>
    %40 = vector.shape_cast %39 : vector<1x8x32xbf16> to vector<8x32xbf16>
    %cst_39 = arith.constant dense<0.000000e+00> : vector<736x32xf32>
    %41 = tpu.matmul %38, %40, %cst_39 {dimension_numbers = #tpu.dot_dimension_numbers<[1], [0], [0], [1], [0, 0, 1, 1], [], []>} : vector<736x8xbf16>, vector<8x32xbf16>, vector<736x32xf32> -> vector<736x32xf32>
    %42 = arith.addf %37, %41 : vector<736x32xf32>
    %c0_40 = arith.constant 0 : index
    %c0_41 = arith.constant 0 : index
    %43 = vector.load %arg4[%c0_40, %c0_41] : memref<1x32xf32, #tpu.memory_space<vmem>>, vector<1x32xf32>
    %44 = vector.broadcast %43 : vector<1x32xf32> to vector<736x32xf32>
    %45 = arith.addf %42, %44 : vector<736x32xf32>
    %cst_42 = arith.constant 0.000000e+00 : f32
    %46 = vector.broadcast %cst_42 : f32 to vector<736x32xf32>
    %47 = arith.maximumf %45, %46 : vector<736x32xf32>
    %48 = arith.truncf %47 : vector<736x32xf32> to vector<736x32xbf16>
    %c0_43 = arith.constant 0 : index
    %c0_44 = arith.constant 0 : index
    %49 = vector.load %arg5[%c0_43, %c0_44] : memref<32x24xbf16, #tpu.memory_space<vmem>>, vector<32x24xbf16>
    %cst_45 = arith.constant dense<0.000000e+00> : vector<736x24xf32>
    %50 = tpu.matmul %48, %49, %cst_45 {dimension_numbers = #tpu.dot_dimension_numbers<[1], [0], [0], [1], [0, 0, 1, 1], [], []>} : vector<736x32xbf16>, vector<32x24xbf16>, vector<736x24xf32> -> vector<736x24xf32>
    %c0_46 = arith.constant 0 : index
    %c0_47 = arith.constant 0 : index
    %51 = vector.load %arg6[%c0_46, %c0_47] : memref<1x24xf32, #tpu.memory_space<vmem>>, vector<1x24xf32>
    %52 = vector.broadcast %51 : vector<1x24xf32> to vector<736x24xf32>
    %53 = arith.addf %50, %52 : vector<736x24xf32>
    %cst_48 = arith.constant 0.000000e+00 : f32
    %54 = vector.broadcast %cst_48 : f32 to vector<736x24xf32>
    %55 = arith.maximumf %53, %54 : vector<736x24xf32>
    %c0_49 = arith.constant 0 : index
    %c0_50 = arith.constant 0 : index
    %56 = vector.load %arg7[%c0_49, %c0_50] : memref<736x24xf32, #tpu.memory_space<vmem>>, vector<736x24xf32>
    tpu.vector_store %arg7[%c0_49, %c0_50], %55 {strides = array<i32>} : memref<736x24xf32, #tpu.memory_space<vmem>>, vector<736x24xf32>,
    return
  }
  func.func @transform_0(%arg0: i32) -> (i32, i32) {
    %c0_i32 = arith.constant 0 : i32
    %c0_i32_0 = arith.constant 0 : i32
    return %arg0, %c0_i32 : i32, i32
  }
  func.func @transform_1(%arg0: i32) -> (i32, i32) {
    %c1_i32 = arith.constant 1 : i32
    %0 = arith.addi %arg0, %c1_i32 : i32
    %c0_i32 = arith.constant 0 : i32
    %c0_i32_0 = arith.constant 0 : i32
    return %0, %c0_i32 : i32, i32
  }
  func.func @transform_2(%arg0: i32) -> (i32, i32, i32) {
    %c0_i32 = arith.constant 0 : i32
    %c0_i32_0 = arith.constant 0 : i32
    %c0_i32_1 = arith.constant 0 : i32
    %c0_i32_2 = arith.constant 0 : i32
    return %c0_i32, %c0_i32_0, %c0_i32_1 : i32, i32, i32
  }
  func.func @transform_3(%arg0: i32) -> (i32, i32) {
    %c0_i32 = arith.constant 0 : i32
    %c0_i32_0 = arith.constant 0 : i32
    %c0_i32_1 = arith.constant 0 : i32
    return %c0_i32, %c0_i32_0 : i32, i32
  }
  func.func @transform_4(%arg0: i32) -> (i32, i32) {
    %c0_i32 = arith.constant 0 : i32
    %c0_i32_0 = arith.constant 0 : i32
    %c0_i32_1 = arith.constant 0 : i32
    return %c0_i32, %c0_i32_0 : i32, i32
  }
  func.func @transform_5(%arg0: i32) -> (i32, i32) {
    %c0_i32 = arith.constant 0 : i32
    %c0_i32_0 = arith.constant 0 : i32
    %c0_i32_1 = arith.constant 0 : i32
    return %c0_i32, %c0_i32_0 : i32, i32
  }
  func.func @transform_6(%arg0: i32) -> (i32, i32) {
    %c0_i32 = arith.constant 0 : i32
    %c0_i32_0 = arith.constant 0 : i32
    return %arg0, %c0_i32 : i32, i32
  }
}

</mosaic_0001>

<llo_original>
// kernel: tile.27
$region0: #{tile.27}
  %s0 = inlined_call_operand.vmem [shape: f32[8,8], index: 0, kind: input, shape index: {}]
  %s1 = inlined_call_operand.vmem [shape: f32[1,64], index: 1, kind: output, shape index: {}]
  $region1: #{tile.27} parent=0
    #allocation0 [shape = 'u8[4096]{0}', space=vmem, size = 0x1000, scoped, tag = 'scoped mem for output reshape']
    %v2 = vld [vmem:[%s0] sm:$0x1]
    %vm3 = vcmask 64512
    %4 = vst.msk [vmem:[#allocation0] sm:$0x1] %vm3, %v2
    %s5 = scalar_lea.vmem %s0, 7
    %v6 = vld [vmem:[%s5] sm:$0x1]
    %7 = vrot.lane.b32.xlu0 %v6, 56
    %v8 = vpop.permute.xlu0 %7
    %vm9 = vcmask 523712
    %10 = vst.msk [vmem:[#allocation0] sm:$0x1] %vm9, %v8
    %s11 = scalar_lea.vmem %s0, 6
    %v12 = vld [vmem:[%s11] sm:$0x1]
    %13 = vrot.lane.b32.xlu0 %v12, 48
    %v14 = vpop.permute.xlu0 %13
    %vm15 = vcmask 458112
    %16 = vst.msk [vmem:[#allocation0] sm:$0x1] %vm15, %v14
    %s17 = scalar_lea.vmem %s0, 5
    %v18 = vld [vmem:[%s17] sm:$0x1]
    %19 = vrot.lane.b32.xlu0 %v18, 40
    %v20 = vpop.permute.xlu0 %19
    %vm21 = vcmask 392512
    %22 = vst.msk [vmem:[#allocation0] sm:$0x1] %vm21, %v20
    %s23 = scalar_lea.vmem %s0, 4
    %v24 = vld [vmem:[%s23] sm:$0x1]
    %25 = vrot.lane.b32.xlu0 %v24, 32
    %v26 = vpop.permute.xlu0 %25
    %vm27 = vcmask 326912
    %28 = vst.msk [vmem:[#allocation0] sm:$0x1] %vm27, %v26
    %s29 = scalar_lea.vmem %s0, 3
    %v30 = vld [vmem:[%s29] sm:$0x1]
    %31 = vrot.lane.b32.xlu0 %v30, 24
    %v32 = vpop.permute.xlu0 %31
    %vm33 = vcmask 261312
    %34 = vst.msk [vmem:[#allocation0] sm:$0x1] %vm33, %v32
    %s35 = scalar_lea.vmem %s0, 2
    %v36 = vld [vmem:[%s35] sm:$0x1]
    %37 = vrot.lane.b32.xlu0 %v36, 16
    %v38 = vpop.permute.xlu0 %37
    %vm39 = vcmask 195712
    %40 = vst.msk [vmem:[#allocation0] sm:$0x1] %vm39, %v38
    %s41 = scalar_lea.vmem %s0, 1
    %v42 = vld [vmem:[%s41] sm:$0x1]
    %43 = vrot.lane.b32.xlu0 %v42, 8
    %v44 = vpop.permute.xlu0 %43
    %vm45 = vcmask 130112
    %46 = vst.msk [vmem:[#allocation0] sm:$0x1] %vm45, %v44
    %s48 = ssub.s32 2, 1
    %v49 = vld [vmem:[#allocation0] sm:%s48]
    %s51 = ssub.s32 2, 1
    %52 = vst [vmem:[%s1] sm:%s51] %v49

// kernel: mul.24
$region0: #{mul.24}
  %s0 = inlined_call_operand.vmem [shape: f32[8,8], index: 0, kind: input, shape index: {}]
  %s1 = inlined_call_operand.vmem [shape: f32[64], index: 1, kind: output, shape index: {}]
  $region1: #{mul.24} parent=0
    #allocation0 [shape = 'u8[4096]{0}', space=vmem, size = 0x1000, scoped, tag = 'scoped mem for output reshape']
    %v2 = vld [vmem:[%s0] sm:$0x1]
    %vm3 = vcmask 64512
    %4 = vst.msk [vmem:[#allocation0] sm:$0x1] %vm3, %v2
    %s5 = scalar_lea.vmem %s0, 7
    %v6 = vld [vmem:[%s5] sm:$0x1]
    %7 = vrot.lane.b32.xlu0 %v6, 56
    %v8 = vpop.permute.xlu0 %7
    %vm9 = vcmask 523712
    %10 = vst.msk [vmem:[#allocation0] sm:$0x1] %vm9, %v8
    %s11 = scalar_lea.vmem %s0, 6
    %v12 = vld [vmem:[%s11] sm:$0x1]
    %13 = vrot.lane.b32.xlu0 %v12, 48
    %v14 = vpop.permute.xlu0 %13
    %vm15 = vcmask 458112
    %16 = vst.msk [vmem:[#allocation0] sm:$0x1] %vm15, %v14
    %s17 = scalar_lea.vmem %s0, 5
    %v18 = vld [vmem:[%s17] sm:$0x1]
    %19 = vrot.lane.b32.xlu0 %v18, 40
    %v20 = vpop.permute.xlu0 %19
    %vm21 = vcmask 392512
    %22 = vst.msk [vmem:[#allocation0] sm:$0x1] %vm21, %v20
    %s23 = scalar_lea.vmem %s0, 4
    %v24 = vld [vmem:[%s23] sm:$0x1]
    %25 = vrot.lane.b32.xlu0 %v24, 32
    %v26 = vpop.permute.xlu0 %25
    %vm27 = vcmask 326912
    %28 = vst.msk [vmem:[#allocation0] sm:$0x1] %vm27, %v26
    %s29 = scalar_lea.vmem %s0, 3
    %v30 = vld [vmem:[%s29] sm:$0x1]
    %31 = vrot.lane.b32.xlu0 %v30, 24
    %v32 = vpop.permute.xlu0 %31
    %vm33 = vcmask 261312
    %34 = vst.msk [vmem:[#allocation0] sm:$0x1] %vm33, %v32
    %s35 = scalar_lea.vmem %s0, 2
    %v36 = vld [vmem:[%s35] sm:$0x1]
    %37 = vrot.lane.b32.xlu0 %v36, 16
    %v38 = vpop.permute.xlu0 %37
    %vm39 = vcmask 195712
    %40 = vst.msk [vmem:[#allocation0] sm:$0x1] %vm39, %v38
    %s41 = scalar_lea.vmem %s0, 1
    %v42 = vld [vmem:[%s41] sm:$0x1]
    %43 = vrot.lane.b32.xlu0 %v42, 8
    %v44 = vpop.permute.xlu0 %43
    %vm45 = vcmask 130112
    %46 = vst.msk [vmem:[#allocation0] sm:$0x1] %vm45, %v44
    %s48 = ssub.s32 2, 1
    %v49 = vld [vmem:[#allocation0] sm:%s48]
    %s51 = ssub.s32 2, 1
    %52 = vst [vmem:[%s1] sm:%s51] %v49

// kernel: tile.22
$region0: #{tile.22}
  #allocation2 [shape = 's32[1]{0}', space=sflag, size = 0x4, scoped, tag = 'scoped memory for tile.22']
  %s0 = inlined_call_operand.hbm [shape: f32[8], index: 0, kind: input, shape index: {}]
  %s1 = inlined_call_operand.vmem [shape: f32[8,8], index: 1, kind: output, shape index: {}]
  $region1: #{tile.22} parent=0
    #allocation0 [shape = 'u8[512]{0}', space=vmem, size = 0x400, scoped, tag = 'operand span for operand 0']
    #allocation1 [shape = 's32[1]{0}', space=sflag, size = 0x4, scoped, tag = 'scoped memory for tile.22']
    %2 = vsyncpa [#allocation1], 0
    // Predicated region
    $region2: #{tile.22} parent=1 // pred_check
      _
    $region3: #{tile.22} parent=1 // pred_check_branch
      %4 = sbr.rel (0) target = $region5
    $region4: #{tile.22} parent=1 // pred_region
      %6 = vsyncadd [#allocation1], 0
      %s8 = sshll.u32 %s0, 4
      %s9 = int_to_ptr.hbm [resolvable:$true] %s8
      %s10 = sshll.u32 [#allocation0], 4
      %s11 = int_to_ptr.vmem [resolvable:$true] %s10
      %13 = dma.hbm_to_vmem [thread:$0]  %s9, 16, %s11, [#allocation1]
    $region5: #{tile.22} parent=1 // pred_fallthru
      _
    // Predicated region
    $region6: #{tile.22} parent=1 // pred_check
      _
    $region7: #{tile.22} parent=1 // pred_check_branch
      %15 = sbr.rel (0) target = $region9
    $region8: #{tile.22} parent=1 // pred_region
      %17 = dma.done [#allocation1], 16
    $region9: #{tile.22} parent=1 // pred_fallthru
      _
    %v18 = vld [vmem:[#allocation0] ss:$0 sm:$0xff]
    %19 = vst [vmem:[%s1] sm:$0xff] %v18
    %20 = vsyncpa [#allocation1], 1

// kernel: tile.30
$region0: #{tile.30}
  #allocation2 [shape = 's32[1]{0}', space=sflag, size = 0x4, scoped, tag = 'scoped memory for tile.30']
  %s0 = inlined_call_operand.hbm [shape: f32[4], index: 0, kind: input, shape index: {}]
  %s1 = inlined_call_operand.vmem [shape: f32[8,4], index: 1, kind: output, shape index: {}]
  $region1: #{tile.30} parent=0
    #allocation0 [shape = 'u8[512]{0}', space=vmem, size = 0x400, scoped, tag = 'operand span for operand 0']
    #allocation1 [shape = 's32[1]{0}', space=sflag, size = 0x4, scoped, tag = 'scoped memory for tile.30']
    %2 = vsyncpa [#allocation1], 0
    // Predicated region
    $region2: #{tile.30} parent=1 // pred_check
      _
    $region3: #{tile.30} parent=1 // pred_check_branch
      %4 = sbr.rel (0) target = $region5
    $region4: #{tile.30} parent=1 // pred_region
      %6 = vsyncadd [#allocation1], 0
      %s8 = sshll.u32 %s0, 4
      %s9 = int_to_ptr.hbm [resolvable:$true] %s8
      %s10 = sshll.u32 [#allocation0], 4
      %s11 = int_to_ptr.vmem [resolvable:$true] %s10
      %13 = dma.hbm_to_vmem [thread:$0]  %s9, 16, %s11, [#allocation1]
    $region5: #{tile.30} parent=1 // pred_fallthru
      _
    // Predicated region
    $region6: #{tile.30} parent=1 // pred_check
      _
    $region7: #{tile.30} parent=1 // pred_check_branch
      %15 = sbr.rel (0) target = $region9
    $region8: #{tile.30} parent=1 // pred_region
      %17 = dma.done [#allocation1], 16
    $region9: #{tile.30} parent=1 // pred_fallthru
      _
    %v18 = vld [vmem:[#allocation0] ss:$0 sm:$0xff]
    %19 = vst [vmem:[%s1] sm:$0xff] %v18
    %20 = vsyncpa [#allocation1], 1

// kernel: mul.27
$region0: #{mul.27}
  %s0 = inlined_call_operand.vmem [shape: f32[8,4], index: 0, kind: input, shape index: {}]
  %s1 = inlined_call_operand.vmem [shape: f32[32], index: 1, kind: output, shape index: {}]
  $region1: #{mul.27} parent=0
    #allocation0 [shape = 'u8[4096]{0}', space=vmem, size = 0x1000, scoped, tag = 'scoped mem for output reshape']
    %v2 = vld [vmem:[%s0] sm:$0x1]
    %vm3 = vcmask 31744
    %4 = vst.msk [vmem:[#allocation0] sm:$0x1] %vm3, %v2
    %s5 = scalar_lea.vmem %s0, 7
    %v6 = vld [vmem:[%s5] sm:$0x1]
    %7 = vrot.lane.b32.xlu0 %v6, 28
    %v8 = vpop.permute.xlu0 %7
    %vm9 = vcmask 261344
    %10 = vst.msk [vmem:[#allocation0] sm:$0x1] %vm9, %v8
    %s11 = scalar_lea.vmem %s0, 6
    %v12 = vld [vmem:[%s11] sm:$0x1]
    %13 = vrot.lane.b32.xlu0 %v12, 24
    %v14 = vpop.permute.xlu0 %13
    %vm15 = vcmask 228544
    %16 = vst.msk [vmem:[#allocation0] sm:$0x1] %vm15, %v14
    %s17 = scalar_lea.vmem %s0, 5
    %v18 = vld [vmem:[%s17] sm:$0x1]
    %19 = vrot.lane.b32.xlu0 %v18, 20
    %v20 = vpop.permute.xlu0 %19
    %vm21 = vcmask 195744
    %22 = vst.msk [vmem:[#allocation0] sm:$0x1] %vm21, %v20
    %s23 = scalar_lea.vmem %s0, 4
    %v24 = vld [vmem:[%s23] sm:$0x1]
    %25 = vrot.lane.b32.xlu0 %v24, 16
    %v26 = vpop.permute.xlu0 %25
    %vm27 = vcmask 162944
    %28 = vst.msk [vmem:[#allocation0] sm:$0x1] %vm27, %v26
    %s29 = scalar_lea.vmem %s0, 3
    %v30 = vld [vmem:[%s29] sm:$0x1]
    %31 = vrot.lane.b32.xlu0 %v30, 12
    %v32 = vpop.permute.xlu0 %31
    %vm33 = vcmask 130144
    %34 = vst.msk [vmem:[#allocation0] sm:$0x1] %vm33, %v32
    %s35 = scalar_lea.vmem %s0, 2
    %v36 = vld [vmem:[%s35] sm:$0x1]
    %37 = vrot.lane.b32.xlu0 %v36, 8
    %v38 = vpop.permute.xlu0 %37
    %vm39 = vcmask 97344
    %40 = vst.msk [vmem:[#allocation0] sm:$0x1] %vm39, %v38
    %s41 = scalar_lea.vmem %s0, 1
    %v42 = vld [vmem:[%s41] sm:$0x1]
    %43 = vrot.lane.b32.xlu0 %v42, 4
    %v44 = vpop.permute.xlu0 %43
    %vm45 = vcmask 64544
    %46 = vst.msk [vmem:[#allocation0] sm:$0x1] %vm45, %v44
    %s48 = ssub.s32 2, 1
    %v49 = vld [vmem:[#allocation0] sm:%s48]
    %s51 = ssub.s32 2, 1
    %52 = vst [vmem:[%s1] sm:%s51] %v49

// kernel: tile.38
$region0: #{tile.38}
  %s0 = inlined_call_operand.vmem [shape: f32[8,4], index: 0, kind: input, shape index: {}]
  %s1 = inlined_call_operand.vmem [shape: f32[1,32], index: 1, kind: output, shape index: {}]
  $region1: #{tile.38} parent=0
    #allocation0 [shape = 'u8[4096]{0}', space=vmem, size = 0x1000, scoped, tag = 'scoped mem for output reshape']
    %v2 = vld [vmem:[%s0] sm:$0x1]
    %vm3 = vcmask 31744
    %4 = vst.msk [vmem:[#allocation0] sm:$0x1] %vm3, %v2
    %s5 = scalar_lea.vmem %s0, 7
    %v6 = vld [vmem:[%s5] sm:$0x1]
    %7 = vrot.lane.b32.xlu0 %v6, 28
    %v8 = vpop.permute.xlu0 %7
    %vm9 = vcmask 261344
    %10 = vst.msk [vmem:[#allocation0] sm:$0x1] %vm9, %v8
    %s11 = scalar_lea.vmem %s0, 6
    %v12 = vld [vmem:[%s11] sm:$0x1]
    %13 = vrot.lane.b32.xlu0 %v12, 24
    %v14 = vpop.permute.xlu0 %13
    %vm15 = vcmask 228544
    %16 = vst.msk [vmem:[#allocation0] sm:$0x1] %vm15, %v14
    %s17 = scalar_lea.vmem %s0, 5
    %v18 = vld [vmem:[%s17] sm:$0x1]
    %19 = vrot.lane.b32.xlu0 %v18, 20
    %v20 = vpop.permute.xlu0 %19
    %vm21 = vcmask 195744
    %22 = vst.msk [vmem:[#allocation0] sm:$0x1] %vm21, %v20
    %s23 = scalar_lea.vmem %s0, 4
    %v24 = vld [vmem:[%s23] sm:$0x1]
    %25 = vrot.lane.b32.xlu0 %v24, 16
    %v26 = vpop.permute.xlu0 %25
    %vm27 = vcmask 162944
    %28 = vst.msk [vmem:[#allocation0] sm:$0x1] %vm27, %v26
    %s29 = scalar_lea.vmem %s0, 3
    %v30 = vld [vmem:[%s29] sm:$0x1]
    %31 = vrot.lane.b32.xlu0 %v30, 12
    %v32 = vpop.permute.xlu0 %31
    %vm33 = vcmask 130144
    %34 = vst.msk [vmem:[#allocation0] sm:$0x1] %vm33, %v32
    %s35 = scalar_lea.vmem %s0, 2
    %v36 = vld [vmem:[%s35] sm:$0x1]
    %37 = vrot.lane.b32.xlu0 %v36, 8
    %v38 = vpop.permute.xlu0 %37
    %vm39 = vcmask 97344
    %40 = vst.msk [vmem:[#allocation0] sm:$0x1] %vm39, %v38
    %s41 = scalar_lea.vmem %s0, 1
    %v42 = vld [vmem:[%s41] sm:$0x1]
    %43 = vrot.lane.b32.xlu0 %v42, 4
    %v44 = vpop.permute.xlu0 %43
    %vm45 = vcmask 64544
    %46 = vst.msk [vmem:[#allocation0] sm:$0x1] %vm45, %v44
    %s48 = ssub.s32 2, 1
    %v49 = vld [vmem:[#allocation0] sm:%s48]
    %s51 = ssub.s32 2, 1
    %52 = vst [vmem:[%s1] sm:%s51] %v49

// kernel: tile.37
$region0: #{tile.37}
  #allocation2 [shape = 's32[1]{0}', space=sflag, size = 0x4, scoped, tag = 'scoped memory for tile.37']
  %s0 = inlined_call_operand.hbm [shape: f32[3], index: 0, kind: input, shape index: {}]
  %s1 = inlined_call_operand.vmem [shape: f32[8,3], index: 1, kind: output, shape index: {}]
  $region1: #{tile.37} parent=0
    #allocation0 [shape = 'u8[512]{0}', space=vmem, size = 0x400, scoped, tag = 'operand span for operand 0']
    #allocation1 [shape = 's32[1]{0}', space=sflag, size = 0x4, scoped, tag = 'scoped memory for tile.37']
    %2 = vsyncpa [#allocation1], 0
    // Predicated region
    $region2: #{tile.37} parent=1 // pred_check
      _
    $region3: #{tile.37} parent=1 // pred_check_branch
      %4 = sbr.rel (0) target = $region5
    $region4: #{tile.37} parent=1 // pred_region
      %6 = vsyncadd [#allocation1], 0
      %s8 = sshll.u32 %s0, 4
      %s9 = int_to_ptr.hbm [resolvable:$true] %s8
      %s10 = sshll.u32 [#allocation0], 4
      %s11 = int_to_ptr.vmem [resolvable:$true] %s10
      %13 = dma.hbm_to_vmem [thread:$0]  %s9, 16, %s11, [#allocation1]
    $region5: #{tile.37} parent=1 // pred_fallthru
      _
    // Predicated region
    $region6: #{tile.37} parent=1 // pred_check
      _
    $region7: #{tile.37} parent=1 // pred_check_branch
      %15 = sbr.rel (0) target = $region9
    $region8: #{tile.37} parent=1 // pred_region
      %17 = dma.done [#allocation1], 16
    $region9: #{tile.37} parent=1 // pred_fallthru
      _
    %v18 = vld [vmem:[#allocation0] ss:$0 sm:$0xff]
    %19 = vst [vmem:[%s1] sm:$0xff] %v18
    %20 = vsyncpa [#allocation1], 1

// kernel: tile.39
$region0: #{tile.39}
  %s0 = inlined_call_operand.vmem [shape: f32[8,3], index: 0, kind: input, shape index: {}]
  %s1 = inlined_call_operand.vmem [shape: f32[1,24], index: 1, kind: output, shape index: {}]
  $region1: #{tile.39} parent=0
    #allocation0 [shape = 'u8[4096]{0}', space=vmem, size = 0x1000, scoped, tag = 'scoped mem for output reshape']
    %v2 = vld [vmem:[%s0] sm:$0x1]
    %vm3 = vcmask 23552
    %4 = vst.msk [vmem:[#allocation0] sm:$0x1] %vm3, %v2
    %s5 = scalar_lea.vmem %s0, 7
    %v6 = vld [vmem:[%s5] sm:$0x1]
    %7 = vrot.lane.b32.xlu0 %v6, 21
    %v8 = vpop.permute.xlu0 %7
    %vm9 = vcmask 195752
    %10 = vst.msk [vmem:[#allocation0] sm:$0x1] %vm9, %v8
    %s11 = scalar_lea.vmem %s0, 6
    %v12 = vld [vmem:[%s11] sm:$0x1]
    %13 = vrot.lane.b32.xlu0 %v12, 18
    %v14 = vpop.permute.xlu0 %13
    %vm15 = vcmask 171152
    %16 = vst.msk [vmem:[#allocation0] sm:$0x1] %vm15, %v14
    %s17 = scalar_lea.vmem %s0, 5
    %v18 = vld [vmem:[%s17] sm:$0x1]
    %19 = vrot.lane.b32.xlu0 %v18, 15
    %v20 = vpop.permute.xlu0 %19
    %vm21 = vcmask 146552
    %22 = vst.msk [vmem:[#allocation0] sm:$0x1] %vm21, %v20
    %s23 = scalar_lea.vmem %s0, 4
    %v24 = vld [vmem:[%s23] sm:$0x1]
    %25 = vrot.lane.b32.xlu0 %v24, 12
    %v26 = vpop.permute.xlu0 %25
    %vm27 = vcmask 121952
    %28 = vst.msk [vmem:[#allocation0] sm:$0x1] %vm27, %v26
    %s29 = scalar_lea.vmem %s0, 3
    %v30 = vld [vmem:[%s29] sm:$0x1]
    %31 = vrot.lane.b32.xlu0 %v30, 9
    %v32 = vpop.permute.xlu0 %31
    %vm33 = vcmask 97352
    %34 = vst.msk [vmem:[#allocation0] sm:$0x1] %vm33, %v32
    %s35 = scalar_lea.vmem %s0, 2
    %v36 = vld [vmem:[%s35] sm:$0x1]
    %37 = vrot.lane.b32.xlu0 %v36, 6
    %v38 = vpop.permute.xlu0 %37
    %vm39 = vcmask 72752
    %40 = vst.msk [vmem:[#allocation0] sm:$0x1] %vm39, %v38
    %s41 = scalar_lea.vmem %s0, 1
    %v42 = vld [vmem:[%s41] sm:$0x1]
    %43 = vrot.lane.b32.xlu0 %v42, 3
    %v44 = vpop.permute.xlu0 %43
    %vm45 = vcmask 48152
    %46 = vst.msk [vmem:[#allocation0] sm:$0x1] %vm45, %v44
    %s48 = ssub.s32 2, 1
    %v49 = vld [vmem:[#allocation0] sm:%s48]
    %s51 = ssub.s32 2, 1
    %52 = vst [vmem:[%s1] sm:%s51] %v49

// kernel: _lambda_.2
$region0: #{_lambda_.2}
  #allocation0 [shape = 'u32[]', space=smem, size = 0x4, offset = 0x4, fixed_abs, tag = 'smem constant byte address 0x4 - core index']
  #allocation1 [shape = 'u32[72,128]{1,0:T(1,128)}', space=vmem, size = 0x9000, scoped, tag = 'internal scratch']
  #allocation2 [shape = 'bf16[256,16]{1,0:T(8,128)(2,1)}', space=vmem, size = 0x10000, scoped, tag = 'scratch operand']
  %s0 = inlined_call_operand.vmem [shape: bf16[384,16], index: 0, kind: input, shape index: {}, may-alias: {0,1}]
  %s1 = inlined_call_operand.vmem [shape: bf16[384,16], index: 1, kind: input, shape index: {}, may-alias: {0,1}]
  %s2 = inlined_call_operand.vmem [shape: bf16[8,16,64], index: 2, kind: input, shape index: {}]
  %s3 = inlined_call_operand.vmem [shape: f32[1,64], index: 3, kind: input, shape index: {}]
  %s4 = inlined_call_operand.vmem [shape: bf16[256,64], index: 4, kind: output, shape index: {}]
  %s5 = sld [smem:[#allocation0]]
  $region49: #{_lambda_.2} parent=0
    _
  %s7 = ssub.s32 1, %s5
  %s8 = scalar_select 0, %s7, %s5
  loop: start=0, step=1, limit=4
  $region2: #{_lambda_.2} parent=0 // loop_pre_header
    _
  $region3: #{_lambda_.2} parent=0 // loop_header
    %s10 = sphi 0, %s14
    %p11 = scmp.ge.s32.totalorder %s10, 4
    %s20 = sphi 0, %s22
    %s23 = sphi 0, %s20
    %s24 = sphi 0, %s23
    %s40 = sphi 0, %s24
    %s48 = sphi 0, %s50
    %s51 = sphi 0, %s48
    %s52 = sphi 0, %s51
    %s68 = sphi 0, %s52
    %s72 = sphi 0, %s72
    %s74 = sphi 0, %s72
    %s75 = sphi 0, %s74
    %s89 = sphi 0, %s75
    %s93 = sphi 0, %s93
    %s95 = sphi 0, %s93
    %s96 = sphi 0, %s95
    %s110 = sphi 0, %s96
    %s116 = sphi 0, %s118
    %s119 = sphi 0, %s116
    %s120 = sphi 0, %s119
    %s136 = sphi 0, %s120
  $region4: #{_lambda_.2} parent=0 // loop_header_branch
    %13 = sbr.rel (%p11) target = $region8
  $region5: #{_lambda_.2} parent=0 // loop_body
    %s15 = ssub.s32 %s10, 1
    %s16 = ssub.s32 %s10, 2
    %s17 = sadd.s32 %s10, 1
    %s18 = ssub.s32 %s10, %s17
    %p19 = scmp.eq.s32.totalorder %s18, 0
    %s21 = sadd.s32 %s20, 1
    %s22 = scalar_select %p19, %s20, %s21
    %p25 = pneg %p19
    %p26 = scmp.eq.s32.totalorder %s10, 1
    %p27 = por %p25, %p26
    %p28 = scmp.ne.s32.totalorder %s20, %s23
    %p29 = scmp.eq.s32.totalorder %s10, 0
    %p30 = por %p28, %p29
    %p31 = scmp.ne.s32.totalorder %s20, %s23
    %p32 = scmp.eq.s32.totalorder %s15, 1
    %p33 = por %p31, %p32
    %p34 = scmp.ne.s32.totalorder %s23, %s24
    %p35 = scmp.eq.s32.totalorder %s15, 0
    %p36 = por %p34, %p35
    %p37 = scmp.ne.s32.totalorder %s23, %s24
    %p38 = scmp.eq.s32.totalorder %s16, 1
    %p39 = por %p37, %p38
    %p41 = scmp.ne.s32.totalorder %s24, %s40
    %p42 = scmp.eq.s32.totalorder %s16, 0
    %p43 = por %p41, %p42
    %s44 = sadd.s32 %s10, 1
    %s45 = sadd.s32 %s17, 1
    %s46 = ssub.s32 %s44, %s45
    %p47 = scmp.eq.s32.totalorder %s46, 0
    %s49 = sadd.s32 %s48, 1
    %s50 = scalar_select %p47, %s48, %s49
    %p53 = pneg %p47
    %p54 = scmp.eq.s32.totalorder %s10, 1
    %p55 = por %p53, %p54
    %p56 = scmp.ne.s32.totalorder %s48, %s51
    %p57 = scmp.eq.s32.totalorder %s10, 0
    %p58 = por %p56, %p57
    %p59 = scmp.ne.s32.totalorder %s48, %s51
    %p60 = scmp.eq.s32.totalorder %s15, 1
    %p61 = por %p59, %p60
    %p62 = scmp.ne.s32.totalorder %s51, %s52
    %p63 = scmp.eq.s32.totalorder %s15, 0
    %p64 = por %p62, %p63
    %p65 = scmp.ne.s32.totalorder %s51, %s52
    %p66 = scmp.eq.s32.totalorder %s16, 1
    %p67 = por %p65, %p66
    %p69 = scmp.ne.s32.totalorder %s52, %s68
    %p70 = scmp.eq.s32.totalorder %s16, 0
    %p71 = por %p69, %p70
    %s73 = sadd.s32 %s72, 1
    %p76 = scmp.eq.s32.totalorder %s10, 1
    %p77 = scmp.ne.s32.totalorder %s72, %s74
    %p78 = scmp.eq.s32.totalorder %s10, 0
    %p79 = por %p77, %p78
    %p80 = scmp.ne.s32.totalorder %s72, %s74
    %p81 = scmp.eq.s32.totalorder %s15, 1
    %p82 = por %p80, %p81
    %p83 = scmp.ne.s32.totalorder %s74, %s75
    %p84 = scmp.eq.s32.totalorder %s15, 0
    %p85 = por %p83, %p84
    %p86 = scmp.ne.s32.totalorder %s74, %s75
    %p87 = scmp.eq.s32.totalorder %s16, 1
    %p88 = por %p86, %p87
    %p90 = scmp.ne.s32.totalorder %s75, %s89
    %p91 = scmp.eq.s32.totalorder %s16, 0
    %p92 = por %p90, %p91
    %s94 = sadd.s32 %s93, 1
    %p97 = scmp.eq.s32.totalorder %s10, 1
    %p98 = scmp.ne.s32.totalorder %s93, %s95
    %p99 = scmp.eq.s32.totalorder %s10, 0
    %p100 = por %p98, %p99
    %p101 = scmp.ne.s32.totalorder %s93, %s95
    %p102 = scmp.eq.s32.totalorder %s15, 1
    %p103 = por %p101, %p102
    %p104 = scmp.ne.s32.totalorder %s95, %s96
    %p105 = scmp.eq.s32.totalorder %s15, 0
    %p106 = por %p104, %p105
    %p107 = scmp.ne.s32.totalorder %s95, %s96
    %p108 = scmp.eq.s32.totalorder %s16, 1
    %p109 = por %p107, %p108
    %p111 = scmp.ne.s32.totalorder %s96, %s110
    %p112 = scmp.eq.s32.totalorder %s16, 0
    %p113 = por %p111, %p112
    %s114 = ssub.s32 %s10, %s17
    %p115 = scmp.eq.s32.totalorder %s114, 0
    %s117 = sadd.s32 %s116, 1
    %s118 = scalar_select %p115, %s116, %s117
    %p121 = pneg %p115
    %p122 = scmp.eq.s32.totalorder %s10, 1
    %p123 = por %p121, %p122
    %p124 = scmp.ne.s32.totalorder %s116, %s119
    %p125 = scmp.eq.s32.totalorder %s10, 0
    %p126 = por %p124, %p125
    %p127 = scmp.ne.s32.totalorder %s116, %s119
    %p128 = scmp.eq.s32.totalorder %s15, 1
    %p129 = por %p127, %p128
    %p130 = scmp.ne.s32.totalorder %s119, %s120
    %p131 = scmp.eq.s32.totalorder %s15, 0
    %p132 = por %p130, %p131
    %p133 = scmp.ne.s32.totalorder %s119, %s120
    %p134 = scmp.eq.s32.totalorder %s16, 1
    %p135 = por %p133, %p134
    %p137 = scmp.ne.s32.totalorder %s120, %s136
    %p138 = scmp.eq.s32.totalorder %s16, 0
    %p139 = por %p137, %p138
    %p140 = scmp.le.s32.totalorder 1, %s10
    %p141 = scmp.lt.s32.totalorder %s10, 3
    %p142 = pnand %p140, %p141
    %p143 = pneg %p142
    // Predicated region
    $region9: #{_lambda_.2} parent=5 // pred_check
      _
    $region10: #{_lambda_.2} parent=5 // pred_check_branch
      %145 = sbr.rel (%p142) target = $region12
    $region11: #{_lambda_.2} parent=5 // pred_region
      %s146 = ssub.s32 %s10, 1
      // Predicated region
      $region13: #{_lambda_.2} parent=11 // pred_check
        %p147 = pneg %p85
      $region14: #{_lambda_.2} parent=11 // pred_check_branch
        %149 = sbr.rel (%p147) target = $region16
      $region15: #{_lambda_.2} parent=11 // pred_region
        _
      $region16: #{_lambda_.2} parent=11 // pred_fallthru
        _
      // Predicated region
      $region17: #{_lambda_.2} parent=11 // pred_check
        %p150 = pneg %p106
      $region18: #{_lambda_.2} parent=11 // pred_check_branch
        %152 = sbr.rel (%p150) target = $region20
      $region19: #{_lambda_.2} parent=11 // pred_region
        _
      $region20: #{_lambda_.2} parent=11 // pred_fallthru
        _
    $region12: #{_lambda_.2} parent=5 // pred_fallthru
      _
    %p153 = scmp.lt.s32.totalorder %s10, 2
    // Predicated region
    $region21: #{_lambda_.2} parent=5 // pred_check
      %p154 = pneg %p153
    $region22: #{_lambda_.2} parent=5 // pred_check_branch
      %156 = sbr.rel (%p154) target = $region24
    $region23: #{_lambda_.2} parent=5 // pred_region
      // Predicated region
      $region25: #{_lambda_.2} parent=23 // pred_check
        %p157 = pneg %p30
      $region26: #{_lambda_.2} parent=23 // pred_check_branch
        %159 = sbr.rel (%p157) target = $region28
      $region27: #{_lambda_.2} parent=23 // pred_region
        %s160 = smul.u32 16, %s10
        %p161 = scmp.lt.s32.totalorder %s160, 47
        %s162 = scalar_select %p161, %s160, 47
        %s163 = smul.addr %s162, 4
        %s164 = scalar_lea.vmem %s0, %s163
        %s165 = smul.u32 16, %s10
      $region28: #{_lambda_.2} parent=23 // pred_fallthru
        _
      // Predicated region
      $region29: #{_lambda_.2} parent=23 // pred_check
        %p166 = pneg %p58
      $region30: #{_lambda_.2} parent=23 // pred_check_branch
        %168 = sbr.rel (%p166) target = $region32
      $region31: #{_lambda_.2} parent=23 // pred_region
        %s169 = sadd.s32 %s10, 1
        %s170 = smul.u32 16, %s169
        %p171 = scmp.lt.s32.totalorder %s170, 47
        %s172 = scalar_select %p171, %s170, 47
        %s173 = smul.addr %s172, 4
        %s174 = scalar_lea.vmem %s1, %s173
        %s175 = sadd.s32 %s10, 1
        %s176 = smul.u32 16, %s175
      $region32: #{_lambda_.2} parent=23 // pred_fallthru
        _
    $region24: #{_lambda_.2} parent=5 // pred_fallthru
      _
    %p177 = scmp.le.s32.totalorder 1, %s10
    %p178 = scmp.lt.s32.totalorder %s10, 3
    %p179 = pnand %p177, %p178
    %p180 = pneg %p179
    // Predicated region
    $region33: #{_lambda_.2} parent=5 // pred_check
      _
    $region34: #{_lambda_.2} parent=5 // pred_check_branch
      %182 = sbr.rel (%p179) target = $region36
    $region35: #{_lambda_.2} parent=5 // pred_region
      %s183 = ssub.s32 %s10, 1
      %s184 = smul.u32 16, %s15
      %p185 = scmp.lt.s32.totalorder %s184, 47
      %s186 = scalar_select %p185, %s184, 47
      %s187 = smul.addr %s186, 4
      %s188 = scalar_lea.vmem %s0, %s187
      %p189 = pneg %p36
      %p190 = pneg %p33
      %s191 = sadd.s32 %s15, 1
      %s192 = smul.u32 16, %s191
      %p193 = scmp.lt.s32.totalorder %s192, 47
      %s194 = scalar_select %p193, %s192, 47
      %s195 = smul.addr %s194, 4
      %s196 = scalar_lea.vmem %s1, %s195
      %p197 = pneg %p64
      %p198 = pneg %p61
      %p199 = pneg %p85
      %p200 = pneg %p82
      %p201 = pneg %p106
      %p202 = pneg %p103
      %p203 = pneg %p132
      %p204 = pneg %p129
      %s205 = smul.u32 16, %s15
      %p206 = scmp.lt.s32.totalorder %s205, 31
      %s207 = scalar_select %p206, %s205, 31
      %s208 = smul.addr %s207, 4
      %s209 = scalar_lea.vmem %s4, %s208
      %s210 = smul.u32 16, %s15
      %p211 = scmp.lt.s32.totalorder %s210, 47
      %s212 = scalar_select %p211, %s210, 47
      %s213 = smul.addr %s212, 4
      %s214 = scalar_lea.vmem %s0, %s213
      %s215 = smul.u32 16, %s15
      %s216 = sadd.s32 %s15, 1
      %s217 = smul.u32 16, %s216
      %p218 = scmp.lt.s32.totalorder %s217, 47
      %s219 = scalar_select %p218, %s217, 47
      %s220 = smul.addr %s219, 4
      %s221 = scalar_lea.vmem %s1, %s220
      %s222 = sadd.s32 %s15, 1
      %s223 = smul.u32 16, %s222
      %s224 = smul.u32 16, %s15
      %p225 = scmp.lt.s32.totalorder %s224, 31
      %s226 = scalar_select %p225, %s224, 31
      %s227 = smul.addr %s226, 4
      %s228 = scalar_lea.vmem %s4, %s227
      %s229 = smul.u32 16, %s15
      %v231 = vld [vmem:[%s214] sm:$0xf]
      %v232 = vld [vmem:[%s214 + $0x4] sm:$0xf]
      %v233 = vld [vmem:[%s214 + $0x8] sm:$0xf]
      %v234 = vld [vmem:[%s214 + $0xc] sm:$0xf]
      %v235 = vld [vmem:[%s214 + $0x10] sm:$0xf]
      %v236 = vld [vmem:[%s214 + $0x14] sm:$0xf]
      %v237 = vld [vmem:[%s214 + $0x18] sm:$0xf]
      %v238 = vld [vmem:[%s214 + $0x1c] sm:$0xf]
      %v239 = vld [vmem:[%s214 + $0x20] sm:$0xf]
      %v240 = vld [vmem:[%s214 + $0x24] sm:$0xf]
      %v241 = vld [vmem:[%s214 + $0x28] sm:$0xf]
      %v242 = vld [vmem:[%s214 + $0x2c] sm:$0xf]
      %v243 = vld [vmem:[%s214 + $0x30] sm:$0xf]
      %v244 = vld [vmem:[%s214 + $0x34] sm:$0xf]
      %v245 = vld [vmem:[%s214 + $0x38] sm:$0xf]
      %v246 = vld [vmem:[%s214 + $0x3c] sm:$0xf]
      %vm247 = vcmask 125952
      %248 = vst.msk [vmem:[#allocation2] sm:$0xf] %vm247, %v231
      %249 = vst.msk [vmem:[#allocation2 + $0x4] sm:$0xf] %vm247, %v232
      %250 = vst.msk [vmem:[#allocation2 + $0x8] sm:$0xf] %vm247, %v233
      %251 = vst.msk [vmem:[#allocation2 + $0xc] sm:$0xf] %vm247, %v234
      %252 = vst.msk [vmem:[#allocation2 + $0x10] sm:$0xf] %vm247, %v235
      %253 = vst.msk [vmem:[#allocation2 + $0x14] sm:$0xf] %vm247, %v236
      %254 = vst.msk [vmem:[#allocation2 + $0x18] sm:$0xf] %vm247, %v237
      %255 = vst.msk [vmem:[#allocation2 + $0x1c] sm:$0xf] %vm247, %v238
      %256 = vst.msk [vmem:[#allocation2 + $0x20] sm:$0xf] %vm247, %v239
      %257 = vst.msk [vmem:[#allocation2 + $0x24] sm:$0xf] %vm247, %v240
      %258 = vst.msk [vmem:[#allocation2 + $0x28] sm:$0xf] %vm247, %v241
      %259 = vst.msk [vmem:[#allocation2 + $0x2c] sm:$0xf] %vm247, %v242
      %260 = vst.msk [vmem:[#allocation2 + $0x30] sm:$0xf] %vm247, %v243
      %261 = vst.msk [vmem:[#allocation2 + $0x34] sm:$0xf] %vm247, %v244
      %262 = vst.msk [vmem:[#allocation2 + $0x38] sm:$0xf] %vm247, %v245
      %263 = vst.msk [vmem:[#allocation2 + $0x3c] sm:$0xf] %vm247, %v246
      %v264 = vld [vmem:[%s221] sm:$0xf]
      %v265 = vld [vmem:[%s221 + $0x4] sm:$0xf]
      %v266 = vld [vmem:[%s221 + $0x8] sm:$0xf]
      %v267 = vld [vmem:[%s221 + $0xc] sm:$0xf]
      %v268 = vld [vmem:[%s221 + $0x10] sm:$0xf]
      %v269 = vld [vmem:[%s221 + $0x14] sm:$0xf]
      %v270 = vld [vmem:[%s221 + $0x18] sm:$0xf]
      %v271 = vld [vmem:[%s221 + $0x1c] sm:$0xf]
      %v272 = vld [vmem:[%s221 + $0x20] sm:$0xf]
      %v273 = vld [vmem:[%s221 + $0x24] sm:$0xf]
      %v274 = vld [vmem:[%s221 + $0x28] sm:$0xf]
      %v275 = vld [vmem:[%s221 + $0x2c] sm:$0xf]
      %v276 = vld [vmem:[%s221 + $0x30] sm:$0xf]
      %v277 = vld [vmem:[%s221 + $0x34] sm:$0xf]
      %v278 = vld [vmem:[%s221 + $0x38] sm:$0xf]
      %v279 = vld [vmem:[%s221 + $0x3c] sm:$0xf]
      %280 = vst.msk [vmem:[#allocation2 + $0x40] sm:$0xf] %vm247, %v264
      %281 = vst.msk [vmem:[#allocation2 + $0x44] sm:$0xf] %vm247, %v265
      %282 = vst.msk [vmem:[#allocation2 + $0x48] sm:$0xf] %vm247, %v266
      %283 = vst.msk [vmem:[#allocation2 + $0x4c] sm:$0xf] %vm247, %v267
      %284 = vst.msk [vmem:[#allocation2 + $0x50] sm:$0xf] %vm247, %v268
      %285 = vst.msk [vmem:[#allocation2 + $0x54] sm:$0xf] %vm247, %v269
      %286 = vst.msk [vmem:[#allocation2 + $0x58] sm:$0xf] %vm247, %v270
      %287 = vst.msk [vmem:[#allocation2 + $0x5c] sm:$0xf] %vm247, %v271
      %288 = vst.msk [vmem:[#allocation2 + $0x60] sm:$0xf] %vm247, %v272
      %289 = vst.msk [vmem:[#allocation2 + $0x64] sm:$0xf] %vm247, %v273
      %290 = vst.msk [vmem:[#allocation2 + $0x68] sm:$0xf] %vm247, %v274
      %291 = vst.msk [vmem:[#allocation2 + $0x6c] sm:$0xf] %vm247, %v275
      %292 = vst.msk [vmem:[#allocation2 + $0x70] sm:$0xf] %vm247, %v276
      %293 = vst.msk [vmem:[#allocation2 + $0x74] sm:$0xf] %vm247, %v277
      %294 = vst.msk [vmem:[#allocation2 + $0x78] sm:$0xf] %vm247, %v278
      %295 = vst.msk [vmem:[#allocation2 + $0x7c] sm:$0xf] %vm247, %v279
      %v296 = vld [vmem:[#allocation2] sm:$0xf]
      %v297 = vld [vmem:[#allocation2 + $0x4] sm:$0xf]
      %v298 = vld [vmem:[#allocation2 + $0x8] sm:$0xf]
      %v299 = vld [vmem:[#allocation2 + $0xc] sm:$0xf]
      %v300 = vld [vmem:[#allocation2 + $0x10] sm:$0xf]
      %v301 = vld [vmem:[#allocation2 + $0x14] sm:$0xf]
      %v302 = vld [vmem:[#allocation2 + $0x18] sm:$0xf]
      %v303 = vld [vmem:[#allocation2 + $0x1c] sm:$0xf]
      %v304 = vld [vmem:[#allocation2 + $0x20] sm:$0xf]
      %v305 = vld [vmem:[#allocation2 + $0x24] sm:$0xf]
      %v306 = vld [vmem:[#allocation2 + $0x28] sm:$0xf]
      %v307 = vld [vmem:[#allocation2 + $0x2c] sm:$0xf]
      %v308 = vld [vmem:[#allocation2 + $0x30] sm:$0xf]
      %v309 = vld [vmem:[#allocation2 + $0x34] sm:$0xf]
      %v310 = vld [vmem:[#allocation2 + $0x38] sm:$0xf]
      %v311 = vld [vmem:[#allocation2 + $0x3c] sm:$0xf]
      %v312 = vld [vmem:[%s2] sm:$0xf]
      %v313 = vld [vmem:[%s2 + $0x4] sm:$0xf]
      %v314 = vld [vmem:[#allocation2 + $0x40] sm:$0x1]
      %s315 = scalar_lea.vmem %s2, 8
      %v316 = vld [vmem:[%s315] sm:$0xf]
      %v317 = vld [vmem:[%s315 + $0x4] sm:$0xf]
      %v335 = vunpack.c.l.b16 %v296
      %v336 = vunpack.c.l.b16 %v297
      %v337 = vunpack.c.l.b16 %v298
      %v338 = vunpack.c.l.b16 %v299
      %v339 = vunpack.c.l.b16 %v300
      %v340 = vunpack.c.l.b16 %v301
      %v341 = vunpack.c.l.b16 %v302
      %v342 = vunpack.c.l.b16 %v303
      %v343 = vunpack.c.l.b16 %v304
      %v344 = vunpack.c.l.b16 %v305
      %v345 = vunpack.c.l.b16 %v306
      %v346 = vunpack.c.l.b16 %v307
      %v347 = vunpack.c.l.b16 %v308
      %v348 = vunpack.c.l.b16 %v309
      %v349 = vunpack.c.l.b16 %v310
      %v350 = vunpack.c.l.b16 %v311
      %v351 = vunpack.c.l.b16 %v314
      %v352 = vpack.c.b16 %v336, %v335
      %v353 = vpack.c.b16 %v338, %v337
      %v354 = vpack.c.b16 %v340, %v339
      %v355 = vpack.c.b16 %v342, %v341
      %v356 = vpack.c.b16 %v344, %v343
      %v357 = vpack.c.b16 %v346, %v345
      %v358 = vpack.c.b16 %v348, %v347
      %v359 = vpack.c.b16 %v350, %v349
      %v360 = vpack.c.b16 %v351, %v351
      %vm361 = vsmask.f32 7424
      %v363 = vshrl.u32 %v352, 16
      %v365 = vshll.u32 %v352, 16
      %v367 = vrot.slane %v365, 1
      %v368 = vor.u32 %v363, %v367
      %v370 = vshll.u32 %v353, 16
      %v372 = vrot.slane %v370, 1
      %v373 = vsel %vm361, %v368, %v372
      %v374 = vshrl.u32 %v353, 16
      %v376 = vor.u32 %v374, %v372
      %v378 = vshll.u32 %v354, 16
      %v380 = vrot.slane %v378, 1
      %v381 = vsel %vm361, %v376, %v380
      %v382 = vshrl.u32 %v354, 16
      %v384 = vor.u32 %v382, %v380
      %v386 = vshll.u32 %v355, 16
      %v388 = vrot.slane %v386, 1
      %v389 = vsel %vm361, %v384, %v388
      %v390 = vshrl.u32 %v355, 16
      %v392 = vor.u32 %v390, %v388
      %v394 = vshll.u32 %v356, 16
      %v396 = vrot.slane %v394, 1
      %v397 = vsel %vm361, %v392, %v396
      %v398 = vshrl.u32 %v356, 16
      %v400 = vor.u32 %v398, %v396
      %v402 = vshll.u32 %v357, 16
      %v404 = vrot.slane %v402, 1
      %v405 = vsel %vm361, %v400, %v404
      %v406 = vshrl.u32 %v357, 16
      %v408 = vor.u32 %v406, %v404
      %v410 = vshll.u32 %v358, 16
      %v412 = vrot.slane %v410, 1
      %v413 = vsel %vm361, %v408, %v412
      %v414 = vshrl.u32 %v358, 16
      %v416 = vor.u32 %v414, %v412
      %v418 = vshll.u32 %v359, 16
      %v420 = vrot.slane %v418, 1
      %v421 = vsel %vm361, %v416, %v420
      %v422 = vshrl.u32 %v359, 16
      %v424 = vor.u32 %v422, %v420
      %v426 = vshll.u32 %v360, 16
      %v428 = vrot.slane %v426, 1
      %v429 = vsel %vm361, %v424, %v428
      %v432 = vunpack.c.l.b16 %v316
      %v433 = vunpack.c.l.b16 %v317
      %v434 = vpack.c.b16 %v433, %v432
      %vm436 = vcmask 130048
      %v438 = vsel %vm436, %v373, 0
      %v441 = vsel %vm436, %v381, 0
      %v444 = vsel %vm436, %v389, 0
      %v447 = vsel %vm436, %v397, 0
      %v450 = vsel %vm436, %v405, 0
      %v453 = vsel %vm436, %v413, 0
      %v456 = vsel %vm436, %v421, 0
      %v459 = vsel %vm436, %v429, 0
      %461 = vmatpush.bf16.msra.mxu0 0
      %462 = vmatpush.bf16.msra.mxu0 0
      %463 = vmatpush.bf16.msra.mxu0 0
      %464 = vmatpush.bf16.msra.mxu0 0
      %465 = vmatpush.bf16.msra.mxu0 0
      %466 = vmatpush.bf16.msra.mxu0 0
      %467 = vmatpush.bf16.msra.mxu0 0
      %468 = vmatpush.bf16.msra.mxu0 %v434
      %469 = vmatmul.bf16.gmra.mxu0 %v438
      %v470 = vpop.f32.mrf.mxu0
      %v471 = vadd.f32 0.0, %v470
      %v472 = vpop.f32.mrf.mxu0
      %v473 = vadd.f32 0.0, %v472
      %474 = vmatmul.bf16.gmra.mxu0 %v441
      %v475 = vpop.f32.mrf.mxu0
      %v476 = vadd.f32 0.0, %v475
      %v477 = vpop.f32.mrf.mxu0
      %v478 = vadd.f32 0.0, %v477
      %479 = vmatmul.bf16.gmra.mxu0 %v444
      %v480 = vpop.f32.mrf.mxu0
      %v481 = vadd.f32 0.0, %v480
      %v482 = vpop.f32.mrf.mxu0
      %v483 = vadd.f32 0.0, %v482
      %484 = vmatmul.bf16.gmra.mxu0 %v447
      %v485 = vpop.f32.mrf.mxu0
      %v486 = vadd.f32 0.0, %v485
      %v487 = vpop.f32.mrf.mxu0
      %v488 = vadd.f32 0.0, %v487
      %489 = vmatmul.bf16.gmra.mxu0 %v450
      %v490 = vpop.f32.mrf.mxu0
      %v491 = vadd.f32 0.0, %v490
      %v492 = vpop.f32.mrf.mxu0
      %v493 = vadd.f32 0.0, %v492
      %494 = vmatmul.bf16.gmra.mxu0 %v453
      %v495 = vpop.f32.mrf.mxu0
      %v496 = vadd.f32 0.0, %v495
      %v497 = vpop.f32.mrf.mxu0
      %v498 = vadd.f32 0.0, %v497
      %499 = vmatmul.bf16.gmra.mxu0 %v456
      %v500 = vpop.f32.mrf.mxu0
      %v501 = vadd.f32 0.0, %v500
      %v502 = vpop.f32.mrf.mxu0
      %v503 = vadd.f32 0.0, %v502
      %504 = vmatmul.bf16.gmra.mxu0 %v459
      %v505 = vpop.f32.mrf.mxu0
      %v506 = vadd.f32 0.0, %v505
      %v507 = vpop.f32.mrf.mxu0
      %v508 = vadd.f32 0.0, %v507
      %509 = vdwg.mxu0
      %v512 = vunpack.c.l.b16 %v312
      %v513 = vunpack.c.l.b16 %v313
      %v514 = vpack.c.b16 %v513, %v512
      %v516 = vsel %vm436, %v352, 0
      %v518 = vsel %vm436, %v353, 0
      %v520 = vsel %vm436, %v354, 0
      %v522 = vsel %vm436, %v355, 0
      %v524 = vsel %vm436, %v356, 0
      %v526 = vsel %vm436, %v357, 0
      %v528 = vsel %vm436, %v358, 0
      %v530 = vsel %vm436, %v359, 0
      %532 = vmatpush.bf16.msra.mxu0 0
      %533 = vmatpush.bf16.msra.mxu0 0
      %534 = vmatpush.bf16.msra.mxu0 0
      %535 = vmatpush.bf16.msra.mxu0 0
      %536 = vmatpush.bf16.msra.mxu0 0
      %537 = vmatpush.bf16.msra.mxu0 0
      %538 = vmatpush.bf16.msra.mxu0 0
      %539 = vmatpush.bf16.msra.mxu0 %v514
      %540 = vmatmul.bf16.gmra.mxu0 %v516
      %v541 = vpop.f32.mrf.mxu0
      %v542 = vadd.f32 %v471, %v541
      %v543 = vpop.f32.mrf.mxu0
      %v544 = vadd.f32 %v473, %v543
      %545 = vmatmul.bf16.gmra.mxu0 %v518
      %v546 = vpop.f32.mrf.mxu0
      %v547 = vadd.f32 %v476, %v546
      %v548 = vpop.f32.mrf.mxu0
      %v549 = vadd.f32 %v478, %v548
      %550 = vmatmul.bf16.gmra.mxu0 %v520
      %v551 = vpop.f32.mrf.mxu0
      %v552 = vadd.f32 %v481, %v551
      %v553 = vpop.f32.mrf.mxu0
      %v554 = vadd.f32 %v483, %v553
      %555 = vmatmul.bf16.gmra.mxu0 %v522
      %v556 = vpop.f32.mrf.mxu0
      %v557 = vadd.f32 %v486, %v556
      %v558 = vpop.f32.mrf.mxu0
      %v559 = vadd.f32 %v488, %v558
      %560 = vmatmul.bf16.gmra.mxu0 %v524
      %v561 = vpop.f32.mrf.mxu0
      %v562 = vadd.f32 %v491, %v561
      %v563 = vpop.f32.mrf.mxu0
      %v564 = vadd.f32 %v493, %v563
      %565 = vmatmul.bf16.gmra.mxu0 %v526
      %v566 = vpop.f32.mrf.mxu0
      %v567 = vadd.f32 %v496, %v566
      %v568 = vpop.f32.mrf.mxu0
      %v569 = vadd.f32 %v498, %v568
      %570 = vmatmul.bf16.gmra.mxu0 %v528
      %v571 = vpop.f32.mrf.mxu0
      %v572 = vadd.f32 %v501, %v571
      %v573 = vpop.f32.mrf.mxu0
      %v574 = vadd.f32 %v503, %v573
      %575 = vmatmul.bf16.gmra.mxu0 %v530
      %v576 = vpop.f32.mrf.mxu0
      %v577 = vadd.f32 %v506, %v576
      %v578 = vpop.f32.mrf.mxu0
      %v579 = vadd.f32 %v508, %v578
      %580 = vdwg.mxu0
      %v581 = vld [vmem:[#allocation2] sm:$0xc]
      %v582 = vld [vmem:[#allocation2 + $0x40] sm:$0x7]
      %s583 = scalar_lea.vmem %s2, 16
      %v584 = vld [vmem:[%s583] sm:$0xf]
      %v585 = vld [vmem:[%s583 + $0x4] sm:$0xf]
      %v588 = vunpack.c.l.b16 %v581
      %v589 = vunpack.c.l.b16 %v582
      %v590 = vpack.c.b16 %v336, %v588
      %v591 = vpack.c.b16 %v589, %v589
      %vm592 = vsmask.f32 5376
      %v594 = vshrl.u32 %v590, 16
      %v596 = vrot.slane %v594, 2
      %v597 = vshll.u32 %v590, 16
      %v599 = vrot.slane %v597, 3
      %v600 = vor.u32 %v596, %v599
      %v601 = vrot.slane %v374, 2
      %v602 = vrot.slane %v370, 3
      %v603 = vor.u32 %v601, %v602
      %v604 = vsel %vm592, %v600, %v603
      %v605 = vrot.slane %v382, 2
      %v606 = vrot.slane %v378, 3
      %v607 = vor.u32 %v605, %v606
      %v608 = vsel %vm592, %v603, %v607
      %v609 = vrot.slane %v390, 2
      %v610 = vrot.slane %v386, 3
      %v611 = vor.u32 %v609, %v610
      %v612 = vsel %vm592, %v607, %v611
      %v613 = vrot.slane %v398, 2
      %v614 = vrot.slane %v394, 3
      %v615 = vor.u32 %v613, %v614
      %v616 = vsel %vm592, %v611, %v615
      %v617 = vrot.slane %v406, 2
      %v618 = vrot.slane %v402, 3
      %v619 = vor.u32 %v617, %v618
      %v620 = vsel %vm592, %v615, %v619
      %v621 = vrot.slane %v414, 2
      %v622 = vrot.slane %v410, 3
      %v623 = vor.u32 %v621, %v622
      %v624 = vsel %vm592, %v619, %v623
      %v625 = vrot.slane %v422, 2
      %v626 = vrot.slane %v418, 3
      %v627 = vor.u32 %v625, %v626
      %v628 = vsel %vm592, %v623, %v627
      %v630 = vshrl.u32 %v591, 16
      %v632 = vrot.slane %v630, 2
      %v633 = vshll.u32 %v591, 16
      %v635 = vrot.slane %v633, 3
      %v636 = vor.u32 %v632, %v635
      %v637 = vsel %vm592, %v627, %v636
      %v640 = vunpack.c.l.b16 %v584
      %v641 = vunpack.c.l.b16 %v585
      %v642 = vpack.c.b16 %v641, %v640
      %v645 = vsel %vm436, %v604, 0
      %v648 = vsel %vm436, %v608, 0
      %v651 = vsel %vm436, %v612, 0
      %v654 = vsel %vm436, %v616, 0
      %v657 = vsel %vm436, %v620, 0
      %v660 = vsel %vm436, %v624, 0
      %v663 = vsel %vm436, %v628, 0
      %v666 = vsel %vm436, %v637, 0
      %668 = vmatpush.bf16.msra.mxu0 0
      %669 = vmatpush.bf16.msra.mxu0 0
      %670 = vmatpush.bf16.msra.mxu0 0
      %671 = vmatpush.bf16.msra.mxu0 0
      %672 = vmatpush.bf16.msra.mxu0 0
      %673 = vmatpush.bf16.msra.mxu0 0
      %674 = vmatpush.bf16.msra.mxu0 0
      %675 = vmatpush.bf16.msra.mxu0 %v642
      %676 = vmatmul.bf16.gmra.mxu0 %v645
      %v677 = vpop.f32.mrf.mxu0
      %v678 = vadd.f32 0.0, %v677
      %v679 = vpop.f32.mrf.mxu0
      %v680 = vadd.f32 0.0, %v679
      %681 = vmatmul.bf16.gmra.mxu0 %v648
      %v682 = vpop.f32.mrf.mxu0
      %v683 = vadd.f32 0.0, %v682
      %v684 = vpop.f32.mrf.mxu0
      %v685 = vadd.f32 0.0, %v684
      %686 = vmatmul.bf16.gmra.mxu0 %v651
      %v687 = vpop.f32.mrf.mxu0
      %v688 = vadd.f32 0.0, %v687
      %v689 = vpop.f32.mrf.mxu0
      %v690 = vadd.f32 0.0, %v689
      %691 = vmatmul.bf16.gmra.mxu0 %v654
      %v692 = vpop.f32.mrf.mxu0
      %v693 = vadd.f32 0.0, %v692
      %v694 = vpop.f32.mrf.mxu0
      %v695 = vadd.f32 0.0, %v694
      %696 = vmatmul.bf16.gmra.mxu0 %v657
      %v697 = vpop.f32.mrf.mxu0
      %v698 = vadd.f32 0.0, %v697
      %v699 = vpop.f32.mrf.mxu0
      %v700 = vadd.f32 0.0, %v699
      %701 = vmatmul.bf16.gmra.mxu0 %v660
      %v702 = vpop.f32.mrf.mxu0
      %v703 = vadd.f32 0.0, %v702
      %v704 = vpop.f32.mrf.mxu0
      %v705 = vadd.f32 0.0, %v704
      %706 = vmatmul.bf16.gmra.mxu0 %v663
      %v707 = vpop.f32.mrf.mxu0
      %v708 = vadd.f32 0.0, %v707
      %v709 = vpop.f32.mrf.mxu0
      %v710 = vadd.f32 0.0, %v709
      %711 = vmatmul.bf16.gmra.mxu0 %v666
      %v712 = vpop.f32.mrf.mxu0
      %v713 = vadd.f32 0.0, %v712
      %v714 = vpop.f32.mrf.mxu0
      %v715 = vadd.f32 0.0, %v714
      %716 = vdwg.mxu0
      %v717 = vadd.f32 %v542, %v678
      %v718 = vadd.f32 %v544, %v680
      %v719 = vadd.f32 %v547, %v683
      %v720 = vadd.f32 %v549, %v685
      %v721 = vadd.f32 %v552, %v688
      %v722 = vadd.f32 %v554, %v690
      %v723 = vadd.f32 %v557, %v693
      %v724 = vadd.f32 %v559, %v695
      %v725 = vadd.f32 %v562, %v698
      %v726 = vadd.f32 %v564, %v700
      %v727 = vadd.f32 %v567, %v703
      %v728 = vadd.f32 %v569, %v705
      %v729 = vadd.f32 %v572, %v708
      %v730 = vadd.f32 %v574, %v710
      %v731 = vadd.f32 %v577, %v713
      %v732 = vadd.f32 %v579, %v715
      %v733 = vld [vmem:[#allocation2] sm:$0x8]
      %s734 = scalar_lea.vmem %s2, 24
      %v735 = vld [vmem:[%s734] sm:$0xf]
      %v736 = vld [vmem:[%s734 + $0x4] sm:$0xf]
      %v738 = vunpack.c.l.b16 %v733
      %v739 = vpack.c.b16 %v336, %v738
      %vm740 = vcmask 1044480
      %v741 = vrot.slane %v739, 3
      %v742 = vrot.slane %v353, 3
      %v743 = vsel %vm740, %v741, %v742
      %v744 = vrot.slane %v354, 3
      %v745 = vsel %vm740, %v742, %v744
      %v746 = vrot.slane %v355, 3
      %v747 = vsel %vm740, %v744, %v746
      %v748 = vrot.slane %v356, 3
      %v749 = vsel %vm740, %v746, %v748
      %v750 = vrot.slane %v357, 3
      %v751 = vsel %vm740, %v748, %v750
      %v752 = vrot.slane %v358, 3
      %v753 = vsel %vm740, %v750, %v752
      %v754 = vrot.slane %v359, 3
      %v755 = vsel %vm740, %v752, %v754
      %v756 = vrot.slane %v591, 3
      %v757 = vsel %vm740, %v754, %v756
      %v760 = vunpack.c.l.b16 %v735
      %v761 = vunpack.c.l.b16 %v736
      %v762 = vpack.c.b16 %v761, %v760
      %v765 = vsel %vm436, %v743, 0
      %v768 = vsel %vm436, %v745, 0
      %v771 = vsel %vm436, %v747, 0
      %v774 = vsel %vm436, %v749, 0
      %v777 = vsel %vm436, %v751, 0
      %v780 = vsel %vm436, %v753, 0
      %v783 = vsel %vm436, %v755, 0
      %v786 = vsel %vm436, %v757, 0
      %788 = vmatpush.bf16.msra.mxu0 0
      %789 = vmatpush.bf16.msra.mxu0 0
      %790 = vmatpush.bf16.msra.mxu0 0
      %791 = vmatpush.bf16.msra.mxu0 0
      %792 = vmatpush.bf16.msra.mxu0 0
      %793 = vmatpush.bf16.msra.mxu0 0
      %794 = vmatpush.bf16.msra.mxu0 0
      %795 = vmatpush.bf16.msra.mxu0 %v762
      %796 = vmatmul.bf16.gmra.mxu0 %v765
      %v797 = vpop.f32.mrf.mxu0
      %v798 = vadd.f32 0.0, %v797
      %v799 = vpop.f32.mrf.mxu0
      %v800 = vadd.f32 0.0, %v799
      %801 = vmatmul.bf16.gmra.mxu0 %v768
      %v802 = vpop.f32.mrf.mxu0
      %v803 = vadd.f32 0.0, %v802
      %v804 = vpop.f32.mrf.mxu0
      %v805 = vadd.f32 0.0, %v804
      %806 = vmatmul.bf16.gmra.mxu0 %v771
      %v807 = vpop.f32.mrf.mxu0
      %v808 = vadd.f32 0.0, %v807
      %v809 = vpop.f32.mrf.mxu0
      %v810 = vadd.f32 0.0, %v809
      %811 = vmatmul.bf16.gmra.mxu0 %v774
      %v812 = vpop.f32.mrf.mxu0
      %v813 = vadd.f32 0.0, %v812
      %v814 = vpop.f32.mrf.mxu0
      %v815 = vadd.f32 0.0, %v814
      %816 = vmatmul.bf16.gmra.mxu0 %v777
      %v817 = vpop.f32.mrf.mxu0
      %v818 = vadd.f32 0.0, %v817
      %v819 = vpop.f32.mrf.mxu0
      %v820 = vadd.f32 0.0, %v819
      %821 = vmatmul.bf16.gmra.mxu0 %v780
      %v822 = vpop.f32.mrf.mxu0
      %v823 = vadd.f32 0.0, %v822
      %v824 = vpop.f32.mrf.mxu0
      %v825 = vadd.f32 0.0, %v824
      %826 = vmatmul.bf16.gmra.mxu0 %v783
      %v827 = vpop.f32.mrf.mxu0
      %v828 = vadd.f32 0.0, %v827
      %v829 = vpop.f32.mrf.mxu0
      %v830 = vadd.f32 0.0, %v829
      %831 = vmatmul.bf16.gmra.mxu0 %v786
      %v832 = vpop.f32.mrf.mxu0
      %v833 = vadd.f32 0.0, %v832
      %v834 = vpop.f32.mrf.mxu0
      %v835 = vadd.f32 0.0, %v834
      %836 = vdwg.mxu0
      %v837 = vadd.f32 %v717, %v798
      %v838 = vadd.f32 %v718, %v800
      %v839 = vadd.f32 %v719, %v803
      %v840 = vadd.f32 %v720, %v805
      %v841 = vadd.f32 %v721, %v808
      %v842 = vadd.f32 %v722, %v810
      %v843 = vadd.f32 %v723, %v813
      %v844 = vadd.f32 %v724, %v815
      %v845 = vadd.f32 %v725, %v818
      %v846 = vadd.f32 %v726, %v820
      %v847 = vadd.f32 %v727, %v823
      %v848 = vadd.f32 %v728, %v825
      %v849 = vadd.f32 %v729, %v828
      %v850 = vadd.f32 %v730, %v830
      %v851 = vadd.f32 %v731, %v833
      %v852 = vadd.f32 %v732, %v835
      %v853 = vld [vmem:[#allocation2 + $0xc] sm:$0xf]
      %v854 = vld [vmem:[#allocation2 + $0x10] sm:$0xf]
      %v855 = vld [vmem:[#allocation2 + $0x14] sm:$0xf]
      %v856 = vld [vmem:[#allocation2 + $0x18] sm:$0xf]
      %v857 = vld [vmem:[#allocation2 + $0x1c] sm:$0xf]
      %v858 = vld [vmem:[#allocation2 + $0x20] sm:$0xf]
      %v859 = vld [vmem:[#allocation2 + $0x24] sm:$0xf]
      %v860 = vld [vmem:[#allocation2 + $0x28] sm:$0xf]
      %v861 = vld [vmem:[#allocation2 + $0x2c] sm:$0xf]
      %v862 = vld [vmem:[#allocation2 + $0x30] sm:$0xf]
      %v863 = vld [vmem:[#allocation2 + $0x34] sm:$0xf]
      %v864 = vld [vmem:[#allocation2 + $0x38] sm:$0xf]
      %v865 = vld [vmem:[#allocation2 + $0x3c] sm:$0xf]
      %v866 = vld [vmem:[#allocation2 + $0x40] sm:$0xf]
      %v867 = vld [vmem:[#allocation2 + $0x44] sm:$0xf]
      %v868 = vld [vmem:[#allocation2 + $0x48] sm:$0xf]
      %v869 = vld [vmem:[#allocation2 + $0x4c] sm:$0x1]
      %s870 = scalar_lea.vmem %s2, 32
      %v871 = vld [vmem:[%s870] sm:$0xf]
      %v872 = vld [vmem:[%s870 + $0x4] sm:$0xf]
      %v890 = vunpack.c.l.b16 %v853
      %v891 = vunpack.c.l.b16 %v854
      %v892 = vunpack.c.l.b16 %v855
      %v893 = vunpack.c.l.b16 %v856
      %v894 = vunpack.c.l.b16 %v857
      %v895 = vunpack.c.l.b16 %v858
      %v896 = vunpack.c.l.b16 %v859
      %v897 = vunpack.c.l.b16 %v860
      %v898 = vunpack.c.l.b16 %v861
      %v899 = vunpack.c.l.b16 %v862
      %v900 = vunpack.c.l.b16 %v863
      %v901 = vunpack.c.l.b16 %v864
      %v902 = vunpack.c.l.b16 %v865
      %v903 = vunpack.c.l.b16 %v866
      %v904 = vunpack.c.l.b16 %v867
      %v905 = vunpack.c.l.b16 %v868
      %v906 = vunpack.c.l.b16 %v869
      %v907 = vpack.c.b16 %v891, %v890
      %v908 = vpack.c.b16 %v893, %v892
      %v909 = vpack.c.b16 %v895, %v894
      %v910 = vpack.c.b16 %v897, %v896
      %v911 = vpack.c.b16 %v899, %v898
      %v912 = vpack.c.b16 %v901, %v900
      %v913 = vpack.c.b16 %v903, %v902
      %v914 = vpack.c.b16 %v905, %v904
      %v915 = vpack.c.b16 %v906, %v906
      %v917 = vshrl.u32 %v907, 16
      %v919 = vshll.u32 %v907, 16
      %v921 = vrot.slane %v919, 1
      %v922 = vor.u32 %v917, %v921
      %v924 = vshll.u32 %v908, 16
      %v926 = vrot.slane %v924, 1
      %v927 = vsel %vm361, %v922, %v926
      %v928 = vshrl.u32 %v908, 16
      %v930 = vor.u32 %v928, %v926
      %v932 = vshll.u32 %v909, 16
      %v934 = vrot.slane %v932, 1
      %v935 = vsel %vm361, %v930, %v934
      %v936 = vshrl.u32 %v909, 16
      %v938 = vor.u32 %v936, %v934
      %v940 = vshll.u32 %v910, 16
      %v942 = vrot.slane %v940, 1
      %v943 = vsel %vm361, %v938, %v942
      %v944 = vshrl.u32 %v910, 16
      %v946 = vor.u32 %v944, %v942
      %v948 = vshll.u32 %v911, 16
      %v950 = vrot.slane %v948, 1
      %v951 = vsel %vm361, %v946, %v950
      %v952 = vshrl.u32 %v911, 16
      %v954 = vor.u32 %v952, %v950
      %v956 = vshll.u32 %v912, 16
      %v958 = vrot.slane %v956, 1
      %v959 = vsel %vm361, %v954, %v958
      %v960 = vshrl.u32 %v912, 16
      %v962 = vor.u32 %v960, %v958
      %v964 = vshll.u32 %v913, 16
      %v966 = vrot.slane %v964, 1
      %v967 = vsel %vm361, %v962, %v966
      %v968 = vshrl.u32 %v913, 16
      %v970 = vor.u32 %v968, %v966
      %v972 = vshll.u32 %v914, 16
      %v974 = vrot.slane %v972, 1
      %v975 = vsel %vm361, %v970, %v974
      %v976 = vshrl.u32 %v914, 16
      %v978 = vor.u32 %v976, %v974
      %v980 = vshll.u32 %v915, 16
      %v982 = vrot.slane %v980, 1
      %v983 = vsel %vm361, %v978, %v982
      %v986 = vunpack.c.l.b16 %v871
      %v987 = vunpack.c.l.b16 %v872
      %v988 = vpack.c.b16 %v987, %v986
      %v991 = vsel %vm436, %v927, 0
      %v994 = vsel %vm436, %v935, 0
      %v997 = vsel %vm436, %v943, 0
      %v1000 = vsel %vm436, %v951, 0
      %v1003 = vsel %vm436, %v959, 0
      %v1006 = vsel %vm436, %v967, 0
      %v1009 = vsel %vm436, %v975, 0
      %v1012 = vsel %vm436, %v983, 0
      %1014 = vmatpush.bf16.msra.mxu0 0
      %1015 = vmatpush.bf16.msra.mxu0 0
      %1016 = vmatpush.bf16.msra.mxu0 0
      %1017 = vmatpush.bf16.msra.mxu0 0
      %1018 = vmatpush.bf16.msra.mxu0 0
      %1019 = vmatpush.bf16.msra.mxu0 0
      %1020 = vmatpush.bf16.msra.mxu0 0
      %1021 = vmatpush.bf16.msra.mxu0 %v988
      %1022 = vmatmul.bf16.gmra.mxu0 %v991
      %v1023 = vpop.f32.mrf.mxu0
      %v1024 = vadd.f32 0.0, %v1023
      %v1025 = vpop.f32.mrf.mxu0
      %v1026 = vadd.f32 0.0, %v1025
      %1027 = vmatmul.bf16.gmra.mxu0 %v994
      %v1028 = vpop.f32.mrf.mxu0
      %v1029 = vadd.f32 0.0, %v1028
      %v1030 = vpop.f32.mrf.mxu0
      %v1031 = vadd.f32 0.0, %v1030
      %1032 = vmatmul.bf16.gmra.mxu0 %v997
      %v1033 = vpop.f32.mrf.mxu0
      %v1034 = vadd.f32 0.0, %v1033
      %v1035 = vpop.f32.mrf.mxu0
      %v1036 = vadd.f32 0.0, %v1035
      %1037 = vmatmul.bf16.gmra.mxu0 %v1000
      %v1038 = vpop.f32.mrf.mxu0
      %v1039 = vadd.f32 0.0, %v1038
      %v1040 = vpop.f32.mrf.mxu0
      %v1041 = vadd.f32 0.0, %v1040
      %1042 = vmatmul.bf16.gmra.mxu0 %v1003
      %v1043 = vpop.f32.mrf.mxu0
      %v1044 = vadd.f32 0.0, %v1043
      %v1045 = vpop.f32.mrf.mxu0
      %v1046 = vadd.f32 0.0, %v1045
      %1047 = vmatmul.bf16.gmra.mxu0 %v1006
      %v1048 = vpop.f32.mrf.mxu0
      %v1049 = vadd.f32 0.0, %v1048
      %v1050 = vpop.f32.mrf.mxu0
      %v1051 = vadd.f32 0.0, %v1050
      %1052 = vmatmul.bf16.gmra.mxu0 %v1009
      %v1053 = vpop.f32.mrf.mxu0
      %v1054 = vadd.f32 0.0, %v1053
      %v1055 = vpop.f32.mrf.mxu0
      %v1056 = vadd.f32 0.0, %v1055
      %1057 = vmatmul.bf16.gmra.mxu0 %v1012
      %v1058 = vpop.f32.mrf.mxu0
      %v1059 = vadd.f32 0.0, %v1058
      %v1060 = vpop.f32.mrf.mxu0
      %v1061 = vadd.f32 0.0, %v1060
      %1062 = vdwg.mxu0
      %v1063 = vadd.f32 %v837, %v1024
      %v1064 = vadd.f32 %v838, %v1026
      %v1065 = vadd.f32 %v839, %v1029
      %v1066 = vadd.f32 %v840, %v1031
      %v1067 = vadd.f32 %v841, %v1034
      %v1068 = vadd.f32 %v842, %v1036
      %v1069 = vadd.f32 %v843, %v1039
      %v1070 = vadd.f32 %v844, %v1041
      %v1071 = vadd.f32 %v845, %v1044
      %v1072 = vadd.f32 %v846, %v1046
      %v1073 = vadd.f32 %v847, %v1049
      %v1074 = vadd.f32 %v848, %v1051
      %v1075 = vadd.f32 %v849, %v1054
      %v1076 = vadd.f32 %v850, %v1056
      %v1077 = vadd.f32 %v851, %v1059
      %v1078 = vadd.f32 %v852, %v1061
      %v1079 = vld [vmem:[#allocation2 + $0xc] sm:$0xe]
      %s1080 = scalar_lea.vmem %s2, 40
      %v1081 = vld [vmem:[%s1080] sm:$0xf]
      %v1082 = vld [vmem:[%s1080 + $0x4] sm:$0xf]
      %v1084 = vunpack.c.l.b16 %v1079
      %v1085 = vpack.c.b16 %v891, %v1084
      %vm1086 = vcmask 1046528
      %v1087 = vrot.slane %v1085, 1
      %v1088 = vrot.slane %v908, 1
      %v1089 = vsel %vm1086, %v1087, %v1088
      %v1090 = vrot.slane %v909, 1
      %v1091 = vsel %vm1086, %v1088, %v1090
      %v1092 = vrot.slane %v910, 1
      %v1093 = vsel %vm1086, %v1090, %v1092
      %v1094 = vrot.slane %v911, 1
      %v1095 = vsel %vm1086, %v1092, %v1094
      %v1096 = vrot.slane %v912, 1
      %v1097 = vsel %vm1086, %v1094, %v1096
      %v1098 = vrot.slane %v913, 1
      %v1099 = vsel %vm1086, %v1096, %v1098
      %v1100 = vrot.slane %v914, 1
      %v1101 = vsel %vm1086, %v1098, %v1100
      %v1102 = vrot.slane %v915, 1
      %v1103 = vsel %vm1086, %v1100, %v1102
      %v1106 = vunpack.c.l.b16 %v1081
      %v1107 = vunpack.c.l.b16 %v1082
      %v1108 = vpack.c.b16 %v1107, %v1106
      %v1111 = vsel %vm436, %v1089, 0
      %v1114 = vsel %vm436, %v1091, 0
      %v1117 = vsel %vm436, %v1093, 0
      %v1120 = vsel %vm436, %v1095, 0
      %v1123 = vsel %vm436, %v1097, 0
      %v1126 = vsel %vm436, %v1099, 0
      %v1129 = vsel %vm436, %v1101, 0
      %v1132 = vsel %vm436, %v1103, 0
      %1134 = vmatpush.bf16.msra.mxu0 0
      %1135 = vmatpush.bf16.msra.mxu0 0
      %1136 = vmatpush.bf16.msra.mxu0 0
      %1137 = vmatpush.bf16.msra.mxu0 0
      %1138 = vmatpush.bf16.msra.mxu0 0
      %1139 = vmatpush.bf16.msra.mxu0 0
      %1140 = vmatpush.bf16.msra.mxu0 0
      %1141 = vmatpush.bf16.msra.mxu0 %v1108
      %1142 = vmatmul.bf16.gmra.mxu0 %v1111
      %v1143 = vpop.f32.mrf.mxu0
      %v1144 = vadd.f32 0.0, %v1143
      %v1145 = vpop.f32.mrf.mxu0
      %v1146 = vadd.f32 0.0, %v1145
      %1147 = vmatmul.bf16.gmra.mxu0 %v1114
      %v1148 = vpop.f32.mrf.mxu0
      %v1149 = vadd.f32 0.0, %v1148
      %v1150 = vpop.f32.mrf.mxu0
      %v1151 = vadd.f32 0.0, %v1150
      %1152 = vmatmul.bf16.gmra.mxu0 %v1117
      %v1153 = vpop.f32.mrf.mxu0
      %v1154 = vadd.f32 0.0, %v1153
      %v1155 = vpop.f32.mrf.mxu0
      %v1156 = vadd.f32 0.0, %v1155
      %1157 = vmatmul.bf16.gmra.mxu0 %v1120
      %v1158 = vpop.f32.mrf.mxu0
      %v1159 = vadd.f32 0.0, %v1158
      %v1160 = vpop.f32.mrf.mxu0
      %v1161 = vadd.f32 0.0, %v1160
      %1162 = vmatmul.bf16.gmra.mxu0 %v1123
      %v1163 = vpop.f32.mrf.mxu0
      %v1164 = vadd.f32 0.0, %v1163
      %v1165 = vpop.f32.mrf.mxu0
      %v1166 = vadd.f32 0.0, %v1165
      %1167 = vmatmul.bf16.gmra.mxu0 %v1126
      %v1168 = vpop.f32.mrf.mxu0
      %v1169 = vadd.f32 0.0, %v1168
      %v1170 = vpop.f32.mrf.mxu0
      %v1171 = vadd.f32 0.0, %v1170
      %1172 = vmatmul.bf16.gmra.mxu0 %v1129
      %v1173 = vpop.f32.mrf.mxu0
      %v1174 = vadd.f32 0.0, %v1173
      %v1175 = vpop.f32.mrf.mxu0
      %v1176 = vadd.f32 0.0, %v1175
      %1177 = vmatmul.bf16.gmra.mxu0 %v1132
      %v1178 = vpop.f32.mrf.mxu0
      %v1179 = vadd.f32 0.0, %v1178
      %v1180 = vpop.f32.mrf.mxu0
      %v1181 = vadd.f32 0.0, %v1180
      %1182 = vdwg.mxu0
      %v1183 = vadd.f32 %v1063, %v1144
      %v1184 = vadd.f32 %v1064, %v1146
      %v1185 = vadd.f32 %v1065, %v1149
      %v1186 = vadd.f32 %v1066, %v1151
      %v1187 = vadd.f32 %v1067, %v1154
      %v1188 = vadd.f32 %v1068, %v1156
      %v1189 = vadd.f32 %v1069, %v1159
      %v1190 = vadd.f32 %v1070, %v1161
      %v1191 = vadd.f32 %v1071, %v1164
      %v1192 = vadd.f32 %v1072, %v1166
      %v1193 = vadd.f32 %v1073, %v1169
      %v1194 = vadd.f32 %v1074, %v1171
      %v1195 = vadd.f32 %v1075, %v1174
      %v1196 = vadd.f32 %v1076, %v1176
      %v1197 = vadd.f32 %v1077, %v1179
      %v1198 = vadd.f32 %v1078, %v1181
      %v1199 = vld [vmem:[#allocation2 + $0xc] sm:$0x8]
      %v1200 = vld [vmem:[#allocation2 + $0x4c] sm:$0x7]
      %s1201 = scalar_lea.vmem %s2, 48
      %v1202 = vld [vmem:[%s1201] sm:$0xf]
      %v1203 = vld [vmem:[%s1201 + $0x4] sm:$0xf]
      %v1206 = vunpack.c.l.b16 %v1199
      %v1207 = vunpack.c.l.b16 %v1200
      %v1208 = vpack.c.b16 %v891, %v1206
      %v1209 = vpack.c.b16 %v1207, %v1207
      %v1210 = vrot.slane %v1208, 3
      %v1211 = vrot.slane %v908, 3
      %v1212 = vsel %vm740, %v1210, %v1211
      %v1213 = vrot.slane %v909, 3
      %v1214 = vsel %vm740, %v1211, %v1213
      %v1215 = vrot.slane %v910, 3
      %v1216 = vsel %vm740, %v1213, %v1215
      %v1217 = vrot.slane %v911, 3
      %v1218 = vsel %vm740, %v1215, %v1217
      %v1219 = vrot.slane %v912, 3
      %v1220 = vsel %vm740, %v1217, %v1219
      %v1221 = vrot.slane %v913, 3
      %v1222 = vsel %vm740, %v1219, %v1221
      %v1223 = vrot.slane %v914, 3
      %v1224 = vsel %vm740, %v1221, %v1223
      %v1225 = vrot.slane %v1209, 3
      %v1226 = vsel %vm740, %v1223, %v1225
      %v1229 = vunpack.c.l.b16 %v1202
      %v1230 = vunpack.c.l.b16 %v1203
      %v1231 = vpack.c.b16 %v1230, %v1229
      %v1234 = vsel %vm436, %v1212, 0
      %v1237 = vsel %vm436, %v1214, 0
      %v1240 = vsel %vm436, %v1216, 0
      %v1243 = vsel %vm436, %v1218, 0
      %v1246 = vsel %vm436, %v1220, 0
      %v1249 = vsel %vm436, %v1222, 0
      %v1252 = vsel %vm436, %v1224, 0
      %v1255 = vsel %vm436, %v1226, 0
      %1257 = vmatpush.bf16.msra.mxu0 0
      %1258 = vmatpush.bf16.msra.mxu0 0
      %1259 = vmatpush.bf16.msra.mxu0 0
      %1260 = vmatpush.bf16.msra.mxu0 0
      %1261 = vmatpush.bf16.msra.mxu0 0
      %1262 = vmatpush.bf16.msra.mxu0 0
      %1263 = vmatpush.bf16.msra.mxu0 0
      %1264 = vmatpush.bf16.msra.mxu0 %v1231
      %1265 = vmatmul.bf16.gmra.mxu0 %v1234
      %v1266 = vpop.f32.mrf.mxu0
      %v1267 = vadd.f32 0.0, %v1266
      %v1268 = vpop.f32.mrf.mxu0
      %v1269 = vadd.f32 0.0, %v1268
      %1270 = vmatmul.bf16.gmra.mxu0 %v1237
      %v1271 = vpop.f32.mrf.mxu0
      %v1272 = vadd.f32 0.0, %v1271
      %v1273 = vpop.f32.mrf.mxu0
      %v1274 = vadd.f32 0.0, %v1273
      %1275 = vmatmul.bf16.gmra.mxu0 %v1240
      %v1276 = vpop.f32.mrf.mxu0
      %v1277 = vadd.f32 0.0, %v1276
      %v1278 = vpop.f32.mrf.mxu0
      %v1279 = vadd.f32 0.0, %v1278
      %1280 = vmatmul.bf16.gmra.mxu0 %v1243
      %v1281 = vpop.f32.mrf.mxu0
      %v1282 = vadd.f32 0.0, %v1281
      %v1283 = vpop.f32.mrf.mxu0
      %v1284 = vadd.f32 0.0, %v1283
      %1285 = vmatmul.bf16.gmra.mxu0 %v1246
      %v1286 = vpop.f32.mrf.mxu0
      %v1287 = vadd.f32 0.0, %v1286
      %v1288 = vpop.f32.mrf.mxu0
      %v1289 = vadd.f32 0.0, %v1288
      %1290 = vmatmul.bf16.gmra.mxu0 %v1249
      %v1291 = vpop.f32.mrf.mxu0
      %v1292 = vadd.f32 0.0, %v1291
      %v1293 = vpop.f32.mrf.mxu0
      %v1294 = vadd.f32 0.0, %v1293
      %1295 = vmatmul.bf16.gmra.mxu0 %v1252
      %v1296 = vpop.f32.mrf.mxu0
      %v1297 = vadd.f32 0.0, %v1296
      %v1298 = vpop.f32.mrf.mxu0
      %v1299 = vadd.f32 0.0, %v1298
      %1300 = vmatmul.bf16.gmra.mxu0 %v1255
      %v1301 = vpop.f32.mrf.mxu0
      %v1302 = vadd.f32 0.0, %v1301
      %v1303 = vpop.f32.mrf.mxu0
      %v1304 = vadd.f32 0.0, %v1303
      %1305 = vdwg.mxu0
      %v1306 = vadd.f32 %v1183, %v1267
      %v1307 = vadd.f32 %v1184, %v1269
      %v1308 = vadd.f32 %v1185, %v1272
      %v1309 = vadd.f32 %v1186, %v1274
      %v1310 = vadd.f32 %v1187, %v1277
      %v1311 = vadd.f32 %v1188, %v1279
      %v1312 = vadd.f32 %v1189, %v1282
      %v1313 = vadd.f32 %v1190, %v1284
      %v1314 = vadd.f32 %v1191, %v1287
      %v1315 = vadd.f32 %v1192, %v1289
      %v1316 = vadd.f32 %v1193, %v1292
      %v1317 = vadd.f32 %v1194, %v1294
      %v1318 = vadd.f32 %v1195, %v1297
      %v1319 = vadd.f32 %v1196, %v1299
      %v1320 = vadd.f32 %v1197, %v1302
      %v1321 = vadd.f32 %v1198, %v1304
      %v1322 = vld [vmem:[#allocation2 + $0x4c] sm:$0xf]
      %s1323 = scalar_lea.vmem %s2, 56
      %v1324 = vld [vmem:[%s1323] sm:$0xf]
      %v1325 = vld [vmem:[%s1323 + $0x4] sm:$0xf]
      %v1327 = vunpack.c.l.b16 %v1322
      %v1328 = vpack.c.b16 %v1327, %v1327
      %vm1329 = vsmask.f32 4352
      %v1331 = vshrl.u32 %v1208, 16
      %v1333 = vrot.slane %v1331, 3
      %v1334 = vshll.u32 %v1208, 16
      %v1336 = vrot.slane %v1334, 4
      %v1337 = vor.u32 %v1333, %v1336
      %v1338 = vrot.slane %v928, 3
      %v1339 = vrot.slane %v924, 4
      %v1340 = vor.u32 %v1338, %v1339
      %v1341 = vsel %vm1329, %v1337, %v1340
      %v1342 = vrot.slane %v936, 3
      %v1343 = vrot.slane %v932, 4
      %v1344 = vor.u32 %v1342, %v1343
      %v1345 = vsel %vm1329, %v1340, %v1344
      %v1346 = vrot.slane %v944, 3
      %v1347 = vrot.slane %v940, 4
      %v1348 = vor.u32 %v1346, %v1347
      %v1349 = vsel %vm1329, %v1344, %v1348
      %v1350 = vrot.slane %v952, 3
      %v1351 = vrot.slane %v948, 4
      %v1352 = vor.u32 %v1350, %v1351
      %v1353 = vsel %vm1329, %v1348, %v1352
      %v1354 = vrot.slane %v960, 3
      %v1355 = vrot.slane %v956, 4
      %v1356 = vor.u32 %v1354, %v1355
      %v1357 = vsel %vm1329, %v1352, %v1356
      %v1358 = vrot.slane %v968, 3
      %v1359 = vrot.slane %v964, 4
      %v1360 = vor.u32 %v1358, %v1359
      %v1361 = vsel %vm1329, %v1356, %v1360
      %v1362 = vrot.slane %v976, 3
      %v1363 = vrot.slane %v972, 4
      %v1364 = vor.u32 %v1362, %v1363
      %v1365 = vsel %vm1329, %v1360, %v1364
      %v1367 = vshrl.u32 %v1328, 16
      %v1369 = vrot.slane %v1367, 3
      %v1370 = vshll.u32 %v1328, 16
      %v1372 = vrot.slane %v1370, 4
      %v1373 = vor.u32 %v1369, %v1372
      %v1374 = vsel %vm1329, %v1364, %v1373
      %v1377 = vunpack.c.l.b16 %v1324
      %v1378 = vunpack.c.l.b16 %v1325
      %v1379 = vpack.c.b16 %v1378, %v1377
      %v1382 = vsel %vm436, %v1341, 0
      %v1385 = vsel %vm436, %v1345, 0
      %v1388 = vsel %vm436, %v1349, 0
      %v1391 = vsel %vm436, %v1353, 0
      %v1394 = vsel %vm436, %v1357, 0
      %v1397 = vsel %vm436, %v1361, 0
      %v1400 = vsel %vm436, %v1365, 0
      %v1403 = vsel %vm436, %v1374, 0
      %1405 = vmatpush.bf16.msra.mxu0 0
      %1406 = vmatpush.bf16.msra.mxu0 0
      %1407 = vmatpush.bf16.msra.mxu0 0
      %1408 = vmatpush.bf16.msra.mxu0 0
      %1409 = vmatpush.bf16.msra.mxu0 0
      %1410 = vmatpush.bf16.msra.mxu0 0
      %1411 = vmatpush.bf16.msra.mxu0 0
      %1412 = vmatpush.bf16.msra.mxu0 %v1379
      %1413 = vmatmul.bf16.gmra.mxu0 %v1382
      %v1414 = vpop.f32.mrf.mxu0
      %v1415 = vadd.f32 0.0, %v1414
      %v1416 = vpop.f32.mrf.mxu0
      %v1417 = vadd.f32 0.0, %v1416
      %1418 = vmatmul.bf16.gmra.mxu0 %v1385
      %v1419 = vpop.f32.mrf.mxu0
      %v1420 = vadd.f32 0.0, %v1419
      %v1421 = vpop.f32.mrf.mxu0
      %v1422 = vadd.f32 0.0, %v1421
      %1423 = vmatmul.bf16.gmra.mxu0 %v1388
      %v1424 = vpop.f32.mrf.mxu0
      %v1425 = vadd.f32 0.0, %v1424
      %v1426 = vpop.f32.mrf.mxu0
      %v1427 = vadd.f32 0.0, %v1426
      %1428 = vmatmul.bf16.gmra.mxu0 %v1391
      %v1429 = vpop.f32.mrf.mxu0
      %v1430 = vadd.f32 0.0, %v1429
      %v1431 = vpop.f32.mrf.mxu0
      %v1432 = vadd.f32 0.0, %v1431
      %1433 = vmatmul.bf16.gmra.mxu0 %v1394
      %v1434 = vpop.f32.mrf.mxu0
      %v1435 = vadd.f32 0.0, %v1434
      %v1436 = vpop.f32.mrf.mxu0
      %v1437 = vadd.f32 0.0, %v1436
      %1438 = vmatmul.bf16.gmra.mxu0 %v1397
      %v1439 = vpop.f32.mrf.mxu0
      %v1440 = vadd.f32 0.0, %v1439
      %v1441 = vpop.f32.mrf.mxu0
      %v1442 = vadd.f32 0.0, %v1441
      %1443 = vmatmul.bf16.gmra.mxu0 %v1400
      %v1444 = vpop.f32.mrf.mxu0
      %v1445 = vadd.f32 0.0, %v1444
      %v1446 = vpop.f32.mrf.mxu0
      %v1447 = vadd.f32 0.0, %v1446
      %1448 = vmatmul.bf16.gmra.mxu0 %v1403
      %v1449 = vpop.f32.mrf.mxu0
      %v1450 = vadd.f32 0.0, %v1449
      %v1451 = vpop.f32.mrf.mxu0
      %v1452 = vadd.f32 0.0, %v1451
      %1453 = vdwg.mxu0
      %v1454 = vadd.f32 %v1306, %v1415
      %v1455 = vadd.f32 %v1307, %v1417
      %v1456 = vadd.f32 %v1308, %v1420
      %v1457 = vadd.f32 %v1309, %v1422
      %v1458 = vadd.f32 %v1310, %v1425
      %v1459 = vadd.f32 %v1311, %v1427
      %v1460 = vadd.f32 %v1312, %v1430
      %v1461 = vadd.f32 %v1313, %v1432
      %v1462 = vadd.f32 %v1314, %v1435
      %v1463 = vadd.f32 %v1315, %v1437
      %v1464 = vadd.f32 %v1316, %v1440
      %v1465 = vadd.f32 %v1317, %v1442
      %v1466 = vadd.f32 %v1318, %v1445
      %v1467 = vadd.f32 %v1319, %v1447
      %v1468 = vadd.f32 %v1320, %v1450
      %v1469 = vadd.f32 %v1321, %v1452
      %v1470 = vld [vmem:[%s3] sm:$0x1]
      %v1472 = vperm.slane %v1470, 0
      %v1474 = vadd.f32 %v1454, %v1472
      %v1475 = vadd.f32 %v1455, %v1472
      %v1476 = vadd.f32 %v1456, %v1472
      %v1477 = vadd.f32 %v1457, %v1472
      %v1478 = vadd.f32 %v1458, %v1472
      %v1479 = vadd.f32 %v1459, %v1472
      %v1480 = vadd.f32 %v1460, %v1472
      %v1481 = vadd.f32 %v1461, %v1472
      %v1482 = vadd.f32 %v1462, %v1472
      %v1483 = vadd.f32 %v1463, %v1472
      %v1484 = vadd.f32 %v1464, %v1472
      %v1485 = vadd.f32 %v1465, %v1472
      %v1486 = vadd.f32 %v1466, %v1472
      %v1487 = vadd.f32 %v1467, %v1472
      %v1488 = vadd.f32 %v1468, %v1472
      %v1489 = vadd.f32 %v1469, %v1472
      %v1490 = vmax.f32 %v1474, 0.0
      %v1491 = vmax.f32 %v1475, 0.0
      %v1492 = vmax.f32 %v1476, 0.0
      %v1493 = vmax.f32 %v1477, 0.0
      %v1494 = vmax.f32 %v1478, 0.0
      %v1495 = vmax.f32 %v1479, 0.0
      %v1496 = vmax.f32 %v1480, 0.0
      %v1497 = vmax.f32 %v1481, 0.0
      %v1498 = vmax.f32 %v1482, 0.0
      %v1499 = vmax.f32 %v1483, 0.0
      %v1500 = vmax.f32 %v1484, 0.0
      %v1501 = vmax.f32 %v1485, 0.0
      %v1502 = vmax.f32 %v1486, 0.0
      %v1503 = vmax.f32 %v1487, 0.0
      %v1504 = vmax.f32 %v1488, 0.0
      %v1505 = vmax.f32 %v1489, 0.0
      %v1506 = vpack.c.bf16 %v1490, %v1490
      %v1507 = vpack.c.bf16 %v1491, %v1491
      %v1508 = vpack.c.bf16 %v1492, %v1492
      %v1509 = vpack.c.bf16 %v1493, %v1493
      %v1510 = vpack.c.bf16 %v1494, %v1494
      %v1511 = vpack.c.bf16 %v1495, %v1495
      %v1512 = vpack.c.bf16 %v1496, %v1496
      %v1513 = vpack.c.bf16 %v1497, %v1497
      %v1514 = vpack.c.bf16 %v1498, %v1498
      %v1515 = vpack.c.bf16 %v1499, %v1499
      %v1516 = vpack.c.bf16 %v1500, %v1500
      %v1517 = vpack.c.bf16 %v1501, %v1501
      %v1518 = vpack.c.bf16 %v1502, %v1502
      %v1519 = vpack.c.bf16 %v1503, %v1503
      %v1520 = vpack.c.bf16 %v1504, %v1504
      %v1521 = vpack.c.bf16 %v1505, %v1505
      %vm1522 = vcmask 519168
      %1523 = vst.msk [vmem:[%s228] sm:$0xf] %vm1522, %v1506
      %1524 = vst.msk [vmem:[%s228 + $0x4] sm:$0xf] %vm1522, %v1507
      %1525 = vst.msk [vmem:[%s228 + $0x8] sm:$0xf] %vm1522, %v1508
      %1526 = vst.msk [vmem:[%s228 + $0xc] sm:$0xf] %vm1522, %v1509
      %1527 = vst.msk [vmem:[%s228 + $0x10] sm:$0xf] %vm1522, %v1510
      %1528 = vst.msk [vmem:[%s228 + $0x14] sm:$0xf] %vm1522, %v1511
      %1529 = vst.msk [vmem:[%s228 + $0x18] sm:$0xf] %vm1522, %v1512
      %1530 = vst.msk [vmem:[%s228 + $0x1c] sm:$0xf] %vm1522, %v1513
      %1531 = vst.msk [vmem:[%s228 + $0x20] sm:$0xf] %vm1522, %v1514
      %1532 = vst.msk [vmem:[%s228 + $0x24] sm:$0xf] %vm1522, %v1515
      %1533 = vst.msk [vmem:[%s228 + $0x28] sm:$0xf] %vm1522, %v1516
      %1534 = vst.msk [vmem:[%s228 + $0x2c] sm:$0xf] %vm1522, %v1517
      %1535 = vst.msk [vmem:[%s228 + $0x30] sm:$0xf] %vm1522, %v1518
      %1536 = vst.msk [vmem:[%s228 + $0x34] sm:$0xf] %vm1522, %v1519
      %1537 = vst.msk [vmem:[%s228 + $0x38] sm:$0xf] %vm1522, %v1520
      %1538 = vst.msk [vmem:[%s228 + $0x3c] sm:$0xf] %vm1522, %v1521
      %s1539 = smul.u32 16, %s15
      %p1540 = scmp.lt.s32.totalorder %s1539, 31
      %s1541 = scalar_select %p1540, %s1539, 31
      %s1542 = smul.addr %s1541, 4
      %s1543 = scalar_lea.vmem %s4, %s1542
      // Predicated region
      $region37: #{_lambda_.2} parent=35 // pred_check
        %p1544 = pneg %p129
      $region38: #{_lambda_.2} parent=35 // pred_check_branch
        %1546 = sbr.rel (%p1544) target = $region40
      $region39: #{_lambda_.2} parent=35 // pred_region
        %s1547 = smul.u32 16, %s15
      $region40: #{_lambda_.2} parent=35 // pred_fallthru
        _
    $region36: #{_lambda_.2} parent=5 // pred_fallthru
      _
    %p1548 = scmp.le.s32.totalorder 2, %s10
    // Predicated region
    $region41: #{_lambda_.2} parent=5 // pred_check
      %p1549 = pneg %p1548
    $region42: #{_lambda_.2} parent=5 // pred_check_branch
      %1551 = sbr.rel (%p1549) target = $region44
    $region43: #{_lambda_.2} parent=5 // pred_region
      %s1552 = ssub.s32 %s10, 2
      // Predicated region
      $region45: #{_lambda_.2} parent=43 // pred_check
        %p1553 = pneg %p135
      $region46: #{_lambda_.2} parent=43 // pred_check_branch
        %1555 = sbr.rel (%p1553) target = $region48
      $region47: #{_lambda_.2} parent=43 // pred_region
        %s1556 = smul.u32 16, %s16
        %p1557 = scmp.lt.s32.totalorder %s1556, 31
        %s1558 = scalar_select %p1557, %s1556, 31
        %s1559 = smul.addr %s1558, 4
        %s1560 = scalar_lea.vmem %s4, %s1559
      $region48: #{_lambda_.2} parent=43 // pred_fallthru
        _
    $region44: #{_lambda_.2} parent=5 // pred_fallthru
      _
  $region6: #{_lambda_.2} parent=0 // loop_footer
    %s14 = sadd.s32 1, %s10
  $region7: #{_lambda_.2} parent=0 // loop_footer_branch
    %9 = sbr.rel target = $region3
  $region8: #{_lambda_.2} parent=0 // loop_exit
    _

// kernel: _lambda_.3
$region0: #{_lambda_.3}
  #allocation0 [shape = 'u32[]', space=smem, size = 0x4, offset = 0x4, fixed_abs, tag = 'smem constant byte address 0x4 - core index']
  #allocation1 [shape = 'u32[72,128]{1,0:T(1,128)}', space=vmem, size = 0x9000, scoped, tag = 'internal scratch']
  #allocation2 [shape = 'bf16[1472,8]{1,0:T(8,128)(2,1)}', space=vmem, size = 0x5c000, scoped, tag = 'scratch operand']
  %s0 = inlined_call_operand.vmem [shape: bf16[2208,8], index: 0, kind: input, shape index: {}, may-alias: {0,1}]
  %s1 = inlined_call_operand.vmem [shape: bf16[2208,8], index: 1, kind: input, shape index: {}, may-alias: {0,1}]
  %s2 = inlined_call_operand.vmem [shape: bf16[8,8,32], index: 2, kind: input, shape index: {}]
  %s3 = inlined_call_operand.vmem [shape: f32[1,32], index: 3, kind: input, shape index: {}]
  %s4 = inlined_call_operand.vmem [shape: bf16[32,24], index: 4, kind: input, shape index: {}]
  %s5 = inlined_call_operand.vmem [shape: f32[1,24], index: 5, kind: input, shape index: {}]
  %s6 = inlined_call_operand.vmem [shape: f32[1472,24], index: 6, kind: output, shape index: {}]
  %s7 = sld [smem:[#allocation0]]
  $region57: #{_lambda_.3} parent=0
    _
  %s9 = ssub.s32 1, %s7
  %s10 = scalar_select 0, %s9, %s7
  loop: start=0, step=1, limit=4
  $region2: #{_lambda_.3} parent=0 // loop_pre_header
    _
  $region3: #{_lambda_.3} parent=0 // loop_header
    %s12 = sphi 0, %s16
    %p13 = scmp.ge.s32.totalorder %s12, 4
    %s22 = sphi 0, %s24
    %s25 = sphi 0, %s22
    %s26 = sphi 0, %s25
    %s42 = sphi 0, %s26
    %s50 = sphi 0, %s52
    %s53 = sphi 0, %s50
    %s54 = sphi 0, %s53
    %s70 = sphi 0, %s54
    %s74 = sphi 0, %s74
    %s76 = sphi 0, %s74
    %s77 = sphi 0, %s76
    %s91 = sphi 0, %s77
    %s95 = sphi 0, %s95
    %s97 = sphi 0, %s95
    %s98 = sphi 0, %s97
    %s112 = sphi 0, %s98
    %s116 = sphi 0, %s116
    %s118 = sphi 0, %s116
    %s119 = sphi 0, %s118
    %s133 = sphi 0, %s119
    %s137 = sphi 0, %s137
    %s139 = sphi 0, %s137
    %s140 = sphi 0, %s139
    %s154 = sphi 0, %s140
    %s160 = sphi 0, %s162
    %s163 = sphi 0, %s160
    %s164 = sphi 0, %s163
    %s180 = sphi 0, %s164
  $region4: #{_lambda_.3} parent=0 // loop_header_branch
    %15 = sbr.rel (%p13) target = $region8
  $region5: #{_lambda_.3} parent=0 // loop_body
    %s17 = ssub.s32 %s12, 1
    %s18 = ssub.s32 %s12, 2
    %s19 = sadd.s32 %s12, 1
    %s20 = ssub.s32 %s12, %s19
    %p21 = scmp.eq.s32.totalorder %s20, 0
    %s23 = sadd.s32 %s22, 1
    %s24 = scalar_select %p21, %s22, %s23
    %p27 = pneg %p21
    %p28 = scmp.eq.s32.totalorder %s12, 1
    %p29 = por %p27, %p28
    %p30 = scmp.ne.s32.totalorder %s22, %s25
    %p31 = scmp.eq.s32.totalorder %s12, 0
    %p32 = por %p30, %p31
    %p33 = scmp.ne.s32.totalorder %s22, %s25
    %p34 = scmp.eq.s32.totalorder %s17, 1
    %p35 = por %p33, %p34
    %p36 = scmp.ne.s32.totalorder %s25, %s26
    %p37 = scmp.eq.s32.totalorder %s17, 0
    %p38 = por %p36, %p37
    %p39 = scmp.ne.s32.totalorder %s25, %s26
    %p40 = scmp.eq.s32.totalorder %s18, 1
    %p41 = por %p39, %p40
    %p43 = scmp.ne.s32.totalorder %s26, %s42
    %p44 = scmp.eq.s32.totalorder %s18, 0
    %p45 = por %p43, %p44
    %s46 = sadd.s32 %s12, 1
    %s47 = sadd.s32 %s19, 1
    %s48 = ssub.s32 %s46, %s47
    %p49 = scmp.eq.s32.totalorder %s48, 0
    %s51 = sadd.s32 %s50, 1
    %s52 = scalar_select %p49, %s50, %s51
    %p55 = pneg %p49
    %p56 = scmp.eq.s32.totalorder %s12, 1
    %p57 = por %p55, %p56
    %p58 = scmp.ne.s32.totalorder %s50, %s53
    %p59 = scmp.eq.s32.totalorder %s12, 0
    %p60 = por %p58, %p59
    %p61 = scmp.ne.s32.totalorder %s50, %s53
    %p62 = scmp.eq.s32.totalorder %s17, 1
    %p63 = por %p61, %p62
    %p64 = scmp.ne.s32.totalorder %s53, %s54
    %p65 = scmp.eq.s32.totalorder %s17, 0
    %p66 = por %p64, %p65
    %p67 = scmp.ne.s32.totalorder %s53, %s54
    %p68 = scmp.eq.s32.totalorder %s18, 1
    %p69 = por %p67, %p68
    %p71 = scmp.ne.s32.totalorder %s54, %s70
    %p72 = scmp.eq.s32.totalorder %s18, 0
    %p73 = por %p71, %p72
    %s75 = sadd.s32 %s74, 1
    %p78 = scmp.eq.s32.totalorder %s12, 1
    %p79 = scmp.ne.s32.totalorder %s74, %s76
    %p80 = scmp.eq.s32.totalorder %s12, 0
    %p81 = por %p79, %p80
    %p82 = scmp.ne.s32.totalorder %s74, %s76
    %p83 = scmp.eq.s32.totalorder %s17, 1
    %p84 = por %p82, %p83
    %p85 = scmp.ne.s32.totalorder %s76, %s77
    %p86 = scmp.eq.s32.totalorder %s17, 0
    %p87 = por %p85, %p86
    %p88 = scmp.ne.s32.totalorder %s76, %s77
    %p89 = scmp.eq.s32.totalorder %s18, 1
    %p90 = por %p88, %p89
    %p92 = scmp.ne.s32.totalorder %s77, %s91
    %p93 = scmp.eq.s32.totalorder %s18, 0
    %p94 = por %p92, %p93
    %s96 = sadd.s32 %s95, 1
    %p99 = scmp.eq.s32.totalorder %s12, 1
    %p100 = scmp.ne.s32.totalorder %s95, %s97
    %p101 = scmp.eq.s32.totalorder %s12, 0
    %p102 = por %p100, %p101
    %p103 = scmp.ne.s32.totalorder %s95, %s97
    %p104 = scmp.eq.s32.totalorder %s17, 1
    %p105 = por %p103, %p104
    %p106 = scmp.ne.s32.totalorder %s97, %s98
    %p107 = scmp.eq.s32.totalorder %s17, 0
    %p108 = por %p106, %p107
    %p109 = scmp.ne.s32.totalorder %s97, %s98
    %p110 = scmp.eq.s32.totalorder %s18, 1
    %p111 = por %p109, %p110
    %p113 = scmp.ne.s32.totalorder %s98, %s112
    %p114 = scmp.eq.s32.totalorder %s18, 0
    %p115 = por %p113, %p114
    %s117 = sadd.s32 %s116, 1
    %p120 = scmp.eq.s32.totalorder %s12, 1
    %p121 = scmp.ne.s32.totalorder %s116, %s118
    %p122 = scmp.eq.s32.totalorder %s12, 0
    %p123 = por %p121, %p122
    %p124 = scmp.ne.s32.totalorder %s116, %s118
    %p125 = scmp.eq.s32.totalorder %s17, 1
    %p126 = por %p124, %p125
    %p127 = scmp.ne.s32.totalorder %s118, %s119
    %p128 = scmp.eq.s32.totalorder %s17, 0
    %p129 = por %p127, %p128
    %p130 = scmp.ne.s32.totalorder %s118, %s119
    %p131 = scmp.eq.s32.totalorder %s18, 1
    %p132 = por %p130, %p131
    %p134 = scmp.ne.s32.totalorder %s119, %s133
    %p135 = scmp.eq.s32.totalorder %s18, 0
    %p136 = por %p134, %p135
    %s138 = sadd.s32 %s137, 1
    %p141 = scmp.eq.s32.totalorder %s12, 1
    %p142 = scmp.ne.s32.totalorder %s137, %s139
    %p143 = scmp.eq.s32.totalorder %s12, 0
    %p144 = por %p142, %p143
    %p145 = scmp.ne.s32.totalorder %s137, %s139
    %p146 = scmp.eq.s32.totalorder %s17, 1
    %p147 = por %p145, %p146
    %p148 = scmp.ne.s32.totalorder %s139, %s140
    %p149 = scmp.eq.s32.totalorder %s17, 0
    %p150 = por %p148, %p149
    %p151 = scmp.ne.s32.totalorder %s139, %s140
    %p152 = scmp.eq.s32.totalorder %s18, 1
    %p153 = por %p151, %p152
    %p155 = scmp.ne.s32.totalorder %s140, %s154
    %p156 = scmp.eq.s32.totalorder %s18, 0
    %p157 = por %p155, %p156
    %s158 = ssub.s32 %s12, %s19
    %p159 = scmp.eq.s32.totalorder %s158, 0
    %s161 = sadd.s32 %s160, 1
    %s162 = scalar_select %p159, %s160, %s161
    %p165 = pneg %p159
    %p166 = scmp.eq.s32.totalorder %s12, 1
    %p167 = por %p165, %p166
    %p168 = scmp.ne.s32.totalorder %s160, %s163
    %p169 = scmp.eq.s32.totalorder %s12, 0
    %p170 = por %p168, %p169
    %p171 = scmp.ne.s32.totalorder %s160, %s163
    %p172 = scmp.eq.s32.totalorder %s17, 1
    %p173 = por %p171, %p172
    %p174 = scmp.ne.s32.totalorder %s163, %s164
    %p175 = scmp.eq.s32.totalorder %s17, 0
    %p176 = por %p174, %p175
    %p177 = scmp.ne.s32.totalorder %s163, %s164
    %p178 = scmp.eq.s32.totalorder %s18, 1
    %p179 = por %p177, %p178
    %p181 = scmp.ne.s32.totalorder %s164, %s180
    %p182 = scmp.eq.s32.totalorder %s18, 0
    %p183 = por %p181, %p182
    %p184 = scmp.le.s32.totalorder 1, %s12
    %p185 = scmp.lt.s32.totalorder %s12, 3
    %p186 = pnand %p184, %p185
    %p187 = pneg %p186
    // Predicated region
    $region9: #{_lambda_.3} parent=5 // pred_check
      _
    $region10: #{_lambda_.3} parent=5 // pred_check_branch
      %189 = sbr.rel (%p186) target = $region12
    $region11: #{_lambda_.3} parent=5 // pred_region
      %s190 = ssub.s32 %s12, 1
      // Predicated region
      $region13: #{_lambda_.3} parent=11 // pred_check
        %p191 = pneg %p87
      $region14: #{_lambda_.3} parent=11 // pred_check_branch
        %193 = sbr.rel (%p191) target = $region16
      $region15: #{_lambda_.3} parent=11 // pred_region
        _
      $region16: #{_lambda_.3} parent=11 // pred_fallthru
        _
      // Predicated region
      $region17: #{_lambda_.3} parent=11 // pred_check
        %p194 = pneg %p108
      $region18: #{_lambda_.3} parent=11 // pred_check_branch
        %196 = sbr.rel (%p194) target = $region20
      $region19: #{_lambda_.3} parent=11 // pred_region
        _
      $region20: #{_lambda_.3} parent=11 // pred_fallthru
        _
      // Predicated region
      $region21: #{_lambda_.3} parent=11 // pred_check
        %p197 = pneg %p129
      $region22: #{_lambda_.3} parent=11 // pred_check_branch
        %199 = sbr.rel (%p197) target = $region24
      $region23: #{_lambda_.3} parent=11 // pred_region
        _
      $region24: #{_lambda_.3} parent=11 // pred_fallthru
        _
      // Predicated region
      $region25: #{_lambda_.3} parent=11 // pred_check
        %p200 = pneg %p150
      $region26: #{_lambda_.3} parent=11 // pred_check_branch
        %202 = sbr.rel (%p200) target = $region28
      $region27: #{_lambda_.3} parent=11 // pred_region
        _
      $region28: #{_lambda_.3} parent=11 // pred_fallthru
        _
    $region12: #{_lambda_.3} parent=5 // pred_fallthru
      _
    %p203 = scmp.lt.s32.totalorder %s12, 2
    // Predicated region
    $region29: #{_lambda_.3} parent=5 // pred_check
      %p204 = pneg %p203
    $region30: #{_lambda_.3} parent=5 // pred_check_branch
      %206 = sbr.rel (%p204) target = $region32
    $region31: #{_lambda_.3} parent=5 // pred_region
      // Predicated region
      $region33: #{_lambda_.3} parent=31 // pred_check
        %p207 = pneg %p32
      $region34: #{_lambda_.3} parent=31 // pred_check_branch
        %209 = sbr.rel (%p207) target = $region36
      $region35: #{_lambda_.3} parent=31 // pred_region
        %s210 = smul.u32 92, %s12
        %p211 = scmp.lt.s32.totalorder %s210, 275
        %s212 = scalar_select %p211, %s210, 275
        %s213 = smul.addr %s212, 4
        %s214 = scalar_lea.vmem %s0, %s213
        %s215 = smul.u32 92, %s12
      $region36: #{_lambda_.3} parent=31 // pred_fallthru
        _
      // Predicated region
      $region37: #{_lambda_.3} parent=31 // pred_check
        %p216 = pneg %p60
      $region38: #{_lambda_.3} parent=31 // pred_check_branch
        %218 = sbr.rel (%p216) target = $region40
      $region39: #{_lambda_.3} parent=31 // pred_region
        %s219 = sadd.s32 %s12, 1
        %s220 = smul.u32 92, %s219
        %p221 = scmp.lt.s32.totalorder %s220, 275
        %s222 = scalar_select %p221, %s220, 275
        %s223 = smul.addr %s222, 4
        %s224 = scalar_lea.vmem %s1, %s223
        %s225 = sadd.s32 %s12, 1
        %s226 = smul.u32 92, %s225
      $region40: #{_lambda_.3} parent=31 // pred_fallthru
        _
    $region32: #{_lambda_.3} parent=5 // pred_fallthru
      _
    %p227 = scmp.le.s32.totalorder 1, %s12
    %p228 = scmp.lt.s32.totalorder %s12, 3
    %p229 = pnand %p227, %p228
    %p230 = pneg %p229
    // Predicated region
    $region41: #{_lambda_.3} parent=5 // pred_check
      _
    $region42: #{_lambda_.3} parent=5 // pred_check_branch
      %232 = sbr.rel (%p229) target = $region44
    $region43: #{_lambda_.3} parent=5 // pred_region
      %s233 = ssub.s32 %s12, 1
      %s234 = smul.u32 92, %s17
      %p235 = scmp.lt.s32.totalorder %s234, 275
      %s236 = scalar_select %p235, %s234, 275
      %s237 = smul.addr %s236, 4
      %s238 = scalar_lea.vmem %s0, %s237
      %p239 = pneg %p38
      %p240 = pneg %p35
      %s241 = sadd.s32 %s17, 1
      %s242 = smul.u32 92, %s241
      %p243 = scmp.lt.s32.totalorder %s242, 275
      %s244 = scalar_select %p243, %s242, 275
      %s245 = smul.addr %s244, 4
      %s246 = scalar_lea.vmem %s1, %s245
      %p247 = pneg %p66
      %p248 = pneg %p63
      %p249 = pneg %p87
      %p250 = pneg %p84
      %p251 = pneg %p108
      %p252 = pneg %p105
      %p253 = pneg %p129
      %p254 = pneg %p126
      %p255 = pneg %p150
      %p256 = pneg %p147
      %p257 = pneg %p176
      %p258 = pneg %p173
      %s259 = smul.u32 92, %s17
      %p260 = scmp.lt.s32.totalorder %s259, 183
      %s261 = scalar_select %p260, %s259, 183
      %s262 = smul.addr %s261, 8
      %s263 = scalar_lea.vmem %s6, %s262
      %s264 = smul.u32 92, %s17
      %p265 = scmp.lt.s32.totalorder %s264, 275
      %s266 = scalar_select %p265, %s264, 275
      %s267 = smul.addr %s266, 4
      %s268 = scalar_lea.vmem %s0, %s267
      %s269 = smul.u32 92, %s17
      %s270 = sadd.s32 %s17, 1
      %s271 = smul.u32 92, %s270
      %p272 = scmp.lt.s32.totalorder %s271, 275
      %s273 = scalar_select %p272, %s271, 275
      %s274 = smul.addr %s273, 4
      %s275 = scalar_lea.vmem %s1, %s274
      %s276 = sadd.s32 %s17, 1
      %s277 = smul.u32 92, %s276
      %s278 = smul.u32 92, %s17
      %p279 = scmp.lt.s32.totalorder %s278, 183
      %s280 = scalar_select %p279, %s278, 183
      %s281 = smul.addr %s280, 8
      %s282 = scalar_lea.vmem %s6, %s281
      %s283 = smul.u32 92, %s17
      %v285 = vld [vmem:[%s268] sm:$0xf]
      %v286 = vld [vmem:[%s268 + $0x4] sm:$0xf]
      %v287 = vld [vmem:[%s268 + $0x8] sm:$0xf]
      %v288 = vld [vmem:[%s268 + $0xc] sm:$0xf]
      %v289 = vld [vmem:[%s268 + $0x10] sm:$0xf]
      %v290 = vld [vmem:[%s268 + $0x14] sm:$0xf]
      %v291 = vld [vmem:[%s268 + $0x18] sm:$0xf]
      %v292 = vld [vmem:[%s268 + $0x1c] sm:$0xf]
      %v293 = vld [vmem:[%s268 + $0x20] sm:$0xf]
      %v294 = vld [vmem:[%s268 + $0x24] sm:$0xf]
      %v295 = vld [vmem:[%s268 + $0x28] sm:$0xf]
      %v296 = vld [vmem:[%s268 + $0x2c] sm:$0xf]
      %v297 = vld [vmem:[%s268 + $0x30] sm:$0xf]
      %v298 = vld [vmem:[%s268 + $0x34] sm:$0xf]
      %v299 = vld [vmem:[%s268 + $0x38] sm:$0xf]
      %v300 = vld [vmem:[%s268 + $0x3c] sm:$0xf]
      %v301 = vld [vmem:[%s268 + $0x40] sm:$0xf]
      %v302 = vld [vmem:[%s268 + $0x44] sm:$0xf]
      %v303 = vld [vmem:[%s268 + $0x48] sm:$0xf]
      %v304 = vld [vmem:[%s268 + $0x4c] sm:$0xf]
      %v305 = vld [vmem:[%s268 + $0x50] sm:$0xf]
      %v306 = vld [vmem:[%s268 + $0x54] sm:$0xf]
      %v307 = vld [vmem:[%s268 + $0x58] sm:$0xf]
      %v308 = vld [vmem:[%s268 + $0x5c] sm:$0xf]
      %v309 = vld [vmem:[%s268 + $0x60] sm:$0xf]
      %v310 = vld [vmem:[%s268 + $0x64] sm:$0xf]
      %v311 = vld [vmem:[%s268 + $0x68] sm:$0xf]
      %v312 = vld [vmem:[%s268 + $0x6c] sm:$0xf]
      %v313 = vld [vmem:[%s268 + $0x70] sm:$0xf]
      %v314 = vld [vmem:[%s268 + $0x74] sm:$0xf]
      %v315 = vld [vmem:[%s268 + $0x78] sm:$0xf]
      %v316 = vld [vmem:[%s268 + $0x7c] sm:$0xf]
      %v317 = vld [vmem:[%s268 + $0x80] sm:$0xf]
      %v318 = vld [vmem:[%s268 + $0x84] sm:$0xf]
      %v319 = vld [vmem:[%s268 + $0x88] sm:$0xf]
      %v320 = vld [vmem:[%s268 + $0x8c] sm:$0xf]
      %v321 = vld [vmem:[%s268 + $0x90] sm:$0xf]
      %v322 = vld [vmem:[%s268 + $0x94] sm:$0xf]
      %v323 = vld [vmem:[%s268 + $0x98] sm:$0xf]
      %v324 = vld [vmem:[%s268 + $0x9c] sm:$0xf]
      %v325 = vld [vmem:[%s268 + $0xa0] sm:$0xf]
      %v326 = vld [vmem:[%s268 + $0xa4] sm:$0xf]
      %v327 = vld [vmem:[%s268 + $0xa8] sm:$0xf]
      %v328 = vld [vmem:[%s268 + $0xac] sm:$0xf]
      %v329 = vld [vmem:[%s268 + $0xb0] sm:$0xf]
      %v330 = vld [vmem:[%s268 + $0xb4] sm:$0xf]
      %v331 = vld [vmem:[%s268 + $0xb8] sm:$0xf]
      %v332 = vld [vmem:[%s268 + $0xbc] sm:$0xf]
      %v333 = vld [vmem:[%s268 + $0xc0] sm:$0xf]
      %v334 = vld [vmem:[%s268 + $0xc4] sm:$0xf]
      %v335 = vld [vmem:[%s268 + $0xc8] sm:$0xf]
      %v336 = vld [vmem:[%s268 + $0xcc] sm:$0xf]
      %v337 = vld [vmem:[%s268 + $0xd0] sm:$0xf]
      %v338 = vld [vmem:[%s268 + $0xd4] sm:$0xf]
      %v339 = vld [vmem:[%s268 + $0xd8] sm:$0xf]
      %v340 = vld [vmem:[%s268 + $0xdc] sm:$0xf]
      %v341 = vld [vmem:[%s268 + $0xe0] sm:$0xf]
      %v342 = vld [vmem:[%s268 + $0xe4] sm:$0xf]
      %v343 = vld [vmem:[%s268 + $0xe8] sm:$0xf]
      %v344 = vld [vmem:[%s268 + $0xec] sm:$0xf]
      %v345 = vld [vmem:[%s268 + $0xf0] sm:$0xf]
      %v346 = vld [vmem:[%s268 + $0xf4] sm:$0xf]
      %v347 = vld [vmem:[%s268 + $0xf8] sm:$0xf]
      %v348 = vld [vmem:[%s268 + $0xfc] sm:$0xf]
      %v349 = vld [vmem:[%s268 + $0x100] sm:$0xf]
      %v350 = vld [vmem:[%s268 + $0x104] sm:$0xf]
      %v351 = vld [vmem:[%s268 + $0x108] sm:$0xf]
      %v352 = vld [vmem:[%s268 + $0x10c] sm:$0xf]
      %v353 = vld [vmem:[%s268 + $0x110] sm:$0xf]
      %v354 = vld [vmem:[%s268 + $0x114] sm:$0xf]
      %v355 = vld [vmem:[%s268 + $0x118] sm:$0xf]
      %v356 = vld [vmem:[%s268 + $0x11c] sm:$0xf]
      %v357 = vld [vmem:[%s268 + $0x120] sm:$0xf]
      %v358 = vld [vmem:[%s268 + $0x124] sm:$0xf]
      %v359 = vld [vmem:[%s268 + $0x128] sm:$0xf]
      %v360 = vld [vmem:[%s268 + $0x12c] sm:$0xf]
      %v361 = vld [vmem:[%s268 + $0x130] sm:$0xf]
      %v362 = vld [vmem:[%s268 + $0x134] sm:$0xf]
      %v363 = vld [vmem:[%s268 + $0x138] sm:$0xf]
      %v364 = vld [vmem:[%s268 + $0x13c] sm:$0xf]
      %v365 = vld [vmem:[%s268 + $0x140] sm:$0xf]
      %v366 = vld [vmem:[%s268 + $0x144] sm:$0xf]
      %v367 = vld [vmem:[%s268 + $0x148] sm:$0xf]
      %v368 = vld [vmem:[%s268 + $0x14c] sm:$0xf]
      %v369 = vld [vmem:[%s268 + $0x150] sm:$0xf]
      %v370 = vld [vmem:[%s268 + $0x154] sm:$0xf]
      %v371 = vld [vmem:[%s268 + $0x158] sm:$0xf]
      %v372 = vld [vmem:[%s268 + $0x15c] sm:$0xf]
      %v373 = vld [vmem:[%s268 + $0x160] sm:$0xf]
      %v374 = vld [vmem:[%s268 + $0x164] sm:$0xf]
      %v375 = vld [vmem:[%s268 + $0x168] sm:$0xf]
      %v376 = vld [vmem:[%s268 + $0x16c] sm:$0xf]
      %vm377 = vcmask 60416
      %378 = vst.msk [vmem:[#allocation2] sm:$0xf] %vm377, %v285
      %379 = vst.msk [vmem:[#allocation2 + $0x4] sm:$0xf] %vm377, %v286
      %380 = vst.msk [vmem:[#allocation2 + $0x8] sm:$0xf] %vm377, %v287
      %381 = vst.msk [vmem:[#allocation2 + $0xc] sm:$0xf] %vm377, %v288
      %382 = vst.msk [vmem:[#allocation2 + $0x10] sm:$0xf] %vm377, %v289
      %383 = vst.msk [vmem:[#allocation2 + $0x14] sm:$0xf] %vm377, %v290
      %384 = vst.msk [vmem:[#allocation2 + $0x18] sm:$0xf] %vm377, %v291
      %385 = vst.msk [vmem:[#allocation2 + $0x1c] sm:$0xf] %vm377, %v292
      %386 = vst.msk [vmem:[#allocation2 + $0x20] sm:$0xf] %vm377, %v293
      %387 = vst.msk [vmem:[#allocation2 + $0x24] sm:$0xf] %vm377, %v294
      %388 = vst.msk [vmem:[#allocation2 + $0x28] sm:$0xf] %vm377, %v295
      %389 = vst.msk [vmem:[#allocation2 + $0x2c] sm:$0xf] %vm377, %v296
      %390 = vst.msk [vmem:[#allocation2 + $0x30] sm:$0xf] %vm377, %v297
      %391 = vst.msk [vmem:[#allocation2 + $0x34] sm:$0xf] %vm377, %v298
      %392 = vst.msk [vmem:[#allocation2 + $0x38] sm:$0xf] %vm377, %v299
      %393 = vst.msk [vmem:[#allocation2 + $0x3c] sm:$0xf] %vm377, %v300
      %394 = vst.msk [vmem:[#allocation2 + $0x40] sm:$0xf] %vm377, %v301
      %395 = vst.msk [vmem:[#allocation2 + $0x44] sm:$0xf] %vm377, %v302
      %396 = vst.msk [vmem:[#allocation2 + $0x48] sm:$0xf] %vm377, %v303
      %397 = vst.msk [vmem:[#allocation2 + $0x4c] sm:$0xf] %vm377, %v304
      %398 = vst.msk [vmem:[#allocation2 + $0x50] sm:$0xf] %vm377, %v305
      %399 = vst.msk [vmem:[#allocation2 + $0x54] sm:$0xf] %vm377, %v306
      %400 = vst.msk [vmem:[#allocation2 + $0x58] sm:$0xf] %vm377, %v307
      %401 = vst.msk [vmem:[#allocation2 + $0x5c] sm:$0xf] %vm377, %v308
      %402 = vst.msk [vmem:[#allocation2 + $0x60] sm:$0xf] %vm377, %v309
      %403 = vst.msk [vmem:[#allocation2 + $0x64] sm:$0xf] %vm377, %v310
      %404 = vst.msk [vmem:[#allocation2 + $0x68] sm:$0xf] %vm377, %v311
      %405 = vst.msk [vmem:[#allocation2 + $0x6c] sm:$0xf] %vm377, %v312
      %406 = vst.msk [vmem:[#allocation2 + $0x70] sm:$0xf] %vm377, %v313
      %407 = vst.msk [vmem:[#allocation2 + $0x74] sm:$0xf] %vm377, %v314
      %408 = vst.msk [vmem:[#allocation2 + $0x78] sm:$0xf] %vm377, %v315
      %409 = vst.msk [vmem:[#allocation2 + $0x7c] sm:$0xf] %vm377, %v316
      %410 = vst.msk [vmem:[#allocation2 + $0x80] sm:$0xf] %vm377, %v317
      %411 = vst.msk [vmem:[#allocation2 + $0x84] sm:$0xf] %vm377, %v318
      %412 = vst.msk [vmem:[#allocation2 + $0x88] sm:$0xf] %vm377, %v319
      %413 = vst.msk [vmem:[#allocation2 + $0x8c] sm:$0xf] %vm377, %v320
      %414 = vst.msk [vmem:[#allocation2 + $0x90] sm:$0xf] %vm377, %v321
      %415 = vst.msk [vmem:[#allocation2 + $0x94] sm:$0xf] %vm377, %v322
      %416 = vst.msk [vmem:[#allocation2 + $0x98] sm:$0xf] %vm377, %v323
      %417 = vst.msk [vmem:[#allocation2 + $0x9c] sm:$0xf] %vm377, %v324
      %418 = vst.msk [vmem:[#allocation2 + $0xa0] sm:$0xf] %vm377, %v325
      %419 = vst.msk [vmem:[#allocation2 + $0xa4] sm:$0xf] %vm377, %v326
      %420 = vst.msk [vmem:[#allocation2 + $0xa8] sm:$0xf] %vm377, %v327
      %421 = vst.msk [vmem:[#allocation2 + $0xac] sm:$0xf] %vm377, %v328
      %422 = vst.msk [vmem:[#allocation2 + $0xb0] sm:$0xf] %vm377, %v329
      %423 = vst.msk [vmem:[#allocation2 + $0xb4] sm:$0xf] %vm377, %v330
      %424 = vst.msk [vmem:[#allocation2 + $0xb8] sm:$0xf] %vm377, %v331
      %425 = vst.msk [vmem:[#allocation2 + $0xbc] sm:$0xf] %vm377, %v332
      %426 = vst.msk [vmem:[#allocation2 + $0xc0] sm:$0xf] %vm377, %v333
      %427 = vst.msk [vmem:[#allocation2 + $0xc4] sm:$0xf] %vm377, %v334
      %428 = vst.msk [vmem:[#allocation2 + $0xc8] sm:$0xf] %vm377, %v335
      %429 = vst.msk [vmem:[#allocation2 + $0xcc] sm:$0xf] %vm377, %v336
      %430 = vst.msk [vmem:[#allocation2 + $0xd0] sm:$0xf] %vm377, %v337
      %431 = vst.msk [vmem:[#allocation2 + $0xd4] sm:$0xf] %vm377, %v338
      %432 = vst.msk [vmem:[#allocation2 + $0xd8] sm:$0xf] %vm377, %v339
      %433 = vst.msk [vmem:[#allocation2 + $0xdc] sm:$0xf] %vm377, %v340
      %434 = vst.msk [vmem:[#allocation2 + $0xe0] sm:$0xf] %vm377, %v341
      %435 = vst.msk [vmem:[#allocation2 + $0xe4] sm:$0xf] %vm377, %v342
      %436 = vst.msk [vmem:[#allocation2 + $0xe8] sm:$0xf] %vm377, %v343
      %437 = vst.msk [vmem:[#allocation2 + $0xec] sm:$0xf] %vm377, %v344
      %438 = vst.msk [vmem:[#allocation2 + $0xf0] sm:$0xf] %vm377, %v345
      %439 = vst.msk [vmem:[#allocation2 + $0xf4] sm:$0xf] %vm377, %v346
      %440 = vst.msk [vmem:[#allocation2 + $0xf8] sm:$0xf] %vm377, %v347
      %441 = vst.msk [vmem:[#allocation2 + $0xfc] sm:$0xf] %vm377, %v348
      %442 = vst.msk [vmem:[#allocation2 + $0x100] sm:$0xf] %vm377, %v349
      %443 = vst.msk [vmem:[#allocation2 + $0x104] sm:$0xf] %vm377, %v350
      %444 = vst.msk [vmem:[#allocation2 + $0x108] sm:$0xf] %vm377, %v351
      %445 = vst.msk [vmem:[#allocation2 + $0x10c] sm:$0xf] %vm377, %v352
      %446 = vst.msk [vmem:[#allocation2 + $0x110] sm:$0xf] %vm377, %v353
      %447 = vst.msk [vmem:[#allocation2 + $0x114] sm:$0xf] %vm377, %v354
      %448 = vst.msk [vmem:[#allocation2 + $0x118] sm:$0xf] %vm377, %v355
      %449 = vst.msk [vmem:[#allocation2 + $0x11c] sm:$0xf] %vm377, %v356
      %450 = vst.msk [vmem:[#allocation2 + $0x120] sm:$0xf] %vm377, %v357
      %451 = vst.msk [vmem:[#allocation2 + $0x124] sm:$0xf] %vm377, %v358
      %452 = vst.msk [vmem:[#allocation2 + $0x128] sm:$0xf] %vm377, %v359
      %453 = vst.msk [vmem:[#allocation2 + $0x12c] sm:$0xf] %vm377, %v360
      %454 = vst.msk [vmem:[#allocation2 + $0x130] sm:$0xf] %vm377, %v361
      %455 = vst.msk [vmem:[#allocation2 + $0x134] sm:$0xf] %vm377, %v362
      %456 = vst.msk [vmem:[#allocation2 + $0x138] sm:$0xf] %vm377, %v363
      %457 = vst.msk [vmem:[#allocation2 + $0x13c] sm:$0xf] %vm377, %v364
      %458 = vst.msk [vmem:[#allocation2 + $0x140] sm:$0xf] %vm377, %v365
      %459 = vst.msk [vmem:[#allocation2 + $0x144] sm:$0xf] %vm377, %v366
      %460 = vst.msk [vmem:[#allocation2 + $0x148] sm:$0xf] %vm377, %v367
      %461 = vst.msk [vmem:[#allocation2 + $0x14c] sm:$0xf] %vm377, %v368
      %462 = vst.msk [vmem:[#allocation2 + $0x150] sm:$0xf] %vm377, %v369
      %463 = vst.msk [vmem:[#allocation2 + $0x154] sm:$0xf] %vm377, %v370
      %464 = vst.msk [vmem:[#allocation2 + $0x158] sm:$0xf] %vm377, %v371
      %465 = vst.msk [vmem:[#allocation2 + $0x15c] sm:$0xf] %vm377, %v372
      %466 = vst.msk [vmem:[#allocation2 + $0x160] sm:$0xf] %vm377, %v373
      %467 = vst.msk [vmem:[#allocation2 + $0x164] sm:$0xf] %vm377, %v374
      %468 = vst.msk [vmem:[#allocation2 + $0x168] sm:$0xf] %vm377, %v375
      %469 = vst.msk [vmem:[#allocation2 + $0x16c] sm:$0xf] %vm377, %v376
      %v470 = vld [vmem:[%s275] sm:$0xf]
      %v471 = vld [vmem:[%s275 + $0x4] sm:$0xf]
      %v472 = vld [vmem:[%s275 + $0x8] sm:$0xf]
      %v473 = vld [vmem:[%s275 + $0xc] sm:$0xf]
      %v474 = vld [vmem:[%s275 + $0x10] sm:$0xf]
      %v475 = vld [vmem:[%s275 + $0x14] sm:$0xf]
      %v476 = vld [vmem:[%s275 + $0x18] sm:$0xf]
      %v477 = vld [vmem:[%s275 + $0x1c] sm:$0xf]
      %v478 = vld [vmem:[%s275 + $0x20] sm:$0xf]
      %v479 = vld [vmem:[%s275 + $0x24] sm:$0xf]
      %v480 = vld [vmem:[%s275 + $0x28] sm:$0xf]
      %v481 = vld [vmem:[%s275 + $0x2c] sm:$0xf]
      %v482 = vld [vmem:[%s275 + $0x30] sm:$0xf]
      %v483 = vld [vmem:[%s275 + $0x34] sm:$0xf]
      %v484 = vld [vmem:[%s275 + $0x38] sm:$0xf]
      %v485 = vld [vmem:[%s275 + $0x3c] sm:$0xf]
      %v486 = vld [vmem:[%s275 + $0x40] sm:$0xf]
      %v487 = vld [vmem:[%s275 + $0x44] sm:$0xf]
      %v488 = vld [vmem:[%s275 + $0x48] sm:$0xf]
      %v489 = vld [vmem:[%s275 + $0x4c] sm:$0xf]
      %v490 = vld [vmem:[%s275 + $0x50] sm:$0xf]
      %v491 = vld [vmem:[%s275 + $0x54] sm:$0xf]
      %v492 = vld [vmem:[%s275 + $0x58] sm:$0xf]
      %v493 = vld [vmem:[%s275 + $0x5c] sm:$0xf]
      %v494 = vld [vmem:[%s275 + $0x60] sm:$0xf]
      %v495 = vld [vmem:[%s275 + $0x64] sm:$0xf]
      %v496 = vld [vmem:[%s275 + $0x68] sm:$0xf]
      %v497 = vld [vmem:[%s275 + $0x6c] sm:$0xf]
      %v498 = vld [vmem:[%s275 + $0x70] sm:$0xf]
      %v499 = vld [vmem:[%s275 + $0x74] sm:$0xf]
      %v500 = vld [vmem:[%s275 + $0x78] sm:$0xf]
      %v501 = vld [vmem:[%s275 + $0x7c] sm:$0xf]
      %v502 = vld [vmem:[%s275 + $0x80] sm:$0xf]
      %v503 = vld [vmem:[%s275 + $0x84] sm:$0xf]
      %v504 = vld [vmem:[%s275 + $0x88] sm:$0xf]
      %v505 = vld [vmem:[%s275 + $0x8c] sm:$0xf]
      %v506 = vld [vmem:[%s275 + $0x90] sm:$0xf]
      %v507 = vld [vmem:[%s275 + $0x94] sm:$0xf]
      %v508 = vld [vmem:[%s275 + $0x98] sm:$0xf]
      %v509 = vld [vmem:[%s275 + $0x9c] sm:$0xf]
      %v510 = vld [vmem:[%s275 + $0xa0] sm:$0xf]
      %v511 = vld [vmem:[%s275 + $0xa4] sm:$0xf]
      %v512 = vld [vmem:[%s275 + $0xa8] sm:$0xf]
      %v513 = vld [vmem:[%s275 + $0xac] sm:$0xf]
      %v514 = vld [vmem:[%s275 + $0xb0] sm:$0xf]
      %v515 = vld [vmem:[%s275 + $0xb4] sm:$0xf]
      %v516 = vld [vmem:[%s275 + $0xb8] sm:$0xf]
      %v517 = vld [vmem:[%s275 + $0xbc] sm:$0xf]
      %v518 = vld [vmem:[%s275 + $0xc0] sm:$0xf]
      %v519 = vld [vmem:[%s275 + $0xc4] sm:$0xf]
      %v520 = vld [vmem:[%s275 + $0xc8] sm:$0xf]
      %v521 = vld [vmem:[%s275 + $0xcc] sm:$0xf]
      %v522 = vld [vmem:[%s275 + $0xd0] sm:$0xf]
      %v523 = vld [vmem:[%s275 + $0xd4] sm:$0xf]
      %v524 = vld [vmem:[%s275 + $0xd8] sm:$0xf]
      %v525 = vld [vmem:[%s275 + $0xdc] sm:$0xf]
      %v526 = vld [vmem:[%s275 + $0xe0] sm:$0xf]
      %v527 = vld [vmem:[%s275 + $0xe4] sm:$0xf]
      %v528 = vld [vmem:[%s275 + $0xe8] sm:$0xf]
      %v529 = vld [vmem:[%s275 + $0xec] sm:$0xf]
      %v530 = vld [vmem:[%s275 + $0xf0] sm:$0xf]
      %v531 = vld [vmem:[%s275 + $0xf4] sm:$0xf]
      %v532 = vld [vmem:[%s275 + $0xf8] sm:$0xf]
      %v533 = vld [vmem:[%s275 + $0xfc] sm:$0xf]
      %v534 = vld [vmem:[%s275 + $0x100] sm:$0xf]
      %v535 = vld [vmem:[%s275 + $0x104] sm:$0xf]
      %v536 = vld [vmem:[%s275 + $0x108] sm:$0xf]
      %v537 = vld [vmem:[%s275 + $0x10c] sm:$0xf]
      %v538 = vld [vmem:[%s275 + $0x110] sm:$0xf]
      %v539 = vld [vmem:[%s275 + $0x114] sm:$0xf]
      %v540 = vld [vmem:[%s275 + $0x118] sm:$0xf]
      %v541 = vld [vmem:[%s275 + $0x11c] sm:$0xf]
      %v542 = vld [vmem:[%s275 + $0x120] sm:$0xf]
      %v543 = vld [vmem:[%s275 + $0x124] sm:$0xf]
      %v544 = vld [vmem:[%s275 + $0x128] sm:$0xf]
      %v545 = vld [vmem:[%s275 + $0x12c] sm:$0xf]
      %v546 = vld [vmem:[%s275 + $0x130] sm:$0xf]
      %v547 = vld [vmem:[%s275 + $0x134] sm:$0xf]
      %v548 = vld [vmem:[%s275 + $0x138] sm:$0xf]
      %v549 = vld [vmem:[%s275 + $0x13c] sm:$0xf]
      %v550 = vld [vmem:[%s275 + $0x140] sm:$0xf]
      %v551 = vld [vmem:[%s275 + $0x144] sm:$0xf]
      %v552 = vld [vmem:[%s275 + $0x148] sm:$0xf]
      %v553 = vld [vmem:[%s275 + $0x14c] sm:$0xf]
      %v554 = vld [vmem:[%s275 + $0x150] sm:$0xf]
      %v555 = vld [vmem:[%s275 + $0x154] sm:$0xf]
      %v556 = vld [vmem:[%s275 + $0x158] sm:$0xf]
      %v557 = vld [vmem:[%s275 + $0x15c] sm:$0xf]
      %v558 = vld [vmem:[%s275 + $0x160] sm:$0xf]
      %v559 = vld [vmem:[%s275 + $0x164] sm:$0xf]
      %v560 = vld [vmem:[%s275 + $0x168] sm:$0xf]
      %v561 = vld [vmem:[%s275 + $0x16c] sm:$0xf]
      %562 = vst.msk [vmem:[#allocation2 + $0x170] sm:$0xf] %vm377, %v470
      %563 = vst.msk [vmem:[#allocation2 + $0x174] sm:$0xf] %vm377, %v471
      %564 = vst.msk [vmem:[#allocation2 + $0x178] sm:$0xf] %vm377, %v472
      %565 = vst.msk [vmem:[#allocation2 + $0x17c] sm:$0xf] %vm377, %v473
      %566 = vst.msk [vmem:[#allocation2 + $0x180] sm:$0xf] %vm377, %v474
      %567 = vst.msk [vmem:[#allocation2 + $0x184] sm:$0xf] %vm377, %v475
      %568 = vst.msk [vmem:[#allocation2 + $0x188] sm:$0xf] %vm377, %v476
      %569 = vst.msk [vmem:[#allocation2 + $0x18c] sm:$0xf] %vm377, %v477
      %570 = vst.msk [vmem:[#allocation2 + $0x190] sm:$0xf] %vm377, %v478
      %571 = vst.msk [vmem:[#allocation2 + $0x194] sm:$0xf] %vm377, %v479
      %572 = vst.msk [vmem:[#allocation2 + $0x198] sm:$0xf] %vm377, %v480
      %573 = vst.msk [vmem:[#allocation2 + $0x19c] sm:$0xf] %vm377, %v481
      %574 = vst.msk [vmem:[#allocation2 + $0x1a0] sm:$0xf] %vm377, %v482
      %575 = vst.msk [vmem:[#allocation2 + $0x1a4] sm:$0xf] %vm377, %v483
      %576 = vst.msk [vmem:[#allocation2 + $0x1a8] sm:$0xf] %vm377, %v484
      %577 = vst.msk [vmem:[#allocation2 + $0x1ac] sm:$0xf] %vm377, %v485
      %578 = vst.msk [vmem:[#allocation2 + $0x1b0] sm:$0xf] %vm377, %v486
      %579 = vst.msk [vmem:[#allocation2 + $0x1b4] sm:$0xf] %vm377, %v487
      %580 = vst.msk [vmem:[#allocation2 + $0x1b8] sm:$0xf] %vm377, %v488
      %581 = vst.msk [vmem:[#allocation2 + $0x1bc] sm:$0xf] %vm377, %v489
      %582 = vst.msk [vmem:[#allocation2 + $0x1c0] sm:$0xf] %vm377, %v490
      %583 = vst.msk [vmem:[#allocation2 + $0x1c4] sm:$0xf] %vm377, %v491
      %584 = vst.msk [vmem:[#allocation2 + $0x1c8] sm:$0xf] %vm377, %v492
      %585 = vst.msk [vmem:[#allocation2 + $0x1cc] sm:$0xf] %vm377, %v493
      %586 = vst.msk [vmem:[#allocation2 + $0x1d0] sm:$0xf] %vm377, %v494
      %587 = vst.msk [vmem:[#allocation2 + $0x1d4] sm:$0xf] %vm377, %v495
      %588 = vst.msk [vmem:[#allocation2 + $0x1d8] sm:$0xf] %vm377, %v496
      %589 = vst.msk [vmem:[#allocation2 + $0x1dc] sm:$0xf] %vm377, %v497
      %590 = vst.msk [vmem:[#allocation2 + $0x1e0] sm:$0xf] %vm377, %v498
      %591 = vst.msk [vmem:[#allocation2 + $0x1e4] sm:$0xf] %vm377, %v499
      %592 = vst.msk [vmem:[#allocation2 + $0x1e8] sm:$0xf] %vm377, %v500
      %593 = vst.msk [vmem:[#allocation2 + $0x1ec] sm:$0xf] %vm377, %v501
      %594 = vst.msk [vmem:[#allocation2 + $0x1f0] sm:$0xf] %vm377, %v502
      %595 = vst.msk [vmem:[#allocation2 + $0x1f4] sm:$0xf] %vm377, %v503
      %596 = vst.msk [vmem:[#allocation2 + $0x1f8] sm:$0xf] %vm377, %v504
      %597 = vst.msk [vmem:[#allocation2 + $0x1fc] sm:$0xf] %vm377, %v505
      %598 = vst.msk [vmem:[#allocation2 + $0x200] sm:$0xf] %vm377, %v506
      %599 = vst.msk [vmem:[#allocation2 + $0x204] sm:$0xf] %vm377, %v507
      %600 = vst.msk [vmem:[#allocation2 + $0x208] sm:$0xf] %vm377, %v508
      %601 = vst.msk [vmem:[#allocation2 + $0x20c] sm:$0xf] %vm377, %v509
      %602 = vst.msk [vmem:[#allocation2 + $0x210] sm:$0xf] %vm377, %v510
      %603 = vst.msk [vmem:[#allocation2 + $0x214] sm:$0xf] %vm377, %v511
      %604 = vst.msk [vmem:[#allocation2 + $0x218] sm:$0xf] %vm377, %v512
      %605 = vst.msk [vmem:[#allocation2 + $0x21c] sm:$0xf] %vm377, %v513
      %606 = vst.msk [vmem:[#allocation2 + $0x220] sm:$0xf] %vm377, %v514
      %607 = vst.msk [vmem:[#allocation2 + $0x224] sm:$0xf] %vm377, %v515
      %608 = vst.msk [vmem:[#allocation2 + $0x228] sm:$0xf] %vm377, %v516
      %609 = vst.msk [vmem:[#allocation2 + $0x22c] sm:$0xf] %vm377, %v517
      %610 = vst.msk [vmem:[#allocation2 + $0x230] sm:$0xf] %vm377, %v518
      %611 = vst.msk [vmem:[#allocation2 + $0x234] sm:$0xf] %vm377, %v519
      %612 = vst.msk [vmem:[#allocation2 + $0x238] sm:$0xf] %vm377, %v520
      %613 = vst.msk [vmem:[#allocation2 + $0x23c] sm:$0xf] %vm377, %v521
      %614 = vst.msk [vmem:[#allocation2 + $0x240] sm:$0xf] %vm377, %v522
      %615 = vst.msk [vmem:[#allocation2 + $0x244] sm:$0xf] %vm377, %v523
      %616 = vst.msk [vmem:[#allocation2 + $0x248] sm:$0xf] %vm377, %v524
      %617 = vst.msk [vmem:[#allocation2 + $0x24c] sm:$0xf] %vm377, %v525
      %618 = vst.msk [vmem:[#allocation2 + $0x250] sm:$0xf] %vm377, %v526
      %619 = vst.msk [vmem:[#allocation2 + $0x254] sm:$0xf] %vm377, %v527
      %620 = vst.msk [vmem:[#allocation2 + $0x258] sm:$0xf] %vm377, %v528
      %621 = vst.msk [vmem:[#allocation2 + $0x25c] sm:$0xf] %vm377, %v529
      %622 = vst.msk [vmem:[#allocation2 + $0x260] sm:$0xf] %vm377, %v530
      %623 = vst.msk [vmem:[#allocation2 + $0x264] sm:$0xf] %vm377, %v531
      %624 = vst.msk [vmem:[#allocation2 + $0x268] sm:$0xf] %vm377, %v532
      %625 = vst.msk [vmem:[#allocation2 + $0x26c] sm:$0xf] %vm377, %v533
      %626 = vst.msk [vmem:[#allocation2 + $0x270] sm:$0xf] %vm377, %v534
      %627 = vst.msk [vmem:[#allocation2 + $0x274] sm:$0xf] %vm377, %v535
      %628 = vst.msk [vmem:[#allocation2 + $0x278] sm:$0xf] %vm377, %v536
      %629 = vst.msk [vmem:[#allocation2 + $0x27c] sm:$0xf] %vm377, %v537
      %630 = vst.msk [vmem:[#allocation2 + $0x280] sm:$0xf] %vm377, %v538
      %631 = vst.msk [vmem:[#allocation2 + $0x284] sm:$0xf] %vm377, %v539
      %632 = vst.msk [vmem:[#allocation2 + $0x288] sm:$0xf] %vm377, %v540
      %633 = vst.msk [vmem:[#allocation2 + $0x28c] sm:$0xf] %vm377, %v541
      %634 = vst.msk [vmem:[#allocation2 + $0x290] sm:$0xf] %vm377, %v542
      %635 = vst.msk [vmem:[#allocation2 + $0x294] sm:$0xf] %vm377, %v543
      %636 = vst.msk [vmem:[#allocation2 + $0x298] sm:$0xf] %vm377, %v544
      %637 = vst.msk [vmem:[#allocation2 + $0x29c] sm:$0xf] %vm377, %v545
      %638 = vst.msk [vmem:[#allocation2 + $0x2a0] sm:$0xf] %vm377, %v546
      %639 = vst.msk [vmem:[#allocation2 + $0x2a4] sm:$0xf] %vm377, %v547
      %640 = vst.msk [vmem:[#allocation2 + $0x2a8] sm:$0xf] %vm377, %v548
      %641 = vst.msk [vmem:[#allocation2 + $0x2ac] sm:$0xf] %vm377, %v549
      %642 = vst.msk [vmem:[#allocation2 + $0x2b0] sm:$0xf] %vm377, %v550
      %643 = vst.msk [vmem:[#allocation2 + $0x2b4] sm:$0xf] %vm377, %v551
      %644 = vst.msk [vmem:[#allocation2 + $0x2b8] sm:$0xf] %vm377, %v552
      %645 = vst.msk [vmem:[#allocation2 + $0x2bc] sm:$0xf] %vm377, %v553
      %646 = vst.msk [vmem:[#allocation2 + $0x2c0] sm:$0xf] %vm377, %v554
      %647 = vst.msk [vmem:[#allocation2 + $0x2c4] sm:$0xf] %vm377, %v555
      %648 = vst.msk [vmem:[#allocation2 + $0x2c8] sm:$0xf] %vm377, %v556
      %649 = vst.msk [vmem:[#allocation2 + $0x2cc] sm:$0xf] %vm377, %v557
      %650 = vst.msk [vmem:[#allocation2 + $0x2d0] sm:$0xf] %vm377, %v558
      %651 = vst.msk [vmem:[#allocation2 + $0x2d4] sm:$0xf] %vm377, %v559
      %652 = vst.msk [vmem:[#allocation2 + $0x2d8] sm:$0xf] %vm377, %v560
      %653 = vst.msk [vmem:[#allocation2 + $0x2dc] sm:$0xf] %vm377, %v561
      %v654 = vld [vmem:[#allocation2] sm:$0xf]
      %v655 = vld [vmem:[#allocation2 + $0x4] sm:$0xf]
      %v656 = vld [vmem:[#allocation2 + $0x8] sm:$0xf]
      %v657 = vld [vmem:[#allocation2 + $0xc] sm:$0xf]
      %v658 = vld [vmem:[#allocation2 + $0x10] sm:$0xf]
      %v659 = vld [vmem:[#allocation2 + $0x14] sm:$0xf]
      %v660 = vld [vmem:[#allocation2 + $0x18] sm:$0xf]
      %v661 = vld [vmem:[#allocation2 + $0x1c] sm:$0xf]
      %v662 = vld [vmem:[#allocation2 + $0x20] sm:$0xf]
      %v663 = vld [vmem:[#allocation2 + $0x24] sm:$0xf]
      %v664 = vld [vmem:[#allocation2 + $0x28] sm:$0xf]
      %v665 = vld [vmem:[#allocation2 + $0x2c] sm:$0xf]
      %v666 = vld [vmem:[#allocation2 + $0x30] sm:$0xf]
      %v667 = vld [vmem:[#allocation2 + $0x34] sm:$0xf]
      %v668 = vld [vmem:[#allocation2 + $0x38] sm:$0xf]
      %v669 = vld [vmem:[#allocation2 + $0x3c] sm:$0xf]
      %v670 = vld [vmem:[#allocation2 + $0x40] sm:$0xf]
      %v671 = vld [vmem:[#allocation2 + $0x44] sm:$0xf]
      %v672 = vld [vmem:[#allocation2 + $0x48] sm:$0xf]
      %v673 = vld [vmem:[#allocation2 + $0x4c] sm:$0xf]
      %v674 = vld [vmem:[#allocation2 + $0x50] sm:$0xf]
      %v675 = vld [vmem:[#allocation2 + $0x54] sm:$0xf]
      %v676 = vld [vmem:[#allocation2 + $0x58] sm:$0xf]
      %v677 = vld [vmem:[#allocation2 + $0x5c] sm:$0xf]
      %v678 = vld [vmem:[#allocation2 + $0x60] sm:$0xf]
      %v679 = vld [vmem:[#allocation2 + $0x64] sm:$0xf]
      %v680 = vld [vmem:[#allocation2 + $0x68] sm:$0xf]
      %v681 = vld [vmem:[#allocation2 + $0x6c] sm:$0xf]
      %v682 = vld [vmem:[#allocation2 + $0x70] sm:$0xf]
      %v683 = vld [vmem:[#allocation2 + $0x74] sm:$0xf]
      %v684 = vld [vmem:[#allocation2 + $0x78] sm:$0xf]
      %v685 = vld [vmem:[#allocation2 + $0x7c] sm:$0xf]
      %v686 = vld [vmem:[#allocation2 + $0x80] sm:$0xf]
      %v687 = vld [vmem:[#allocation2 + $0x84] sm:$0xf]
      %v688 = vld [vmem:[#allocation2 + $0x88] sm:$0xf]
      %v689 = vld [vmem:[#allocation2 + $0x8c] sm:$0xf]
      %v690 = vld [vmem:[#allocation2 + $0x90] sm:$0xf]
      %v691 = vld [vmem:[#allocation2 + $0x94] sm:$0xf]
      %v692 = vld [vmem:[#allocation2 + $0x98] sm:$0xf]
      %v693 = vld [vmem:[#allocation2 + $0x9c] sm:$0xf]
      %v694 = vld [vmem:[#allocation2 + $0xa0] sm:$0xf]
      %v695 = vld [vmem:[#allocation2 + $0xa4] sm:$0xf]
      %v696 = vld [vmem:[#allocation2 + $0xa8] sm:$0xf]
      %v697 = vld [vmem:[#allocation2 + $0xac] sm:$0xf]
      %v698 = vld [vmem:[#allocation2 + $0xb0] sm:$0xf]
      %v699 = vld [vmem:[#allocation2 + $0xb4] sm:$0xf]
      %v700 = vld [vmem:[#allocation2 + $0xb8] sm:$0xf]
      %v701 = vld [vmem:[#allocation2 + $0xbc] sm:$0xf]
      %v702 = vld [vmem:[#allocation2 + $0xc0] sm:$0xf]
      %v703 = vld [vmem:[#allocation2 + $0xc4] sm:$0xf]
      %v704 = vld [vmem:[#allocation2 + $0xc8] sm:$0xf]
      %v705 = vld [vmem:[#allocation2 + $0xcc] sm:$0xf]
      %v706 = vld [vmem:[#allocation2 + $0xd0] sm:$0xf]
      %v707 = vld [vmem:[#allocation2 + $0xd4] sm:$0xf]
      %v708 = vld [vmem:[#allocation2 + $0xd8] sm:$0xf]
      %v709 = vld [vmem:[#allocation2 + $0xdc] sm:$0xf]
      %v710 = vld [vmem:[#allocation2 + $0xe0] sm:$0xf]
      %v711 = vld [vmem:[#allocation2 + $0xe4] sm:$0xf]
      %v712 = vld [vmem:[#allocation2 + $0xe8] sm:$0xf]
      %v713 = vld [vmem:[#allocation2 + $0xec] sm:$0xf]
      %v714 = vld [vmem:[#allocation2 + $0xf0] sm:$0xf]
      %v715 = vld [vmem:[#allocation2 + $0xf4] sm:$0xf]
      %v716 = vld [vmem:[#allocation2 + $0xf8] sm:$0xf]
      %v717 = vld [vmem:[#allocation2 + $0xfc] sm:$0xf]
      %v718 = vld [vmem:[#allocation2 + $0x100] sm:$0xf]
      %v719 = vld [vmem:[#allocation2 + $0x104] sm:$0xf]
      %v720 = vld [vmem:[#allocation2 + $0x108] sm:$0xf]
      %v721 = vld [vmem:[#allocation2 + $0x10c] sm:$0xf]
      %v722 = vld [vmem:[#allocation2 + $0x110] sm:$0xf]
      %v723 = vld [vmem:[#allocation2 + $0x114] sm:$0xf]
      %v724 = vld [vmem:[#allocation2 + $0x118] sm:$0xf]
      %v725 = vld [vmem:[#allocation2 + $0x11c] sm:$0xf]
      %v726 = vld [vmem:[#allocation2 + $0x120] sm:$0xf]
      %v727 = vld [vmem:[#allocation2 + $0x124] sm:$0xf]
      %v728 = vld [vmem:[#allocation2 + $0x128] sm:$0xf]
      %v729 = vld [vmem:[#allocation2 + $0x12c] sm:$0xf]
      %v730 = vld [vmem:[#allocation2 + $0x130] sm:$0xf]
      %v731 = vld [vmem:[#allocation2 + $0x134] sm:$0xf]
      %v732 = vld [vmem:[#allocation2 + $0x138] sm:$0xf]
      %v733 = vld [vmem:[#allocation2 + $0x13c] sm:$0xf]
      %v734 = vld [vmem:[#allocation2 + $0x140] sm:$0xf]
      %v735 = vld [vmem:[#allocation2 + $0x144] sm:$0xf]
      %v736 = vld [vmem:[#allocation2 + $0x148] sm:$0xf]
      %v737 = vld [vmem:[#allocation2 + $0x14c] sm:$0xf]
      %v738 = vld [vmem:[#allocation2 + $0x150] sm:$0xf]
      %v739 = vld [vmem:[#allocation2 + $0x154] sm:$0xf]
      %v740 = vld [vmem:[#allocation2 + $0x158] sm:$0xf]
      %v741 = vld [vmem:[#allocation2 + $0x15c] sm:$0xf]
      %v742 = vld [vmem:[#allocation2 + $0x160] sm:$0xf]
      %v743 = vld [vmem:[#allocation2 + $0x164] sm:$0xf]
      %v744 = vld [vmem:[#allocation2 + $0x168] sm:$0xf]
      %v745 = vld [vmem:[#allocation2 + $0x16c] sm:$0xf]
      %v746 = vld [vmem:[%s2] sm:$0xf]
      %v747 = vld [vmem:[#allocation2 + $0x170] sm:$0x1]
      %s748 = scalar_lea.vmem %s2, 4
      %v749 = vld [vmem:[%s748] sm:$0xf]
      %v843 = vunpack.c.l.b16 %v654
      %v844 = vunpack.c.l.b16 %v655
      %v845 = vunpack.c.l.b16 %v656
      %v846 = vunpack.c.l.b16 %v657
      %v847 = vunpack.c.l.b16 %v658
      %v848 = vunpack.c.l.b16 %v659
      %v849 = vunpack.c.l.b16 %v660
      %v850 = vunpack.c.l.b16 %v661
      %v851 = vunpack.c.l.b16 %v662
      %v852 = vunpack.c.l.b16 %v663
      %v853 = vunpack.c.l.b16 %v664
      %v854 = vunpack.c.l.b16 %v665
      %v855 = vunpack.c.l.b16 %v666
      %v856 = vunpack.c.l.b16 %v667
      %v857 = vunpack.c.l.b16 %v668
      %v858 = vunpack.c.l.b16 %v669
      %v859 = vunpack.c.l.b16 %v670
      %v860 = vunpack.c.l.b16 %v671
      %v861 = vunpack.c.l.b16 %v672
      %v862 = vunpack.c.l.b16 %v673
      %v863 = vunpack.c.l.b16 %v674
      %v864 = vunpack.c.l.b16 %v675
      %v865 = vunpack.c.l.b16 %v676
      %v866 = vunpack.c.l.b16 %v677
      %v867 = vunpack.c.l.b16 %v678
      %v868 = vunpack.c.l.b16 %v679
      %v869 = vunpack.c.l.b16 %v680
      %v870 = vunpack.c.l.b16 %v681
      %v871 = vunpack.c.l.b16 %v682
      %v872 = vunpack.c.l.b16 %v683
      %v873 = vunpack.c.l.b16 %v684
      %v874 = vunpack.c.l.b16 %v685
      %v875 = vunpack.c.l.b16 %v686
      %v876 = vunpack.c.l.b16 %v687
      %v877 = vunpack.c.l.b16 %v688
      %v878 = vunpack.c.l.b16 %v689
      %v879 = vunpack.c.l.b16 %v690
      %v880 = vunpack.c.l.b16 %v691
      %v881 = vunpack.c.l.b16 %v692
      %v882 = vunpack.c.l.b16 %v693
      %v883 = vunpack.c.l.b16 %v694
      %v884 = vunpack.c.l.b16 %v695
      %v885 = vunpack.c.l.b16 %v696
      %v886 = vunpack.c.l.b16 %v697
      %v887 = vunpack.c.l.b16 %v698
      %v888 = vunpack.c.l.b16 %v699
      %v889 = vunpack.c.l.b16 %v700
      %v890 = vunpack.c.l.b16 %v701
      %v891 = vunpack.c.l.b16 %v702
      %v892 = vunpack.c.l.b16 %v703
      %v893 = vunpack.c.l.b16 %v704
      %v894 = vunpack.c.l.b16 %v705
      %v895 = vunpack.c.l.b16 %v706
      %v896 = vunpack.c.l.b16 %v707
      %v897 = vunpack.c.l.b16 %v708
      %v898 = vunpack.c.l.b16 %v709
      %v899 = vunpack.c.l.b16 %v710
      %v900 = vunpack.c.l.b16 %v711
      %v901 = vunpack.c.l.b16 %v712
      %v902 = vunpack.c.l.b16 %v713
      %v903 = vunpack.c.l.b16 %v714
      %v904 = vunpack.c.l.b16 %v715
      %v905 = vunpack.c.l.b16 %v716
      %v906 = vunpack.c.l.b16 %v717
      %v907 = vunpack.c.l.b16 %v718
      %v908 = vunpack.c.l.b16 %v719
      %v909 = vunpack.c.l.b16 %v720
      %v910 = vunpack.c.l.b16 %v721
      %v911 = vunpack.c.l.b16 %v722
      %v912 = vunpack.c.l.b16 %v723
      %v913 = vunpack.c.l.b16 %v724
      %v914 = vunpack.c.l.b16 %v725
      %v915 = vunpack.c.l.b16 %v726
      %v916 = vunpack.c.l.b16 %v727
      %v917 = vunpack.c.l.b16 %v728
      %v918 = vunpack.c.l.b16 %v729
      %v919 = vunpack.c.l.b16 %v730
      %v920 = vunpack.c.l.b16 %v731
      %v921 = vunpack.c.l.b16 %v732
      %v922 = vunpack.c.l.b16 %v733
      %v923 = vunpack.c.l.b16 %v734
      %v924 = vunpack.c.l.b16 %v735
      %v925 = vunpack.c.l.b16 %v736
      %v926 = vunpack.c.l.b16 %v737
      %v927 = vunpack.c.l.b16 %v738
      %v928 = vunpack.c.l.b16 %v739
      %v929 = vunpack.c.l.b16 %v740
      %v930 = vunpack.c.l.b16 %v741
      %v931 = vunpack.c.l.b16 %v742
      %v932 = vunpack.c.l.b16 %v743
      %v933 = vunpack.c.l.b16 %v744
      %v934 = vunpack.c.l.b16 %v745
      %v935 = vunpack.c.l.b16 %v747
      %v936 = vpack.c.b16 %v844, %v843
      %v937 = vpack.c.b16 %v846, %v845
      %v938 = vpack.c.b16 %v848, %v847
      %v939 = vpack.c.b16 %v850, %v849
      %v940 = vpack.c.b16 %v852, %v851
      %v941 = vpack.c.b16 %v854, %v853
      %v942 = vpack.c.b16 %v856, %v855
      %v943 = vpack.c.b16 %v858, %v857
      %v944 = vpack.c.b16 %v860, %v859
      %v945 = vpack.c.b16 %v862, %v861
      %v946 = vpack.c.b16 %v864, %v863
      %v947 = vpack.c.b16 %v866, %v865
      %v948 = vpack.c.b16 %v868, %v867
      %v949 = vpack.c.b16 %v870, %v869
      %v950 = vpack.c.b16 %v872, %v871
      %v951 = vpack.c.b16 %v874, %v873
      %v952 = vpack.c.b16 %v876, %v875
      %v953 = vpack.c.b16 %v878, %v877
      %v954 = vpack.c.b16 %v880, %v879
      %v955 = vpack.c.b16 %v882, %v881
      %v956 = vpack.c.b16 %v884, %v883
      %v957 = vpack.c.b16 %v886, %v885
      %v958 = vpack.c.b16 %v888, %v887
      %v959 = vpack.c.b16 %v890, %v889
      %v960 = vpack.c.b16 %v892, %v891
      %v961 = vpack.c.b16 %v894, %v893
      %v962 = vpack.c.b16 %v896, %v895
      %v963 = vpack.c.b16 %v898, %v897
      %v964 = vpack.c.b16 %v900, %v899
      %v965 = vpack.c.b16 %v902, %v901
      %v966 = vpack.c.b16 %v904, %v903
      %v967 = vpack.c.b16 %v906, %v905
      %v968 = vpack.c.b16 %v908, %v907
      %v969 = vpack.c.b16 %v910, %v909
      %v970 = vpack.c.b16 %v912, %v911
      %v971 = vpack.c.b16 %v914, %v913
      %v972 = vpack.c.b16 %v916, %v915
      %v973 = vpack.c.b16 %v918, %v917
      %v974 = vpack.c.b16 %v920, %v919
      %v975 = vpack.c.b16 %v922, %v921
      %v976 = vpack.c.b16 %v924, %v923
      %v977 = vpack.c.b16 %v926, %v925
      %v978 = vpack.c.b16 %v928, %v927
      %v979 = vpack.c.b16 %v930, %v929
      %v980 = vpack.c.b16 %v932, %v931
      %v981 = vpack.c.b16 %v934, %v933
      %v982 = vpack.c.b16 %v935, %v935
      %vm983 = vsmask.f32 7424
      %v985 = vshrl.u32 %v936, 16
      %v987 = vshll.u32 %v936, 16
      %v989 = vrot.slane %v987, 1
      %v990 = vor.u32 %v985, %v989
      %v992 = vshll.u32 %v937, 16
      %v994 = vrot.slane %v992, 1
      %v995 = vsel %vm983, %v990, %v994
      %v996 = vshrl.u32 %v937, 16
      %v998 = vor.u32 %v996, %v994
      %v1000 = vshll.u32 %v938, 16
      %v1002 = vrot.slane %v1000, 1
      %v1003 = vsel %vm983, %v998, %v1002
      %v1004 = vshrl.u32 %v938, 16
      %v1006 = vor.u32 %v1004, %v1002
      %v1008 = vshll.u32 %v939, 16
      %v1010 = vrot.slane %v1008, 1
      %v1011 = vsel %vm983, %v1006, %v1010
      %v1012 = vshrl.u32 %v939, 16
      %v1014 = vor.u32 %v1012, %v1010
      %v1016 = vshll.u32 %v940, 16
      %v1018 = vrot.slane %v1016, 1
      %v1019 = vsel %vm983, %v1014, %v1018
      %v1020 = vshrl.u32 %v940, 16
      %v1022 = vor.u32 %v1020, %v1018
      %v1024 = vshll.u32 %v941, 16
      %v1026 = vrot.slane %v1024, 1
      %v1027 = vsel %vm983, %v1022, %v1026
      %v1028 = vshrl.u32 %v941, 16
      %v1030 = vor.u32 %v1028, %v1026
      %v1032 = vshll.u32 %v942, 16
      %v1034 = vrot.slane %v1032, 1
      %v1035 = vsel %vm983, %v1030, %v1034
      %v1036 = vshrl.u32 %v942, 16
      %v1038 = vor.u32 %v1036, %v1034
      %v1040 = vshll.u32 %v943, 16
      %v1042 = vrot.slane %v1040, 1
      %v1043 = vsel %vm983, %v1038, %v1042
      %v1044 = vshrl.u32 %v943, 16
      %v1046 = vor.u32 %v1044, %v1042
      %v1048 = vshll.u32 %v944, 16
      %v1050 = vrot.slane %v1048, 1
      %v1051 = vsel %vm983, %v1046, %v1050
      %v1052 = vshrl.u32 %v944, 16
      %v1054 = vor.u32 %v1052, %v1050
      %v1056 = vshll.u32 %v945, 16
      %v1058 = vrot.slane %v1056, 1
      %v1059 = vsel %vm983, %v1054, %v1058
      %v1060 = vshrl.u32 %v945, 16
      %v1062 = vor.u32 %v1060, %v1058
      %v1064 = vshll.u32 %v946, 16
      %v1066 = vrot.slane %v1064, 1
      %v1067 = vsel %vm983, %v1062, %v1066
      %v1068 = vshrl.u32 %v946, 16
      %v1070 = vor.u32 %v1068, %v1066
      %v1072 = vshll.u32 %v947, 16
      %v1074 = vrot.slane %v1072, 1
      %v1075 = vsel %vm983, %v1070, %v1074
      %v1076 = vshrl.u32 %v947, 16
      %v1078 = vor.u32 %v1076, %v1074
      %v1080 = vshll.u32 %v948, 16
      %v1082 = vrot.slane %v1080, 1
      %v1083 = vsel %vm983, %v1078, %v1082
      %v1084 = vshrl.u32 %v948, 16
      %v1086 = vor.u32 %v1084, %v1082
      %v1088 = vshll.u32 %v949, 16
      %v1090 = vrot.slane %v1088, 1
      %v1091 = vsel %vm983, %v1086, %v1090
      %v1092 = vshrl.u32 %v949, 16
      %v1094 = vor.u32 %v1092, %v1090
      %v1096 = vshll.u32 %v950, 16
      %v1098 = vrot.slane %v1096, 1
      %v1099 = vsel %vm983, %v1094, %v1098
      %v1100 = vshrl.u32 %v950, 16
      %v1102 = vor.u32 %v1100, %v1098
      %v1104 = vshll.u32 %v951, 16
      %v1106 = vrot.slane %v1104, 1
      %v1107 = vsel %vm983, %v1102, %v1106
      %v1108 = vshrl.u32 %v951, 16
      %v1110 = vor.u32 %v1108, %v1106
      %v1112 = vshll.u32 %v952, 16
      %v1114 = vrot.slane %v1112, 1
      %v1115 = vsel %vm983, %v1110, %v1114
      %v1116 = vshrl.u32 %v952, 16
      %v1118 = vor.u32 %v1116, %v1114
      %v1120 = vshll.u32 %v953, 16
      %v1122 = vrot.slane %v1120, 1
      %v1123 = vsel %vm983, %v1118, %v1122
      %v1124 = vshrl.u32 %v953, 16
      %v1126 = vor.u32 %v1124, %v1122
      %v1128 = vshll.u32 %v954, 16
      %v1130 = vrot.slane %v1128, 1
      %v1131 = vsel %vm983, %v1126, %v1130
      %v1132 = vshrl.u32 %v954, 16
      %v1134 = vor.u32 %v1132, %v1130
      %v1136 = vshll.u32 %v955, 16
      %v1138 = vrot.slane %v1136, 1
      %v1139 = vsel %vm983, %v1134, %v1138
      %v1140 = vshrl.u32 %v955, 16
      %v1142 = vor.u32 %v1140, %v1138
      %v1144 = vshll.u32 %v956, 16
      %v1146 = vrot.slane %v1144, 1
      %v1147 = vsel %vm983, %v1142, %v1146
      %v1148 = vshrl.u32 %v956, 16
      %v1150 = vor.u32 %v1148, %v1146
      %v1152 = vshll.u32 %v957, 16
      %v1154 = vrot.slane %v1152, 1
      %v1155 = vsel %vm983, %v1150, %v1154
      %v1156 = vshrl.u32 %v957, 16
      %v1158 = vor.u32 %v1156, %v1154
      %v1160 = vshll.u32 %v958, 16
      %v1162 = vrot.slane %v1160, 1
      %v1163 = vsel %vm983, %v1158, %v1162
      %v1164 = vshrl.u32 %v958, 16
      %v1166 = vor.u32 %v1164, %v1162
      %v1168 = vshll.u32 %v959, 16
      %v1170 = vrot.slane %v1168, 1
      %v1171 = vsel %vm983, %v1166, %v1170
      %v1172 = vshrl.u32 %v959, 16
      %v1174 = vor.u32 %v1172, %v1170
      %v1176 = vshll.u32 %v960, 16
      %v1178 = vrot.slane %v1176, 1
      %v1179 = vsel %vm983, %v1174, %v1178
      %v1180 = vshrl.u32 %v960, 16
      %v1182 = vor.u32 %v1180, %v1178
      %v1184 = vshll.u32 %v961, 16
      %v1186 = vrot.slane %v1184, 1
      %v1187 = vsel %vm983, %v1182, %v1186
      %v1188 = vshrl.u32 %v961, 16
      %v1190 = vor.u32 %v1188, %v1186
      %v1192 = vshll.u32 %v962, 16
      %v1194 = vrot.slane %v1192, 1
      %v1195 = vsel %vm983, %v1190, %v1194
      %v1196 = vshrl.u32 %v962, 16
      %v1198 = vor.u32 %v1196, %v1194
      %v1200 = vshll.u32 %v963, 16
      %v1202 = vrot.slane %v1200, 1
      %v1203 = vsel %vm983, %v1198, %v1202
      %v1204 = vshrl.u32 %v963, 16
      %v1206 = vor.u32 %v1204, %v1202
      %v1208 = vshll.u32 %v964, 16
      %v1210 = vrot.slane %v1208, 1
      %v1211 = vsel %vm983, %v1206, %v1210
      %v1212 = vshrl.u32 %v964, 16
      %v1214 = vor.u32 %v1212, %v1210
      %v1216 = vshll.u32 %v965, 16
      %v1218 = vrot.slane %v1216, 1
      %v1219 = vsel %vm983, %v1214, %v1218
      %v1220 = vshrl.u32 %v965, 16
      %v1222 = vor.u32 %v1220, %v1218
      %v1224 = vshll.u32 %v966, 16
      %v1226 = vrot.slane %v1224, 1
      %v1227 = vsel %vm983, %v1222, %v1226
      %v1228 = vshrl.u32 %v966, 16
      %v1230 = vor.u32 %v1228, %v1226
      %v1232 = vshll.u32 %v967, 16
      %v1234 = vrot.slane %v1232, 1
      %v1235 = vsel %vm983, %v1230, %v1234
      %v1236 = vshrl.u32 %v967, 16
      %v1238 = vor.u32 %v1236, %v1234
      %v1240 = vshll.u32 %v968, 16
      %v1242 = vrot.slane %v1240, 1
      %v1243 = vsel %vm983, %v1238, %v1242
      %v1244 = vshrl.u32 %v968, 16
      %v1246 = vor.u32 %v1244, %v1242
      %v1248 = vshll.u32 %v969, 16
      %v1250 = vrot.slane %v1248, 1
      %v1251 = vsel %vm983, %v1246, %v1250
      %v1252 = vshrl.u32 %v969, 16
      %v1254 = vor.u32 %v1252, %v1250
      %v1256 = vshll.u32 %v970, 16
      %v1258 = vrot.slane %v1256, 1
      %v1259 = vsel %vm983, %v1254, %v1258
      %v1260 = vshrl.u32 %v970, 16
      %v1262 = vor.u32 %v1260, %v1258
      %v1264 = vshll.u32 %v971, 16
      %v1266 = vrot.slane %v1264, 1
      %v1267 = vsel %vm983, %v1262, %v1266
      %v1268 = vshrl.u32 %v971, 16
      %v1270 = vor.u32 %v1268, %v1266
      %v1272 = vshll.u32 %v972, 16
      %v1274 = vrot.slane %v1272, 1
      %v1275 = vsel %vm983, %v1270, %v1274
      %v1276 = vshrl.u32 %v972, 16
      %v1278 = vor.u32 %v1276, %v1274
      %v1280 = vshll.u32 %v973, 16
      %v1282 = vrot.slane %v1280, 1
      %v1283 = vsel %vm983, %v1278, %v1282
      %v1284 = vshrl.u32 %v973, 16
      %v1286 = vor.u32 %v1284, %v1282
      %v1288 = vshll.u32 %v974, 16
      %v1290 = vrot.slane %v1288, 1
      %v1291 = vsel %vm983, %v1286, %v1290
      %v1292 = vshrl.u32 %v974, 16
      %v1294 = vor.u32 %v1292, %v1290
      %v1296 = vshll.u32 %v975, 16
      %v1298 = vrot.slane %v1296, 1
      %v1299 = vsel %vm983, %v1294, %v1298
      %v1300 = vshrl.u32 %v975, 16
      %v1302 = vor.u32 %v1300, %v1298
      %v1304 = vshll.u32 %v976, 16
      %v1306 = vrot.slane %v1304, 1
      %v1307 = vsel %vm983, %v1302, %v1306
      %v1308 = vshrl.u32 %v976, 16
      %v1310 = vor.u32 %v1308, %v1306
      %v1312 = vshll.u32 %v977, 16
      %v1314 = vrot.slane %v1312, 1
      %v1315 = vsel %vm983, %v1310, %v1314
      %v1316 = vshrl.u32 %v977, 16
      %v1318 = vor.u32 %v1316, %v1314
      %v1320 = vshll.u32 %v978, 16
      %v1322 = vrot.slane %v1320, 1
      %v1323 = vsel %vm983, %v1318, %v1322
      %v1324 = vshrl.u32 %v978, 16
      %v1326 = vor.u32 %v1324, %v1322
      %v1328 = vshll.u32 %v979, 16
      %v1330 = vrot.slane %v1328, 1
      %v1331 = vsel %vm983, %v1326, %v1330
      %v1332 = vshrl.u32 %v979, 16
      %v1334 = vor.u32 %v1332, %v1330
      %v1336 = vshll.u32 %v980, 16
      %v1338 = vrot.slane %v1336, 1
      %v1339 = vsel %vm983, %v1334, %v1338
      %v1340 = vshrl.u32 %v980, 16
      %v1342 = vor.u32 %v1340, %v1338
      %v1344 = vshll.u32 %v981, 16
      %v1346 = vrot.slane %v1344, 1
      %v1347 = vsel %vm983, %v1342, %v1346
      %v1348 = vshrl.u32 %v981, 16
      %v1350 = vor.u32 %v1348, %v1346
      %v1352 = vshll.u32 %v982, 16
      %v1354 = vrot.slane %v1352, 1
      %v1355 = vsel %vm983, %v1350, %v1354
      %vm1356 = vcmask 64512
      %v1358 = vsel %vm1356, %v995, 0
      %v1361 = vsel %vm1356, %v1003, 0
      %v1364 = vsel %vm1356, %v1011, 0
      %v1367 = vsel %vm1356, %v1019, 0
      %v1370 = vsel %vm1356, %v1027, 0
      %v1373 = vsel %vm1356, %v1035, 0
      %v1376 = vsel %vm1356, %v1043, 0
      %v1379 = vsel %vm1356, %v1051, 0
      %v1382 = vsel %vm1356, %v1059, 0
      %v1385 = vsel %vm1356, %v1067, 0
      %v1388 = vsel %vm1356, %v1075, 0
      %v1391 = vsel %vm1356, %v1083, 0
      %v1394 = vsel %vm1356, %v1091, 0
      %v1397 = vsel %vm1356, %v1099, 0
      %v1400 = vsel %vm1356, %v1107, 0
      %v1403 = vsel %vm1356, %v1115, 0
      %v1406 = vsel %vm1356, %v1123, 0
      %v1409 = vsel %vm1356, %v1131, 0
      %v1412 = vsel %vm1356, %v1139, 0
      %v1415 = vsel %vm1356, %v1147, 0
      %v1418 = vsel %vm1356, %v1155, 0
      %v1421 = vsel %vm1356, %v1163, 0
      %v1424 = vsel %vm1356, %v1171, 0
      %v1427 = vsel %vm1356, %v1179, 0
      %v1430 = vsel %vm1356, %v1187, 0
      %v1433 = vsel %vm1356, %v1195, 0
      %v1436 = vsel %vm1356, %v1203, 0
      %v1439 = vsel %vm1356, %v1211, 0
      %v1442 = vsel %vm1356, %v1219, 0
      %v1445 = vsel %vm1356, %v1227, 0
      %v1448 = vsel %vm1356, %v1235, 0
      %v1451 = vsel %vm1356, %v1243, 0
      %v1454 = vsel %vm1356, %v1251, 0
      %v1457 = vsel %vm1356, %v1259, 0
      %v1460 = vsel %vm1356, %v1267, 0
      %v1463 = vsel %vm1356, %v1275, 0
      %v1466 = vsel %vm1356, %v1283, 0
      %v1469 = vsel %vm1356, %v1291, 0
      %v1472 = vsel %vm1356, %v1299, 0
      %v1475 = vsel %vm1356, %v1307, 0
      %v1478 = vsel %vm1356, %v1315, 0
      %v1481 = vsel %vm1356, %v1323, 0
      %v1484 = vsel %vm1356, %v1331, 0
      %v1487 = vsel %vm1356, %v1339, 0
      %v1490 = vsel %vm1356, %v1347, 0
      %v1493 = vsel %vm1356, %v1355, 0
      %vm1495 = vcmask 1043456
      %v1497 = vsel %vm1495, %v749, 0
      %1499 = vmatpush.bf16.msra.mxu0 0
      %1500 = vmatpush.bf16.msra.mxu0 0
      %1501 = vmatpush.bf16.msra.mxu0 0
      %1502 = vmatpush.bf16.msra.mxu0 0
      %1503 = vmatpush.bf16.msra.mxu0 0
      %1504 = vmatpush.bf16.msra.mxu0 0
      %1505 = vmatpush.bf16.msra.mxu0 0
      %1506 = vmatpush.bf16.msra.mxu0 %v1497
      %1507 = vmatmul.bf16.gmra.mxu0 %v1358
      %v1508 = vpop.f32.mrf.mxu0
      %v1509 = vadd.f32 0.0, %v1508
      %v1510 = vpop.f32.mrf.mxu0
      %v1511 = vadd.f32 0.0, %v1510
      %1512 = vmatmul.bf16.gmra.mxu0 %v1361
      %v1513 = vpop.f32.mrf.mxu0
      %v1514 = vadd.f32 0.0, %v1513
      %v1515 = vpop.f32.mrf.mxu0
      %v1516 = vadd.f32 0.0, %v1515
      %1517 = vmatmul.bf16.gmra.mxu0 %v1364
      %v1518 = vpop.f32.mrf.mxu0
      %v1519 = vadd.f32 0.0, %v1518
      %v1520 = vpop.f32.mrf.mxu0
      %v1521 = vadd.f32 0.0, %v1520
      %1522 = vmatmul.bf16.gmra.mxu0 %v1367
      %v1523 = vpop.f32.mrf.mxu0
      %v1524 = vadd.f32 0.0, %v1523
      %v1525 = vpop.f32.mrf.mxu0
      %v1526 = vadd.f32 0.0, %v1525
      %1527 = vmatmul.bf16.gmra.mxu0 %v1370
      %v1528 = vpop.f32.mrf.mxu0
      %v1529 = vadd.f32 0.0, %v1528
      %v1530 = vpop.f32.mrf.mxu0
      %v1531 = vadd.f32 0.0, %v1530
      %1532 = vmatmul.bf16.gmra.mxu0 %v1373
      %v1533 = vpop.f32.mrf.mxu0
      %v1534 = vadd.f32 0.0, %v1533
      %v1535 = vpop.f32.mrf.mxu0
      %v1536 = vadd.f32 0.0, %v1535
      %1537 = vmatmul.bf16.gmra.mxu0 %v1376
      %v1538 = vpop.f32.mrf.mxu0
      %v1539 = vadd.f32 0.0, %v1538
      %v1540 = vpop.f32.mrf.mxu0
      %v1541 = vadd.f32 0.0, %v1540
      %1542 = vmatmul.bf16.gmra.mxu0 %v1379
      %v1543 = vpop.f32.mrf.mxu0
      %v1544 = vadd.f32 0.0, %v1543
      %v1545 = vpop.f32.mrf.mxu0
      %v1546 = vadd.f32 0.0, %v1545
      %1547 = vmatmul.bf16.gmra.mxu0 %v1382
      %v1548 = vpop.f32.mrf.mxu0
      %v1549 = vadd.f32 0.0, %v1548
      %v1550 = vpop.f32.mrf.mxu0
      %v1551 = vadd.f32 0.0, %v1550
      %1552 = vmatmul.bf16.gmra.mxu0 %v1385
      %v1553 = vpop.f32.mrf.mxu0
      %v1554 = vadd.f32 0.0, %v1553
      %v1555 = vpop.f32.mrf.mxu0
      %v1556 = vadd.f32 0.0, %v1555
      %1557 = vmatmul.bf16.gmra.mxu0 %v1388
      %v1558 = vpop.f32.mrf.mxu0
      %v1559 = vadd.f32 0.0, %v1558
      %v1560 = vpop.f32.mrf.mxu0
      %v1561 = vadd.f32 0.0, %v1560
      %1562 = vmatmul.bf16.gmra.mxu0 %v1391
      %v1563 = vpop.f32.mrf.mxu0
      %v1564 = vadd.f32 0.0, %v1563
      %v1565 = vpop.f32.mrf.mxu0
      %v1566 = vadd.f32 0.0, %v1565
      %1567 = vmatmul.bf16.gmra.mxu0 %v1394
      %v1568 = vpop.f32.mrf.mxu0
      %v1569 = vadd.f32 0.0, %v1568
      %v1570 = vpop.f32.mrf.mxu0
      %v1571 = vadd.f32 0.0, %v1570
      %1572 = vmatmul.bf16.gmra.mxu0 %v1397
      %v1573 = vpop.f32.mrf.mxu0
      %v1574 = vadd.f32 0.0, %v1573
      %v1575 = vpop.f32.mrf.mxu0
      %v1576 = vadd.f32 0.0, %v1575
      %1577 = vmatmul.bf16.gmra.mxu0 %v1400
      %v1578 = vpop.f32.mrf.mxu0
      %v1579 = vadd.f32 0.0, %v1578
      %v1580 = vpop.f32.mrf.mxu0
      %v1581 = vadd.f32 0.0, %v1580
      %1582 = vmatmul.bf16.gmra.mxu0 %v1403
      %v1583 = vpop.f32.mrf.mxu0
      %v1584 = vadd.f32 0.0, %v1583
      %v1585 = vpop.f32.mrf.mxu0
      %v1586 = vadd.f32 0.0, %v1585
      %1587 = vmatmul.bf16.gmra.mxu0 %v1406
      %v1588 = vpop.f32.mrf.mxu0
      %v1589 = vadd.f32 0.0, %v1588
      %v1590 = vpop.f32.mrf.mxu0
      %v1591 = vadd.f32 0.0, %v1590
      %1592 = vmatmul.bf16.gmra.mxu0 %v1409
      %v1593 = vpop.f32.mrf.mxu0
      %v1594 = vadd.f32 0.0, %v1593
      %v1595 = vpop.f32.mrf.mxu0
      %v1596 = vadd.f32 0.0, %v1595
      %1597 = vmatmul.bf16.gmra.mxu0 %v1412
      %v1598 = vpop.f32.mrf.mxu0
      %v1599 = vadd.f32 0.0, %v1598
      %v1600 = vpop.f32.mrf.mxu0
      %v1601 = vadd.f32 0.0, %v1600
      %1602 = vmatmul.bf16.gmra.mxu0 %v1415
      %v1603 = vpop.f32.mrf.mxu0
      %v1604 = vadd.f32 0.0, %v1603
      %v1605 = vpop.f32.mrf.mxu0
      %v1606 = vadd.f32 0.0, %v1605
      %1607 = vmatmul.bf16.gmra.mxu0 %v1418
      %v1608 = vpop.f32.mrf.mxu0
      %v1609 = vadd.f32 0.0, %v1608
      %v1610 = vpop.f32.mrf.mxu0
      %v1611 = vadd.f32 0.0, %v1610
      %1612 = vmatmul.bf16.gmra.mxu0 %v1421
      %v1613 = vpop.f32.mrf.mxu0
      %v1614 = vadd.f32 0.0, %v1613
      %v1615 = vpop.f32.mrf.mxu0
      %v1616 = vadd.f32 0.0, %v1615
      %1617 = vmatmul.bf16.gmra.mxu0 %v1424
      %v1618 = vpop.f32.mrf.mxu0
      %v1619 = vadd.f32 0.0, %v1618
      %v1620 = vpop.f32.mrf.mxu0
      %v1621 = vadd.f32 0.0, %v1620
      %1622 = vmatmul.bf16.gmra.mxu0 %v1427
      %v1623 = vpop.f32.mrf.mxu0
      %v1624 = vadd.f32 0.0, %v1623
      %v1625 = vpop.f32.mrf.mxu0
      %v1626 = vadd.f32 0.0, %v1625
      %1627 = vmatmul.bf16.gmra.mxu0 %v1430
      %v1628 = vpop.f32.mrf.mxu0
      %v1629 = vadd.f32 0.0, %v1628
      %v1630 = vpop.f32.mrf.mxu0
      %v1631 = vadd.f32 0.0, %v1630
      %1632 = vmatmul.bf16.gmra.mxu0 %v1433
      %v1633 = vpop.f32.mrf.mxu0
      %v1634 = vadd.f32 0.0, %v1633
      %v1635 = vpop.f32.mrf.mxu0
      %v1636 = vadd.f32 0.0, %v1635
      %1637 = vmatmul.bf16.gmra.mxu0 %v1436
      %v1638 = vpop.f32.mrf.mxu0
      %v1639 = vadd.f32 0.0, %v1638
      %v1640 = vpop.f32.mrf.mxu0
      %v1641 = vadd.f32 0.0, %v1640
      %1642 = vmatmul.bf16.gmra.mxu0 %v1439
      %v1643 = vpop.f32.mrf.mxu0
      %v1644 = vadd.f32 0.0, %v1643
      %v1645 = vpop.f32.mrf.mxu0
      %v1646 = vadd.f32 0.0, %v1645
      %1647 = vmatmul.bf16.gmra.mxu0 %v1442
      %v1648 = vpop.f32.mrf.mxu0
      %v1649 = vadd.f32 0.0, %v1648
      %v1650 = vpop.f32.mrf.mxu0
      %v1651 = vadd.f32 0.0, %v1650
      %1652 = vmatmul.bf16.gmra.mxu0 %v1445
      %v1653 = vpop.f32.mrf.mxu0
      %v1654 = vadd.f32 0.0, %v1653
      %v1655 = vpop.f32.mrf.mxu0
      %v1656 = vadd.f32 0.0, %v1655
      %1657 = vmatmul.bf16.gmra.mxu0 %v1448
      %v1658 = vpop.f32.mrf.mxu0
      %v1659 = vadd.f32 0.0, %v1658
      %v1660 = vpop.f32.mrf.mxu0
      %v1661 = vadd.f32 0.0, %v1660
      %1662 = vmatmul.bf16.gmra.mxu0 %v1451
      %v1663 = vpop.f32.mrf.mxu0
      %v1664 = vadd.f32 0.0, %v1663
      %v1665 = vpop.f32.mrf.mxu0
      %v1666 = vadd.f32 0.0, %v1665
      %1667 = vmatmul.bf16.gmra.mxu0 %v1454
      %v1668 = vpop.f32.mrf.mxu0
      %v1669 = vadd.f32 0.0, %v1668
      %v1670 = vpop.f32.mrf.mxu0
      %v1671 = vadd.f32 0.0, %v1670
      %1672 = vmatmul.bf16.gmra.mxu0 %v1457
      %v1673 = vpop.f32.mrf.mxu0
      %v1674 = vadd.f32 0.0, %v1673
      %v1675 = vpop.f32.mrf.mxu0
      %v1676 = vadd.f32 0.0, %v1675
      %1677 = vmatmul.bf16.gmra.mxu0 %v1460
      %v1678 = vpop.f32.mrf.mxu0
      %v1679 = vadd.f32 0.0, %v1678
      %v1680 = vpop.f32.mrf.mxu0
      %v1681 = vadd.f32 0.0, %v1680
      %1682 = vmatmul.bf16.gmra.mxu0 %v1463
      %v1683 = vpop.f32.mrf.mxu0
      %v1684 = vadd.f32 0.0, %v1683
      %v1685 = vpop.f32.mrf.mxu0
      %v1686 = vadd.f32 0.0, %v1685
      %1687 = vmatmul.bf16.gmra.mxu0 %v1466
      %v1688 = vpop.f32.mrf.mxu0
      %v1689 = vadd.f32 0.0, %v1688
      %v1690 = vpop.f32.mrf.mxu0
      %v1691 = vadd.f32 0.0, %v1690
      %1692 = vmatmul.bf16.gmra.mxu0 %v1469
      %v1693 = vpop.f32.mrf.mxu0
      %v1694 = vadd.f32 0.0, %v1693
      %v1695 = vpop.f32.mrf.mxu0
      %v1696 = vadd.f32 0.0, %v1695
      %1697 = vmatmul.bf16.gmra.mxu0 %v1472
      %v1698 = vpop.f32.mrf.mxu0
      %v1699 = vadd.f32 0.0, %v1698
      %v1700 = vpop.f32.mrf.mxu0
      %v1701 = vadd.f32 0.0, %v1700
      %1702 = vmatmul.bf16.gmra.mxu0 %v1475
      %v1703 = vpop.f32.mrf.mxu0
      %v1704 = vadd.f32 0.0, %v1703
      %v1705 = vpop.f32.mrf.mxu0
      %v1706 = vadd.f32 0.0, %v1705
      %1707 = vmatmul.bf16.gmra.mxu0 %v1478
      %v1708 = vpop.f32.mrf.mxu0
      %v1709 = vadd.f32 0.0, %v1708
      %v1710 = vpop.f32.mrf.mxu0
      %v1711 = vadd.f32 0.0, %v1710
      %1712 = vmatmul.bf16.gmra.mxu0 %v1481
      %v1713 = vpop.f32.mrf.mxu0
      %v1714 = vadd.f32 0.0, %v1713
      %v1715 = vpop.f32.mrf.mxu0
      %v1716 = vadd.f32 0.0, %v1715
      %1717 = vmatmul.bf16.gmra.mxu0 %v1484
      %v1718 = vpop.f32.mrf.mxu0
      %v1719 = vadd.f32 0.0, %v1718
      %v1720 = vpop.f32.mrf.mxu0
      %v1721 = vadd.f32 0.0, %v1720
      %1722 = vmatmul.bf16.gmra.mxu0 %v1487
      %v1723 = vpop.f32.mrf.mxu0
      %v1724 = vadd.f32 0.0, %v1723
      %v1725 = vpop.f32.mrf.mxu0
      %v1726 = vadd.f32 0.0, %v1725
      %1727 = vmatmul.bf16.gmra.mxu0 %v1490
      %v1728 = vpop.f32.mrf.mxu0
      %v1729 = vadd.f32 0.0, %v1728
      %v1730 = vpop.f32.mrf.mxu0
      %v1731 = vadd.f32 0.0, %v1730
      %1732 = vmatmul.bf16.gmra.mxu0 %v1493
      %v1733 = vpop.f32.mrf.mxu0
      %v1734 = vadd.f32 0.0, %v1733
      %v1735 = vpop.f32.mrf.mxu0
      %v1736 = vadd.f32 0.0, %v1735
      %1737 = vdwg.mxu0
      %v1738 = vsel %vm1356, %v936, 0
      %v1740 = vsel %vm1356, %v937, 0
      %v1742 = vsel %vm1356, %v938, 0
      %v1744 = vsel %vm1356, %v939, 0
      %v1746 = vsel %vm1356, %v940, 0
      %v1748 = vsel %vm1356, %v941, 0
      %v1750 = vsel %vm1356, %v942, 0
      %v1752 = vsel %vm1356, %v943, 0
      %v1754 = vsel %vm1356, %v944, 0
      %v1756 = vsel %vm1356, %v945, 0
      %v1758 = vsel %vm1356, %v946, 0
      %v1760 = vsel %vm1356, %v947, 0
      %v1762 = vsel %vm1356, %v948, 0
      %v1764 = vsel %vm1356, %v949, 0
      %v1766 = vsel %vm1356, %v950, 0
      %v1768 = vsel %vm1356, %v951, 0
      %v1770 = vsel %vm1356, %v952, 0
      %v1772 = vsel %vm1356, %v953, 0
      %v1774 = vsel %vm1356, %v954, 0
      %v1776 = vsel %vm1356, %v955, 0
      %v1778 = vsel %vm1356, %v956, 0
      %v1780 = vsel %vm1356, %v957, 0
      %v1782 = vsel %vm1356, %v958, 0
      %v1784 = vsel %vm1356, %v959, 0
      %v1786 = vsel %vm1356, %v960, 0
      %v1788 = vsel %vm1356, %v961, 0
      %v1790 = vsel %vm1356, %v962, 0
      %v1792 = vsel %vm1356, %v963, 0
      %v1794 = vsel %vm1356, %v964, 0
      %v1796 = vsel %vm1356, %v965, 0
      %v1798 = vsel %vm1356, %v966, 0
      %v1800 = vsel %vm1356, %v967, 0
      %v1802 = vsel %vm1356, %v968, 0
      %v1804 = vsel %vm1356, %v969, 0
      %v1806 = vsel %vm1356, %v970, 0
      %v1808 = vsel %vm1356, %v971, 0
      %v1810 = vsel %vm1356, %v972, 0
      %v1812 = vsel %vm1356, %v973, 0
      %v1814 = vsel %vm1356, %v974, 0
      %v1816 = vsel %vm1356, %v975, 0
      %v1818 = vsel %vm1356, %v976, 0
      %v1820 = vsel %vm1356, %v977, 0
      %v1822 = vsel %vm1356, %v978, 0
      %v1824 = vsel %vm1356, %v979, 0
      %v1826 = vsel %vm1356, %v980, 0
      %v1828 = vsel %vm1356, %v981, 0
      %v1831 = vsel %vm1495, %v746, 0
      %1833 = vmatpush.bf16.msra.mxu0 0
      %1834 = vmatpush.bf16.msra.mxu0 0
      %1835 = vmatpush.bf16.msra.mxu0 0
      %1836 = vmatpush.bf16.msra.mxu0 0
      %1837 = vmatpush.bf16.msra.mxu0 0
      %1838 = vmatpush.bf16.msra.mxu0 0
      %1839 = vmatpush.bf16.msra.mxu0 0
      %1840 = vmatpush.bf16.msra.mxu0 %v1831
      %1841 = vmatmul.bf16.gmra.mxu0 %v1738
      %v1842 = vpop.f32.mrf.mxu0
      %v1843 = vadd.f32 %v1509, %v1842
      %v1844 = vpop.f32.mrf.mxu0
      %v1845 = vadd.f32 %v1511, %v1844
      %1846 = vmatmul.bf16.gmra.mxu0 %v1740
      %v1847 = vpop.f32.mrf.mxu0
      %v1848 = vadd.f32 %v1514, %v1847
      %v1849 = vpop.f32.mrf.mxu0
      %v1850 = vadd.f32 %v1516, %v1849
      %1851 = vmatmul.bf16.gmra.mxu0 %v1742
      %v1852 = vpop.f32.mrf.mxu0
      %v1853 = vadd.f32 %v1519, %v1852
      %v1854 = vpop.f32.mrf.mxu0
      %v1855 = vadd.f32 %v1521, %v1854
      %1856 = vmatmul.bf16.gmra.mxu0 %v1744
      %v1857 = vpop.f32.mrf.mxu0
      %v1858 = vadd.f32 %v1524, %v1857
      %v1859 = vpop.f32.mrf.mxu0
      %v1860 = vadd.f32 %v1526, %v1859
      %1861 = vmatmul.bf16.gmra.mxu0 %v1746
      %v1862 = vpop.f32.mrf.mxu0
      %v1863 = vadd.f32 %v1529, %v1862
      %v1864 = vpop.f32.mrf.mxu0
      %v1865 = vadd.f32 %v1531, %v1864
      %1866 = vmatmul.bf16.gmra.mxu0 %v1748
      %v1867 = vpop.f32.mrf.mxu0
      %v1868 = vadd.f32 %v1534, %v1867
      %v1869 = vpop.f32.mrf.mxu0
      %v1870 = vadd.f32 %v1536, %v1869
      %1871 = vmatmul.bf16.gmra.mxu0 %v1750
      %v1872 = vpop.f32.mrf.mxu0
      %v1873 = vadd.f32 %v1539, %v1872
      %v1874 = vpop.f32.mrf.mxu0
      %v1875 = vadd.f32 %v1541, %v1874
      %1876 = vmatmul.bf16.gmra.mxu0 %v1752
      %v1877 = vpop.f32.mrf.mxu0
      %v1878 = vadd.f32 %v1544, %v1877
      %v1879 = vpop.f32.mrf.mxu0
      %v1880 = vadd.f32 %v1546, %v1879
      %1881 = vmatmul.bf16.gmra.mxu0 %v1754
      %v1882 = vpop.f32.mrf.mxu0
      %v1883 = vadd.f32 %v1549, %v1882
      %v1884 = vpop.f32.mrf.mxu0
      %v1885 = vadd.f32 %v1551, %v1884
      %1886 = vmatmul.bf16.gmra.mxu0 %v1756
      %v1887 = vpop.f32.mrf.mxu0
      %v1888 = vadd.f32 %v1554, %v1887
      %v1889 = vpop.f32.mrf.mxu0
      %v1890 = vadd.f32 %v1556, %v1889
      %1891 = vmatmul.bf16.gmra.mxu0 %v1758
      %v1892 = vpop.f32.mrf.mxu0
      %v1893 = vadd.f32 %v1559, %v1892
      %v1894 = vpop.f32.mrf.mxu0
      %v1895 = vadd.f32 %v1561, %v1894
      %1896 = vmatmul.bf16.gmra.mxu0 %v1760
      %v1897 = vpop.f32.mrf.mxu0
      %v1898 = vadd.f32 %v1564, %v1897
      %v1899 = vpop.f32.mrf.mxu0
      %v1900 = vadd.f32 %v1566, %v1899
      %1901 = vmatmul.bf16.gmra.mxu0 %v1762
      %v1902 = vpop.f32.mrf.mxu0
      %v1903 = vadd.f32 %v1569, %v1902
      %v1904 = vpop.f32.mrf.mxu0
      %v1905 = vadd.f32 %v1571, %v1904
      %1906 = vmatmul.bf16.gmra.mxu0 %v1764
      %v1907 = vpop.f32.mrf.mxu0
      %v1908 = vadd.f32 %v1574, %v1907
      %v1909 = vpop.f32.mrf.mxu0
      %v1910 = vadd.f32 %v1576, %v1909
      %1911 = vmatmul.bf16.gmra.mxu0 %v1766
      %v1912 = vpop.f32.mrf.mxu0
      %v1913 = vadd.f32 %v1579, %v1912
      %v1914 = vpop.f32.mrf.mxu0
      %v1915 = vadd.f32 %v1581, %v1914
      %1916 = vmatmul.bf16.gmra.mxu0 %v1768
      %v1917 = vpop.f32.mrf.mxu0
      %v1918 = vadd.f32 %v1584, %v1917
      %v1919 = vpop.f32.mrf.mxu0
      %v1920 = vadd.f32 %v1586, %v1919
      %1921 = vmatmul.bf16.gmra.mxu0 %v1770
      %v1922 = vpop.f32.mrf.mxu0
      %v1923 = vadd.f32 %v1589, %v1922
      %v1924 = vpop.f32.mrf.mxu0
      %v1925 = vadd.f32 %v1591, %v1924
      %1926 = vmatmul.bf16.gmra.mxu0 %v1772
      %v1927 = vpop.f32.mrf.mxu0
      %v1928 = vadd.f32 %v1594, %v1927
      %v1929 = vpop.f32.mrf.mxu0
      %v1930 = vadd.f32 %v1596, %v1929
      %1931 = vmatmul.bf16.gmra.mxu0 %v1774
      %v1932 = vpop.f32.mrf.mxu0
      %v1933 = vadd.f32 %v1599, %v1932
      %v1934 = vpop.f32.mrf.mxu0
      %v1935 = vadd.f32 %v1601, %v1934
      %1936 = vmatmul.bf16.gmra.mxu0 %v1776
      %v1937 = vpop.f32.mrf.mxu0
      %v1938 = vadd.f32 %v1604, %v1937
      %v1939 = vpop.f32.mrf.mxu0
      %v1940 = vadd.f32 %v1606, %v1939
      %1941 = vmatmul.bf16.gmra.mxu0 %v1778
      %v1942 = vpop.f32.mrf.mxu0
      %v1943 = vadd.f32 %v1609, %v1942
      %v1944 = vpop.f32.mrf.mxu0
      %v1945 = vadd.f32 %v1611, %v1944
      %1946 = vmatmul.bf16.gmra.mxu0 %v1780
      %v1947 = vpop.f32.mrf.mxu0
      %v1948 = vadd.f32 %v1614, %v1947
      %v1949 = vpop.f32.mrf.mxu0
      %v1950 = vadd.f32 %v1616, %v1949
      %1951 = vmatmul.bf16.gmra.mxu0 %v1782
      %v1952 = vpop.f32.mrf.mxu0
      %v1953 = vadd.f32 %v1619, %v1952
      %v1954 = vpop.f32.mrf.mxu0
      %v1955 = vadd.f32 %v1621, %v1954
      %1956 = vmatmul.bf16.gmra.mxu0 %v1784
      %v1957 = vpop.f32.mrf.mxu0
      %v1958 = vadd.f32 %v1624, %v1957
      %v1959 = vpop.f32.mrf.mxu0
      %v1960 = vadd.f32 %v1626, %v1959
      %1961 = vmatmul.bf16.gmra.mxu0 %v1786
      %v1962 = vpop.f32.mrf.mxu0
      %v1963 = vadd.f32 %v1629, %v1962
      %v1964 = vpop.f32.mrf.mxu0
      %v1965 = vadd.f32 %v1631, %v1964
      %1966 = vmatmul.bf16.gmra.mxu0 %v1788
      %v1967 = vpop.f32.mrf.mxu0
      %v1968 = vadd.f32 %v1634, %v1967
      %v1969 = vpop.f32.mrf.mxu0
      %v1970 = vadd.f32 %v1636, %v1969
      %1971 = vmatmul.bf16.gmra.mxu0 %v1790
      %v1972 = vpop.f32.mrf.mxu0
      %v1973 = vadd.f32 %v1639, %v1972
      %v1974 = vpop.f32.mrf.mxu0
      %v1975 = vadd.f32 %v1641, %v1974
      %1976 = vmatmul.bf16.gmra.mxu0 %v1792
      %v1977 = vpop.f32.mrf.mxu0
      %v1978 = vadd.f32 %v1644, %v1977
      %v1979 = vpop.f32.mrf.mxu0
      %v1980 = vadd.f32 %v1646, %v1979
      %1981 = vmatmul.bf16.gmra.mxu0 %v1794
      %v1982 = vpop.f32.mrf.mxu0
      %v1983 = vadd.f32 %v1649, %v1982
      %v1984 = vpop.f32.mrf.mxu0
      %v1985 = vadd.f32 %v1651, %v1984
      %1986 = vmatmul.bf16.gmra.mxu0 %v1796
      %v1987 = vpop.f32.mrf.mxu0
      %v1988 = vadd.f32 %v1654, %v1987
      %v1989 = vpop.f32.mrf.mxu0
      %v1990 = vadd.f32 %v1656, %v1989
      %1991 = vmatmul.bf16.gmra.mxu0 %v1798
      %v1992 = vpop.f32.mrf.mxu0
      %v1993 = vadd.f32 %v1659, %v1992
      %v1994 = vpop.f32.mrf.mxu0
      %v1995 = vadd.f32 %v1661, %v1994
      %1996 = vmatmul.bf16.gmra.mxu0 %v1800
      %v1997 = vpop.f32.mrf.mxu0
      %v1998 = vadd.f32 %v1664, %v1997
      %v1999 = vpop.f32.mrf.mxu0
      %v2000 = vadd.f32 %v1666, %v1999
      %2001 = vmatmul.bf16.gmra.mxu0 %v1802
      %v2002 = vpop.f32.mrf.mxu0
      %v2003 = vadd.f32 %v1669, %v2002
      %v2004 = vpop.f32.mrf.mxu0
      %v2005 = vadd.f32 %v1671, %v2004
      %2006 = vmatmul.bf16.gmra.mxu0 %v1804
      %v2007 = vpop.f32.mrf.mxu0
      %v2008 = vadd.f32 %v1674, %v2007
      %v2009 = vpop.f32.mrf.mxu0
      %v2010 = vadd.f32 %v1676, %v2009
      %2011 = vmatmul.bf16.gmra.mxu0 %v1806
      %v2012 = vpop.f32.mrf.mxu0
      %v2013 = vadd.f32 %v1679, %v2012
      %v2014 = vpop.f32.mrf.mxu0
      %v2015 = vadd.f32 %v1681, %v2014
      %2016 = vmatmul.bf16.gmra.mxu0 %v1808
      %v2017 = vpop.f32.mrf.mxu0
      %v2018 = vadd.f32 %v1684, %v2017
      %v2019 = vpop.f32.mrf.mxu0
      %v2020 = vadd.f32 %v1686, %v2019
      %2021 = vmatmul.bf16.gmra.mxu0 %v1810
      %v2022 = vpop.f32.mrf.mxu0
      %v2023 = vadd.f32 %v1689, %v2022
      %v2024 = vpop.f32.mrf.mxu0
      %v2025 = vadd.f32 %v1691, %v2024
      %2026 = vmatmul.bf16.gmra.mxu0 %v1812
      %v2027 = vpop.f32.mrf.mxu0
      %v2028 = vadd.f32 %v1694, %v2027
      %v2029 = vpop.f32.mrf.mxu0
      %v2030 = vadd.f32 %v1696, %v2029
      %2031 = vmatmul.bf16.gmra.mxu0 %v1814
      %v2032 = vpop.f32.mrf.mxu0
      %v2033 = vadd.f32 %v1699, %v2032
      %v2034 = vpop.f32.mrf.mxu0
      %v2035 = vadd.f32 %v1701, %v2034
      %2036 = vmatmul.bf16.gmra.mxu0 %v1816
      %v2037 = vpop.f32.mrf.mxu0
      %v2038 = vadd.f32 %v1704, %v2037
      %v2039 = vpop.f32.mrf.mxu0
      %v2040 = vadd.f32 %v1706, %v2039
      %2041 = vmatmul.bf16.gmra.mxu0 %v1818
      %v2042 = vpop.f32.mrf.mxu0
      %v2043 = vadd.f32 %v1709, %v2042
      %v2044 = vpop.f32.mrf.mxu0
      %v2045 = vadd.f32 %v1711, %v2044
      %2046 = vmatmul.bf16.gmra.mxu0 %v1820
      %v2047 = vpop.f32.mrf.mxu0
      %v2048 = vadd.f32 %v1714, %v2047
      %v2049 = vpop.f32.mrf.mxu0
      %v2050 = vadd.f32 %v1716, %v2049
      %2051 = vmatmul.bf16.gmra.mxu0 %v1822
      %v2052 = vpop.f32.mrf.mxu0
      %v2053 = vadd.f32 %v1719, %v2052
      %v2054 = vpop.f32.mrf.mxu0
      %v2055 = vadd.f32 %v1721, %v2054
      %2056 = vmatmul.bf16.gmra.mxu0 %v1824
      %v2057 = vpop.f32.mrf.mxu0
      %v2058 = vadd.f32 %v1724, %v2057
      %v2059 = vpop.f32.mrf.mxu0
      %v2060 = vadd.f32 %v1726, %v2059
      %2061 = vmatmul.bf16.gmra.mxu0 %v1826
      %v2062 = vpop.f32.mrf.mxu0
      %v2063 = vadd.f32 %v1729, %v2062
      %v2064 = vpop.f32.mrf.mxu0
      %v2065 = vadd.f32 %v1731, %v2064
      %2066 = vmatmul.bf16.gmra.mxu0 %v1828
      %v2067 = vpop.f32.mrf.mxu0
      %v2068 = vadd.f32 %v1734, %v2067
      %v2069 = vpop.f32.mrf.mxu0
      %v2070 = vadd.f32 %v1736, %v2069
      %2071 = vdwg.mxu0
      %v2072 = vld [vmem:[#allocation2 + $0x4] sm:$0xf]
      %v2073 = vld [vmem:[#allocation2 + $0x8] sm:$0xf]
      %v2074 = vld [vmem:[#allocation2 + $0xc] sm:$0xf]
      %v2075 = vld [vmem:[#allocation2 + $0x10] sm:$0xf]
      %v2076 = vld [vmem:[#allocation2 + $0x14] sm:$0xf]
      %v2077 = vld [vmem:[#allocation2 + $0x18] sm:$0xf]
      %v2078 = vld [vmem:[#allocation2 + $0x1c] sm:$0xf]
      %v2079 = vld [vmem:[#allocation2 + $0x20] sm:$0xf]
      %v2080 = vld [vmem:[#allocation2 + $0x24] sm:$0xf]
      %v2081 = vld [vmem:[#allocation2 + $0x28] sm:$0xf]
      %v2082 = vld [vmem:[#allocation2 + $0x2c] sm:$0xf]
      %v2083 = vld [vmem:[#allocation2 + $0x30] sm:$0xf]
      %v2084 = vld [vmem:[#allocation2 + $0x34] sm:$0xf]
      %v2085 = vld [vmem:[#allocation2 + $0x38] sm:$0xf]
      %v2086 = vld [vmem:[#allocation2 + $0x3c] sm:$0xf]
      %v2087 = vld [vmem:[#allocation2 + $0x40] sm:$0xf]
      %v2088 = vld [vmem:[#allocation2 + $0x44] sm:$0xf]
      %v2089 = vld [vmem:[#allocation2 + $0x48] sm:$0xf]
      %v2090 = vld [vmem:[#allocation2 + $0x4c] sm:$0xf]
      %v2091 = vld [vmem:[#allocation2 + $0x50] sm:$0xf]
      %v2092 = vld [vmem:[#allocation2 + $0x54] sm:$0xf]
      %v2093 = vld [vmem:[#allocation2 + $0x58] sm:$0xf]
      %v2094 = vld [vmem:[#allocation2 + $0x5c] sm:$0xf]
      %v2095 = vld [vmem:[#allocation2 + $0x60] sm:$0xf]
      %v2096 = vld [vmem:[#allocation2 + $0x64] sm:$0xf]
      %v2097 = vld [vmem:[#allocation2 + $0x68] sm:$0xf]
      %v2098 = vld [vmem:[#allocation2 + $0x6c] sm:$0xf]
      %v2099 = vld [vmem:[#allocation2 + $0x70] sm:$0xf]
      %v2100 = vld [vmem:[#allocation2 + $0x74] sm:$0xf]
      %v2101 = vld [vmem:[#allocation2 + $0x78] sm:$0xf]
      %v2102 = vld [vmem:[#allocation2 + $0x7c] sm:$0xf]
      %v2103 = vld [vmem:[#allocation2 + $0x80] sm:$0xf]
      %v2104 = vld [vmem:[#allocation2 + $0x84] sm:$0xf]
      %v2105 = vld [vmem:[#allocation2 + $0x88] sm:$0xf]
      %v2106 = vld [vmem:[#allocation2 + $0x8c] sm:$0xf]
      %v2107 = vld [vmem:[#allocation2 + $0x90] sm:$0xf]
      %v2108 = vld [vmem:[#allocation2 + $0x94] sm:$0xf]
      %v2109 = vld [vmem:[#allocation2 + $0x98] sm:$0xf]
      %v2110 = vld [vmem:[#allocation2 + $0x9c] sm:$0xf]
      %v2111 = vld [vmem:[#allocation2 + $0xa0] sm:$0xf]
      %v2112 = vld [vmem:[#allocation2 + $0xa4] sm:$0xf]
      %v2113 = vld [vmem:[#allocation2 + $0xa8] sm:$0xf]
      %v2114 = vld [vmem:[#allocation2 + $0xac] sm:$0xf]
      %v2115 = vld [vmem:[#allocation2 + $0xb0] sm:$0xf]
      %v2116 = vld [vmem:[#allocation2 + $0xb4] sm:$0xf]
      %v2117 = vld [vmem:[#allocation2 + $0xb8] sm:$0xf]
      %v2118 = vld [vmem:[#allocation2 + $0xbc] sm:$0xf]
      %v2119 = vld [vmem:[#allocation2 + $0xc0] sm:$0xf]
      %v2120 = vld [vmem:[#allocation2 + $0xc4] sm:$0xf]
      %v2121 = vld [vmem:[#allocation2 + $0xc8] sm:$0xf]
      %v2122 = vld [vmem:[#allocation2 + $0xcc] sm:$0xf]
      %v2123 = vld [vmem:[#allocation2 + $0xd0] sm:$0xf]
      %v2124 = vld [vmem:[#allocation2 + $0xd4] sm:$0xf]
      %v2125 = vld [vmem:[#allocation2 + $0xd8] sm:$0xf]
      %v2126 = vld [vmem:[#allocation2 + $0xdc] sm:$0xf]
      %v2127 = vld [vmem:[#allocation2 + $0xe0] sm:$0xf]
      %v2128 = vld [vmem:[#allocation2 + $0xe4] sm:$0xf]
      %v2129 = vld [vmem:[#allocation2 + $0xe8] sm:$0xf]
      %v2130 = vld [vmem:[#allocation2 + $0xec] sm:$0xf]
      %v2131 = vld [vmem:[#allocation2 + $0xf0] sm:$0xf]
      %v2132 = vld [vmem:[#allocation2 + $0xf4] sm:$0xf]
      %v2133 = vld [vmem:[#allocation2 + $0xf8] sm:$0xf]
      %v2134 = vld [vmem:[#allocation2 + $0xfc] sm:$0xf]
      %v2135 = vld [vmem:[#allocation2 + $0x100] sm:$0xf]
      %v2136 = vld [vmem:[#allocation2 + $0x104] sm:$0xf]
      %v2137 = vld [vmem:[#allocation2 + $0x108] sm:$0xf]
      %v2138 = vld [vmem:[#allocation2 + $0x10c] sm:$0xf]
      %v2139 = vld [vmem:[#allocation2 + $0x110] sm:$0xf]
      %v2140 = vld [vmem:[#allocation2 + $0x114] sm:$0xf]
      %v2141 = vld [vmem:[#allocation2 + $0x118] sm:$0xf]
      %v2142 = vld [vmem:[#allocation2 + $0x11c] sm:$0xf]
      %v2143 = vld [vmem:[#allocation2 + $0x120] sm:$0xf]
      %v2144 = vld [vmem:[#allocation2 + $0x124] sm:$0xf]
      %v2145 = vld [vmem:[#allocation2 + $0x128] sm:$0xf]
      %v2146 = vld [vmem:[#allocation2 + $0x12c] sm:$0xf]
      %v2147 = vld [vmem:[#allocation2 + $0x130] sm:$0xf]
      %v2148 = vld [vmem:[#allocation2 + $0x134] sm:$0xf]
      %v2149 = vld [vmem:[#allocation2 + $0x138] sm:$0xf]
      %v2150 = vld [vmem:[#allocation2 + $0x13c] sm:$0xf]
      %v2151 = vld [vmem:[#allocation2 + $0x140] sm:$0xf]
      %v2152 = vld [vmem:[#allocation2 + $0x144] sm:$0xf]
      %v2153 = vld [vmem:[#allocation2 + $0x148] sm:$0xf]
      %v2154 = vld [vmem:[#allocation2 + $0x14c] sm:$0xf]
      %v2155 = vld [vmem:[#allocation2 + $0x150] sm:$0xf]
      %v2156 = vld [vmem:[#allocation2 + $0x154] sm:$0xf]
      %v2157 = vld [vmem:[#allocation2 + $0x158] sm:$0xf]
      %v2158 = vld [vmem:[#allocation2 + $0x15c] sm:$0xf]
      %v2159 = vld [vmem:[#allocation2 + $0x160] sm:$0xf]
      %v2160 = vld [vmem:[#allocation2 + $0x164] sm:$0xf]
      %v2161 = vld [vmem:[#allocation2 + $0x168] sm:$0xf]
      %v2162 = vld [vmem:[#allocation2 + $0x16c] sm:$0xf]
      %v2163 = vld [vmem:[#allocation2 + $0x170] sm:$0xf]
      %v2164 = vld [vmem:[#allocation2 + $0x174] sm:$0x1]
      %s2165 = scalar_lea.vmem %s2, 8
      %v2166 = vld [vmem:[%s2165] sm:$0xf]
      %v2260 = vunpack.c.l.b16 %v2072
      %v2261 = vunpack.c.l.b16 %v2073
      %v2262 = vunpack.c.l.b16 %v2074
      %v2263 = vunpack.c.l.b16 %v2075
      %v2264 = vunpack.c.l.b16 %v2076
      %v2265 = vunpack.c.l.b16 %v2077
      %v2266 = vunpack.c.l.b16 %v2078
      %v2267 = vunpack.c.l.b16 %v2079
      %v2268 = vunpack.c.l.b16 %v2080
      %v2269 = vunpack.c.l.b16 %v2081
      %v2270 = vunpack.c.l.b16 %v2082
      %v2271 = vunpack.c.l.b16 %v2083
      %v2272 = vunpack.c.l.b16 %v2084
      %v2273 = vunpack.c.l.b16 %v2085
      %v2274 = vunpack.c.l.b16 %v2086
      %v2275 = vunpack.c.l.b16 %v2087
      %v2276 = vunpack.c.l.b16 %v2088
      %v2277 = vunpack.c.l.b16 %v2089
      %v2278 = vunpack.c.l.b16 %v2090
      %v2279 = vunpack.c.l.b16 %v2091
      %v2280 = vunpack.c.l.b16 %v2092
      %v2281 = vunpack.c.l.b16 %v2093
      %v2282 = vunpack.c.l.b16 %v2094
      %v2283 = vunpack.c.l.b16 %v2095
      %v2284 = vunpack.c.l.b16 %v2096
      %v2285 = vunpack.c.l.b16 %v2097
      %v2286 = vunpack.c.l.b16 %v2098
      %v2287 = vunpack.c.l.b16 %v2099
      %v2288 = vunpack.c.l.b16 %v2100
      %v2289 = vunpack.c.l.b16 %v2101
      %v2290 = vunpack.c.l.b16 %v2102
      %v2291 = vunpack.c.l.b16 %v2103
      %v2292 = vunpack.c.l.b16 %v2104
      %v2293 = vunpack.c.l.b16 %v2105
      %v2294 = vunpack.c.l.b16 %v2106
      %v2295 = vunpack.c.l.b16 %v2107
      %v2296 = vunpack.c.l.b16 %v2108
      %v2297 = vunpack.c.l.b16 %v2109
      %v2298 = vunpack.c.l.b16 %v2110
      %v2299 = vunpack.c.l.b16 %v2111
      %v2300 = vunpack.c.l.b16 %v2112
      %v2301 = vunpack.c.l.b16 %v2113
      %v2302 = vunpack.c.l.b16 %v2114
      %v2303 = vunpack.c.l.b16 %v2115
      %v2304 = vunpack.c.l.b16 %v2116
      %v2305 = vunpack.c.l.b16 %v2117
      %v2306 = vunpack.c.l.b16 %v2118
      %v2307 = vunpack.c.l.b16 %v2119
      %v2308 = vunpack.c.l.b16 %v2120
      %v2309 = vunpack.c.l.b16 %v2121
      %v2310 = vunpack.c.l.b16 %v2122
      %v2311 = vunpack.c.l.b16 %v2123
      %v2312 = vunpack.c.l.b16 %v2124
      %v2313 = vunpack.c.l.b16 %v2125
      %v2314 = vunpack.c.l.b16 %v2126
      %v2315 = vunpack.c.l.b16 %v2127
      %v2316 = vunpack.c.l.b16 %v2128
      %v2317 = vunpack.c.l.b16 %v2129
      %v2318 = vunpack.c.l.b16 %v2130
      %v2319 = vunpack.c.l.b16 %v2131
      %v2320 = vunpack.c.l.b16 %v2132
      %v2321 = vunpack.c.l.b16 %v2133
      %v2322 = vunpack.c.l.b16 %v2134
      %v2323 = vunpack.c.l.b16 %v2135
      %v2324 = vunpack.c.l.b16 %v2136
      %v2325 = vunpack.c.l.b16 %v2137
      %v2326 = vunpack.c.l.b16 %v2138
      %v2327 = vunpack.c.l.b16 %v2139
      %v2328 = vunpack.c.l.b16 %v2140
      %v2329 = vunpack.c.l.b16 %v2141
      %v2330 = vunpack.c.l.b16 %v2142
      %v2331 = vunpack.c.l.b16 %v2143
      %v2332 = vunpack.c.l.b16 %v2144
      %v2333 = vunpack.c.l.b16 %v2145
      %v2334 = vunpack.c.l.b16 %v2146
      %v2335 = vunpack.c.l.b16 %v2147
      %v2336 = vunpack.c.l.b16 %v2148
      %v2337 = vunpack.c.l.b16 %v2149
      %v2338 = vunpack.c.l.b16 %v2150
      %v2339 = vunpack.c.l.b16 %v2151
      %v2340 = vunpack.c.l.b16 %v2152
      %v2341 = vunpack.c.l.b16 %v2153
      %v2342 = vunpack.c.l.b16 %v2154
      %v2343 = vunpack.c.l.b16 %v2155
      %v2344 = vunpack.c.l.b16 %v2156
      %v2345 = vunpack.c.l.b16 %v2157
      %v2346 = vunpack.c.l.b16 %v2158
      %v2347 = vunpack.c.l.b16 %v2159
      %v2348 = vunpack.c.l.b16 %v2160
      %v2349 = vunpack.c.l.b16 %v2161
      %v2350 = vunpack.c.l.b16 %v2162
      %v2351 = vunpack.c.l.b16 %v2163
      %v2352 = vunpack.c.l.b16 %v2164
      %v2353 = vpack.c.b16 %v2261, %v2260
      %v2354 = vpack.c.b16 %v2263, %v2262
      %v2355 = vpack.c.b16 %v2265, %v2264
      %v2356 = vpack.c.b16 %v2267, %v2266
      %v2357 = vpack.c.b16 %v2269, %v2268
      %v2358 = vpack.c.b16 %v2271, %v2270
      %v2359 = vpack.c.b16 %v2273, %v2272
      %v2360 = vpack.c.b16 %v2275, %v2274
      %v2361 = vpack.c.b16 %v2277, %v2276
      %v2362 = vpack.c.b16 %v2279, %v2278
      %v2363 = vpack.c.b16 %v2281, %v2280
      %v2364 = vpack.c.b16 %v2283, %v2282
      %v2365 = vpack.c.b16 %v2285, %v2284
      %v2366 = vpack.c.b16 %v2287, %v2286
      %v2367 = vpack.c.b16 %v2289, %v2288
      %v2368 = vpack.c.b16 %v2291, %v2290
      %v2369 = vpack.c.b16 %v2293, %v2292
      %v2370 = vpack.c.b16 %v2295, %v2294
      %v2371 = vpack.c.b16 %v2297, %v2296
      %v2372 = vpack.c.b16 %v2299, %v2298
      %v2373 = vpack.c.b16 %v2301, %v2300
      %v2374 = vpack.c.b16 %v2303, %v2302
      %v2375 = vpack.c.b16 %v2305, %v2304
      %v2376 = vpack.c.b16 %v2307, %v2306
      %v2377 = vpack.c.b16 %v2309, %v2308
      %v2378 = vpack.c.b16 %v2311, %v2310
      %v2379 = vpack.c.b16 %v2313, %v2312
      %v2380 = vpack.c.b16 %v2315, %v2314
      %v2381 = vpack.c.b16 %v2317, %v2316
      %v2382 = vpack.c.b16 %v2319, %v2318
      %v2383 = vpack.c.b16 %v2321, %v2320
      %v2384 = vpack.c.b16 %v2323, %v2322
      %v2385 = vpack.c.b16 %v2325, %v2324
      %v2386 = vpack.c.b16 %v2327, %v2326
      %v2387 = vpack.c.b16 %v2329, %v2328
      %v2388 = vpack.c.b16 %v2331, %v2330
      %v2389 = vpack.c.b16 %v2333, %v2332
      %v2390 = vpack.c.b16 %v2335, %v2334
      %v2391 = vpack.c.b16 %v2337, %v2336
      %v2392 = vpack.c.b16 %v2339, %v2338
      %v2393 = vpack.c.b16 %v2341, %v2340
      %v2394 = vpack.c.b16 %v2343, %v2342
      %v2395 = vpack.c.b16 %v2345, %v2344
      %v2396 = vpack.c.b16 %v2347, %v2346
      %v2397 = vpack.c.b16 %v2349, %v2348
      %v2398 = vpack.c.b16 %v2351, %v2350
      %v2399 = vpack.c.b16 %v2352, %v2352
      %v2401 = vshrl.u32 %v2353, 16
      %v2403 = vshll.u32 %v2353, 16
      %v2405 = vrot.slane %v2403, 1
      %v2406 = vor.u32 %v2401, %v2405
      %v2408 = vshll.u32 %v2354, 16
      %v2410 = vrot.slane %v2408, 1
      %v2411 = vsel %vm983, %v2406, %v2410
      %v2412 = vshrl.u32 %v2354, 16
      %v2414 = vor.u32 %v2412, %v2410
      %v2416 = vshll.u32 %v2355, 16
      %v2418 = vrot.slane %v2416, 1
      %v2419 = vsel %vm983, %v2414, %v2418
      %v2420 = vshrl.u32 %v2355, 16
      %v2422 = vor.u32 %v2420, %v2418
      %v2424 = vshll.u32 %v2356, 16
      %v2426 = vrot.slane %v2424, 1
      %v2427 = vsel %vm983, %v2422, %v2426
      %v2428 = vshrl.u32 %v2356, 16
      %v2430 = vor.u32 %v2428, %v2426
      %v2432 = vshll.u32 %v2357, 16
      %v2434 = vrot.slane %v2432, 1
      %v2435 = vsel %vm983, %v2430, %v2434
      %v2436 = vshrl.u32 %v2357, 16
      %v2438 = vor.u32 %v2436, %v2434
      %v2440 = vshll.u32 %v2358, 16
      %v2442 = vrot.slane %v2440, 1
      %v2443 = vsel %vm983, %v2438, %v2442
      %v2444 = vshrl.u32 %v2358, 16
      %v2446 = vor.u32 %v2444, %v2442
      %v2448 = vshll.u32 %v2359, 16
      %v2450 = vrot.slane %v2448, 1
      %v2451 = vsel %vm983, %v2446, %v2450
      %v2452 = vshrl.u32 %v2359, 16
      %v2454 = vor.u32 %v2452, %v2450
      %v2456 = vshll.u32 %v2360, 16
      %v2458 = vrot.slane %v2456, 1
      %v2459 = vsel %vm983, %v2454, %v2458
      %v2460 = vshrl.u32 %v2360, 16
      %v2462 = vor.u32 %v2460, %v2458
      %v2464 = vshll.u32 %v2361, 16
      %v2466 = vrot.slane %v2464, 1
      %v2467 = vsel %vm983, %v2462, %v2466
      %v2468 = vshrl.u32 %v2361, 16
      %v2470 = vor.u32 %v2468, %v2466
      %v2472 = vshll.u32 %v2362, 16
      %v2474 = vrot.slane %v2472, 1
      %v2475 = vsel %vm983, %v2470, %v2474
      %v2476 = vshrl.u32 %v2362, 16
      %v2478 = vor.u32 %v2476, %v2474
      %v2480 = vshll.u32 %v2363, 16
      %v2482 = vrot.slane %v2480, 1
      %v2483 = vsel %vm983, %v2478, %v2482
      %v2484 = vshrl.u32 %v2363, 16
      %v2486 = vor.u32 %v2484, %v2482
      %v2488 = vshll.u32 %v2364, 16
      %v2490 = vrot.slane %v2488, 1
      %v2491 = vsel %vm983, %v2486, %v2490
      %v2492 = vshrl.u32 %v2364, 16
      %v2494 = vor.u32 %v2492, %v2490
      %v2496 = vshll.u32 %v2365, 16
      %v2498 = vrot.slane %v2496, 1
      %v2499 = vsel %vm983, %v2494, %v2498
      %v2500 = vshrl.u32 %v2365, 16
      %v2502 = vor.u32 %v2500, %v2498
      %v2504 = vshll.u32 %v2366, 16
      %v2506 = vrot.slane %v2504, 1
      %v2507 = vsel %vm983, %v2502, %v2506
      %v2508 = vshrl.u32 %v2366, 16
      %v2510 = vor.u32 %v2508, %v2506
      %v2512 = vshll.u32 %v2367, 16
      %v2514 = vrot.slane %v2512, 1
      %v2515 = vsel %vm983, %v2510, %v2514
      %v2516 = vshrl.u32 %v2367, 16
      %v2518 = vor.u32 %v2516, %v2514
      %v2520 = vshll.u32 %v2368, 16
      %v2522 = vrot.slane %v2520, 1
      %v2523 = vsel %vm983, %v2518, %v2522
      %v2524 = vshrl.u32 %v2368, 16
      %v2526 = vor.u32 %v2524, %v2522
      %v2528 = vshll.u32 %v2369, 16
      %v2530 = vrot.slane %v2528, 1
      %v2531 = vsel %vm983, %v2526, %v2530
      %v2532 = vshrl.u32 %v2369, 16
      %v2534 = vor.u32 %v2532, %v2530
      %v2536 = vshll.u32 %v2370, 16
      %v2538 = vrot.slane %v2536, 1
      %v2539 = vsel %vm983, %v2534, %v2538
      %v2540 = vshrl.u32 %v2370, 16
      %v2542 = vor.u32 %v2540, %v2538
      %v2544 = vshll.u32 %v2371, 16
      %v2546 = vrot.slane %v2544, 1
      %v2547 = vsel %vm983, %v2542, %v2546
      %v2548 = vshrl.u32 %v2371, 16
      %v2550 = vor.u32 %v2548, %v2546
      %v2552 = vshll.u32 %v2372, 16
      %v2554 = vrot.slane %v2552, 1
      %v2555 = vsel %vm983, %v2550, %v2554
      %v2556 = vshrl.u32 %v2372, 16
      %v2558 = vor.u32 %v2556, %v2554
      %v2560 = vshll.u32 %v2373, 16
      %v2562 = vrot.slane %v2560, 1
      %v2563 = vsel %vm983, %v2558, %v2562
      %v2564 = vshrl.u32 %v2373, 16
      %v2566 = vor.u32 %v2564, %v2562
      %v2568 = vshll.u32 %v2374, 16
      %v2570 = vrot.slane %v2568, 1
      %v2571 = vsel %vm983, %v2566, %v2570
      %v2572 = vshrl.u32 %v2374, 16
      %v2574 = vor.u32 %v2572, %v2570
      %v2576 = vshll.u32 %v2375, 16
      %v2578 = vrot.slane %v2576, 1
      %v2579 = vsel %vm983, %v2574, %v2578
      %v2580 = vshrl.u32 %v2375, 16
      %v2582 = vor.u32 %v2580, %v2578
      %v2584 = vshll.u32 %v2376, 16
      %v2586 = vrot.slane %v2584, 1
      %v2587 = vsel %vm983, %v2582, %v2586
      %v2588 = vshrl.u32 %v2376, 16
      %v2590 = vor.u32 %v2588, %v2586
      %v2592 = vshll.u32 %v2377, 16
      %v2594 = vrot.slane %v2592, 1
      %v2595 = vsel %vm983, %v2590, %v2594
      %v2596 = vshrl.u32 %v2377, 16
      %v2598 = vor.u32 %v2596, %v2594
      %v2600 = vshll.u32 %v2378, 16
      %v2602 = vrot.slane %v2600, 1
      %v2603 = vsel %vm983, %v2598, %v2602
      %v2604 = vshrl.u32 %v2378, 16
      %v2606 = vor.u32 %v2604, %v2602
      %v2608 = vshll.u32 %v2379, 16
      %v2610 = vrot.slane %v2608, 1
      %v2611 = vsel %vm983, %v2606, %v2610
      %v2612 = vshrl.u32 %v2379, 16
      %v2614 = vor.u32 %v2612, %v2610
      %v2616 = vshll.u32 %v2380, 16
      %v2618 = vrot.slane %v2616, 1
      %v2619 = vsel %vm983, %v2614, %v2618
      %v2620 = vshrl.u32 %v2380, 16
      %v2622 = vor.u32 %v2620, %v2618
      %v2624 = vshll.u32 %v2381, 16
      %v2626 = vrot.slane %v2624, 1
      %v2627 = vsel %vm983, %v2622, %v2626
      %v2628 = vshrl.u32 %v2381, 16
      %v2630 = vor.u32 %v2628, %v2626
      %v2632 = vshll.u32 %v2382, 16
      %v2634 = vrot.slane %v2632, 1
      %v2635 = vsel %vm983, %v2630, %v2634
      %v2636 = vshrl.u32 %v2382, 16
      %v2638 = vor.u32 %v2636, %v2634
      %v2640 = vshll.u32 %v2383, 16
      %v2642 = vrot.slane %v2640, 1
      %v2643 = vsel %vm983, %v2638, %v2642
      %v2644 = vshrl.u32 %v2383, 16
      %v2646 = vor.u32 %v2644, %v2642
      %v2648 = vshll.u32 %v2384, 16
      %v2650 = vrot.slane %v2648, 1
      %v2651 = vsel %vm983, %v2646, %v2650
      %v2652 = vshrl.u32 %v2384, 16
      %v2654 = vor.u32 %v2652, %v2650
      %v2656 = vshll.u32 %v2385, 16
      %v2658 = vrot.slane %v2656, 1
      %v2659 = vsel %vm983, %v2654, %v2658
      %v2660 = vshrl.u32 %v2385, 16
      %v2662 = vor.u32 %v2660, %v2658
      %v2664 = vshll.u32 %v2386, 16
      %v2666 = vrot.slane %v2664, 1
      %v2667 = vsel %vm983, %v2662, %v2666
      %v2668 = vshrl.u32 %v2386, 16
      %v2670 = vor.u32 %v2668, %v2666
      %v2672 = vshll.u32 %v2387, 16
      %v2674 = vrot.slane %v2672, 1
      %v2675 = vsel %vm983, %v2670, %v2674
      %v2676 = vshrl.u32 %v2387, 16
      %v2678 = vor.u32 %v2676, %v2674
      %v2680 = vshll.u32 %v2388, 16
      %v2682 = vrot.slane %v2680, 1
      %v2683 = vsel %vm983, %v2678, %v2682
      %v2684 = vshrl.u32 %v2388, 16
      %v2686 = vor.u32 %v2684, %v2682
      %v2688 = vshll.u32 %v2389, 16
      %v2690 = vrot.slane %v2688, 1
      %v2691 = vsel %vm983, %v2686, %v2690
      %v2692 = vshrl.u32 %v2389, 16
      %v2694 = vor.u32 %v2692, %v2690
      %v2696 = vshll.u32 %v2390, 16
      %v2698 = vrot.slane %v2696, 1
      %v2699 = vsel %vm983, %v2694, %v2698
      %v2700 = vshrl.u32 %v2390, 16
      %v2702 = vor.u32 %v2700, %v2698
      %v2704 = vshll.u32 %v2391, 16
      %v2706 = vrot.slane %v2704, 1
      %v2707 = vsel %vm983, %v2702, %v2706
      %v2708 = vshrl.u32 %v2391, 16
      %v2710 = vor.u32 %v2708, %v2706
      %v2712 = vshll.u32 %v2392, 16
      %v2714 = vrot.slane %v2712, 1
      %v2715 = vsel %vm983, %v2710, %v2714
      %v2716 = vshrl.u32 %v2392, 16
      %v2718 = vor.u32 %v2716, %v2714
      %v2720 = vshll.u32 %v2393, 16
      %v2722 = vrot.slane %v2720, 1
      %v2723 = vsel %vm983, %v2718, %v2722
      %v2724 = vshrl.u32 %v2393, 16
      %v2726 = vor.u32 %v2724, %v2722
      %v2728 = vshll.u32 %v2394, 16
      %v2730 = vrot.slane %v2728, 1
      %v2731 = vsel %vm983, %v2726, %v2730
      %v2732 = vshrl.u32 %v2394, 16
      %v2734 = vor.u32 %v2732, %v2730
      %v2736 = vshll.u32 %v2395, 16
      %v2738 = vrot.slane %v2736, 1
      %v2739 = vsel %vm983, %v2734, %v2738
      %v2740 = vshrl.u32 %v2395, 16
      %v2742 = vor.u32 %v2740, %v2738
      %v2744 = vshll.u32 %v2396, 16
      %v2746 = vrot.slane %v2744, 1
      %v2747 = vsel %vm983, %v2742, %v2746
      %v2748 = vshrl.u32 %v2396, 16
      %v2750 = vor.u32 %v2748, %v2746
      %v2752 = vshll.u32 %v2397, 16
      %v2754 = vrot.slane %v2752, 1
      %v2755 = vsel %vm983, %v2750, %v2754
      %v2756 = vshrl.u32 %v2397, 16
      %v2758 = vor.u32 %v2756, %v2754
      %v2760 = vshll.u32 %v2398, 16
      %v2762 = vrot.slane %v2760, 1
      %v2763 = vsel %vm983, %v2758, %v2762
      %v2764 = vshrl.u32 %v2398, 16
      %v2766 = vor.u32 %v2764, %v2762
      %v2768 = vshll.u32 %v2399, 16
      %v2770 = vrot.slane %v2768, 1
      %v2771 = vsel %vm983, %v2766, %v2770
      %v2773 = vsel %vm1356, %v2411, 0
      %v2776 = vsel %vm1356, %v2419, 0
      %v2779 = vsel %vm1356, %v2427, 0
      %v2782 = vsel %vm1356, %v2435, 0
      %v2785 = vsel %vm1356, %v2443, 0
      %v2788 = vsel %vm1356, %v2451, 0
      %v2791 = vsel %vm1356, %v2459, 0
      %v2794 = vsel %vm1356, %v2467, 0
      %v2797 = vsel %vm1356, %v2475, 0
      %v2800 = vsel %vm1356, %v2483, 0
      %v2803 = vsel %vm1356, %v2491, 0
      %v2806 = vsel %vm1356, %v2499, 0
      %v2809 = vsel %vm1356, %v2507, 0
      %v2812 = vsel %vm1356, %v2515, 0
      %v2815 = vsel %vm1356, %v2523, 0
      %v2818 = vsel %vm1356, %v2531, 0
      %v2821 = vsel %vm1356, %v2539, 0
      %v2824 = vsel %vm1356, %v2547, 0
      %v2827 = vsel %vm1356, %v2555, 0
      %v2830 = vsel %vm1356, %v2563, 0
      %v2833 = vsel %vm1356, %v2571, 0
      %v2836 = vsel %vm1356, %v2579, 0
      %v2839 = vsel %vm1356, %v2587, 0
      %v2842 = vsel %vm1356, %v2595, 0
      %v2845 = vsel %vm1356, %v2603, 0
      %v2848 = vsel %vm1356, %v2611, 0
      %v2851 = vsel %vm1356, %v2619, 0
      %v2854 = vsel %vm1356, %v2627, 0
      %v2857 = vsel %vm1356, %v2635, 0
      %v2860 = vsel %vm1356, %v2643, 0
      %v2863 = vsel %vm1356, %v2651, 0
      %v2866 = vsel %vm1356, %v2659, 0
      %v2869 = vsel %vm1356, %v2667, 0
      %v2872 = vsel %vm1356, %v2675, 0
      %v2875 = vsel %vm1356, %v2683, 0
      %v2878 = vsel %vm1356, %v2691, 0
      %v2881 = vsel %vm1356, %v2699, 0
      %v2884 = vsel %vm1356, %v2707, 0
      %v2887 = vsel %vm1356, %v2715, 0
      %v2890 = vsel %vm1356, %v2723, 0
      %v2893 = vsel %vm1356, %v2731, 0
      %v2896 = vsel %vm1356, %v2739, 0
      %v2899 = vsel %vm1356, %v2747, 0
      %v2902 = vsel %vm1356, %v2755, 0
      %v2905 = vsel %vm1356, %v2763, 0
      %v2908 = vsel %vm1356, %v2771, 0
      %v2911 = vsel %vm1495, %v2166, 0
      %2913 = vmatpush.bf16.msra.mxu0 0
      %2914 = vmatpush.bf16.msra.mxu0 0
      %2915 = vmatpush.bf16.msra.mxu0 0
      %2916 = vmatpush.bf16.msra.mxu0 0
      %2917 = vmatpush.bf16.msra.mxu0 0
      %2918 = vmatpush.bf16.msra.mxu0 0
      %2919 = vmatpush.bf16.msra.mxu0 0
      %2920 = vmatpush.bf16.msra.mxu0 %v2911
      %2921 = vmatmul.bf16.gmra.mxu0 %v2773
      %v2922 = vpop.f32.mrf.mxu0
      %v2923 = vadd.f32 0.0, %v2922
      %v2924 = vpop.f32.mrf.mxu0
      %v2925 = vadd.f32 0.0, %v2924
      %2926 = vmatmul.bf16.gmra.mxu0 %v2776
      %v2927 = vpop.f32.mrf.mxu0
      %v2928 = vadd.f32 0.0, %v2927
      %v2929 = vpop.f32.mrf.mxu0
      %v2930 = vadd.f32 0.0, %v2929
      %2931 = vmatmul.bf16.gmra.mxu0 %v2779
      %v2932 = vpop.f32.mrf.mxu0
      %v2933 = vadd.f32 0.0, %v2932
      %v2934 = vpop.f32.mrf.mxu0
      %v2935 = vadd.f32 0.0, %v2934
      %2936 = vmatmul.bf16.gmra.mxu0 %v2782
      %v2937 = vpop.f32.mrf.mxu0
      %v2938 = vadd.f32 0.0, %v2937
      %v2939 = vpop.f32.mrf.mxu0
      %v2940 = vadd.f32 0.0, %v2939
      %2941 = vmatmul.bf16.gmra.mxu0 %v2785
      %v2942 = vpop.f32.mrf.mxu0
      %v2943 = vadd.f32 0.0, %v2942
      %v2944 = vpop.f32.mrf.mxu0
      %v2945 = vadd.f32 0.0, %v2944
      %2946 = vmatmul.bf16.gmra.mxu0 %v2788
      %v2947 = vpop.f32.mrf.mxu0
      %v2948 = vadd.f32 0.0, %v2947
      %v2949 = vpop.f32.mrf.mxu0
      %v2950 = vadd.f32 0.0, %v2949
      %2951 = vmatmul.bf16.gmra.mxu0 %v2791
      %v2952 = vpop.f32.mrf.mxu0
      %v2953 = vadd.f32 0.0, %v2952
      %v2954 = vpop.f32.mrf.mxu0
      %v2955 = vadd.f32 0.0, %v2954
      %2956 = vmatmul.bf16.gmra.mxu0 %v2794
      %v2957 = vpop.f32.mrf.mxu0
      %v2958 = vadd.f32 0.0, %v2957
      %v2959 = vpop.f32.mrf.mxu0
      %v2960 = vadd.f32 0.0, %v2959
      %2961 = vmatmul.bf16.gmra.mxu0 %v2797
      %v2962 = vpop.f32.mrf.mxu0
      %v2963 = vadd.f32 0.0, %v2962
      %v2964 = vpop.f32.mrf.mxu0
      %v2965 = vadd.f32 0.0, %v2964
      %2966 = vmatmul.bf16.gmra.mxu0 %v2800
      %v2967 = vpop.f32.mrf.mxu0
      %v2968 = vadd.f32 0.0, %v2967
      %v2969 = vpop.f32.mrf.mxu0
      %v2970 = vadd.f32 0.0, %v2969
      %2971 = vmatmul.bf16.gmra.mxu0 %v2803
      %v2972 = vpop.f32.mrf.mxu0
      %v2973 = vadd.f32 0.0, %v2972
      %v2974 = vpop.f32.mrf.mxu0
      %v2975 = vadd.f32 0.0, %v2974
      %2976 = vmatmul.bf16.gmra.mxu0 %v2806
      %v2977 = vpop.f32.mrf.mxu0
      %v2978 = vadd.f32 0.0, %v2977
      %v2979 = vpop.f32.mrf.mxu0
      %v2980 = vadd.f32 0.0, %v2979
      %2981 = vmatmul.bf16.gmra.mxu0 %v2809
      %v2982 = vpop.f32.mrf.mxu0
      %v2983 = vadd.f32 0.0, %v2982
      %v2984 = vpop.f32.mrf.mxu0
      %v2985 = vadd.f32 0.0, %v2984
      %2986 = vmatmul.bf16.gmra.mxu0 %v2812
      %v2987 = vpop.f32.mrf.mxu0
      %v2988 = vadd.f32 0.0, %v2987
      %v2989 = vpop.f32.mrf.mxu0
      %v2990 = vadd.f32 0.0, %v2989
      %2991 = vmatmul.bf16.gmra.mxu0 %v2815
      %v2992 = vpop.f32.mrf.mxu0
      %v2993 = vadd.f32 0.0, %v2992
      %v2994 = vpop.f32.mrf.mxu0
      %v2995 = vadd.f32 0.0, %v2994
      %2996 = vmatmul.bf16.gmra.mxu0 %v2818
      %v2997 = vpop.f32.mrf.mxu0
      %v2998 = vadd.f32 0.0, %v2997
      %v2999 = vpop.f32.mrf.mxu0
      %v3000 = vadd.f32 0.0, %v2999
      %3001 = vmatmul.bf16.gmra.mxu0 %v2821
      %v3002 = vpop.f32.mrf.mxu0
      %v3003 = vadd.f32 0.0, %v3002
      %v3004 = vpop.f32.mrf.mxu0
      %v3005 = vadd.f32 0.0, %v3004
      %3006 = vmatmul.bf16.gmra.mxu0 %v2824
      %v3007 = vpop.f32.mrf.mxu0
      %v3008 = vadd.f32 0.0, %v3007
      %v3009 = vpop.f32.mrf.mxu0
      %v3010 = vadd.f32 0.0, %v3009
      %3011 = vmatmul.bf16.gmra.mxu0 %v2827
      %v3012 = vpop.f32.mrf.mxu0
      %v3013 = vadd.f32 0.0, %v3012
      %v3014 = vpop.f32.mrf.mxu0
      %v3015 = vadd.f32 0.0, %v3014
      %3016 = vmatmul.bf16.gmra.mxu0 %v2830
      %v3017 = vpop.f32.mrf.mxu0
      %v3018 = vadd.f32 0.0, %v3017
      %v3019 = vpop.f32.mrf.mxu0
      %v3020 = vadd.f32 0.0, %v3019
      %3021 = vmatmul.bf16.gmra.mxu0 %v2833
      %v3022 = vpop.f32.mrf.mxu0
      %v3023 = vadd.f32 0.0, %v3022
      %v3024 = vpop.f32.mrf.mxu0
      %v3025 = vadd.f32 0.0, %v3024
      %3026 = vmatmul.bf16.gmra.mxu0 %v2836
      %v3027 = vpop.f32.mrf.mxu0
      %v3028 = vadd.f32 0.0, %v3027
      %v3029 = vpop.f32.mrf.mxu0
      %v3030 = vadd.f32 0.0, %v3029
      %3031 = vmatmul.bf16.gmra.mxu0 %v2839
      %v3032 = vpop.f32.mrf.mxu0
      %v3033 = vadd.f32 0.0, %v3032
      %v3034 = vpop.f32.mrf.mxu0
      %v3035 = vadd.f32 0.0, %v3034
      %3036 = vmatmul.bf16.gmra.mxu0 %v2842
      %v3037 = vpop.f32.mrf.mxu0
      %v3038 = vadd.f32 0.0, %v3037
      %v3039 = vpop.f32.mrf.mxu0
      %v3040 = vadd.f32 0.0, %v3039
      %3041 = vmatmul.bf16.gmra.mxu0 %v2845
      %v3042 = vpop.f32.mrf.mxu0
      %v3043 = vadd.f32 0.0, %v3042
      %v3044 = vpop.f32.mrf.mxu0
      %v3045 = vadd.f32 0.0, %v3044
      %3046 = vmatmul.bf16.gmra.mxu0 %v2848
      %v3047 = vpop.f32.mrf.mxu0
      %v3048 = vadd.f32 0.0, %v3047
      %v3049 = vpop.f32.mrf.mxu0
      %v3050 = vadd.f32 0.0, %v3049
      %3051 = vmatmul.bf16.gmra.mxu0 %v2851
      %v3052 = vpop.f32.mrf.mxu0
      %v3053 = vadd.f32 0.0, %v3052
      %v3054 = vpop.f32.mrf.mxu0
      %v3055 = vadd.f32 0.0, %v3054
      %3056 = vmatmul.bf16.gmra.mxu0 %v2854
      %v3057 = vpop.f32.mrf.mxu0
      %v3058 = vadd.f32 0.0, %v3057
      %v3059 = vpop.f32.mrf.mxu0
      %v3060 = vadd.f32 0.0, %v3059
      %3061 = vmatmul.bf16.gmra.mxu0 %v2857
      %v3062 = vpop.f32.mrf.mxu0
      %v3063 = vadd.f32 0.0, %v3062
      %v3064 = vpop.f32.mrf.mxu0
      %v3065 = vadd.f32 0.0, %v3064
      %3066 = vmatmul.bf16.gmra.mxu0 %v2860
      %v3067 = vpop.f32.mrf.mxu0
      %v3068 = vadd.f32 0.0, %v3067
      %v3069 = vpop.f32.mrf.mxu0
      %v3070 = vadd.f32 0.0, %v3069
      %3071 = vmatmul.bf16.gmra.mxu0 %v2863
      %v3072 = vpop.f32.mrf.mxu0
      %v3073 = vadd.f32 0.0, %v3072
      %v3074 = vpop.f32.mrf.mxu0
      %v3075 = vadd.f32 0.0, %v3074
      %3076 = vmatmul.bf16.gmra.mxu0 %v2866
      %v3077 = vpop.f32.mrf.mxu0
      %v3078 = vadd.f32 0.0, %v3077
      %v3079 = vpop.f32.mrf.mxu0
      %v3080 = vadd.f32 0.0, %v3079
      %3081 = vmatmul.bf16.gmra.mxu0 %v2869
      %v3082 = vpop.f32.mrf.mxu0
      %v3083 = vadd.f32 0.0, %v3082
      %v3084 = vpop.f32.mrf.mxu0
      %v3085 = vadd.f32 0.0, %v3084
      %3086 = vmatmul.bf16.gmra.mxu0 %v2872
      %v3087 = vpop.f32.mrf.mxu0
      %v3088 = vadd.f32 0.0, %v3087
      %v3089 = vpop.f32.mrf.mxu0
      %v3090 = vadd.f32 0.0, %v3089
      %3091 = vmatmul.bf16.gmra.mxu0 %v2875
      %v3092 = vpop.f32.mrf.mxu0
      %v3093 = vadd.f32 0.0, %v3092
      %v3094 = vpop.f32.mrf.mxu0
      %v3095 = vadd.f32 0.0, %v3094
      %3096 = vmatmul.bf16.gmra.mxu0 %v2878
      %v3097 = vpop.f32.mrf.mxu0
      %v3098 = vadd.f32 0.0, %v3097
      %v3099 = vpop.f32.mrf.mxu0
      %v3100 = vadd.f32 0.0, %v3099
      %3101 = vmatmul.bf16.gmra.mxu0 %v2881
      %v3102 = vpop.f32.mrf.mxu0
      %v3103 = vadd.f32 0.0, %v3102
      %v3104 = vpop.f32.mrf.mxu0
      %v3105 = vadd.f32 0.0, %v3104
      %3106 = vmatmul.bf16.gmra.mxu0 %v2884
      %v3107 = vpop.f32.mrf.mxu0
      %v3108 = vadd.f32 0.0, %v3107
      %v3109 = vpop.f32.mrf.mxu0
      %v3110 = vadd.f32 0.0, %v3109
      %3111 = vmatmul.bf16.gmra.mxu0 %v2887
      %v3112 = vpop.f32.mrf.mxu0
      %v3113 = vadd.f32 0.0, %v3112
      %v3114 = vpop.f32.mrf.mxu0
      %v3115 = vadd.f32 0.0, %v3114
      %3116 = vmatmul.bf16.gmra.mxu0 %v2890
      %v3117 = vpop.f32.mrf.mxu0
      %v3118 = vadd.f32 0.0, %v3117
      %v3119 = vpop.f32.mrf.mxu0
      %v3120 = vadd.f32 0.0, %v3119
      %3121 = vmatmul.bf16.gmra.mxu0 %v2893
      %v3122 = vpop.f32.mrf.mxu0
      %v3123 = vadd.f32 0.0, %v3122
      %v3124 = vpop.f32.mrf.mxu0
      %v3125 = vadd.f32 0.0, %v3124
      %3126 = vmatmul.bf16.gmra.mxu0 %v2896
      %v3127 = vpop.f32.mrf.mxu0
      %v3128 = vadd.f32 0.0, %v3127
      %v3129 = vpop.f32.mrf.mxu0
      %v3130 = vadd.f32 0.0, %v3129
      %3131 = vmatmul.bf16.gmra.mxu0 %v2899
      %v3132 = vpop.f32.mrf.mxu0
      %v3133 = vadd.f32 0.0, %v3132
      %v3134 = vpop.f32.mrf.mxu0
      %v3135 = vadd.f32 0.0, %v3134
      %3136 = vmatmul.bf16.gmra.mxu0 %v2902
      %v3137 = vpop.f32.mrf.mxu0
      %v3138 = vadd.f32 0.0, %v3137
      %v3139 = vpop.f32.mrf.mxu0
      %v3140 = vadd.f32 0.0, %v3139
      %3141 = vmatmul.bf16.gmra.mxu0 %v2905
      %v3142 = vpop.f32.mrf.mxu0
      %v3143 = vadd.f32 0.0, %v3142
      %v3144 = vpop.f32.mrf.mxu0
      %v3145 = vadd.f32 0.0, %v3144
      %3146 = vmatmul.bf16.gmra.mxu0 %v2908
      %v3147 = vpop.f32.mrf.mxu0
      %v3148 = vadd.f32 0.0, %v3147
      %v3149 = vpop.f32.mrf.mxu0
      %v3150 = vadd.f32 0.0, %v3149
      %3151 = vdwg.mxu0
      %v3152 = vadd.f32 %v1843, %v2923
      %v3153 = vadd.f32 %v1845, %v2925
      %v3154 = vadd.f32 %v1848, %v2928
      %v3155 = vadd.f32 %v1850, %v2930
      %v3156 = vadd.f32 %v1853, %v2933
      %v3157 = vadd.f32 %v1855, %v2935
      %v3158 = vadd.f32 %v1858, %v2938
      %v3159 = vadd.f32 %v1860, %v2940
      %v3160 = vadd.f32 %v1863, %v2943
      %v3161 = vadd.f32 %v1865, %v2945
      %v3162 = vadd.f32 %v1868, %v2948
      %v3163 = vadd.f32 %v1870, %v2950
      %v3164 = vadd.f32 %v1873, %v2953
      %v3165 = vadd.f32 %v1875, %v2955
      %v3166 = vadd.f32 %v1878, %v2958
      %v3167 = vadd.f32 %v1880, %v2960
      %v3168 = vadd.f32 %v1883, %v2963
      %v3169 = vadd.f32 %v1885, %v2965
      %v3170 = vadd.f32 %v1888, %v2968
      %v3171 = vadd.f32 %v1890, %v2970
      %v3172 = vadd.f32 %v1893, %v2973
      %v3173 = vadd.f32 %v1895, %v2975
      %v3174 = vadd.f32 %v1898, %v2978
      %v3175 = vadd.f32 %v1900, %v2980
      %v3176 = vadd.f32 %v1903, %v2983
      %v3177 = vadd.f32 %v1905, %v2985
      %v3178 = vadd.f32 %v1908, %v2988
      %v3179 = vadd.f32 %v1910, %v2990
      %v3180 = vadd.f32 %v1913, %v2993
      %v3181 = vadd.f32 %v1915, %v2995
      %v3182 = vadd.f32 %v1918, %v2998
      %v3183 = vadd.f32 %v1920, %v3000
      %v3184 = vadd.f32 %v1923, %v3003
      %v3185 = vadd.f32 %v1925, %v3005
      %v3186 = vadd.f32 %v1928, %v3008
      %v3187 = vadd.f32 %v1930, %v3010
      %v3188 = vadd.f32 %v1933, %v3013
      %v3189 = vadd.f32 %v1935, %v3015
      %v3190 = vadd.f32 %v1938, %v3018
      %v3191 = vadd.f32 %v1940, %v3020
      %v3192 = vadd.f32 %v1943, %v3023
      %v3193 = vadd.f32 %v1945, %v3025
      %v3194 = vadd.f32 %v1948, %v3028
      %v3195 = vadd.f32 %v1950, %v3030
      %v3196 = vadd.f32 %v1953, %v3033
      %v3197 = vadd.f32 %v1955, %v3035
      %v3198 = vadd.f32 %v1958, %v3038
      %v3199 = vadd.f32 %v1960, %v3040
      %v3200 = vadd.f32 %v1963, %v3043
      %v3201 = vadd.f32 %v1965, %v3045
      %v3202 = vadd.f32 %v1968, %v3048
      %v3203 = vadd.f32 %v1970, %v3050
      %v3204 = vadd.f32 %v1973, %v3053
      %v3205 = vadd.f32 %v1975, %v3055
      %v3206 = vadd.f32 %v1978, %v3058
      %v3207 = vadd.f32 %v1980, %v3060
      %v3208 = vadd.f32 %v1983, %v3063
      %v3209 = vadd.f32 %v1985, %v3065
      %v3210 = vadd.f32 %v1988, %v3068
      %v3211 = vadd.f32 %v1990, %v3070
      %v3212 = vadd.f32 %v1993, %v3073
      %v3213 = vadd.f32 %v1995, %v3075
      %v3214 = vadd.f32 %v1998, %v3078
      %v3215 = vadd.f32 %v2000, %v3080
      %v3216 = vadd.f32 %v2003, %v3083
      %v3217 = vadd.f32 %v2005, %v3085
      %v3218 = vadd.f32 %v2008, %v3088
      %v3219 = vadd.f32 %v2010, %v3090
      %v3220 = vadd.f32 %v2013, %v3093
      %v3221 = vadd.f32 %v2015, %v3095
      %v3222 = vadd.f32 %v2018, %v3098
      %v3223 = vadd.f32 %v2020, %v3100
      %v3224 = vadd.f32 %v2023, %v3103
      %v3225 = vadd.f32 %v2025, %v3105
      %v3226 = vadd.f32 %v2028, %v3108
      %v3227 = vadd.f32 %v2030, %v3110
      %v3228 = vadd.f32 %v2033, %v3113
      %v3229 = vadd.f32 %v2035, %v3115
      %v3230 = vadd.f32 %v2038, %v3118
      %v3231 = vadd.f32 %v2040, %v3120
      %v3232 = vadd.f32 %v2043, %v3123
      %v3233 = vadd.f32 %v2045, %v3125
      %v3234 = vadd.f32 %v2048, %v3128
      %v3235 = vadd.f32 %v2050, %v3130
      %v3236 = vadd.f32 %v2053, %v3133
      %v3237 = vadd.f32 %v2055, %v3135
      %v3238 = vadd.f32 %v2058, %v3138
      %v3239 = vadd.f32 %v2060, %v3140
      %v3240 = vadd.f32 %v2063, %v3143
      %v3241 = vadd.f32 %v2065, %v3145
      %v3242 = vadd.f32 %v2068, %v3148
      %v3243 = vadd.f32 %v2070, %v3150
      %v3244 = vld [vmem:[#allocation2 + $0x4] sm:$0xe]
      %s3245 = scalar_lea.vmem %s2, 12
      %v3246 = vld [vmem:[%s3245] sm:$0xf]
      %v3248 = vunpack.c.l.b16 %v3244
      %v3249 = vpack.c.b16 %v2261, %v3248
      %vm3250 = vcmask 1046528
      %v3251 = vrot.slane %v3249, 1
      %v3252 = vrot.slane %v2354, 1
      %v3253 = vsel %vm3250, %v3251, %v3252
      %v3254 = vrot.slane %v2355, 1
      %v3255 = vsel %vm3250, %v3252, %v3254
      %v3256 = vrot.slane %v2356, 1
      %v3257 = vsel %vm3250, %v3254, %v3256
      %v3258 = vrot.slane %v2357, 1
      %v3259 = vsel %vm3250, %v3256, %v3258
      %v3260 = vrot.slane %v2358, 1
      %v3261 = vsel %vm3250, %v3258, %v3260
      %v3262 = vrot.slane %v2359, 1
      %v3263 = vsel %vm3250, %v3260, %v3262
      %v3264 = vrot.slane %v2360, 1
      %v3265 = vsel %vm3250, %v3262, %v3264
      %v3266 = vrot.slane %v2361, 1
      %v3267 = vsel %vm3250, %v3264, %v3266
      %v3268 = vrot.slane %v2362, 1
      %v3269 = vsel %vm3250, %v3266, %v3268
      %v3270 = vrot.slane %v2363, 1
      %v3271 = vsel %vm3250, %v3268, %v3270
      %v3272 = vrot.slane %v2364, 1
      %v3273 = vsel %vm3250, %v3270, %v3272
      %v3274 = vrot.slane %v2365, 1
      %v3275 = vsel %vm3250, %v3272, %v3274
      %v3276 = vrot.slane %v2366, 1
      %v3277 = vsel %vm3250, %v3274, %v3276
      %v3278 = vrot.slane %v2367, 1
      %v3279 = vsel %vm3250, %v3276, %v3278
      %v3280 = vrot.slane %v2368, 1
      %v3281 = vsel %vm3250, %v3278, %v3280
      %v3282 = vrot.slane %v2369, 1
      %v3283 = vsel %vm3250, %v3280, %v3282
      %v3284 = vrot.slane %v2370, 1
      %v3285 = vsel %vm3250, %v3282, %v3284
      %v3286 = vrot.slane %v2371, 1
      %v3287 = vsel %vm3250, %v3284, %v3286
      %v3288 = vrot.slane %v2372, 1
      %v3289 = vsel %vm3250, %v3286, %v3288
      %v3290 = vrot.slane %v2373, 1
      %v3291 = vsel %vm3250, %v3288, %v3290
      %v3292 = vrot.slane %v2374, 1
      %v3293 = vsel %vm3250, %v3290, %v3292
      %v3294 = vrot.slane %v2375, 1
      %v3295 = vsel %vm3250, %v3292, %v3294
      %v3296 = vrot.slane %v2376, 1
      %v3297 = vsel %vm3250, %v3294, %v3296
      %v3298 = vrot.slane %v2377, 1
      %v3299 = vsel %vm3250, %v3296, %v3298
      %v3300 = vrot.slane %v2378, 1
      %v3301 = vsel %vm3250, %v3298, %v3300
      %v3302 = vrot.slane %v2379, 1
      %v3303 = vsel %vm3250, %v3300, %v3302
      %v3304 = vrot.slane %v2380, 1
      %v3305 = vsel %vm3250, %v3302, %v3304
      %v3306 = vrot.slane %v2381, 1
      %v3307 = vsel %vm3250, %v3304, %v3306
      %v3308 = vrot.slane %v2382, 1
      %v3309 = vsel %vm3250, %v3306, %v3308
      %v3310 = vrot.slane %v2383, 1
      %v3311 = vsel %vm3250, %v3308, %v3310
      %v3312 = vrot.slane %v2384, 1
      %v3313 = vsel %vm3250, %v3310, %v3312
      %v3314 = vrot.slane %v2385, 1
      %v3315 = vsel %vm3250, %v3312, %v3314
      %v3316 = vrot.slane %v2386, 1
      %v3317 = vsel %vm3250, %v3314, %v3316
      %v3318 = vrot.slane %v2387, 1
      %v3319 = vsel %vm3250, %v3316, %v3318
      %v3320 = vrot.slane %v2388, 1
      %v3321 = vsel %vm3250, %v3318, %v3320
      %v3322 = vrot.slane %v2389, 1
      %v3323 = vsel %vm3250, %v3320, %v3322
      %v3324 = vrot.slane %v2390, 1
      %v3325 = vsel %vm3250, %v3322, %v3324
      %v3326 = vrot.slane %v2391, 1
      %v3327 = vsel %vm3250, %v3324, %v3326
      %v3328 = vrot.slane %v2392, 1
      %v3329 = vsel %vm3250, %v3326, %v3328
      %v3330 = vrot.slane %v2393, 1
      %v3331 = vsel %vm3250, %v3328, %v3330
      %v3332 = vrot.slane %v2394, 1
      %v3333 = vsel %vm3250, %v3330, %v3332
      %v3334 = vrot.slane %v2395, 1
      %v3335 = vsel %vm3250, %v3332, %v3334
      %v3336 = vrot.slane %v2396, 1
      %v3337 = vsel %vm3250, %v3334, %v3336
      %v3338 = vrot.slane %v2397, 1
      %v3339 = vsel %vm3250, %v3336, %v3338
      %v3340 = vrot.slane %v2398, 1
      %v3341 = vsel %vm3250, %v3338, %v3340
      %v3342 = vrot.slane %v2399, 1
      %v3343 = vsel %vm3250, %v3340, %v3342
      %v3345 = vsel %vm1356, %v3253, 0
      %v3348 = vsel %vm1356, %v3255, 0
      %v3351 = vsel %vm1356, %v3257, 0
      %v3354 = vsel %vm1356, %v3259, 0
      %v3357 = vsel %vm1356, %v3261, 0
      %v3360 = vsel %vm1356, %v3263, 0
      %v3363 = vsel %vm1356, %v3265, 0
      %v3366 = vsel %vm1356, %v3267, 0
      %v3369 = vsel %vm1356, %v3269, 0
      %v3372 = vsel %vm1356, %v3271, 0
      %v3375 = vsel %vm1356, %v3273, 0
      %v3378 = vsel %vm1356, %v3275, 0
      %v3381 = vsel %vm1356, %v3277, 0
      %v3384 = vsel %vm1356, %v3279, 0
      %v3387 = vsel %vm1356, %v3281, 0
      %v3390 = vsel %vm1356, %v3283, 0
      %v3393 = vsel %vm1356, %v3285, 0
      %v3396 = vsel %vm1356, %v3287, 0
      %v3399 = vsel %vm1356, %v3289, 0
      %v3402 = vsel %vm1356, %v3291, 0
      %v3405 = vsel %vm1356, %v3293, 0
      %v3408 = vsel %vm1356, %v3295, 0
      %v3411 = vsel %vm1356, %v3297, 0
      %v3414 = vsel %vm1356, %v3299, 0
      %v3417 = vsel %vm1356, %v3301, 0
      %v3420 = vsel %vm1356, %v3303, 0
      %v3423 = vsel %vm1356, %v3305, 0
      %v3426 = vsel %vm1356, %v3307, 0
      %v3429 = vsel %vm1356, %v3309, 0
      %v3432 = vsel %vm1356, %v3311, 0
      %v3435 = vsel %vm1356, %v3313, 0
      %v3438 = vsel %vm1356, %v3315, 0
      %v3441 = vsel %vm1356, %v3317, 0
      %v3444 = vsel %vm1356, %v3319, 0
      %v3447 = vsel %vm1356, %v3321, 0
      %v3450 = vsel %vm1356, %v3323, 0
      %v3453 = vsel %vm1356, %v3325, 0
      %v3456 = vsel %vm1356, %v3327, 0
      %v3459 = vsel %vm1356, %v3329, 0
      %v3462 = vsel %vm1356, %v3331, 0
      %v3465 = vsel %vm1356, %v3333, 0
      %v3468 = vsel %vm1356, %v3335, 0
      %v3471 = vsel %vm1356, %v3337, 0
      %v3474 = vsel %vm1356, %v3339, 0
      %v3477 = vsel %vm1356, %v3341, 0
      %v3480 = vsel %vm1356, %v3343, 0
      %v3483 = vsel %vm1495, %v3246, 0
      %3485 = vmatpush.bf16.msra.mxu0 0
      %3486 = vmatpush.bf16.msra.mxu0 0
      %3487 = vmatpush.bf16.msra.mxu0 0
      %3488 = vmatpush.bf16.msra.mxu0 0
      %3489 = vmatpush.bf16.msra.mxu0 0
      %3490 = vmatpush.bf16.msra.mxu0 0
      %3491 = vmatpush.bf16.msra.mxu0 0
      %3492 = vmatpush.bf16.msra.mxu0 %v3483
      %3493 = vmatmul.bf16.gmra.mxu0 %v3345
      %v3494 = vpop.f32.mrf.mxu0
      %v3495 = vadd.f32 0.0, %v3494
      %v3496 = vpop.f32.mrf.mxu0
      %v3497 = vadd.f32 0.0, %v3496
      %3498 = vmatmul.bf16.gmra.mxu0 %v3348
      %v3499 = vpop.f32.mrf.mxu0
      %v3500 = vadd.f32 0.0, %v3499
      %v3501 = vpop.f32.mrf.mxu0
      %v3502 = vadd.f32 0.0, %v3501
      %3503 = vmatmul.bf16.gmra.mxu0 %v3351
      %v3504 = vpop.f32.mrf.mxu0
      %v3505 = vadd.f32 0.0, %v3504
      %v3506 = vpop.f32.mrf.mxu0
      %v3507 = vadd.f32 0.0, %v3506
      %3508 = vmatmul.bf16.gmra.mxu0 %v3354
      %v3509 = vpop.f32.mrf.mxu0
      %v3510 = vadd.f32 0.0, %v3509
      %v3511 = vpop.f32.mrf.mxu0
      %v3512 = vadd.f32 0.0, %v3511
      %3513 = vmatmul.bf16.gmra.mxu0 %v3357
      %v3514 = vpop.f32.mrf.mxu0
      %v3515 = vadd.f32 0.0, %v3514
      %v3516 = vpop.f32.mrf.mxu0
      %v3517 = vadd.f32 0.0, %v3516
      %3518 = vmatmul.bf16.gmra.mxu0 %v3360
      %v3519 = vpop.f32.mrf.mxu0
      %v3520 = vadd.f32 0.0, %v3519
      %v3521 = vpop.f32.mrf.mxu0
      %v3522 = vadd.f32 0.0, %v3521
      %3523 = vmatmul.bf16.gmra.mxu0 %v3363
      %v3524 = vpop.f32.mrf.mxu0
      %v3525 = vadd.f32 0.0, %v3524
      %v3526 = vpop.f32.mrf.mxu0
      %v3527 = vadd.f32 0.0, %v3526
      %3528 = vmatmul.bf16.gmra.mxu0 %v3366
      %v3529 = vpop.f32.mrf.mxu0
      %v3530 = vadd.f32 0.0, %v3529
      %v3531 = vpop.f32.mrf.mxu0
      %v3532 = vadd.f32 0.0, %v3531
      %3533 = vmatmul.bf16.gmra.mxu0 %v3369
      %v3534 = vpop.f32.mrf.mxu0
      %v3535 = vadd.f32 0.0, %v3534
      %v3536 = vpop.f32.mrf.mxu0
      %v3537 = vadd.f32 0.0, %v3536
      %3538 = vmatmul.bf16.gmra.mxu0 %v3372
      %v3539 = vpop.f32.mrf.mxu0
      %v3540 = vadd.f32 0.0, %v3539
      %v3541 = vpop.f32.mrf.mxu0
      %v3542 = vadd.f32 0.0, %v3541
      %3543 = vmatmul.bf16.gmra.mxu0 %v3375
      %v3544 = vpop.f32.mrf.mxu0
      %v3545 = vadd.f32 0.0, %v3544
      %v3546 = vpop.f32.mrf.mxu0
      %v3547 = vadd.f32 0.0, %v3546
      %3548 = vmatmul.bf16.gmra.mxu0 %v3378
      %v3549 = vpop.f32.mrf.mxu0
      %v3550 = vadd.f32 0.0, %v3549
      %v3551 = vpop.f32.mrf.mxu0
      %v3552 = vadd.f32 0.0, %v3551
      %3553 = vmatmul.bf16.gmra.mxu0 %v3381
      %v3554 = vpop.f32.mrf.mxu0
      %v3555 = vadd.f32 0.0, %v3554
      %v3556 = vpop.f32.mrf.mxu0
      %v3557 = vadd.f32 0.0, %v3556
      %3558 = vmatmul.bf16.gmra.mxu0 %v3384
      %v3559 = vpop.f32.mrf.mxu0
      %v3560 = vadd.f32 0.0, %v3559
      %v3561 = vpop.f32.mrf.mxu0
      %v3562 = vadd.f32 0.0, %v3561
      %3563 = vmatmul.bf16.gmra.mxu0 %v3387
      %v3564 = vpop.f32.mrf.mxu0
      %v3565 = vadd.f32 0.0, %v3564
      %v3566 = vpop.f32.mrf.mxu0
      %v3567 = vadd.f32 0.0, %v3566
      %3568 = vmatmul.bf16.gmra.mxu0 %v3390
      %v3569 = vpop.f32.mrf.mxu0
      %v3570 = vadd.f32 0.0, %v3569
      %v3571 = vpop.f32.mrf.mxu0
      %v3572 = vadd.f32 0.0, %v3571
      %3573 = vmatmul.bf16.gmra.mxu0 %v3393
      %v3574 = vpop.f32.mrf.mxu0
      %v3575 = vadd.f32 0.0, %v3574
      %v3576 = vpop.f32.mrf.mxu0
      %v3577 = vadd.f32 0.0, %v3576
      %3578 = vmatmul.bf16.gmra.mxu0 %v3396
      %v3579 = vpop.f32.mrf.mxu0
      %v3580 = vadd.f32 0.0, %v3579
      %v3581 = vpop.f32.mrf.mxu0
      %v3582 = vadd.f32 0.0, %v3581
      %3583 = vmatmul.bf16.gmra.mxu0 %v3399
      %v3584 = vpop.f32.mrf.mxu0
      %v3585 = vadd.f32 0.0, %v3584
      %v3586 = vpop.f32.mrf.mxu0
      %v3587 = vadd.f32 0.0, %v3586
      %3588 = vmatmul.bf16.gmra.mxu0 %v3402
      %v3589 = vpop.f32.mrf.mxu0
      %v3590 = vadd.f32 0.0, %v3589
      %v3591 = vpop.f32.mrf.mxu0
      %v3592 = vadd.f32 0.0, %v3591
      %3593 = vmatmul.bf16.gmra.mxu0 %v3405
      %v3594 = vpop.f32.mrf.mxu0
      %v3595 = vadd.f32 0.0, %v3594
      %v3596 = vpop.f32.mrf.mxu0
      %v3597 = vadd.f32 0.0, %v3596
      %3598 = vmatmul.bf16.gmra.mxu0 %v3408
      %v3599 = vpop.f32.mrf.mxu0
      %v3600 = vadd.f32 0.0, %v3599
      %v3601 = vpop.f32.mrf.mxu0
      %v3602 = vadd.f32 0.0, %v3601
      %3603 = vmatmul.bf16.gmra.mxu0 %v3411
      %v3604 = vpop.f32.mrf.mxu0
      %v3605 = vadd.f32 0.0, %v3604
      %v3606 = vpop.f32.mrf.mxu0
      %v3607 = vadd.f32 0.0, %v3606
      %3608 = vmatmul.bf16.gmra.mxu0 %v3414
      %v3609 = vpop.f32.mrf.mxu0
      %v3610 = vadd.f32 0.0, %v3609
      %v3611 = vpop.f32.mrf.mxu0
      %v3612 = vadd.f32 0.0, %v3611
      %3613 = vmatmul.bf16.gmra.mxu0 %v3417
      %v3614 = vpop.f32.mrf.mxu0
      %v3615 = vadd.f32 0.0, %v3614
      %v3616 = vpop.f32.mrf.mxu0
      %v3617 = vadd.f32 0.0, %v3616
      %3618 = vmatmul.bf16.gmra.mxu0 %v3420
      %v3619 = vpop.f32.mrf.mxu0
      %v3620 = vadd.f32 0.0, %v3619
      %v3621 = vpop.f32.mrf.mxu0
      %v3622 = vadd.f32 0.0, %v3621
      %3623 = vmatmul.bf16.gmra.mxu0 %v3423
      %v3624 = vpop.f32.mrf.mxu0
      %v3625 = vadd.f32 0.0, %v3624
      %v3626 = vpop.f32.mrf.mxu0
      %v3627 = vadd.f32 0.0, %v3626
      %3628 = vmatmul.bf16.gmra.mxu0 %v3426
      %v3629 = vpop.f32.mrf.mxu0
      %v3630 = vadd.f32 0.0, %v3629
      %v3631 = vpop.f32.mrf.mxu0
      %v3632 = vadd.f32 0.0, %v3631
      %3633 = vmatmul.bf16.gmra.mxu0 %v3429
      %v3634 = vpop.f32.mrf.mxu0
      %v3635 = vadd.f32 0.0, %v3634
      %v3636 = vpop.f32.mrf.mxu0
      %v3637 = vadd.f32 0.0, %v3636
      %3638 = vmatmul.bf16.gmra.mxu0 %v3432
      %v3639 = vpop.f32.mrf.mxu0
      %v3640 = vadd.f32 0.0, %v3639
      %v3641 = vpop.f32.mrf.mxu0
      %v3642 = vadd.f32 0.0, %v3641
      %3643 = vmatmul.bf16.gmra.mxu0 %v3435
      %v3644 = vpop.f32.mrf.mxu0
      %v3645 = vadd.f32 0.0, %v3644
      %v3646 = vpop.f32.mrf.mxu0
      %v3647 = vadd.f32 0.0, %v3646
      %3648 = vmatmul.bf16.gmra.mxu0 %v3438
      %v3649 = vpop.f32.mrf.mxu0
      %v3650 = vadd.f32 0.0, %v3649
      %v3651 = vpop.f32.mrf.mxu0
      %v3652 = vadd.f32 0.0, %v3651
      %3653 = vmatmul.bf16.gmra.mxu0 %v3441
      %v3654 = vpop.f32.mrf.mxu0
      %v3655 = vadd.f32 0.0, %v3654
      %v3656 = vpop.f32.mrf.mxu0
      %v3657 = vadd.f32 0.0, %v3656
      %3658 = vmatmul.bf16.gmra.mxu0 %v3444
      %v3659 = vpop.f32.mrf.mxu0
      %v3660 = vadd.f32 0.0, %v3659
      %v3661 = vpop.f32.mrf.mxu0
      %v3662 = vadd.f32 0.0, %v3661
      %3663 = vmatmul.bf16.gmra.mxu0 %v3447
      %v3664 = vpop.f32.mrf.mxu0
      %v3665 = vadd.f32 0.0, %v3664
      %v3666 = vpop.f32.mrf.mxu0
      %v3667 = vadd.f32 0.0, %v3666
      %3668 = vmatmul.bf16.gmra.mxu0 %v3450
      %v3669 = vpop.f32.mrf.mxu0
      %v3670 = vadd.f32 0.0, %v3669
      %v3671 = vpop.f32.mrf.mxu0
      %v3672 = vadd.f32 0.0, %v3671
      %3673 = vmatmul.bf16.gmra.mxu0 %v3453
      %v3674 = vpop.f32.mrf.mxu0
      %v3675 = vadd.f32 0.0, %v3674
      %v3676 = vpop.f32.mrf.mxu0
      %v3677 = vadd.f32 0.0, %v3676
      %3678 = vmatmul.bf16.gmra.mxu0 %v3456
      %v3679 = vpop.f32.mrf.mxu0
      %v3680 = vadd.f32 0.0, %v3679
      %v3681 = vpop.f32.mrf.mxu0
      %v3682 = vadd.f32 0.0, %v3681
      %3683 = vmatmul.bf16.gmra.mxu0 %v3459
      %v3684 = vpop.f32.mrf.mxu0
      %v3685 = vadd.f32 0.0, %v3684
      %v3686 = vpop.f32.mrf.mxu0
      %v3687 = vadd.f32 0.0, %v3686
      %3688 = vmatmul.bf16.gmra.mxu0 %v3462
      %v3689 = vpop.f32.mrf.mxu0
      %v3690 = vadd.f32 0.0, %v3689
      %v3691 = vpop.f32.mrf.mxu0
      %v3692 = vadd.f32 0.0, %v3691
      %3693 = vmatmul.bf16.gmra.mxu0 %v3465
      %v3694 = vpop.f32.mrf.mxu0
      %v3695 = vadd.f32 0.0, %v3694
      %v3696 = vpop.f32.mrf.mxu0
      %v3697 = vadd.f32 0.0, %v3696
      %3698 = vmatmul.bf16.gmra.mxu0 %v3468
      %v3699 = vpop.f32.mrf.mxu0
      %v3700 = vadd.f32 0.0, %v3699
      %v3701 = vpop.f32.mrf.mxu0
      %v3702 = vadd.f32 0.0, %v3701
      %3703 = vmatmul.bf16.gmra.mxu0 %v3471
      %v3704 = vpop.f32.mrf.mxu0
      %v3705 = vadd.f32 0.0, %v3704
      %v3706 = vpop.f32.mrf.mxu0
      %v3707 = vadd.f32 0.0, %v3706
      %3708 = vmatmul.bf16.gmra.mxu0 %v3474
      %v3709 = vpop.f32.mrf.mxu0
      %v3710 = vadd.f32 0.0, %v3709
      %v3711 = vpop.f32.mrf.mxu0
      %v3712 = vadd.f32 0.0, %v3711
      %3713 = vmatmul.bf16.gmra.mxu0 %v3477
      %v3714 = vpop.f32.mrf.mxu0
      %v3715 = vadd.f32 0.0, %v3714
      %v3716 = vpop.f32.mrf.mxu0
      %v3717 = vadd.f32 0.0, %v3716
      %3718 = vmatmul.bf16.gmra.mxu0 %v3480
      %v3719 = vpop.f32.mrf.mxu0
      %v3720 = vadd.f32 0.0, %v3719
      %v3721 = vpop.f32.mrf.mxu0
      %v3722 = vadd.f32 0.0, %v3721
      %3723 = vdwg.mxu0
      %v3724 = vadd.f32 %v3152, %v3495
      %v3725 = vadd.f32 %v3153, %v3497
      %v3726 = vadd.f32 %v3154, %v3500
      %v3727 = vadd.f32 %v3155, %v3502
      %v3728 = vadd.f32 %v3156, %v3505
      %v3729 = vadd.f32 %v3157, %v3507
      %v3730 = vadd.f32 %v3158, %v3510
      %v3731 = vadd.f32 %v3159, %v3512
      %v3732 = vadd.f32 %v3160, %v3515
      %v3733 = vadd.f32 %v3161, %v3517
      %v3734 = vadd.f32 %v3162, %v3520
      %v3735 = vadd.f32 %v3163, %v3522
      %v3736 = vadd.f32 %v3164, %v3525
      %v3737 = vadd.f32 %v3165, %v3527
      %v3738 = vadd.f32 %v3166, %v3530
      %v3739 = vadd.f32 %v3167, %v3532
      %v3740 = vadd.f32 %v3168, %v3535
      %v3741 = vadd.f32 %v3169, %v3537
      %v3742 = vadd.f32 %v3170, %v3540
      %v3743 = vadd.f32 %v3171, %v3542
      %v3744 = vadd.f32 %v3172, %v3545
      %v3745 = vadd.f32 %v3173, %v3547
      %v3746 = vadd.f32 %v3174, %v3550
      %v3747 = vadd.f32 %v3175, %v3552
      %v3748 = vadd.f32 %v3176, %v3555
      %v3749 = vadd.f32 %v3177, %v3557
      %v3750 = vadd.f32 %v3178, %v3560
      %v3751 = vadd.f32 %v3179, %v3562
      %v3752 = vadd.f32 %v3180, %v3565
      %v3753 = vadd.f32 %v3181, %v3567
      %v3754 = vadd.f32 %v3182, %v3570
      %v3755 = vadd.f32 %v3183, %v3572
      %v3756 = vadd.f32 %v3184, %v3575
      %v3757 = vadd.f32 %v3185, %v3577
      %v3758 = vadd.f32 %v3186, %v3580
      %v3759 = vadd.f32 %v3187, %v3582
      %v3760 = vadd.f32 %v3188, %v3585
      %v3761 = vadd.f32 %v3189, %v3587
      %v3762 = vadd.f32 %v3190, %v3590
      %v3763 = vadd.f32 %v3191, %v3592
      %v3764 = vadd.f32 %v3192, %v3595
      %v3765 = vadd.f32 %v3193, %v3597
      %v3766 = vadd.f32 %v3194, %v3600
      %v3767 = vadd.f32 %v3195, %v3602
      %v3768 = vadd.f32 %v3196, %v3605
      %v3769 = vadd.f32 %v3197, %v3607
      %v3770 = vadd.f32 %v3198, %v3610
      %v3771 = vadd.f32 %v3199, %v3612
      %v3772 = vadd.f32 %v3200, %v3615
      %v3773 = vadd.f32 %v3201, %v3617
      %v3774 = vadd.f32 %v3202, %v3620
      %v3775 = vadd.f32 %v3203, %v3622
      %v3776 = vadd.f32 %v3204, %v3625
      %v3777 = vadd.f32 %v3205, %v3627
      %v3778 = vadd.f32 %v3206, %v3630
      %v3779 = vadd.f32 %v3207, %v3632
      %v3780 = vadd.f32 %v3208, %v3635
      %v3781 = vadd.f32 %v3209, %v3637
      %v3782 = vadd.f32 %v3210, %v3640
      %v3783 = vadd.f32 %v3211, %v3642
      %v3784 = vadd.f32 %v3212, %v3645
      %v3785 = vadd.f32 %v3213, %v3647
      %v3786 = vadd.f32 %v3214, %v3650
      %v3787 = vadd.f32 %v3215, %v3652
      %v3788 = vadd.f32 %v3216, %v3655
      %v3789 = vadd.f32 %v3217, %v3657
      %v3790 = vadd.f32 %v3218, %v3660
      %v3791 = vadd.f32 %v3219, %v3662
      %v3792 = vadd.f32 %v3220, %v3665
      %v3793 = vadd.f32 %v3221, %v3667
      %v3794 = vadd.f32 %v3222, %v3670
      %v3795 = vadd.f32 %v3223, %v3672
      %v3796 = vadd.f32 %v3224, %v3675
      %v3797 = vadd.f32 %v3225, %v3677
      %v3798 = vadd.f32 %v3226, %v3680
      %v3799 = vadd.f32 %v3227, %v3682
      %v3800 = vadd.f32 %v3228, %v3685
      %v3801 = vadd.f32 %v3229, %v3687
      %v3802 = vadd.f32 %v3230, %v3690
      %v3803 = vadd.f32 %v3231, %v3692
      %v3804 = vadd.f32 %v3232, %v3695
      %v3805 = vadd.f32 %v3233, %v3697
      %v3806 = vadd.f32 %v3234, %v3700
      %v3807 = vadd.f32 %v3235, %v3702
      %v3808 = vadd.f32 %v3236, %v3705
      %v3809 = vadd.f32 %v3237, %v3707
      %v3810 = vadd.f32 %v3238, %v3710
      %v3811 = vadd.f32 %v3239, %v3712
      %v3812 = vadd.f32 %v3240, %v3715
      %v3813 = vadd.f32 %v3241, %v3717
      %v3814 = vadd.f32 %v3242, %v3720
      %v3815 = vadd.f32 %v3243, %v3722
      %v3816 = vld [vmem:[#allocation2 + $0x28] sm:$0xf]
      %v3817 = vld [vmem:[#allocation2 + $0x2c] sm:$0xf]
      %v3818 = vld [vmem:[#allocation2 + $0x30] sm:$0xf]
      %v3819 = vld [vmem:[#allocation2 + $0x34] sm:$0xf]
      %v3820 = vld [vmem:[#allocation2 + $0x38] sm:$0xf]
      %v3821 = vld [vmem:[#allocation2 + $0x3c] sm:$0xf]
      %v3822 = vld [vmem:[#allocation2 + $0x40] sm:$0xf]
      %v3823 = vld [vmem:[#allocation2 + $0x44] sm:$0xf]
      %v3824 = vld [vmem:[#allocation2 + $0x48] sm:$0xf]
      %v3825 = vld [vmem:[#allocation2 + $0x4c] sm:$0xf]
      %v3826 = vld [vmem:[#allocation2 + $0x50] sm:$0xf]
      %v3827 = vld [vmem:[#allocation2 + $0x54] sm:$0xf]
      %v3828 = vld [vmem:[#allocation2 + $0x58] sm:$0xf]
      %v3829 = vld [vmem:[#allocation2 + $0x5c] sm:$0xf]
      %v3830 = vld [vmem:[#allocation2 + $0x60] sm:$0xf]
      %v3831 = vld [vmem:[#allocation2 + $0x64] sm:$0xf]
      %v3832 = vld [vmem:[#allocation2 + $0x68] sm:$0xf]
      %v3833 = vld [vmem:[#allocation2 + $0x6c] sm:$0xf]
      %v3834 = vld [vmem:[#allocation2 + $0x70] sm:$0xf]
      %v3835 = vld [vmem:[#allocation2 + $0x74] sm:$0xf]
      %v3836 = vld [vmem:[#allocation2 + $0x78] sm:$0xf]
      %v3837 = vld [vmem:[#allocation2 + $0x7c] sm:$0xf]
      %v3838 = vld [vmem:[#allocation2 + $0x80] sm:$0xf]
      %v3839 = vld [vmem:[#allocation2 + $0x84] sm:$0xf]
      %v3840 = vld [vmem:[#allocation2 + $0x88] sm:$0xf]
      %v3841 = vld [vmem:[#allocation2 + $0x8c] sm:$0xf]
      %v3842 = vld [vmem:[#allocation2 + $0x90] sm:$0xf]
      %v3843 = vld [vmem:[#allocation2 + $0x94] sm:$0xf]
      %v3844 = vld [vmem:[#allocation2 + $0x98] sm:$0xf]
      %v3845 = vld [vmem:[#allocation2 + $0x9c] sm:$0xf]
      %v3846 = vld [vmem:[#allocation2 + $0xa0] sm:$0xf]
      %v3847 = vld [vmem:[#allocation2 + $0xa4] sm:$0xf]
      %v3848 = vld [vmem:[#allocation2 + $0xa8] sm:$0xf]
      %v3849 = vld [vmem:[#allocation2 + $0xac] sm:$0xf]
      %v3850 = vld [vmem:[#allocation2 + $0xb0] sm:$0xf]
      %v3851 = vld [vmem:[#allocation2 + $0xb4] sm:$0xf]
      %v3852 = vld [vmem:[#allocation2 + $0xb8] sm:$0xf]
      %v3853 = vld [vmem:[#allocation2 + $0xbc] sm:$0xf]
      %v3854 = vld [vmem:[#allocation2 + $0xc0] sm:$0xf]
      %v3855 = vld [vmem:[#allocation2 + $0xc4] sm:$0xf]
      %v3856 = vld [vmem:[#allocation2 + $0xc8] sm:$0xf]
      %v3857 = vld [vmem:[#allocation2 + $0xcc] sm:$0xf]
      %v3858 = vld [vmem:[#allocation2 + $0xd0] sm:$0xf]
      %v3859 = vld [vmem:[#allocation2 + $0xd4] sm:$0xf]
      %v3860 = vld [vmem:[#allocation2 + $0xd8] sm:$0xf]
      %v3861 = vld [vmem:[#allocation2 + $0xdc] sm:$0xf]
      %v3862 = vld [vmem:[#allocation2 + $0xe0] sm:$0xf]
      %v3863 = vld [vmem:[#allocation2 + $0xe4] sm:$0xf]
      %v3864 = vld [vmem:[#allocation2 + $0xe8] sm:$0xf]
      %v3865 = vld [vmem:[#allocation2 + $0xec] sm:$0xf]
      %v3866 = vld [vmem:[#allocation2 + $0xf0] sm:$0xf]
      %v3867 = vld [vmem:[#allocation2 + $0xf4] sm:$0xf]
      %v3868 = vld [vmem:[#allocation2 + $0xf8] sm:$0xf]
      %v3869 = vld [vmem:[#allocation2 + $0xfc] sm:$0xf]
      %v3870 = vld [vmem:[#allocation2 + $0x100] sm:$0xf]
      %v3871 = vld [vmem:[#allocation2 + $0x104] sm:$0xf]
      %v3872 = vld [vmem:[#allocation2 + $0x108] sm:$0xf]
      %v3873 = vld [vmem:[#allocation2 + $0x10c] sm:$0xf]
      %v3874 = vld [vmem:[#allocation2 + $0x110] sm:$0xf]
      %v3875 = vld [vmem:[#allocation2 + $0x114] sm:$0xf]
      %v3876 = vld [vmem:[#allocation2 + $0x118] sm:$0xf]
      %v3877 = vld [vmem:[#allocation2 + $0x11c] sm:$0xf]
      %v3878 = vld [vmem:[#allocation2 + $0x120] sm:$0xf]
      %v3879 = vld [vmem:[#allocation2 + $0x124] sm:$0xf]
      %v3880 = vld [vmem:[#allocation2 + $0x128] sm:$0xf]
      %v3881 = vld [vmem:[#allocation2 + $0x12c] sm:$0xf]
      %v3882 = vld [vmem:[#allocation2 + $0x130] sm:$0xf]
      %v3883 = vld [vmem:[#allocation2 + $0x134] sm:$0xf]
      %v3884 = vld [vmem:[#allocation2 + $0x138] sm:$0xf]
      %v3885 = vld [vmem:[#allocation2 + $0x13c] sm:$0xf]
      %v3886 = vld [vmem:[#allocation2 + $0x140] sm:$0xf]
      %v3887 = vld [vmem:[#allocation2 + $0x144] sm:$0xf]
      %v3888 = vld [vmem:[#allocation2 + $0x148] sm:$0xf]
      %v3889 = vld [vmem:[#allocation2 + $0x14c] sm:$0xf]
      %v3890 = vld [vmem:[#allocation2 + $0x150] sm:$0xf]
      %v3891 = vld [vmem:[#allocation2 + $0x154] sm:$0xf]
      %v3892 = vld [vmem:[#allocation2 + $0x158] sm:$0xf]
      %v3893 = vld [vmem:[#allocation2 + $0x15c] sm:$0xf]
      %v3894 = vld [vmem:[#allocation2 + $0x160] sm:$0xf]
      %v3895 = vld [vmem:[#allocation2 + $0x164] sm:$0xf]
      %v3896 = vld [vmem:[#allocation2 + $0x168] sm:$0xf]
      %v3897 = vld [vmem:[#allocation2 + $0x16c] sm:$0xf]
      %v3898 = vld [vmem:[#allocation2 + $0x170] sm:$0xf]
      %v3899 = vld [vmem:[#allocation2 + $0x174] sm:$0xf]
      %v3900 = vld [vmem:[#allocation2 + $0x178] sm:$0xf]
      %v3901 = vld [vmem:[#allocation2 + $0x17c] sm:$0xf]
      %v3902 = vld [vmem:[#allocation2 + $0x180] sm:$0xf]
      %v3903 = vld [vmem:[#allocation2 + $0x184] sm:$0xf]
      %v3904 = vld [vmem:[#allocation2 + $0x188] sm:$0xf]
      %v3905 = vld [vmem:[#allocation2 + $0x18c] sm:$0xf]
      %v3906 = vld [vmem:[#allocation2 + $0x190] sm:$0xf]
      %v3907 = vld [vmem:[#allocation2 + $0x194] sm:$0xf]
      %v3908 = vld [vmem:[#allocation2 + $0x198] sm:$0x1]
      %s3909 = scalar_lea.vmem %s2, 16
      %v3910 = vld [vmem:[%s3909] sm:$0xf]
      %v4004 = vunpack.c.l.b16 %v3816
      %v4005 = vunpack.c.l.b16 %v3817
      %v4006 = vunpack.c.l.b16 %v3818
      %v4007 = vunpack.c.l.b16 %v3819
      %v4008 = vunpack.c.l.b16 %v3820
      %v4009 = vunpack.c.l.b16 %v3821
      %v4010 = vunpack.c.l.b16 %v3822
      %v4011 = vunpack.c.l.b16 %v3823
      %v4012 = vunpack.c.l.b16 %v3824
      %v4013 = vunpack.c.l.b16 %v3825
      %v4014 = vunpack.c.l.b16 %v3826
      %v4015 = vunpack.c.l.b16 %v3827
      %v4016 = vunpack.c.l.b16 %v3828
      %v4017 = vunpack.c.l.b16 %v3829
      %v4018 = vunpack.c.l.b16 %v3830
      %v4019 = vunpack.c.l.b16 %v3831
      %v4020 = vunpack.c.l.b16 %v3832
      %v4021 = vunpack.c.l.b16 %v3833
      %v4022 = vunpack.c.l.b16 %v3834
      %v4023 = vunpack.c.l.b16 %v3835
      %v4024 = vunpack.c.l.b16 %v3836
      %v4025 = vunpack.c.l.b16 %v3837
      %v4026 = vunpack.c.l.b16 %v3838
      %v4027 = vunpack.c.l.b16 %v3839
      %v4028 = vunpack.c.l.b16 %v3840
      %v4029 = vunpack.c.l.b16 %v3841
      %v4030 = vunpack.c.l.b16 %v3842
      %v4031 = vunpack.c.l.b16 %v3843
      %v4032 = vunpack.c.l.b16 %v3844
      %v4033 = vunpack.c.l.b16 %v3845
      %v4034 = vunpack.c.l.b16 %v3846
      %v4035 = vunpack.c.l.b16 %v3847
      %v4036 = vunpack.c.l.b16 %v3848
      %v4037 = vunpack.c.l.b16 %v3849
      %v4038 = vunpack.c.l.b16 %v3850
      %v4039 = vunpack.c.l.b16 %v3851
      %v4040 = vunpack.c.l.b16 %v3852
      %v4041 = vunpack.c.l.b16 %v3853
      %v4042 = vunpack.c.l.b16 %v3854
      %v4043 = vunpack.c.l.b16 %v3855
      %v4044 = vunpack.c.l.b16 %v3856
      %v4045 = vunpack.c.l.b16 %v3857
      %v4046 = vunpack.c.l.b16 %v3858
      %v4047 = vunpack.c.l.b16 %v3859
      %v4048 = vunpack.c.l.b16 %v3860
      %v4049 = vunpack.c.l.b16 %v3861
      %v4050 = vunpack.c.l.b16 %v3862
      %v4051 = vunpack.c.l.b16 %v3863
      %v4052 = vunpack.c.l.b16 %v3864
      %v4053 = vunpack.c.l.b16 %v3865
      %v4054 = vunpack.c.l.b16 %v3866
      %v4055 = vunpack.c.l.b16 %v3867
      %v4056 = vunpack.c.l.b16 %v3868
      %v4057 = vunpack.c.l.b16 %v3869
      %v4058 = vunpack.c.l.b16 %v3870
      %v4059 = vunpack.c.l.b16 %v3871
      %v4060 = vunpack.c.l.b16 %v3872
      %v4061 = vunpack.c.l.b16 %v3873
      %v4062 = vunpack.c.l.b16 %v3874
      %v4063 = vunpack.c.l.b16 %v3875
      %v4064 = vunpack.c.l.b16 %v3876
      %v4065 = vunpack.c.l.b16 %v3877
      %v4066 = vunpack.c.l.b16 %v3878
      %v4067 = vunpack.c.l.b16 %v3879
      %v4068 = vunpack.c.l.b16 %v3880
      %v4069 = vunpack.c.l.b16 %v3881
      %v4070 = vunpack.c.l.b16 %v3882
      %v4071 = vunpack.c.l.b16 %v3883
      %v4072 = vunpack.c.l.b16 %v3884
      %v4073 = vunpack.c.l.b16 %v3885
      %v4074 = vunpack.c.l.b16 %v3886
      %v4075 = vunpack.c.l.b16 %v3887
      %v4076 = vunpack.c.l.b16 %v3888
      %v4077 = vunpack.c.l.b16 %v3889
      %v4078 = vunpack.c.l.b16 %v3890
      %v4079 = vunpack.c.l.b16 %v3891
      %v4080 = vunpack.c.l.b16 %v3892
      %v4081 = vunpack.c.l.b16 %v3893
      %v4082 = vunpack.c.l.b16 %v3894
      %v4083 = vunpack.c.l.b16 %v3895
      %v4084 = vunpack.c.l.b16 %v3896
      %v4085 = vunpack.c.l.b16 %v3897
      %v4086 = vunpack.c.l.b16 %v3898
      %v4087 = vunpack.c.l.b16 %v3899
      %v4088 = vunpack.c.l.b16 %v3900
      %v4089 = vunpack.c.l.b16 %v3901
      %v4090 = vunpack.c.l.b16 %v3902
      %v4091 = vunpack.c.l.b16 %v3903
      %v4092 = vunpack.c.l.b16 %v3904
      %v4093 = vunpack.c.l.b16 %v3905
      %v4094 = vunpack.c.l.b16 %v3906
      %v4095 = vunpack.c.l.b16 %v3907
      %v4096 = vunpack.c.l.b16 %v3908
      %v4097 = vpack.c.b16 %v4005, %v4004
      %v4098 = vpack.c.b16 %v4007, %v4006
      %v4099 = vpack.c.b16 %v4009, %v4008
      %v4100 = vpack.c.b16 %v4011, %v4010
      %v4101 = vpack.c.b16 %v4013, %v4012
      %v4102 = vpack.c.b16 %v4015, %v4014
      %v4103 = vpack.c.b16 %v4017, %v4016
      %v4104 = vpack.c.b16 %v4019, %v4018
      %v4105 = vpack.c.b16 %v4021, %v4020
      %v4106 = vpack.c.b16 %v4023, %v4022
      %v4107 = vpack.c.b16 %v4025, %v4024
      %v4108 = vpack.c.b16 %v4027, %v4026
      %v4109 = vpack.c.b16 %v4029, %v4028
      %v4110 = vpack.c.b16 %v4031, %v4030
      %v4111 = vpack.c.b16 %v4033, %v4032
      %v4112 = vpack.c.b16 %v4035, %v4034
      %v4113 = vpack.c.b16 %v4037, %v4036
      %v4114 = vpack.c.b16 %v4039, %v4038
      %v4115 = vpack.c.b16 %v4041, %v4040
      %v4116 = vpack.c.b16 %v4043, %v4042
      %v4117 = vpack.c.b16 %v4045, %v4044
      %v4118 = vpack.c.b16 %v4047, %v4046
      %v4119 = vpack.c.b16 %v4049, %v4048
      %v4120 = vpack.c.b16 %v4051, %v4050
      %v4121 = vpack.c.b16 %v4053, %v4052
      %v4122 = vpack.c.b16 %v4055, %v4054
      %v4123 = vpack.c.b16 %v4057, %v4056
      %v4124 = vpack.c.b16 %v4059, %v4058
      %v4125 = vpack.c.b16 %v4061, %v4060
      %v4126 = vpack.c.b16 %v4063, %v4062
      %v4127 = vpack.c.b16 %v4065, %v4064
      %v4128 = vpack.c.b16 %v4067, %v4066
      %v4129 = vpack.c.b16 %v4069, %v4068
      %v4130 = vpack.c.b16 %v4071, %v4070
      %v4131 = vpack.c.b16 %v4073, %v4072
      %v4132 = vpack.c.b16 %v4075, %v4074
      %v4133 = vpack.c.b16 %v4077, %v4076
      %v4134 = vpack.c.b16 %v4079, %v4078
      %v4135 = vpack.c.b16 %v4081, %v4080
      %v4136 = vpack.c.b16 %v4083, %v4082
      %v4137 = vpack.c.b16 %v4085, %v4084
      %v4138 = vpack.c.b16 %v4087, %v4086
      %v4139 = vpack.c.b16 %v4089, %v4088
      %v4140 = vpack.c.b16 %v4091, %v4090
      %v4141 = vpack.c.b16 %v4093, %v4092
      %v4142 = vpack.c.b16 %v4095, %v4094
      %v4143 = vpack.c.b16 %v4096, %v4096
      %v4145 = vshrl.u32 %v4097, 16
      %v4147 = vshll.u32 %v4097, 16
      %v4149 = vrot.slane %v4147, 1
      %v4150 = vor.u32 %v4145, %v4149
      %v4152 = vshll.u32 %v4098, 16
      %v4154 = vrot.slane %v4152, 1
      %v4155 = vsel %vm983, %v4150, %v4154
      %v4156 = vshrl.u32 %v4098, 16
      %v4158 = vor.u32 %v4156, %v4154
      %v4160 = vshll.u32 %v4099, 16
      %v4162 = vrot.slane %v4160, 1
      %v4163 = vsel %vm983, %v4158, %v4162
      %v4164 = vshrl.u32 %v4099, 16
      %v4166 = vor.u32 %v4164, %v4162
      %v4168 = vshll.u32 %v4100, 16
      %v4170 = vrot.slane %v4168, 1
      %v4171 = vsel %vm983, %v4166, %v4170
      %v4172 = vshrl.u32 %v4100, 16
      %v4174 = vor.u32 %v4172, %v4170
      %v4176 = vshll.u32 %v4101, 16
      %v4178 = vrot.slane %v4176, 1
      %v4179 = vsel %vm983, %v4174, %v4178
      %v4180 = vshrl.u32 %v4101, 16
      %v4182 = vor.u32 %v4180, %v4178
      %v4184 = vshll.u32 %v4102, 16
      %v4186 = vrot.slane %v4184, 1
      %v4187 = vsel %vm983, %v4182, %v4186
      %v4188 = vshrl.u32 %v4102, 16
      %v4190 = vor.u32 %v4188, %v4186
      %v4192 = vshll.u32 %v4103, 16
      %v4194 = vrot.slane %v4192, 1
      %v4195 = vsel %vm983, %v4190, %v4194
      %v4196 = vshrl.u32 %v4103, 16
      %v4198 = vor.u32 %v4196, %v4194
      %v4200 = vshll.u32 %v4104, 16
      %v4202 = vrot.slane %v4200, 1
      %v4203 = vsel %vm983, %v4198, %v4202
      %v4204 = vshrl.u32 %v4104, 16
      %v4206 = vor.u32 %v4204, %v4202
      %v4208 = vshll.u32 %v4105, 16
      %v4210 = vrot.slane %v4208, 1
      %v4211 = vsel %vm983, %v4206, %v4210
      %v4212 = vshrl.u32 %v4105, 16
      %v4214 = vor.u32 %v4212, %v4210
      %v4216 = vshll.u32 %v4106, 16
      %v4218 = vrot.slane %v4216, 1
      %v4219 = vsel %vm983, %v4214, %v4218
      %v4220 = vshrl.u32 %v4106, 16
      %v4222 = vor.u32 %v4220, %v4218
      %v4224 = vshll.u32 %v4107, 16
      %v4226 = vrot.slane %v4224, 1
      %v4227 = vsel %vm983, %v4222, %v4226
      %v4228 = vshrl.u32 %v4107, 16
      %v4230 = vor.u32 %v4228, %v4226
      %v4232 = vshll.u32 %v4108, 16
      %v4234 = vrot.slane %v4232, 1
      %v4235 = vsel %vm983, %v4230, %v4234
      %v4236 = vshrl.u32 %v4108, 16
      %v4238 = vor.u32 %v4236, %v4234
      %v4240 = vshll.u32 %v4109, 16
      %v4242 = vrot.slane %v4240, 1
      %v4243 = vsel %vm983, %v4238, %v4242
      %v4244 = vshrl.u32 %v4109, 16
      %v4246 = vor.u32 %v4244, %v4242
      %v4248 = vshll.u32 %v4110, 16
      %v4250 = vrot.slane %v4248, 1
      %v4251 = vsel %vm983, %v4246, %v4250
      %v4252 = vshrl.u32 %v4110, 16
      %v4254 = vor.u32 %v4252, %v4250
      %v4256 = vshll.u32 %v4111, 16
      %v4258 = vrot.slane %v4256, 1
      %v4259 = vsel %vm983, %v4254, %v4258
      %v4260 = vshrl.u32 %v4111, 16
      %v4262 = vor.u32 %v4260, %v4258
      %v4264 = vshll.u32 %v4112, 16
      %v4266 = vrot.slane %v4264, 1
      %v4267 = vsel %vm983, %v4262, %v4266
      %v4268 = vshrl.u32 %v4112, 16
      %v4270 = vor.u32 %v4268, %v4266
      %v4272 = vshll.u32 %v4113, 16
      %v4274 = vrot.slane %v4272, 1
      %v4275 = vsel %vm983, %v4270, %v4274
      %v4276 = vshrl.u32 %v4113, 16
      %v4278 = vor.u32 %v4276, %v4274
      %v4280 = vshll.u32 %v4114, 16
      %v4282 = vrot.slane %v4280, 1
      %v4283 = vsel %vm983, %v4278, %v4282
      %v4284 = vshrl.u32 %v4114, 16
      %v4286 = vor.u32 %v4284, %v4282
      %v4288 = vshll.u32 %v4115, 16
      %v4290 = vrot.slane %v4288, 1
      %v4291 = vsel %vm983, %v4286, %v4290
      %v4292 = vshrl.u32 %v4115, 16
      %v4294 = vor.u32 %v4292, %v4290
      %v4296 = vshll.u32 %v4116, 16
      %v4298 = vrot.slane %v4296, 1
      %v4299 = vsel %vm983, %v4294, %v4298
      %v4300 = vshrl.u32 %v4116, 16
      %v4302 = vor.u32 %v4300, %v4298
      %v4304 = vshll.u32 %v4117, 16
      %v4306 = vrot.slane %v4304, 1
      %v4307 = vsel %vm983, %v4302, %v4306
      %v4308 = vshrl.u32 %v4117, 16
      %v4310 = vor.u32 %v4308, %v4306
      %v4312 = vshll.u32 %v4118, 16
      %v4314 = vrot.slane %v4312, 1
      %v4315 = vsel %vm983, %v4310, %v4314
      %v4316 = vshrl.u32 %v4118, 16
      %v4318 = vor.u32 %v4316, %v4314
      %v4320 = vshll.u32 %v4119, 16
      %v4322 = vrot.slane %v4320, 1
      %v4323 = vsel %vm983, %v4318, %v4322
      %v4324 = vshrl.u32 %v4119, 16
      %v4326 = vor.u32 %v4324, %v4322
      %v4328 = vshll.u32 %v4120, 16
      %v4330 = vrot.slane %v4328, 1
      %v4331 = vsel %vm983, %v4326, %v4330
      %v4332 = vshrl.u32 %v4120, 16
      %v4334 = vor.u32 %v4332, %v4330
      %v4336 = vshll.u32 %v4121, 16
      %v4338 = vrot.slane %v4336, 1
      %v4339 = vsel %vm983, %v4334, %v4338
      %v4340 = vshrl.u32 %v4121, 16
      %v4342 = vor.u32 %v4340, %v4338
      %v4344 = vshll.u32 %v4122, 16
      %v4346 = vrot.slane %v4344, 1
      %v4347 = vsel %vm983, %v4342, %v4346
      %v4348 = vshrl.u32 %v4122, 16
      %v4350 = vor.u32 %v4348, %v4346
      %v4352 = vshll.u32 %v4123, 16
      %v4354 = vrot.slane %v4352, 1
      %v4355 = vsel %vm983, %v4350, %v4354
      %v4356 = vshrl.u32 %v4123, 16
      %v4358 = vor.u32 %v4356, %v4354
      %v4360 = vshll.u32 %v4124, 16
      %v4362 = vrot.slane %v4360, 1
      %v4363 = vsel %vm983, %v4358, %v4362
      %v4364 = vshrl.u32 %v4124, 16
      %v4366 = vor.u32 %v4364, %v4362
      %v4368 = vshll.u32 %v4125, 16
      %v4370 = vrot.slane %v4368, 1
      %v4371 = vsel %vm983, %v4366, %v4370
      %v4372 = vshrl.u32 %v4125, 16
      %v4374 = vor.u32 %v4372, %v4370
      %v4376 = vshll.u32 %v4126, 16
      %v4378 = vrot.slane %v4376, 1
      %v4379 = vsel %vm983, %v4374, %v4378
      %v4380 = vshrl.u32 %v4126, 16
      %v4382 = vor.u32 %v4380, %v4378
      %v4384 = vshll.u32 %v4127, 16
      %v4386 = vrot.slane %v4384, 1
      %v4387 = vsel %vm983, %v4382, %v4386
      %v4388 = vshrl.u32 %v4127, 16
      %v4390 = vor.u32 %v4388, %v4386
      %v4392 = vshll.u32 %v4128, 16
      %v4394 = vrot.slane %v4392, 1
      %v4395 = vsel %vm983, %v4390, %v4394
      %v4396 = vshrl.u32 %v4128, 16
      %v4398 = vor.u32 %v4396, %v4394
      %v4400 = vshll.u32 %v4129, 16
      %v4402 = vrot.slane %v4400, 1
      %v4403 = vsel %vm983, %v4398, %v4402
      %v4404 = vshrl.u32 %v4129, 16
      %v4406 = vor.u32 %v4404, %v4402
      %v4408 = vshll.u32 %v4130, 16
      %v4410 = vrot.slane %v4408, 1
      %v4411 = vsel %vm983, %v4406, %v4410
      %v4412 = vshrl.u32 %v4130, 16
      %v4414 = vor.u32 %v4412, %v4410
      %v4416 = vshll.u32 %v4131, 16
      %v4418 = vrot.slane %v4416, 1
      %v4419 = vsel %vm983, %v4414, %v4418
      %v4420 = vshrl.u32 %v4131, 16
      %v4422 = vor.u32 %v4420, %v4418
      %v4424 = vshll.u32 %v4132, 16
      %v4426 = vrot.slane %v4424, 1
      %v4427 = vsel %vm983, %v4422, %v4426
      %v4428 = vshrl.u32 %v4132, 16
      %v4430 = vor.u32 %v4428, %v4426
      %v4432 = vshll.u32 %v4133, 16
      %v4434 = vrot.slane %v4432, 1
      %v4435 = vsel %vm983, %v4430, %v4434
      %v4436 = vshrl.u32 %v4133, 16
      %v4438 = vor.u32 %v4436, %v4434
      %v4440 = vshll.u32 %v4134, 16
      %v4442 = vrot.slane %v4440, 1
      %v4443 = vsel %vm983, %v4438, %v4442
      %v4444 = vshrl.u32 %v4134, 16
      %v4446 = vor.u32 %v4444, %v4442
      %v4448 = vshll.u32 %v4135, 16
      %v4450 = vrot.slane %v4448, 1
      %v4451 = vsel %vm983, %v4446, %v4450
      %v4452 = vshrl.u32 %v4135, 16
      %v4454 = vor.u32 %v4452, %v4450
      %v4456 = vshll.u32 %v4136, 16
      %v4458 = vrot.slane %v4456, 1
      %v4459 = vsel %vm983, %v4454, %v4458
      %v4460 = vshrl.u32 %v4136, 16
      %v4462 = vor.u32 %v4460, %v4458
      %v4464 = vshll.u32 %v4137, 16
      %v4466 = vrot.slane %v4464, 1
      %v4467 = vsel %vm983, %v4462, %v4466
      %v4468 = vshrl.u32 %v4137, 16
      %v4470 = vor.u32 %v4468, %v4466
      %v4472 = vshll.u32 %v4138, 16
      %v4474 = vrot.slane %v4472, 1
      %v4475 = vsel %vm983, %v4470, %v4474
      %v4476 = vshrl.u32 %v4138, 16
      %v4478 = vor.u32 %v4476, %v4474
      %v4480 = vshll.u32 %v4139, 16
      %v4482 = vrot.slane %v4480, 1
      %v4483 = vsel %vm983, %v4478, %v4482
      %v4484 = vshrl.u32 %v4139, 16
      %v4486 = vor.u32 %v4484, %v4482
      %v4488 = vshll.u32 %v4140, 16
      %v4490 = vrot.slane %v4488, 1
      %v4491 = vsel %vm983, %v4486, %v4490
      %v4492 = vshrl.u32 %v4140, 16
      %v4494 = vor.u32 %v4492, %v4490
      %v4496 = vshll.u32 %v4141, 16
      %v4498 = vrot.slane %v4496, 1
      %v4499 = vsel %vm983, %v4494, %v4498
      %v4500 = vshrl.u32 %v4141, 16
      %v4502 = vor.u32 %v4500, %v4498
      %v4504 = vshll.u32 %v4142, 16
      %v4506 = vrot.slane %v4504, 1
      %v4507 = vsel %vm983, %v4502, %v4506
      %v4508 = vshrl.u32 %v4142, 16
      %v4510 = vor.u32 %v4508, %v4506
      %v4512 = vshll.u32 %v4143, 16
      %v4514 = vrot.slane %v4512, 1
      %v4515 = vsel %vm983, %v4510, %v4514
      %v4517 = vsel %vm1356, %v4155, 0
      %v4520 = vsel %vm1356, %v4163, 0
      %v4523 = vsel %vm1356, %v4171, 0
      %v4526 = vsel %vm1356, %v4179, 0
      %v4529 = vsel %vm1356, %v4187, 0
      %v4532 = vsel %vm1356, %v4195, 0
      %v4535 = vsel %vm1356, %v4203, 0
      %v4538 = vsel %vm1356, %v4211, 0
      %v4541 = vsel %vm1356, %v4219, 0
      %v4544 = vsel %vm1356, %v4227, 0
      %v4547 = vsel %vm1356, %v4235, 0
      %v4550 = vsel %vm1356, %v4243, 0
      %v4553 = vsel %vm1356, %v4251, 0
      %v4556 = vsel %vm1356, %v4259, 0
      %v4559 = vsel %vm1356, %v4267, 0
      %v4562 = vsel %vm1356, %v4275, 0
      %v4565 = vsel %vm1356, %v4283, 0
      %v4568 = vsel %vm1356, %v4291, 0
      %v4571 = vsel %vm1356, %v4299, 0
      %v4574 = vsel %vm1356, %v4307, 0
      %v4577 = vsel %vm1356, %v4315, 0
      %v4580 = vsel %vm1356, %v4323, 0
      %v4583 = vsel %vm1356, %v4331, 0
      %v4586 = vsel %vm1356, %v4339, 0
      %v4589 = vsel %vm1356, %v4347, 0
      %v4592 = vsel %vm1356, %v4355, 0
      %v4595 = vsel %vm1356, %v4363, 0
      %v4598 = vsel %vm1356, %v4371, 0
      %v4601 = vsel %vm1356, %v4379, 0
      %v4604 = vsel %vm1356, %v4387, 0
      %v4607 = vsel %vm1356, %v4395, 0
      %v4610 = vsel %vm1356, %v4403, 0
      %v4613 = vsel %vm1356, %v4411, 0
      %v4616 = vsel %vm1356, %v4419, 0
      %v4619 = vsel %vm1356, %v4427, 0
      %v4622 = vsel %vm1356, %v4435, 0
      %v4625 = vsel %vm1356, %v4443, 0
      %v4628 = vsel %vm1356, %v4451, 0
      %v4631 = vsel %vm1356, %v4459, 0
      %v4634 = vsel %vm1356, %v4467, 0
      %v4637 = vsel %vm1356, %v4475, 0
      %v4640 = vsel %vm1356, %v4483, 0
      %v4643 = vsel %vm1356, %v4491, 0
      %v4646 = vsel %vm1356, %v4499, 0
      %v4649 = vsel %vm1356, %v4507, 0
      %v4652 = vsel %vm1356, %v4515, 0
      %v4655 = vsel %vm1495, %v3910, 0
      %4657 = vmatpush.bf16.msra.mxu0 0
      %4658 = vmatpush.bf16.msra.mxu0 0
      %4659 = vmatpush.bf16.msra.mxu0 0
      %4660 = vmatpush.bf16.msra.mxu0 0
      %4661 = vmatpush.bf16.msra.mxu0 0
      %4662 = vmatpush.bf16.msra.mxu0 0
      %4663 = vmatpush.bf16.msra.mxu0 0
      %4664 = vmatpush.bf16.msra.mxu0 %v4655
      %4665 = vmatmul.bf16.gmra.mxu0 %v4517
      %v4666 = vpop.f32.mrf.mxu0
      %v4667 = vadd.f32 0.0, %v4666
      %v4668 = vpop.f32.mrf.mxu0
      %v4669 = vadd.f32 0.0, %v4668
      %4670 = vmatmul.bf16.gmra.mxu0 %v4520
      %v4671 = vpop.f32.mrf.mxu0
      %v4672 = vadd.f32 0.0, %v4671
      %v4673 = vpop.f32.mrf.mxu0
      %v4674 = vadd.f32 0.0, %v4673
      %4675 = vmatmul.bf16.gmra.mxu0 %v4523
      %v4676 = vpop.f32.mrf.mxu0
      %v4677 = vadd.f32 0.0, %v4676
      %v4678 = vpop.f32.mrf.mxu0
      %v4679 = vadd.f32 0.0, %v4678
      %4680 = vmatmul.bf16.gmra.mxu0 %v4526
      %v4681 = vpop.f32.mrf.mxu0
      %v4682 = vadd.f32 0.0, %v4681
      %v4683 = vpop.f32.mrf.mxu0
      %v4684 = vadd.f32 0.0, %v4683
      %4685 = vmatmul.bf16.gmra.mxu0 %v4529
      %v4686 = vpop.f32.mrf.mxu0
      %v4687 = vadd.f32 0.0, %v4686
      %v4688 = vpop.f32.mrf.mxu0
      %v4689 = vadd.f32 0.0, %v4688
      %4690 = vmatmul.bf16.gmra.mxu0 %v4532
      %v4691 = vpop.f32.mrf.mxu0
      %v4692 = vadd.f32 0.0, %v4691
      %v4693 = vpop.f32.mrf.mxu0
      %v4694 = vadd.f32 0.0, %v4693
      %4695 = vmatmul.bf16.gmra.mxu0 %v4535
      %v4696 = vpop.f32.mrf.mxu0
      %v4697 = vadd.f32 0.0, %v4696
      %v4698 = vpop.f32.mrf.mxu0
      %v4699 = vadd.f32 0.0, %v4698
      %4700 = vmatmul.bf16.gmra.mxu0 %v4538
      %v4701 = vpop.f32.mrf.mxu0
      %v4702 = vadd.f32 0.0, %v4701
      %v4703 = vpop.f32.mrf.mxu0
      %v4704 = vadd.f32 0.0, %v4703
      %4705 = vmatmul.bf16.gmra.mxu0 %v4541
      %v4706 = vpop.f32.mrf.mxu0
      %v4707 = vadd.f32 0.0, %v4706
      %v4708 = vpop.f32.mrf.mxu0
      %v4709 = vadd.f32 0.0, %v4708
      %4710 = vmatmul.bf16.gmra.mxu0 %v4544
      %v4711 = vpop.f32.mrf.mxu0
      %v4712 = vadd.f32 0.0, %v4711
      %v4713 = vpop.f32.mrf.mxu0
      %v4714 = vadd.f32 0.0, %v4713
      %4715 = vmatmul.bf16.gmra.mxu0 %v4547
      %v4716 = vpop.f32.mrf.mxu0
      %v4717 = vadd.f32 0.0, %v4716
      %v4718 = vpop.f32.mrf.mxu0
      %v4719 = vadd.f32 0.0, %v4718
      %4720 = vmatmul.bf16.gmra.mxu0 %v4550
      %v4721 = vpop.f32.mrf.mxu0
      %v4722 = vadd.f32 0.0, %v4721
      %v4723 = vpop.f32.mrf.mxu0
      %v4724 = vadd.f32 0.0, %v4723
      %4725 = vmatmul.bf16.gmra.mxu0 %v4553
      %v4726 = vpop.f32.mrf.mxu0
      %v4727 = vadd.f32 0.0, %v4726
      %v4728 = vpop.f32.mrf.mxu0
      %v4729 = vadd.f32 0.0, %v4728
      %4730 = vmatmul.bf16.gmra.mxu0 %v4556
      %v4731 = vpop.f32.mrf.mxu0
      %v4732 = vadd.f32 0.0, %v4731
      %v4733 = vpop.f32.mrf.mxu0
      %v4734 = vadd.f32 0.0, %v4733
      %4735 = vmatmul.bf16.gmra.mxu0 %v4559
      %v4736 = vpop.f32.mrf.mxu0
      %v4737 = vadd.f32 0.0, %v4736
      %v4738 = vpop.f32.mrf.mxu0
      %v4739 = vadd.f32 0.0, %v4738
      %4740 = vmatmul.bf16.gmra.mxu0 %v4562
      %v4741 = vpop.f32.mrf.mxu0
      %v4742 = vadd.f32 0.0, %v4741
      %v4743 = vpop.f32.mrf.mxu0
      %v4744 = vadd.f32 0.0, %v4743
      %4745 = vmatmul.bf16.gmra.mxu0 %v4565
      %v4746 = vpop.f32.mrf.mxu0
      %v4747 = vadd.f32 0.0, %v4746
      %v4748 = vpop.f32.mrf.mxu0
      %v4749 = vadd.f32 0.0, %v4748
      %4750 = vmatmul.bf16.gmra.mxu0 %v4568
      %v4751 = vpop.f32.mrf.mxu0
      %v4752 = vadd.f32 0.0, %v4751
      %v4753 = vpop.f32.mrf.mxu0
      %v4754 = vadd.f32 0.0, %v4753
      %4755 = vmatmul.bf16.gmra.mxu0 %v4571
      %v4756 = vpop.f32.mrf.mxu0
      %v4757 = vadd.f32 0.0, %v4756
      %v4758 = vpop.f32.mrf.mxu0
      %v4759 = vadd.f32 0.0, %v4758
      %4760 = vmatmul.bf16.gmra.mxu0 %v4574
      %v4761 = vpop.f32.mrf.mxu0
      %v4762 = vadd.f32 0.0, %v4761
      %v4763 = vpop.f32.mrf.mxu0
      %v4764 = vadd.f32 0.0, %v4763
      %4765 = vmatmul.bf16.gmra.mxu0 %v4577
      %v4766 = vpop.f32.mrf.mxu0
      %v4767 = vadd.f32 0.0, %v4766
      %v4768 = vpop.f32.mrf.mxu0
      %v4769 = vadd.f32 0.0, %v4768
      %4770 = vmatmul.bf16.gmra.mxu0 %v4580
      %v4771 = vpop.f32.mrf.mxu0
      %v4772 = vadd.f32 0.0, %v4771
      %v4773 = vpop.f32.mrf.mxu0
      %v4774 = vadd.f32 0.0, %v4773
      %4775 = vmatmul.bf16.gmra.mxu0 %v4583
      %v4776 = vpop.f32.mrf.mxu0
      %v4777 = vadd.f32 0.0, %v4776
      %v4778 = vpop.f32.mrf.mxu0
      %v4779 = vadd.f32 0.0, %v4778
      %4780 = vmatmul.bf16.gmra.mxu0 %v4586
      %v4781 = vpop.f32.mrf.mxu0
      %v4782 = vadd.f32 0.0, %v4781
      %v4783 = vpop.f32.mrf.mxu0
      %v4784 = vadd.f32 0.0, %v4783
      %4785 = vmatmul.bf16.gmra.mxu0 %v4589
      %v4786 = vpop.f32.mrf.mxu0
      %v4787 = vadd.f32 0.0, %v4786
      %v4788 = vpop.f32.mrf.mxu0
      %v4789 = vadd.f32 0.0, %v4788
      %4790 = vmatmul.bf16.gmra.mxu0 %v4592
      %v4791 = vpop.f32.mrf.mxu0
      %v4792 = vadd.f32 0.0, %v4791
      %v4793 = vpop.f32.mrf.mxu0
      %v4794 = vadd.f32 0.0, %v4793
      %4795 = vmatmul.bf16.gmra.mxu0 %v4595
      %v4796 = vpop.f32.mrf.mxu0
      %v4797 = vadd.f32 0.0, %v4796
      %v4798 = vpop.f32.mrf.mxu0
      %v4799 = vadd.f32 0.0, %v4798
      %4800 = vmatmul.bf16.gmra.mxu0 %v4598
      %v4801 = vpop.f32.mrf.mxu0
      %v4802 = vadd.f32 0.0, %v4801
      %v4803 = vpop.f32.mrf.mxu0
      %v4804 = vadd.f32 0.0, %v4803
      %4805 = vmatmul.bf16.gmra.mxu0 %v4601
      %v4806 = vpop.f32.mrf.mxu0
      %v4807 = vadd.f32 0.0, %v4806
      %v4808 = vpop.f32.mrf.mxu0
      %v4809 = vadd.f32 0.0, %v4808
      %4810 = vmatmul.bf16.gmra.mxu0 %v4604
      %v4811 = vpop.f32.mrf.mxu0
      %v4812 = vadd.f32 0.0, %v4811
      %v4813 = vpop.f32.mrf.mxu0
      %v4814 = vadd.f32 0.0, %v4813
      %4815 = vmatmul.bf16.gmra.mxu0 %v4607
      %v4816 = vpop.f32.mrf.mxu0
      %v4817 = vadd.f32 0.0, %v4816
      %v4818 = vpop.f32.mrf.mxu0
      %v4819 = vadd.f32 0.0, %v4818
      %4820 = vmatmul.bf16.gmra.mxu0 %v4610
      %v4821 = vpop.f32.mrf.mxu0
      %v4822 = vadd.f32 0.0, %v4821
      %v4823 = vpop.f32.mrf.mxu0
      %v4824 = vadd.f32 0.0, %v4823
      %4825 = vmatmul.bf16.gmra.mxu0 %v4613
      %v4826 = vpop.f32.mrf.mxu0
      %v4827 = vadd.f32 0.0, %v4826
      %v4828 = vpop.f32.mrf.mxu0
      %v4829 = vadd.f32 0.0, %v4828
      %4830 = vmatmul.bf16.gmra.mxu0 %v4616
      %v4831 = vpop.f32.mrf.mxu0
      %v4832 = vadd.f32 0.0, %v4831
      %v4833 = vpop.f32.mrf.mxu0
      %v4834 = vadd.f32 0.0, %v4833
      %4835 = vmatmul.bf16.gmra.mxu0 %v4619
      %v4836 = vpop.f32.mrf.mxu0
      %v4837 = vadd.f32 0.0, %v4836
      %v4838 = vpop.f32.mrf.mxu0
      %v4839 = vadd.f32 0.0, %v4838
      %4840 = vmatmul.bf16.gmra.mxu0 %v4622
      %v4841 = vpop.f32.mrf.mxu0
      %v4842 = vadd.f32 0.0, %v4841
      %v4843 = vpop.f32.mrf.mxu0
      %v4844 = vadd.f32 0.0, %v4843
      %4845 = vmatmul.bf16.gmra.mxu0 %v4625
      %v4846 = vpop.f32.mrf.mxu0
      %v4847 = vadd.f32 0.0, %v4846
      %v4848 = vpop.f32.mrf.mxu0
      %v4849 = vadd.f32 0.0, %v4848
      %4850 = vmatmul.bf16.gmra.mxu0 %v4628
      %v4851 = vpop.f32.mrf.mxu0
      %v4852 = vadd.f32 0.0, %v4851
      %v4853 = vpop.f32.mrf.mxu0
      %v4854 = vadd.f32 0.0, %v4853
      %4855 = vmatmul.bf16.gmra.mxu0 %v4631
      %v4856 = vpop.f32.mrf.mxu0
      %v4857 = vadd.f32 0.0, %v4856
      %v4858 = vpop.f32.mrf.mxu0
      %v4859 = vadd.f32 0.0, %v4858
      %4860 = vmatmul.bf16.gmra.mxu0 %v4634
      %v4861 = vpop.f32.mrf.mxu0
      %v4862 = vadd.f32 0.0, %v4861
      %v4863 = vpop.f32.mrf.mxu0
      %v4864 = vadd.f32 0.0, %v4863
      %4865 = vmatmul.bf16.gmra.mxu0 %v4637
      %v4866 = vpop.f32.mrf.mxu0
      %v4867 = vadd.f32 0.0, %v4866
      %v4868 = vpop.f32.mrf.mxu0
      %v4869 = vadd.f32 0.0, %v4868
      %4870 = vmatmul.bf16.gmra.mxu0 %v4640
      %v4871 = vpop.f32.mrf.mxu0
      %v4872 = vadd.f32 0.0, %v4871
      %v4873 = vpop.f32.mrf.mxu0
      %v4874 = vadd.f32 0.0, %v4873
      %4875 = vmatmul.bf16.gmra.mxu0 %v4643
      %v4876 = vpop.f32.mrf.mxu0
      %v4877 = vadd.f32 0.0, %v4876
      %v4878 = vpop.f32.mrf.mxu0
      %v4879 = vadd.f32 0.0, %v4878
      %4880 = vmatmul.bf16.gmra.mxu0 %v4646
      %v4881 = vpop.f32.mrf.mxu0
      %v4882 = vadd.f32 0.0, %v4881
      %v4883 = vpop.f32.mrf.mxu0
      %v4884 = vadd.f32 0.0, %v4883
      %4885 = vmatmul.bf16.gmra.mxu0 %v4649
      %v4886 = vpop.f32.mrf.mxu0
      %v4887 = vadd.f32 0.0, %v4886
      %v4888 = vpop.f32.mrf.mxu0
      %v4889 = vadd.f32 0.0, %v4888
      %4890 = vmatmul.bf16.gmra.mxu0 %v4652
      %v4891 = vpop.f32.mrf.mxu0
      %v4892 = vadd.f32 0.0, %v4891
      %v4893 = vpop.f32.mrf.mxu0
      %v4894 = vadd.f32 0.0, %v4893
      %4895 = vdwg.mxu0
      %v4896 = vadd.f32 %v3724, %v4667
      %v4897 = vadd.f32 %v3725, %v4669
      %v4898 = vadd.f32 %v3726, %v4672
      %v4899 = vadd.f32 %v3727, %v4674
      %v4900 = vadd.f32 %v3728, %v4677
      %v4901 = vadd.f32 %v3729, %v4679
      %v4902 = vadd.f32 %v3730, %v4682
      %v4903 = vadd.f32 %v3731, %v4684
      %v4904 = vadd.f32 %v3732, %v4687
      %v4905 = vadd.f32 %v3733, %v4689
      %v4906 = vadd.f32 %v3734, %v4692
      %v4907 = vadd.f32 %v3735, %v4694
      %v4908 = vadd.f32 %v3736, %v4697
      %v4909 = vadd.f32 %v3737, %v4699
      %v4910 = vadd.f32 %v3738, %v4702
      %v4911 = vadd.f32 %v3739, %v4704
      %v4912 = vadd.f32 %v3740, %v4707
      %v4913 = vadd.f32 %v3741, %v4709
      %v4914 = vadd.f32 %v3742, %v4712
      %v4915 = vadd.f32 %v3743, %v4714
      %v4916 = vadd.f32 %v3744, %v4717
      %v4917 = vadd.f32 %v3745, %v4719
      %v4918 = vadd.f32 %v3746, %v4722
      %v4919 = vadd.f32 %v3747, %v4724
      %v4920 = vadd.f32 %v3748, %v4727
      %v4921 = vadd.f32 %v3749, %v4729
      %v4922 = vadd.f32 %v3750, %v4732
      %v4923 = vadd.f32 %v3751, %v4734
      %v4924 = vadd.f32 %v3752, %v4737
      %v4925 = vadd.f32 %v3753, %v4739
      %v4926 = vadd.f32 %v3754, %v4742
      %v4927 = vadd.f32 %v3755, %v4744
      %v4928 = vadd.f32 %v3756, %v4747
      %v4929 = vadd.f32 %v3757, %v4749
      %v4930 = vadd.f32 %v3758, %v4752
      %v4931 = vadd.f32 %v3759, %v4754
      %v4932 = vadd.f32 %v3760, %v4757
      %v4933 = vadd.f32 %v3761, %v4759
      %v4934 = vadd.f32 %v3762, %v4762
      %v4935 = vadd.f32 %v3763, %v4764
      %v4936 = vadd.f32 %v3764, %v4767
      %v4937 = vadd.f32 %v3765, %v4769
      %v4938 = vadd.f32 %v3766, %v4772
      %v4939 = vadd.f32 %v3767, %v4774
      %v4940 = vadd.f32 %v3768, %v4777
      %v4941 = vadd.f32 %v3769, %v4779
      %v4942 = vadd.f32 %v3770, %v4782
      %v4943 = vadd.f32 %v3771, %v4784
      %v4944 = vadd.f32 %v3772, %v4787
      %v4945 = vadd.f32 %v3773, %v4789
      %v4946 = vadd.f32 %v3774, %v4792
      %v4947 = vadd.f32 %v3775, %v4794
      %v4948 = vadd.f32 %v3776, %v4797
      %v4949 = vadd.f32 %v3777, %v4799
      %v4950 = vadd.f32 %v3778, %v4802
      %v4951 = vadd.f32 %v3779, %v4804
      %v4952 = vadd.f32 %v3780, %v4807
      %v4953 = vadd.f32 %v3781, %v4809
      %v4954 = vadd.f32 %v3782, %v4812
      %v4955 = vadd.f32 %v3783, %v4814
      %v4956 = vadd.f32 %v3784, %v4817
      %v4957 = vadd.f32 %v3785, %v4819
      %v4958 = vadd.f32 %v3786, %v4822
      %v4959 = vadd.f32 %v3787, %v4824
      %v4960 = vadd.f32 %v3788, %v4827
      %v4961 = vadd.f32 %v3789, %v4829
      %v4962 = vadd.f32 %v3790, %v4832
      %v4963 = vadd.f32 %v3791, %v4834
      %v4964 = vadd.f32 %v3792, %v4837
      %v4965 = vadd.f32 %v3793, %v4839
      %v4966 = vadd.f32 %v3794, %v4842
      %v4967 = vadd.f32 %v3795, %v4844
      %v4968 = vadd.f32 %v3796, %v4847
      %v4969 = vadd.f32 %v3797, %v4849
      %v4970 = vadd.f32 %v3798, %v4852
      %v4971 = vadd.f32 %v3799, %v4854
      %v4972 = vadd.f32 %v3800, %v4857
      %v4973 = vadd.f32 %v3801, %v4859
      %v4974 = vadd.f32 %v3802, %v4862
      %v4975 = vadd.f32 %v3803, %v4864
      %v4976 = vadd.f32 %v3804, %v4867
      %v4977 = vadd.f32 %v3805, %v4869
      %v4978 = vadd.f32 %v3806, %v4872
      %v4979 = vadd.f32 %v3807, %v4874
      %v4980 = vadd.f32 %v3808, %v4877
      %v4981 = vadd.f32 %v3809, %v4879
      %v4982 = vadd.f32 %v3810, %v4882
      %v4983 = vadd.f32 %v3811, %v4884
      %v4984 = vadd.f32 %v3812, %v4887
      %v4985 = vadd.f32 %v3813, %v4889
      %v4986 = vadd.f32 %v3814, %v4892
      %v4987 = vadd.f32 %v3815, %v4894
      %v4988 = vld [vmem:[#allocation2 + $0x28] sm:$0xe]
      %s4989 = scalar_lea.vmem %s2, 20
      %v4990 = vld [vmem:[%s4989] sm:$0xf]
      %v4992 = vunpack.c.l.b16 %v4988
      %v4993 = vpack.c.b16 %v4005, %v4992
      %v4994 = vrot.slane %v4993, 1
      %v4995 = vrot.slane %v4098, 1
      %v4996 = vsel %vm3250, %v4994, %v4995
      %v4997 = vrot.slane %v4099, 1
      %v4998 = vsel %vm3250, %v4995, %v4997
      %v4999 = vrot.slane %v4100, 1
      %v5000 = vsel %vm3250, %v4997, %v4999
      %v5001 = vrot.slane %v4101, 1
      %v5002 = vsel %vm3250, %v4999, %v5001
      %v5003 = vrot.slane %v4102, 1
      %v5004 = vsel %vm3250, %v5001, %v5003
      %v5005 = vrot.slane %v4103, 1
      %v5006 = vsel %vm3250, %v5003, %v5005
      %v5007 = vrot.slane %v4104, 1
      %v5008 = vsel %vm3250, %v5005, %v5007
      %v5009 = vrot.slane %v4105, 1
      %v5010 = vsel %vm3250, %v5007, %v5009
      %v5011 = vrot.slane %v4106, 1
      %v5012 = vsel %vm3250, %v5009, %v5011
      %v5013 = vrot.slane %v4107, 1
      %v5014 = vsel %vm3250, %v5011, %v5013
      %v5015 = vrot.slane %v4108, 1
      %v5016 = vsel %vm3250, %v5013, %v5015
      %v5017 = vrot.slane %v4109, 1
      %v5018 = vsel %vm3250, %v5015, %v5017
      %v5019 = vrot.slane %v4110, 1
      %v5020 = vsel %vm3250, %v5017, %v5019
      %v5021 = vrot.slane %v4111, 1
      %v5022 = vsel %vm3250, %v5019, %v5021
      %v5023 = vrot.slane %v4112, 1
      %v5024 = vsel %vm3250, %v5021, %v5023
      %v5025 = vrot.slane %v4113, 1
      %v5026 = vsel %vm3250, %v5023, %v5025
      %v5027 = vrot.slane %v4114, 1
      %v5028 = vsel %vm3250, %v5025, %v5027
      %v5029 = vrot.slane %v4115, 1
      %v5030 = vsel %vm3250, %v5027, %v5029
      %v5031 = vrot.slane %v4116, 1
      %v5032 = vsel %vm3250, %v5029, %v5031
      %v5033 = vrot.slane %v4117, 1
      %v5034 = vsel %vm3250, %v5031, %v5033
      %v5035 = vrot.slane %v4118, 1
      %v5036 = vsel %vm3250, %v5033, %v5035
      %v5037 = vrot.slane %v4119, 1
      %v5038 = vsel %vm3250, %v5035, %v5037
      %v5039 = vrot.slane %v4120, 1
      %v5040 = vsel %vm3250, %v5037, %v5039
      %v5041 = vrot.slane %v4121, 1
      %v5042 = vsel %vm3250, %v5039, %v5041
      %v5043 = vrot.slane %v4122, 1
      %v5044 = vsel %vm3250, %v5041, %v5043
      %v5045 = vrot.slane %v4123, 1
      %v5046 = vsel %vm3250, %v5043, %v5045
      %v5047 = vrot.slane %v4124, 1
      %v5048 = vsel %vm3250, %v5045, %v5047
      %v5049 = vrot.slane %v4125, 1
      %v5050 = vsel %vm3250, %v5047, %v5049
      %v5051 = vrot.slane %v4126, 1
      %v5052 = vsel %vm3250, %v5049, %v5051
      %v5053 = vrot.slane %v4127, 1
      %v5054 = vsel %vm3250, %v5051, %v5053
      %v5055 = vrot.slane %v4128, 1
      %v5056 = vsel %vm3250, %v5053, %v5055
      %v5057 = vrot.slane %v4129, 1
      %v5058 = vsel %vm3250, %v5055, %v5057
      %v5059 = vrot.slane %v4130, 1
      %v5060 = vsel %vm3250, %v5057, %v5059
      %v5061 = vrot.slane %v4131, 1
      %v5062 = vsel %vm3250, %v5059, %v5061
      %v5063 = vrot.slane %v4132, 1
      %v5064 = vsel %vm3250, %v5061, %v5063
      %v5065 = vrot.slane %v4133, 1
      %v5066 = vsel %vm3250, %v5063, %v5065
      %v5067 = vrot.slane %v4134, 1
      %v5068 = vsel %vm3250, %v5065, %v5067
      %v5069 = vrot.slane %v4135, 1
      %v5070 = vsel %vm3250, %v5067, %v5069
      %v5071 = vrot.slane %v4136, 1
      %v5072 = vsel %vm3250, %v5069, %v5071
      %v5073 = vrot.slane %v4137, 1
      %v5074 = vsel %vm3250, %v5071, %v5073
      %v5075 = vrot.slane %v4138, 1
      %v5076 = vsel %vm3250, %v5073, %v5075
      %v5077 = vrot.slane %v4139, 1
      %v5078 = vsel %vm3250, %v5075, %v5077
      %v5079 = vrot.slane %v4140, 1
      %v5080 = vsel %vm3250, %v5077, %v5079
      %v5081 = vrot.slane %v4141, 1
      %v5082 = vsel %vm3250, %v5079, %v5081
      %v5083 = vrot.slane %v4142, 1
      %v5084 = vsel %vm3250, %v5081, %v5083
      %v5085 = vrot.slane %v4143, 1
      %v5086 = vsel %vm3250, %v5083, %v5085
      %v5088 = vsel %vm1356, %v4996, 0
      %v5091 = vsel %vm1356, %v4998, 0
      %v5094 = vsel %vm1356, %v5000, 0
      %v5097 = vsel %vm1356, %v5002, 0
      %v5100 = vsel %vm1356, %v5004, 0
      %v5103 = vsel %vm1356, %v5006, 0
      %v5106 = vsel %vm1356, %v5008, 0
      %v5109 = vsel %vm1356, %v5010, 0
      %v5112 = vsel %vm1356, %v5012, 0
      %v5115 = vsel %vm1356, %v5014, 0
      %v5118 = vsel %vm1356, %v5016, 0
      %v5121 = vsel %vm1356, %v5018, 0
      %v5124 = vsel %vm1356, %v5020, 0
      %v5127 = vsel %vm1356, %v5022, 0
      %v5130 = vsel %vm1356, %v5024, 0
      %v5133 = vsel %vm1356, %v5026, 0
      %v5136 = vsel %vm1356, %v5028, 0
      %v5139 = vsel %vm1356, %v5030, 0
      %v5142 = vsel %vm1356, %v5032, 0
      %v5145 = vsel %vm1356, %v5034, 0
      %v5148 = vsel %vm1356, %v5036, 0
      %v5151 = vsel %vm1356, %v5038, 0
      %v5154 = vsel %vm1356, %v5040, 0
      %v5157 = vsel %vm1356, %v5042, 0
      %v5160 = vsel %vm1356, %v5044, 0
      %v5163 = vsel %vm1356, %v5046, 0
      %v5166 = vsel %vm1356, %v5048, 0
      %v5169 = vsel %vm1356, %v5050, 0
      %v5172 = vsel %vm1356, %v5052, 0
      %v5175 = vsel %vm1356, %v5054, 0
      %v5178 = vsel %vm1356, %v5056, 0
      %v5181 = vsel %vm1356, %v5058, 0
      %v5184 = vsel %vm1356, %v5060, 0
      %v5187 = vsel %vm1356, %v5062, 0
      %v5190 = vsel %vm1356, %v5064, 0
      %v5193 = vsel %vm1356, %v5066, 0
      %v5196 = vsel %vm1356, %v5068, 0
      %v5199 = vsel %vm1356, %v5070, 0
      %v5202 = vsel %vm1356, %v5072, 0
      %v5205 = vsel %vm1356, %v5074, 0
      %v5208 = vsel %vm1356, %v5076, 0
      %v5211 = vsel %vm1356, %v5078, 0
      %v5214 = vsel %vm1356, %v5080, 0
      %v5217 = vsel %vm1356, %v5082, 0
      %v5220 = vsel %vm1356, %v5084, 0
      %v5223 = vsel %vm1356, %v5086, 0
      %v5226 = vsel %vm1495, %v4990, 0
      %5228 = vmatpush.bf16.msra.mxu0 0
      %5229 = vmatpush.bf16.msra.mxu0 0
      %5230 = vmatpush.bf16.msra.mxu0 0
      %5231 = vmatpush.bf16.msra.mxu0 0
      %5232 = vmatpush.bf16.msra.mxu0 0
      %5233 = vmatpush.bf16.msra.mxu0 0
      %5234 = vmatpush.bf16.msra.mxu0 0
      %5235 = vmatpush.bf16.msra.mxu0 %v5226
      %5236 = vmatmul.bf16.gmra.mxu0 %v5088
      %v5237 = vpop.f32.mrf.mxu0
      %v5238 = vadd.f32 0.0, %v5237
      %v5239 = vpop.f32.mrf.mxu0
      %v5240 = vadd.f32 0.0, %v5239
      %5241 = vmatmul.bf16.gmra.mxu0 %v5091
      %v5242 = vpop.f32.mrf.mxu0
      %v5243 = vadd.f32 0.0, %v5242
      %v5244 = vpop.f32.mrf.mxu0
      %v5245 = vadd.f32 0.0, %v5244
      %5246 = vmatmul.bf16.gmra.mxu0 %v5094
      %v5247 = vpop.f32.mrf.mxu0
      %v5248 = vadd.f32 0.0, %v5247
      %v5249 = vpop.f32.mrf.mxu0
      %v5250 = vadd.f32 0.0, %v5249
      %5251 = vmatmul.bf16.gmra.mxu0 %v5097
      %v5252 = vpop.f32.mrf.mxu0
      %v5253 = vadd.f32 0.0, %v5252
      %v5254 = vpop.f32.mrf.mxu0
      %v5255 = vadd.f32 0.0, %v5254
      %5256 = vmatmul.bf16.gmra.mxu0 %v5100
      %v5257 = vpop.f32.mrf.mxu0
      %v5258 = vadd.f32 0.0, %v5257
      %v5259 = vpop.f32.mrf.mxu0
      %v5260 = vadd.f32 0.0, %v5259
      %5261 = vmatmul.bf16.gmra.mxu0 %v5103
      %v5262 = vpop.f32.mrf.mxu0
      %v5263 = vadd.f32 0.0, %v5262
      %v5264 = vpop.f32.mrf.mxu0
      %v5265 = vadd.f32 0.0, %v5264
      %5266 = vmatmul.bf16.gmra.mxu0 %v5106
      %v5267 = vpop.f32.mrf.mxu0
      %v5268 = vadd.f32 0.0, %v5267
      %v5269 = vpop.f32.mrf.mxu0
      %v5270 = vadd.f32 0.0, %v5269
      %5271 = vmatmul.bf16.gmra.mxu0 %v5109
      %v5272 = vpop.f32.mrf.mxu0
      %v5273 = vadd.f32 0.0, %v5272
      %v5274 = vpop.f32.mrf.mxu0
      %v5275 = vadd.f32 0.0, %v5274
      %5276 = vmatmul.bf16.gmra.mxu0 %v5112
      %v5277 = vpop.f32.mrf.mxu0
      %v5278 = vadd.f32 0.0, %v5277
      %v5279 = vpop.f32.mrf.mxu0
      %v5280 = vadd.f32 0.0, %v5279
      %5281 = vmatmul.bf16.gmra.mxu0 %v5115
      %v5282 = vpop.f32.mrf.mxu0
      %v5283 = vadd.f32 0.0, %v5282
      %v5284 = vpop.f32.mrf.mxu0
      %v5285 = vadd.f32 0.0, %v5284
      %5286 = vmatmul.bf16.gmra.mxu0 %v5118
      %v5287 = vpop.f32.mrf.mxu0
      %v5288 = vadd.f32 0.0, %v5287
      %v5289 = vpop.f32.mrf.mxu0
      %v5290 = vadd.f32 0.0, %v5289
      %5291 = vmatmul.bf16.gmra.mxu0 %v5121
      %v5292 = vpop.f32.mrf.mxu0
      %v5293 = vadd.f32 0.0, %v5292
      %v5294 = vpop.f32.mrf.mxu0
      %v5295 = vadd.f32 0.0, %v5294
      %5296 = vmatmul.bf16.gmra.mxu0 %v5124
      %v5297 = vpop.f32.mrf.mxu0
      %v5298 = vadd.f32 0.0, %v5297
      %v5299 = vpop.f32.mrf.mxu0
      %v5300 = vadd.f32 0.0, %v5299
      %5301 = vmatmul.bf16.gmra.mxu0 %v5127
      %v5302 = vpop.f32.mrf.mxu0
      %v5303 = vadd.f32 0.0, %v5302
      %v5304 = vpop.f32.mrf.mxu0
      %v5305 = vadd.f32 0.0, %v5304
      %5306 = vmatmul.bf16.gmra.mxu0 %v5130
      %v5307 = vpop.f32.mrf.mxu0
      %v5308 = vadd.f32 0.0, %v5307
      %v5309 = vpop.f32.mrf.mxu0
      %v5310 = vadd.f32 0.0, %v5309
      %5311 = vmatmul.bf16.gmra.mxu0 %v5133
      %v5312 = vpop.f32.mrf.mxu0
      %v5313 = vadd.f32 0.0, %v5312
      %v5314 = vpop.f32.mrf.mxu0
      %v5315 = vadd.f32 0.0, %v5314
      %5316 = vmatmul.bf16.gmra.mxu0 %v5136
      %v5317 = vpop.f32.mrf.mxu0
      %v5318 = vadd.f32 0.0, %v5317
      %v5319 = vpop.f32.mrf.mxu0
      %v5320 = vadd.f32 0.0, %v5319
      %5321 = vmatmul.bf16.gmra.mxu0 %v5139
      %v5322 = vpop.f32.mrf.mxu0
      %v5323 = vadd.f32 0.0, %v5322
      %v5324 = vpop.f32.mrf.mxu0
      %v5325 = vadd.f32 0.0, %v5324
      %5326 = vmatmul.bf16.gmra.mxu0 %v5142
      %v5327 = vpop.f32.mrf.mxu0
      %v5328 = vadd.f32 0.0, %v5327
      %v5329 = vpop.f32.mrf.mxu0
      %v5330 = vadd.f32 0.0, %v5329
      %5331 = vmatmul.bf16.gmra.mxu0 %v5145
      %v5332 = vpop.f32.mrf.mxu0
      %v5333 = vadd.f32 0.0, %v5332
      %v5334 = vpop.f32.mrf.mxu0
      %v5335 = vadd.f32 0.0, %v5334
      %5336 = vmatmul.bf16.gmra.mxu0 %v5148
      %v5337 = vpop.f32.mrf.mxu0
      %v5338 = vadd.f32 0.0, %v5337
      %v5339 = vpop.f32.mrf.mxu0
      %v5340 = vadd.f32 0.0, %v5339
      %5341 = vmatmul.bf16.gmra.mxu0 %v5151
      %v5342 = vpop.f32.mrf.mxu0
      %v5343 = vadd.f32 0.0, %v5342
      %v5344 = vpop.f32.mrf.mxu0
      %v5345 = vadd.f32 0.0, %v5344
      %5346 = vmatmul.bf16.gmra.mxu0 %v5154
      %v5347 = vpop.f32.mrf.mxu0
      %v5348 = vadd.f32 0.0, %v5347
      %v5349 = vpop.f32.mrf.mxu0
      %v5350 = vadd.f32 0.0, %v5349
      %5351 = vmatmul.bf16.gmra.mxu0 %v5157
      %v5352 = vpop.f32.mrf.mxu0
      %v5353 = vadd.f32 0.0, %v5352
      %v5354 = vpop.f32.mrf.mxu0
      %v5355 = vadd.f32 0.0, %v5354
      %5356 = vmatmul.bf16.gmra.mxu0 %v5160
      %v5357 = vpop.f32.mrf.mxu0
      %v5358 = vadd.f32 0.0, %v5357
      %v5359 = vpop.f32.mrf.mxu0
      %v5360 = vadd.f32 0.0, %v5359
      %5361 = vmatmul.bf16.gmra.mxu0 %v5163
      %v5362 = vpop.f32.mrf.mxu0
      %v5363 = vadd.f32 0.0, %v5362
      %v5364 = vpop.f32.mrf.mxu0
      %v5365 = vadd.f32 0.0, %v5364
      %5366 = vmatmul.bf16.gmra.mxu0 %v5166
      %v5367 = vpop.f32.mrf.mxu0
      %v5368 = vadd.f32 0.0, %v5367
      %v5369 = vpop.f32.mrf.mxu0
      %v5370 = vadd.f32 0.0, %v5369
      %5371 = vmatmul.bf16.gmra.mxu0 %v5169
      %v5372 = vpop.f32.mrf.mxu0
      %v5373 = vadd.f32 0.0, %v5372
      %v5374 = vpop.f32.mrf.mxu0
      %v5375 = vadd.f32 0.0, %v5374
      %5376 = vmatmul.bf16.gmra.mxu0 %v5172
      %v5377 = vpop.f32.mrf.mxu0
      %v5378 = vadd.f32 0.0, %v5377
      %v5379 = vpop.f32.mrf.mxu0
      %v5380 = vadd.f32 0.0, %v5379
      %5381 = vmatmul.bf16.gmra.mxu0 %v5175
      %v5382 = vpop.f32.mrf.mxu0
      %v5383 = vadd.f32 0.0, %v5382
      %v5384 = vpop.f32.mrf.mxu0
      %v5385 = vadd.f32 0.0, %v5384
      %5386 = vmatmul.bf16.gmra.mxu0 %v5178
      %v5387 = vpop.f32.mrf.mxu0
      %v5388 = vadd.f32 0.0, %v5387
      %v5389 = vpop.f32.mrf.mxu0
      %v5390 = vadd.f32 0.0, %v5389
      %5391 = vmatmul.bf16.gmra.mxu0 %v5181
      %v5392 = vpop.f32.mrf.mxu0
      %v5393 = vadd.f32 0.0, %v5392
      %v5394 = vpop.f32.mrf.mxu0
      %v5395 = vadd.f32 0.0, %v5394
      %5396 = vmatmul.bf16.gmra.mxu0 %v5184
      %v5397 = vpop.f32.mrf.mxu0
      %v5398 = vadd.f32 0.0, %v5397
      %v5399 = vpop.f32.mrf.mxu0
      %v5400 = vadd.f32 0.0, %v5399
      %5401 = vmatmul.bf16.gmra.mxu0 %v5187
      %v5402 = vpop.f32.mrf.mxu0
      %v5403 = vadd.f32 0.0, %v5402
      %v5404 = vpop.f32.mrf.mxu0
      %v5405 = vadd.f32 0.0, %v5404
      %5406 = vmatmul.bf16.gmra.mxu0 %v5190
      %v5407 = vpop.f32.mrf.mxu0
      %v5408 = vadd.f32 0.0, %v5407
      %v5409 = vpop.f32.mrf.mxu0
      %v5410 = vadd.f32 0.0, %v5409
      %5411 = vmatmul.bf16.gmra.mxu0 %v5193
      %v5412 = vpop.f32.mrf.mxu0
      %v5413 = vadd.f32 0.0, %v5412
      %v5414 = vpop.f32.mrf.mxu0
      %v5415 = vadd.f32 0.0, %v5414
      %5416 = vmatmul.bf16.gmra.mxu0 %v5196
      %v5417 = vpop.f32.mrf.mxu0
      %v5418 = vadd.f32 0.0, %v5417
      %v5419 = vpop.f32.mrf.mxu0
      %v5420 = vadd.f32 0.0, %v5419
      %5421 = vmatmul.bf16.gmra.mxu0 %v5199
      %v5422 = vpop.f32.mrf.mxu0
      %v5423 = vadd.f32 0.0, %v5422
      %v5424 = vpop.f32.mrf.mxu0
      %v5425 = vadd.f32 0.0, %v5424
      %5426 = vmatmul.bf16.gmra.mxu0 %v5202
      %v5427 = vpop.f32.mrf.mxu0
      %v5428 = vadd.f32 0.0, %v5427
      %v5429 = vpop.f32.mrf.mxu0
      %v5430 = vadd.f32 0.0, %v5429
      %5431 = vmatmul.bf16.gmra.mxu0 %v5205
      %v5432 = vpop.f32.mrf.mxu0
      %v5433 = vadd.f32 0.0, %v5432
      %v5434 = vpop.f32.mrf.mxu0
      %v5435 = vadd.f32 0.0, %v5434
      %5436 = vmatmul.bf16.gmra.mxu0 %v5208
      %v5437 = vpop.f32.mrf.mxu0
      %v5438 = vadd.f32 0.0, %v5437
      %v5439 = vpop.f32.mrf.mxu0
      %v5440 = vadd.f32 0.0, %v5439
      %5441 = vmatmul.bf16.gmra.mxu0 %v5211
      %v5442 = vpop.f32.mrf.mxu0
      %v5443 = vadd.f32 0.0, %v5442
      %v5444 = vpop.f32.mrf.mxu0
      %v5445 = vadd.f32 0.0, %v5444
      %5446 = vmatmul.bf16.gmra.mxu0 %v5214
      %v5447 = vpop.f32.mrf.mxu0
      %v5448 = vadd.f32 0.0, %v5447
      %v5449 = vpop.f32.mrf.mxu0
      %v5450 = vadd.f32 0.0, %v5449
      %5451 = vmatmul.bf16.gmra.mxu0 %v5217
      %v5452 = vpop.f32.mrf.mxu0
      %v5453 = vadd.f32 0.0, %v5452
      %v5454 = vpop.f32.mrf.mxu0
      %v5455 = vadd.f32 0.0, %v5454
      %5456 = vmatmul.bf16.gmra.mxu0 %v5220
      %v5457 = vpop.f32.mrf.mxu0
      %v5458 = vadd.f32 0.0, %v5457
      %v5459 = vpop.f32.mrf.mxu0
      %v5460 = vadd.f32 0.0, %v5459
      %5461 = vmatmul.bf16.gmra.mxu0 %v5223
      %v5462 = vpop.f32.mrf.mxu0
      %v5463 = vadd.f32 0.0, %v5462
      %v5464 = vpop.f32.mrf.mxu0
      %v5465 = vadd.f32 0.0, %v5464
      %5466 = vdwg.mxu0
      %v5467 = vadd.f32 %v4896, %v5238
      %v5468 = vadd.f32 %v4897, %v5240
      %v5469 = vadd.f32 %v4898, %v5243
      %v5470 = vadd.f32 %v4899, %v5245
      %v5471 = vadd.f32 %v4900, %v5248
      %v5472 = vadd.f32 %v4901, %v5250
      %v5473 = vadd.f32 %v4902, %v5253
      %v5474 = vadd.f32 %v4903, %v5255
      %v5475 = vadd.f32 %v4904, %v5258
      %v5476 = vadd.f32 %v4905, %v5260
      %v5477 = vadd.f32 %v4906, %v5263
      %v5478 = vadd.f32 %v4907, %v5265
      %v5479 = vadd.f32 %v4908, %v5268
      %v5480 = vadd.f32 %v4909, %v5270
      %v5481 = vadd.f32 %v4910, %v5273
      %v5482 = vadd.f32 %v4911, %v5275
      %v5483 = vadd.f32 %v4912, %v5278
      %v5484 = vadd.f32 %v4913, %v5280
      %v5485 = vadd.f32 %v4914, %v5283
      %v5486 = vadd.f32 %v4915, %v5285
      %v5487 = vadd.f32 %v4916, %v5288
      %v5488 = vadd.f32 %v4917, %v5290
      %v5489 = vadd.f32 %v4918, %v5293
      %v5490 = vadd.f32 %v4919, %v5295
      %v5491 = vadd.f32 %v4920, %v5298
      %v5492 = vadd.f32 %v4921, %v5300
      %v5493 = vadd.f32 %v4922, %v5303
      %v5494 = vadd.f32 %v4923, %v5305
      %v5495 = vadd.f32 %v4924, %v5308
      %v5496 = vadd.f32 %v4925, %v5310
      %v5497 = vadd.f32 %v4926, %v5313
      %v5498 = vadd.f32 %v4927, %v5315
      %v5499 = vadd.f32 %v4928, %v5318
      %v5500 = vadd.f32 %v4929, %v5320
      %v5501 = vadd.f32 %v4930, %v5323
      %v5502 = vadd.f32 %v4931, %v5325
      %v5503 = vadd.f32 %v4932, %v5328
      %v5504 = vadd.f32 %v4933, %v5330
      %v5505 = vadd.f32 %v4934, %v5333
      %v5506 = vadd.f32 %v4935, %v5335
      %v5507 = vadd.f32 %v4936, %v5338
      %v5508 = vadd.f32 %v4937, %v5340
      %v5509 = vadd.f32 %v4938, %v5343
      %v5510 = vadd.f32 %v4939, %v5345
      %v5511 = vadd.f32 %v4940, %v5348
      %v5512 = vadd.f32 %v4941, %v5350
      %v5513 = vadd.f32 %v4942, %v5353
      %v5514 = vadd.f32 %v4943, %v5355
      %v5515 = vadd.f32 %v4944, %v5358
      %v5516 = vadd.f32 %v4945, %v5360
      %v5517 = vadd.f32 %v4946, %v5363
      %v5518 = vadd.f32 %v4947, %v5365
      %v5519 = vadd.f32 %v4948, %v5368
      %v5520 = vadd.f32 %v4949, %v5370
      %v5521 = vadd.f32 %v4950, %v5373
      %v5522 = vadd.f32 %v4951, %v5375
      %v5523 = vadd.f32 %v4952, %v5378
      %v5524 = vadd.f32 %v4953, %v5380
      %v5525 = vadd.f32 %v4954, %v5383
      %v5526 = vadd.f32 %v4955, %v5385
      %v5527 = vadd.f32 %v4956, %v5388
      %v5528 = vadd.f32 %v4957, %v5390
      %v5529 = vadd.f32 %v4958, %v5393
      %v5530 = vadd.f32 %v4959, %v5395
      %v5531 = vadd.f32 %v4960, %v5398
      %v5532 = vadd.f32 %v4961, %v5400
      %v5533 = vadd.f32 %v4962, %v5403
      %v5534 = vadd.f32 %v4963, %v5405
      %v5535 = vadd.f32 %v4964, %v5408
      %v5536 = vadd.f32 %v4965, %v5410
      %v5537 = vadd.f32 %v4966, %v5413
      %v5538 = vadd.f32 %v4967, %v5415
      %v5539 = vadd.f32 %v4968, %v5418
      %v5540 = vadd.f32 %v4969, %v5420
      %v5541 = vadd.f32 %v4970, %v5423
      %v5542 = vadd.f32 %v4971, %v5425
      %v5543 = vadd.f32 %v4972, %v5428
      %v5544 = vadd.f32 %v4973, %v5430
      %v5545 = vadd.f32 %v4974, %v5433
      %v5546 = vadd.f32 %v4975, %v5435
      %v5547 = vadd.f32 %v4976, %v5438
      %v5548 = vadd.f32 %v4977, %v5440
      %v5549 = vadd.f32 %v4978, %v5443
      %v5550 = vadd.f32 %v4979, %v5445
      %v5551 = vadd.f32 %v4980, %v5448
      %v5552 = vadd.f32 %v4981, %v5450
      %v5553 = vadd.f32 %v4982, %v5453
      %v5554 = vadd.f32 %v4983, %v5455
      %v5555 = vadd.f32 %v4984, %v5458
      %v5556 = vadd.f32 %v4985, %v5460
      %v5557 = vadd.f32 %v4986, %v5463
      %v5558 = vadd.f32 %v4987, %v5465
      %v5559 = vld [vmem:[#allocation2 + $0x2c] sm:$0xe]
      %v5560 = vld [vmem:[#allocation2 + $0x30] sm:$0xf]
      %v5561 = vld [vmem:[#allocation2 + $0x34] sm:$0xf]
      %v5562 = vld [vmem:[#allocation2 + $0x38] sm:$0xf]
      %v5563 = vld [vmem:[#allocation2 + $0x3c] sm:$0xf]
      %v5564 = vld [vmem:[#allocation2 + $0x40] sm:$0xf]
      %v5565 = vld [vmem:[#allocation2 + $0x44] sm:$0xf]
      %v5566 = vld [vmem:[#allocation2 + $0x48] sm:$0xf]
      %v5567 = vld [vmem:[#allocation2 + $0x4c] sm:$0xf]
      %v5568 = vld [vmem:[#allocation2 + $0x50] sm:$0xf]
      %v5569 = vld [vmem:[#allocation2 + $0x54] sm:$0xf]
      %v5570 = vld [vmem:[#allocation2 + $0x58] sm:$0xf]
      %v5571 = vld [vmem:[#allocation2 + $0x5c] sm:$0xf]
      %v5572 = vld [vmem:[#allocation2 + $0x60] sm:$0xf]
      %v5573 = vld [vmem:[#allocation2 + $0x64] sm:$0xf]
      %v5574 = vld [vmem:[#allocation2 + $0x68] sm:$0xf]
      %v5575 = vld [vmem:[#allocation2 + $0x6c] sm:$0xf]
      %v5576 = vld [vmem:[#allocation2 + $0x70] sm:$0xf]
      %v5577 = vld [vmem:[#allocation2 + $0x74] sm:$0xf]
      %v5578 = vld [vmem:[#allocation2 + $0x78] sm:$0xf]
      %v5579 = vld [vmem:[#allocation2 + $0x7c] sm:$0xf]
      %v5580 = vld [vmem:[#allocation2 + $0x80] sm:$0xf]
      %v5581 = vld [vmem:[#allocation2 + $0x84] sm:$0xf]
      %v5582 = vld [vmem:[#allocation2 + $0x88] sm:$0xf]
      %v5583 = vld [vmem:[#allocation2 + $0x8c] sm:$0xf]
      %v5584 = vld [vmem:[#allocation2 + $0x90] sm:$0xf]
      %v5585 = vld [vmem:[#allocation2 + $0x94] sm:$0xf]
      %v5586 = vld [vmem:[#allocation2 + $0x98] sm:$0xf]
      %v5587 = vld [vmem:[#allocation2 + $0x9c] sm:$0xf]
      %v5588 = vld [vmem:[#allocation2 + $0xa0] sm:$0xf]
      %v5589 = vld [vmem:[#allocation2 + $0xa4] sm:$0xf]
      %v5590 = vld [vmem:[#allocation2 + $0xa8] sm:$0xf]
      %v5591 = vld [vmem:[#allocation2 + $0xac] sm:$0xf]
      %v5592 = vld [vmem:[#allocation2 + $0xb0] sm:$0xf]
      %v5593 = vld [vmem:[#allocation2 + $0xb4] sm:$0xf]
      %v5594 = vld [vmem:[#allocation2 + $0xb8] sm:$0xf]
      %v5595 = vld [vmem:[#allocation2 + $0xbc] sm:$0xf]
      %v5596 = vld [vmem:[#allocation2 + $0xc0] sm:$0xf]
      %v5597 = vld [vmem:[#allocation2 + $0xc4] sm:$0xf]
      %v5598 = vld [vmem:[#allocation2 + $0xc8] sm:$0xf]
      %v5599 = vld [vmem:[#allocation2 + $0xcc] sm:$0xf]
      %v5600 = vld [vmem:[#allocation2 + $0xd0] sm:$0xf]
      %v5601 = vld [vmem:[#allocation2 + $0xd4] sm:$0xf]
      %v5602 = vld [vmem:[#allocation2 + $0xd8] sm:$0xf]
      %v5603 = vld [vmem:[#allocation2 + $0xdc] sm:$0xf]
      %v5604 = vld [vmem:[#allocation2 + $0xe0] sm:$0xf]
      %v5605 = vld [vmem:[#allocation2 + $0xe4] sm:$0xf]
      %v5606 = vld [vmem:[#allocation2 + $0xe8] sm:$0xf]
      %v5607 = vld [vmem:[#allocation2 + $0xec] sm:$0xf]
      %v5608 = vld [vmem:[#allocation2 + $0xf0] sm:$0xf]
      %v5609 = vld [vmem:[#allocation2 + $0xf4] sm:$0xf]
      %v5610 = vld [vmem:[#allocation2 + $0xf8] sm:$0xf]
      %v5611 = vld [vmem:[#allocation2 + $0xfc] sm:$0xf]
      %v5612 = vld [vmem:[#allocation2 + $0x100] sm:$0xf]
      %v5613 = vld [vmem:[#allocation2 + $0x104] sm:$0xf]
      %v5614 = vld [vmem:[#allocation2 + $0x108] sm:$0xf]
      %v5615 = vld [vmem:[#allocation2 + $0x10c] sm:$0xf]
      %v5616 = vld [vmem:[#allocation2 + $0x110] sm:$0xf]
      %v5617 = vld [vmem:[#allocation2 + $0x114] sm:$0xf]
      %v5618 = vld [vmem:[#allocation2 + $0x118] sm:$0xf]
      %v5619 = vld [vmem:[#allocation2 + $0x11c] sm:$0xf]
      %v5620 = vld [vmem:[#allocation2 + $0x120] sm:$0xf]
      %v5621 = vld [vmem:[#allocation2 + $0x124] sm:$0xf]
      %v5622 = vld [vmem:[#allocation2 + $0x128] sm:$0xf]
      %v5623 = vld [vmem:[#allocation2 + $0x12c] sm:$0xf]
      %v5624 = vld [vmem:[#allocation2 + $0x130] sm:$0xf]
      %v5625 = vld [vmem:[#allocation2 + $0x134] sm:$0xf]
      %v5626 = vld [vmem:[#allocation2 + $0x138] sm:$0xf]
      %v5627 = vld [vmem:[#allocation2 + $0x13c] sm:$0xf]
      %v5628 = vld [vmem:[#allocation2 + $0x140] sm:$0xf]
      %v5629 = vld [vmem:[#allocation2 + $0x144] sm:$0xf]
      %v5630 = vld [vmem:[#allocation2 + $0x148] sm:$0xf]
      %v5631 = vld [vmem:[#allocation2 + $0x14c] sm:$0xf]
      %v5632 = vld [vmem:[#allocation2 + $0x150] sm:$0xf]
      %v5633 = vld [vmem:[#allocation2 + $0x154] sm:$0xf]
      %v5634 = vld [vmem:[#allocation2 + $0x158] sm:$0xf]
      %v5635 = vld [vmem:[#allocation2 + $0x15c] sm:$0xf]
      %v5636 = vld [vmem:[#allocation2 + $0x160] sm:$0xf]
      %v5637 = vld [vmem:[#allocation2 + $0x164] sm:$0xf]
      %v5638 = vld [vmem:[#allocation2 + $0x168] sm:$0xf]
      %v5639 = vld [vmem:[#allocation2 + $0x16c] sm:$0xf]
      %v5640 = vld [vmem:[#allocation2 + $0x170] sm:$0xf]
      %v5641 = vld [vmem:[#allocation2 + $0x174] sm:$0xf]
      %v5642 = vld [vmem:[#allocation2 + $0x178] sm:$0xf]
      %v5643 = vld [vmem:[#allocation2 + $0x17c] sm:$0xf]
      %v5644 = vld [vmem:[#allocation2 + $0x180] sm:$0xf]
      %v5645 = vld [vmem:[#allocation2 + $0x184] sm:$0xf]
      %v5646 = vld [vmem:[#allocation2 + $0x188] sm:$0xf]
      %v5647 = vld [vmem:[#allocation2 + $0x18c] sm:$0xf]
      %v5648 = vld [vmem:[#allocation2 + $0x190] sm:$0xf]
      %v5649 = vld [vmem:[#allocation2 + $0x194] sm:$0xf]
      %v5650 = vld [vmem:[#allocation2 + $0x198] sm:$0xf]
      %v5651 = vld [vmem:[#allocation2 + $0x19c] sm:$0x1]
      %s5652 = scalar_lea.vmem %s2, 24
      %v5653 = vld [vmem:[%s5652] sm:$0xf]
      %v5747 = vunpack.c.l.b16 %v5559
      %v5748 = vunpack.c.l.b16 %v5560
      %v5749 = vunpack.c.l.b16 %v5561
      %v5750 = vunpack.c.l.b16 %v5562
      %v5751 = vunpack.c.l.b16 %v5563
      %v5752 = vunpack.c.l.b16 %v5564
      %v5753 = vunpack.c.l.b16 %v5565
      %v5754 = vunpack.c.l.b16 %v5566
      %v5755 = vunpack.c.l.b16 %v5567
      %v5756 = vunpack.c.l.b16 %v5568
      %v5757 = vunpack.c.l.b16 %v5569
      %v5758 = vunpack.c.l.b16 %v5570
      %v5759 = vunpack.c.l.b16 %v5571
      %v5760 = vunpack.c.l.b16 %v5572
      %v5761 = vunpack.c.l.b16 %v5573
      %v5762 = vunpack.c.l.b16 %v5574
      %v5763 = vunpack.c.l.b16 %v5575
      %v5764 = vunpack.c.l.b16 %v5576
      %v5765 = vunpack.c.l.b16 %v5577
      %v5766 = vunpack.c.l.b16 %v5578
      %v5767 = vunpack.c.l.b16 %v5579
      %v5768 = vunpack.c.l.b16 %v5580
      %v5769 = vunpack.c.l.b16 %v5581
      %v5770 = vunpack.c.l.b16 %v5582
      %v5771 = vunpack.c.l.b16 %v5583
      %v5772 = vunpack.c.l.b16 %v5584
      %v5773 = vunpack.c.l.b16 %v5585
      %v5774 = vunpack.c.l.b16 %v5586
      %v5775 = vunpack.c.l.b16 %v5587
      %v5776 = vunpack.c.l.b16 %v5588
      %v5777 = vunpack.c.l.b16 %v5589
      %v5778 = vunpack.c.l.b16 %v5590
      %v5779 = vunpack.c.l.b16 %v5591
      %v5780 = vunpack.c.l.b16 %v5592
      %v5781 = vunpack.c.l.b16 %v5593
      %v5782 = vunpack.c.l.b16 %v5594
      %v5783 = vunpack.c.l.b16 %v5595
      %v5784 = vunpack.c.l.b16 %v5596
      %v5785 = vunpack.c.l.b16 %v5597
      %v5786 = vunpack.c.l.b16 %v5598
      %v5787 = vunpack.c.l.b16 %v5599
      %v5788 = vunpack.c.l.b16 %v5600
      %v5789 = vunpack.c.l.b16 %v5601
      %v5790 = vunpack.c.l.b16 %v5602
      %v5791 = vunpack.c.l.b16 %v5603
      %v5792 = vunpack.c.l.b16 %v5604
      %v5793 = vunpack.c.l.b16 %v5605
      %v5794 = vunpack.c.l.b16 %v5606
      %v5795 = vunpack.c.l.b16 %v5607
      %v5796 = vunpack.c.l.b16 %v5608
      %v5797 = vunpack.c.l.b16 %v5609
      %v5798 = vunpack.c.l.b16 %v5610
      %v5799 = vunpack.c.l.b16 %v5611
      %v5800 = vunpack.c.l.b16 %v5612
      %v5801 = vunpack.c.l.b16 %v5613
      %v5802 = vunpack.c.l.b16 %v5614
      %v5803 = vunpack.c.l.b16 %v5615
      %v5804 = vunpack.c.l.b16 %v5616
      %v5805 = vunpack.c.l.b16 %v5617
      %v5806 = vunpack.c.l.b16 %v5618
      %v5807 = vunpack.c.l.b16 %v5619
      %v5808 = vunpack.c.l.b16 %v5620
      %v5809 = vunpack.c.l.b16 %v5621
      %v5810 = vunpack.c.l.b16 %v5622
      %v5811 = vunpack.c.l.b16 %v5623
      %v5812 = vunpack.c.l.b16 %v5624
      %v5813 = vunpack.c.l.b16 %v5625
      %v5814 = vunpack.c.l.b16 %v5626
      %v5815 = vunpack.c.l.b16 %v5627
      %v5816 = vunpack.c.l.b16 %v5628
      %v5817 = vunpack.c.l.b16 %v5629
      %v5818 = vunpack.c.l.b16 %v5630
      %v5819 = vunpack.c.l.b16 %v5631
      %v5820 = vunpack.c.l.b16 %v5632
      %v5821 = vunpack.c.l.b16 %v5633
      %v5822 = vunpack.c.l.b16 %v5634
      %v5823 = vunpack.c.l.b16 %v5635
      %v5824 = vunpack.c.l.b16 %v5636
      %v5825 = vunpack.c.l.b16 %v5637
      %v5826 = vunpack.c.l.b16 %v5638
      %v5827 = vunpack.c.l.b16 %v5639
      %v5828 = vunpack.c.l.b16 %v5640
      %v5829 = vunpack.c.l.b16 %v5641
      %v5830 = vunpack.c.l.b16 %v5642
      %v5831 = vunpack.c.l.b16 %v5643
      %v5832 = vunpack.c.l.b16 %v5644
      %v5833 = vunpack.c.l.b16 %v5645
      %v5834 = vunpack.c.l.b16 %v5646
      %v5835 = vunpack.c.l.b16 %v5647
      %v5836 = vunpack.c.l.b16 %v5648
      %v5837 = vunpack.c.l.b16 %v5649
      %v5838 = vunpack.c.l.b16 %v5650
      %v5839 = vunpack.c.l.b16 %v5651
      %v5840 = vpack.c.b16 %v5748, %v5747
      %v5841 = vpack.c.b16 %v5750, %v5749
      %v5842 = vpack.c.b16 %v5752, %v5751
      %v5843 = vpack.c.b16 %v5754, %v5753
      %v5844 = vpack.c.b16 %v5756, %v5755
      %v5845 = vpack.c.b16 %v5758, %v5757
      %v5846 = vpack.c.b16 %v5760, %v5759
      %v5847 = vpack.c.b16 %v5762, %v5761
      %v5848 = vpack.c.b16 %v5764, %v5763
      %v5849 = vpack.c.b16 %v5766, %v5765
      %v5850 = vpack.c.b16 %v5768, %v5767
      %v5851 = vpack.c.b16 %v5770, %v5769
      %v5852 = vpack.c.b16 %v5772, %v5771
      %v5853 = vpack.c.b16 %v5774, %v5773
      %v5854 = vpack.c.b16 %v5776, %v5775
      %v5855 = vpack.c.b16 %v5778, %v5777
      %v5856 = vpack.c.b16 %v5780, %v5779
      %v5857 = vpack.c.b16 %v5782, %v5781
      %v5858 = vpack.c.b16 %v5784, %v5783
      %v5859 = vpack.c.b16 %v5786, %v5785
      %v5860 = vpack.c.b16 %v5788, %v5787
      %v5861 = vpack.c.b16 %v5790, %v5789
      %v5862 = vpack.c.b16 %v5792, %v5791
      %v5863 = vpack.c.b16 %v5794, %v5793
      %v5864 = vpack.c.b16 %v5796, %v5795
      %v5865 = vpack.c.b16 %v5798, %v5797
      %v5866 = vpack.c.b16 %v5800, %v5799
      %v5867 = vpack.c.b16 %v5802, %v5801
      %v5868 = vpack.c.b16 %v5804, %v5803
      %v5869 = vpack.c.b16 %v5806, %v5805
      %v5870 = vpack.c.b16 %v5808, %v5807
      %v5871 = vpack.c.b16 %v5810, %v5809
      %v5872 = vpack.c.b16 %v5812, %v5811
      %v5873 = vpack.c.b16 %v5814, %v5813
      %v5874 = vpack.c.b16 %v5816, %v5815
      %v5875 = vpack.c.b16 %v5818, %v5817
      %v5876 = vpack.c.b16 %v5820, %v5819
      %v5877 = vpack.c.b16 %v5822, %v5821
      %v5878 = vpack.c.b16 %v5824, %v5823
      %v5879 = vpack.c.b16 %v5826, %v5825
      %v5880 = vpack.c.b16 %v5828, %v5827
      %v5881 = vpack.c.b16 %v5830, %v5829
      %v5882 = vpack.c.b16 %v5832, %v5831
      %v5883 = vpack.c.b16 %v5834, %v5833
      %v5884 = vpack.c.b16 %v5836, %v5835
      %v5885 = vpack.c.b16 %v5838, %v5837
      %v5886 = vpack.c.b16 %v5839, %v5839
      %v5887 = vrot.slane %v5840, 1
      %v5888 = vrot.slane %v5841, 1
      %v5889 = vsel %vm3250, %v5887, %v5888
      %v5890 = vrot.slane %v5842, 1
      %v5891 = vsel %vm3250, %v5888, %v5890
      %v5892 = vrot.slane %v5843, 1
      %v5893 = vsel %vm3250, %v5890, %v5892
      %v5894 = vrot.slane %v5844, 1
      %v5895 = vsel %vm3250, %v5892, %v5894
      %v5896 = vrot.slane %v5845, 1
      %v5897 = vsel %vm3250, %v5894, %v5896
      %v5898 = vrot.slane %v5846, 1
      %v5899 = vsel %vm3250, %v5896, %v5898
      %v5900 = vrot.slane %v5847, 1
      %v5901 = vsel %vm3250, %v5898, %v5900
      %v5902 = vrot.slane %v5848, 1
      %v5903 = vsel %vm3250, %v5900, %v5902
      %v5904 = vrot.slane %v5849, 1
      %v5905 = vsel %vm3250, %v5902, %v5904
      %v5906 = vrot.slane %v5850, 1
      %v5907 = vsel %vm3250, %v5904, %v5906
      %v5908 = vrot.slane %v5851, 1
      %v5909 = vsel %vm3250, %v5906, %v5908
      %v5910 = vrot.slane %v5852, 1
      %v5911 = vsel %vm3250, %v5908, %v5910
      %v5912 = vrot.slane %v5853, 1
      %v5913 = vsel %vm3250, %v5910, %v5912
      %v5914 = vrot.slane %v5854, 1
      %v5915 = vsel %vm3250, %v5912, %v5914
      %v5916 = vrot.slane %v5855, 1
      %v5917 = vsel %vm3250, %v5914, %v5916
      %v5918 = vrot.slane %v5856, 1
      %v5919 = vsel %vm3250, %v5916, %v5918
      %v5920 = vrot.slane %v5857, 1
      %v5921 = vsel %vm3250, %v5918, %v5920
      %v5922 = vrot.slane %v5858, 1
      %v5923 = vsel %vm3250, %v5920, %v5922
      %v5924 = vrot.slane %v5859, 1
      %v5925 = vsel %vm3250, %v5922, %v5924
      %v5926 = vrot.slane %v5860, 1
      %v5927 = vsel %vm3250, %v5924, %v5926
      %v5928 = vrot.slane %v5861, 1
      %v5929 = vsel %vm3250, %v5926, %v5928
      %v5930 = vrot.slane %v5862, 1
      %v5931 = vsel %vm3250, %v5928, %v5930
      %v5932 = vrot.slane %v5863, 1
      %v5933 = vsel %vm3250, %v5930, %v5932
      %v5934 = vrot.slane %v5864, 1
      %v5935 = vsel %vm3250, %v5932, %v5934
      %v5936 = vrot.slane %v5865, 1
      %v5937 = vsel %vm3250, %v5934, %v5936
      %v5938 = vrot.slane %v5866, 1
      %v5939 = vsel %vm3250, %v5936, %v5938
      %v5940 = vrot.slane %v5867, 1
      %v5941 = vsel %vm3250, %v5938, %v5940
      %v5942 = vrot.slane %v5868, 1
      %v5943 = vsel %vm3250, %v5940, %v5942
      %v5944 = vrot.slane %v5869, 1
      %v5945 = vsel %vm3250, %v5942, %v5944
      %v5946 = vrot.slane %v5870, 1
      %v5947 = vsel %vm3250, %v5944, %v5946
      %v5948 = vrot.slane %v5871, 1
      %v5949 = vsel %vm3250, %v5946, %v5948
      %v5950 = vrot.slane %v5872, 1
      %v5951 = vsel %vm3250, %v5948, %v5950
      %v5952 = vrot.slane %v5873, 1
      %v5953 = vsel %vm3250, %v5950, %v5952
      %v5954 = vrot.slane %v5874, 1
      %v5955 = vsel %vm3250, %v5952, %v5954
      %v5956 = vrot.slane %v5875, 1
      %v5957 = vsel %vm3250, %v5954, %v5956
      %v5958 = vrot.slane %v5876, 1
      %v5959 = vsel %vm3250, %v5956, %v5958
      %v5960 = vrot.slane %v5877, 1
      %v5961 = vsel %vm3250, %v5958, %v5960
      %v5962 = vrot.slane %v5878, 1
      %v5963 = vsel %vm3250, %v5960, %v5962
      %v5964 = vrot.slane %v5879, 1
      %v5965 = vsel %vm3250, %v5962, %v5964
      %v5966 = vrot.slane %v5880, 1
      %v5967 = vsel %vm3250, %v5964, %v5966
      %v5968 = vrot.slane %v5881, 1
      %v5969 = vsel %vm3250, %v5966, %v5968
      %v5970 = vrot.slane %v5882, 1
      %v5971 = vsel %vm3250, %v5968, %v5970
      %v5972 = vrot.slane %v5883, 1
      %v5973 = vsel %vm3250, %v5970, %v5972
      %v5974 = vrot.slane %v5884, 1
      %v5975 = vsel %vm3250, %v5972, %v5974
      %v5976 = vrot.slane %v5885, 1
      %v5977 = vsel %vm3250, %v5974, %v5976
      %v5978 = vrot.slane %v5886, 1
      %v5979 = vsel %vm3250, %v5976, %v5978
      %v5981 = vsel %vm1356, %v5889, 0
      %v5984 = vsel %vm1356, %v5891, 0
      %v5987 = vsel %vm1356, %v5893, 0
      %v5990 = vsel %vm1356, %v5895, 0
      %v5993 = vsel %vm1356, %v5897, 0
      %v5996 = vsel %vm1356, %v5899, 0
      %v5999 = vsel %vm1356, %v5901, 0
      %v6002 = vsel %vm1356, %v5903, 0
      %v6005 = vsel %vm1356, %v5905, 0
      %v6008 = vsel %vm1356, %v5907, 0
      %v6011 = vsel %vm1356, %v5909, 0
      %v6014 = vsel %vm1356, %v5911, 0
      %v6017 = vsel %vm1356, %v5913, 0
      %v6020 = vsel %vm1356, %v5915, 0
      %v6023 = vsel %vm1356, %v5917, 0
      %v6026 = vsel %vm1356, %v5919, 0
      %v6029 = vsel %vm1356, %v5921, 0
      %v6032 = vsel %vm1356, %v5923, 0
      %v6035 = vsel %vm1356, %v5925, 0
      %v6038 = vsel %vm1356, %v5927, 0
      %v6041 = vsel %vm1356, %v5929, 0
      %v6044 = vsel %vm1356, %v5931, 0
      %v6047 = vsel %vm1356, %v5933, 0
      %v6050 = vsel %vm1356, %v5935, 0
      %v6053 = vsel %vm1356, %v5937, 0
      %v6056 = vsel %vm1356, %v5939, 0
      %v6059 = vsel %vm1356, %v5941, 0
      %v6062 = vsel %vm1356, %v5943, 0
      %v6065 = vsel %vm1356, %v5945, 0
      %v6068 = vsel %vm1356, %v5947, 0
      %v6071 = vsel %vm1356, %v5949, 0
      %v6074 = vsel %vm1356, %v5951, 0
      %v6077 = vsel %vm1356, %v5953, 0
      %v6080 = vsel %vm1356, %v5955, 0
      %v6083 = vsel %vm1356, %v5957, 0
      %v6086 = vsel %vm1356, %v5959, 0
      %v6089 = vsel %vm1356, %v5961, 0
      %v6092 = vsel %vm1356, %v5963, 0
      %v6095 = vsel %vm1356, %v5965, 0
      %v6098 = vsel %vm1356, %v5967, 0
      %v6101 = vsel %vm1356, %v5969, 0
      %v6104 = vsel %vm1356, %v5971, 0
      %v6107 = vsel %vm1356, %v5973, 0
      %v6110 = vsel %vm1356, %v5975, 0
      %v6113 = vsel %vm1356, %v5977, 0
      %v6116 = vsel %vm1356, %v5979, 0
      %v6119 = vsel %vm1495, %v5653, 0
      %6121 = vmatpush.bf16.msra.mxu0 0
      %6122 = vmatpush.bf16.msra.mxu0 0
      %6123 = vmatpush.bf16.msra.mxu0 0
      %6124 = vmatpush.bf16.msra.mxu0 0
      %6125 = vmatpush.bf16.msra.mxu0 0
      %6126 = vmatpush.bf16.msra.mxu0 0
      %6127 = vmatpush.bf16.msra.mxu0 0
      %6128 = vmatpush.bf16.msra.mxu0 %v6119
      %6129 = vmatmul.bf16.gmra.mxu0 %v5981
      %v6130 = vpop.f32.mrf.mxu0
      %v6131 = vadd.f32 0.0, %v6130
      %v6132 = vpop.f32.mrf.mxu0
      %v6133 = vadd.f32 0.0, %v6132
      %6134 = vmatmul.bf16.gmra.mxu0 %v5984
      %v6135 = vpop.f32.mrf.mxu0
      %v6136 = vadd.f32 0.0, %v6135
      %v6137 = vpop.f32.mrf.mxu0
      %v6138 = vadd.f32 0.0, %v6137
      %6139 = vmatmul.bf16.gmra.mxu0 %v5987
      %v6140 = vpop.f32.mrf.mxu0
      %v6141 = vadd.f32 0.0, %v6140
      %v6142 = vpop.f32.mrf.mxu0
      %v6143 = vadd.f32 0.0, %v6142
      %6144 = vmatmul.bf16.gmra.mxu0 %v5990
      %v6145 = vpop.f32.mrf.mxu0
      %v6146 = vadd.f32 0.0, %v6145
      %v6147 = vpop.f32.mrf.mxu0
      %v6148 = vadd.f32 0.0, %v6147
      %6149 = vmatmul.bf16.gmra.mxu0 %v5993
      %v6150 = vpop.f32.mrf.mxu0
      %v6151 = vadd.f32 0.0, %v6150
      %v6152 = vpop.f32.mrf.mxu0
      %v6153 = vadd.f32 0.0, %v6152
      %6154 = vmatmul.bf16.gmra.mxu0 %v5996
      %v6155 = vpop.f32.mrf.mxu0
      %v6156 = vadd.f32 0.0, %v6155
      %v6157 = vpop.f32.mrf.mxu0
      %v6158 = vadd.f32 0.0, %v6157
      %6159 = vmatmul.bf16.gmra.mxu0 %v5999
      %v6160 = vpop.f32.mrf.mxu0
      %v6161 = vadd.f32 0.0, %v6160
      %v6162 = vpop.f32.mrf.mxu0
      %v6163 = vadd.f32 0.0, %v6162
      %6164 = vmatmul.bf16.gmra.mxu0 %v6002
      %v6165 = vpop.f32.mrf.mxu0
      %v6166 = vadd.f32 0.0, %v6165
      %v6167 = vpop.f32.mrf.mxu0
      %v6168 = vadd.f32 0.0, %v6167
      %6169 = vmatmul.bf16.gmra.mxu0 %v6005
      %v6170 = vpop.f32.mrf.mxu0
      %v6171 = vadd.f32 0.0, %v6170
      %v6172 = vpop.f32.mrf.mxu0
      %v6173 = vadd.f32 0.0, %v6172
      %6174 = vmatmul.bf16.gmra.mxu0 %v6008
      %v6175 = vpop.f32.mrf.mxu0
      %v6176 = vadd.f32 0.0, %v6175
      %v6177 = vpop.f32.mrf.mxu0
      %v6178 = vadd.f32 0.0, %v6177
      %6179 = vmatmul.bf16.gmra.mxu0 %v6011
      %v6180 = vpop.f32.mrf.mxu0
      %v6181 = vadd.f32 0.0, %v6180
      %v6182 = vpop.f32.mrf.mxu0
      %v6183 = vadd.f32 0.0, %v6182
      %6184 = vmatmul.bf16.gmra.mxu0 %v6014
      %v6185 = vpop.f32.mrf.mxu0
      %v6186 = vadd.f32 0.0, %v6185
      %v6187 = vpop.f32.mrf.mxu0
      %v6188 = vadd.f32 0.0, %v6187
      %6189 = vmatmul.bf16.gmra.mxu0 %v6017
      %v6190 = vpop.f32.mrf.mxu0
      %v6191 = vadd.f32 0.0, %v6190
      %v6192 = vpop.f32.mrf.mxu0
      %v6193 = vadd.f32 0.0, %v6192
      %6194 = vmatmul.bf16.gmra.mxu0 %v6020
      %v6195 = vpop.f32.mrf.mxu0
      %v6196 = vadd.f32 0.0, %v6195
      %v6197 = vpop.f32.mrf.mxu0
      %v6198 = vadd.f32 0.0, %v6197
      %6199 = vmatmul.bf16.gmra.mxu0 %v6023
      %v6200 = vpop.f32.mrf.mxu0
      %v6201 = vadd.f32 0.0, %v6200
      %v6202 = vpop.f32.mrf.mxu0
      %v6203 = vadd.f32 0.0, %v6202
      %6204 = vmatmul.bf16.gmra.mxu0 %v6026
      %v6205 = vpop.f32.mrf.mxu0
      %v6206 = vadd.f32 0.0, %v6205
      %v6207 = vpop.f32.mrf.mxu0
      %v6208 = vadd.f32 0.0, %v6207
      %6209 = vmatmul.bf16.gmra.mxu0 %v6029
      %v6210 = vpop.f32.mrf.mxu0
      %v6211 = vadd.f32 0.0, %v6210
      %v6212 = vpop.f32.mrf.mxu0
      %v6213 = vadd.f32 0.0, %v6212
      %6214 = vmatmul.bf16.gmra.mxu0 %v6032
      %v6215 = vpop.f32.mrf.mxu0
      %v6216 = vadd.f32 0.0, %v6215
      %v6217 = vpop.f32.mrf.mxu0
      %v6218 = vadd.f32 0.0, %v6217
      %6219 = vmatmul.bf16.gmra.mxu0 %v6035
      %v6220 = vpop.f32.mrf.mxu0
      %v6221 = vadd.f32 0.0, %v6220
      %v6222 = vpop.f32.mrf.mxu0
      %v6223 = vadd.f32 0.0, %v6222
      %6224 = vmatmul.bf16.gmra.mxu0 %v6038
      %v6225 = vpop.f32.mrf.mxu0
      %v6226 = vadd.f32 0.0, %v6225
      %v6227 = vpop.f32.mrf.mxu0
      %v6228 = vadd.f32 0.0, %v6227
      %6229 = vmatmul.bf16.gmra.mxu0 %v6041
      %v6230 = vpop.f32.mrf.mxu0
      %v6231 = vadd.f32 0.0, %v6230
      %v6232 = vpop.f32.mrf.mxu0
      %v6233 = vadd.f32 0.0, %v6232
      %6234 = vmatmul.bf16.gmra.mxu0 %v6044
      %v6235 = vpop.f32.mrf.mxu0
      %v6236 = vadd.f32 0.0, %v6235
      %v6237 = vpop.f32.mrf.mxu0
      %v6238 = vadd.f32 0.0, %v6237
      %6239 = vmatmul.bf16.gmra.mxu0 %v6047
      %v6240 = vpop.f32.mrf.mxu0
      %v6241 = vadd.f32 0.0, %v6240
      %v6242 = vpop.f32.mrf.mxu0
      %v6243 = vadd.f32 0.0, %v6242
      %6244 = vmatmul.bf16.gmra.mxu0 %v6050
      %v6245 = vpop.f32.mrf.mxu0
      %v6246 = vadd.f32 0.0, %v6245
      %v6247 = vpop.f32.mrf.mxu0
      %v6248 = vadd.f32 0.0, %v6247
      %6249 = vmatmul.bf16.gmra.mxu0 %v6053
      %v6250 = vpop.f32.mrf.mxu0
      %v6251 = vadd.f32 0.0, %v6250
      %v6252 = vpop.f32.mrf.mxu0
      %v6253 = vadd.f32 0.0, %v6252
      %6254 = vmatmul.bf16.gmra.mxu0 %v6056
      %v6255 = vpop.f32.mrf.mxu0
      %v6256 = vadd.f32 0.0, %v6255
      %v6257 = vpop.f32.mrf.mxu0
      %v6258 = vadd.f32 0.0, %v6257
      %6259 = vmatmul.bf16.gmra.mxu0 %v6059
      %v6260 = vpop.f32.mrf.mxu0
      %v6261 = vadd.f32 0.0, %v6260
      %v6262 = vpop.f32.mrf.mxu0
      %v6263 = vadd.f32 0.0, %v6262
      %6264 = vmatmul.bf16.gmra.mxu0 %v6062
      %v6265 = vpop.f32.mrf.mxu0
      %v6266 = vadd.f32 0.0, %v6265
      %v6267 = vpop.f32.mrf.mxu0
      %v6268 = vadd.f32 0.0, %v6267
      %6269 = vmatmul.bf16.gmra.mxu0 %v6065
      %v6270 = vpop.f32.mrf.mxu0
      %v6271 = vadd.f32 0.0, %v6270
      %v6272 = vpop.f32.mrf.mxu0
      %v6273 = vadd.f32 0.0, %v6272
      %6274 = vmatmul.bf16.gmra.mxu0 %v6068
      %v6275 = vpop.f32.mrf.mxu0
      %v6276 = vadd.f32 0.0, %v6275
      %v6277 = vpop.f32.mrf.mxu0
      %v6278 = vadd.f32 0.0, %v6277
      %6279 = vmatmul.bf16.gmra.mxu0 %v6071
      %v6280 = vpop.f32.mrf.mxu0
      %v6281 = vadd.f32 0.0, %v6280
      %v6282 = vpop.f32.mrf.mxu0
      %v6283 = vadd.f32 0.0, %v6282
      %6284 = vmatmul.bf16.gmra.mxu0 %v6074
      %v6285 = vpop.f32.mrf.mxu0
      %v6286 = vadd.f32 0.0, %v6285
      %v6287 = vpop.f32.mrf.mxu0
      %v6288 = vadd.f32 0.0, %v6287
      %6289 = vmatmul.bf16.gmra.mxu0 %v6077
      %v6290 = vpop.f32.mrf.mxu0
      %v6291 = vadd.f32 0.0, %v6290
      %v6292 = vpop.f32.mrf.mxu0
      %v6293 = vadd.f32 0.0, %v6292
      %6294 = vmatmul.bf16.gmra.mxu0 %v6080
      %v6295 = vpop.f32.mrf.mxu0
      %v6296 = vadd.f32 0.0, %v6295
      %v6297 = vpop.f32.mrf.mxu0
      %v6298 = vadd.f32 0.0, %v6297
      %6299 = vmatmul.bf16.gmra.mxu0 %v6083
      %v6300 = vpop.f32.mrf.mxu0
      %v6301 = vadd.f32 0.0, %v6300
      %v6302 = vpop.f32.mrf.mxu0
      %v6303 = vadd.f32 0.0, %v6302
      %6304 = vmatmul.bf16.gmra.mxu0 %v6086
      %v6305 = vpop.f32.mrf.mxu0
      %v6306 = vadd.f32 0.0, %v6305
      %v6307 = vpop.f32.mrf.mxu0
      %v6308 = vadd.f32 0.0, %v6307
      %6309 = vmatmul.bf16.gmra.mxu0 %v6089
      %v6310 = vpop.f32.mrf.mxu0
      %v6311 = vadd.f32 0.0, %v6310
      %v6312 = vpop.f32.mrf.mxu0
      %v6313 = vadd.f32 0.0, %v6312
      %6314 = vmatmul.bf16.gmra.mxu0 %v6092
      %v6315 = vpop.f32.mrf.mxu0
      %v6316 = vadd.f32 0.0, %v6315
      %v6317 = vpop.f32.mrf.mxu0
      %v6318 = vadd.f32 0.0, %v6317
      %6319 = vmatmul.bf16.gmra.mxu0 %v6095
      %v6320 = vpop.f32.mrf.mxu0
      %v6321 = vadd.f32 0.0, %v6320
      %v6322 = vpop.f32.mrf.mxu0
      %v6323 = vadd.f32 0.0, %v6322
      %6324 = vmatmul.bf16.gmra.mxu0 %v6098
      %v6325 = vpop.f32.mrf.mxu0
      %v6326 = vadd.f32 0.0, %v6325
      %v6327 = vpop.f32.mrf.mxu0
      %v6328 = vadd.f32 0.0, %v6327
      %6329 = vmatmul.bf16.gmra.mxu0 %v6101
      %v6330 = vpop.f32.mrf.mxu0
      %v6331 = vadd.f32 0.0, %v6330
      %v6332 = vpop.f32.mrf.mxu0
      %v6333 = vadd.f32 0.0, %v6332
      %6334 = vmatmul.bf16.gmra.mxu0 %v6104
      %v6335 = vpop.f32.mrf.mxu0
      %v6336 = vadd.f32 0.0, %v6335
      %v6337 = vpop.f32.mrf.mxu0
      %v6338 = vadd.f32 0.0, %v6337
      %6339 = vmatmul.bf16.gmra.mxu0 %v6107
      %v6340 = vpop.f32.mrf.mxu0
      %v6341 = vadd.f32 0.0, %v6340
      %v6342 = vpop.f32.mrf.mxu0
      %v6343 = vadd.f32 0.0, %v6342
      %6344 = vmatmul.bf16.gmra.mxu0 %v6110
      %v6345 = vpop.f32.mrf.mxu0
      %v6346 = vadd.f32 0.0, %v6345
      %v6347 = vpop.f32.mrf.mxu0
      %v6348 = vadd.f32 0.0, %v6347
      %6349 = vmatmul.bf16.gmra.mxu0 %v6113
      %v6350 = vpop.f32.mrf.mxu0
      %v6351 = vadd.f32 0.0, %v6350
      %v6352 = vpop.f32.mrf.mxu0
      %v6353 = vadd.f32 0.0, %v6352
      %6354 = vmatmul.bf16.gmra.mxu0 %v6116
      %v6355 = vpop.f32.mrf.mxu0
      %v6356 = vadd.f32 0.0, %v6355
      %v6357 = vpop.f32.mrf.mxu0
      %v6358 = vadd.f32 0.0, %v6357
      %6359 = vdwg.mxu0
      %v6360 = vadd.f32 %v5467, %v6131
      %v6361 = vadd.f32 %v5468, %v6133
      %v6362 = vadd.f32 %v5469, %v6136
      %v6363 = vadd.f32 %v5470, %v6138
      %v6364 = vadd.f32 %v5471, %v6141
      %v6365 = vadd.f32 %v5472, %v6143
      %v6366 = vadd.f32 %v5473, %v6146
      %v6367 = vadd.f32 %v5474, %v6148
      %v6368 = vadd.f32 %v5475, %v6151
      %v6369 = vadd.f32 %v5476, %v6153
      %v6370 = vadd.f32 %v5477, %v6156
      %v6371 = vadd.f32 %v5478, %v6158
      %v6372 = vadd.f32 %v5479, %v6161
      %v6373 = vadd.f32 %v5480, %v6163
      %v6374 = vadd.f32 %v5481, %v6166
      %v6375 = vadd.f32 %v5482, %v6168
      %v6376 = vadd.f32 %v5483, %v6171
      %v6377 = vadd.f32 %v5484, %v6173
      %v6378 = vadd.f32 %v5485, %v6176
      %v6379 = vadd.f32 %v5486, %v6178
      %v6380 = vadd.f32 %v5487, %v6181
      %v6381 = vadd.f32 %v5488, %v6183
      %v6382 = vadd.f32 %v5489, %v6186
      %v6383 = vadd.f32 %v5490, %v6188
      %v6384 = vadd.f32 %v5491, %v6191
      %v6385 = vadd.f32 %v5492, %v6193
      %v6386 = vadd.f32 %v5493, %v6196
      %v6387 = vadd.f32 %v5494, %v6198
      %v6388 = vadd.f32 %v5495, %v6201
      %v6389 = vadd.f32 %v5496, %v6203
      %v6390 = vadd.f32 %v5497, %v6206
      %v6391 = vadd.f32 %v5498, %v6208
      %v6392 = vadd.f32 %v5499, %v6211
      %v6393 = vadd.f32 %v5500, %v6213
      %v6394 = vadd.f32 %v5501, %v6216
      %v6395 = vadd.f32 %v5502, %v6218
      %v6396 = vadd.f32 %v5503, %v6221
      %v6397 = vadd.f32 %v5504, %v6223
      %v6398 = vadd.f32 %v5505, %v6226
      %v6399 = vadd.f32 %v5506, %v6228
      %v6400 = vadd.f32 %v5507, %v6231
      %v6401 = vadd.f32 %v5508, %v6233
      %v6402 = vadd.f32 %v5509, %v6236
      %v6403 = vadd.f32 %v5510, %v6238
      %v6404 = vadd.f32 %v5511, %v6241
      %v6405 = vadd.f32 %v5512, %v6243
      %v6406 = vadd.f32 %v5513, %v6246
      %v6407 = vadd.f32 %v5514, %v6248
      %v6408 = vadd.f32 %v5515, %v6251
      %v6409 = vadd.f32 %v5516, %v6253
      %v6410 = vadd.f32 %v5517, %v6256
      %v6411 = vadd.f32 %v5518, %v6258
      %v6412 = vadd.f32 %v5519, %v6261
      %v6413 = vadd.f32 %v5520, %v6263
      %v6414 = vadd.f32 %v5521, %v6266
      %v6415 = vadd.f32 %v5522, %v6268
      %v6416 = vadd.f32 %v5523, %v6271
      %v6417 = vadd.f32 %v5524, %v6273
      %v6418 = vadd.f32 %v5525, %v6276
      %v6419 = vadd.f32 %v5526, %v6278
      %v6420 = vadd.f32 %v5527, %v6281
      %v6421 = vadd.f32 %v5528, %v6283
      %v6422 = vadd.f32 %v5529, %v6286
      %v6423 = vadd.f32 %v5530, %v6288
      %v6424 = vadd.f32 %v5531, %v6291
      %v6425 = vadd.f32 %v5532, %v6293
      %v6426 = vadd.f32 %v5533, %v6296
      %v6427 = vadd.f32 %v5534, %v6298
      %v6428 = vadd.f32 %v5535, %v6301
      %v6429 = vadd.f32 %v5536, %v6303
      %v6430 = vadd.f32 %v5537, %v6306
      %v6431 = vadd.f32 %v5538, %v6308
      %v6432 = vadd.f32 %v5539, %v6311
      %v6433 = vadd.f32 %v5540, %v6313
      %v6434 = vadd.f32 %v5541, %v6316
      %v6435 = vadd.f32 %v5542, %v6318
      %v6436 = vadd.f32 %v5543, %v6321
      %v6437 = vadd.f32 %v5544, %v6323
      %v6438 = vadd.f32 %v5545, %v6326
      %v6439 = vadd.f32 %v5546, %v6328
      %v6440 = vadd.f32 %v5547, %v6331
      %v6441 = vadd.f32 %v5548, %v6333
      %v6442 = vadd.f32 %v5549, %v6336
      %v6443 = vadd.f32 %v5550, %v6338
      %v6444 = vadd.f32 %v5551, %v6341
      %v6445 = vadd.f32 %v5552, %v6343
      %v6446 = vadd.f32 %v5553, %v6346
      %v6447 = vadd.f32 %v5554, %v6348
      %v6448 = vadd.f32 %v5555, %v6351
      %v6449 = vadd.f32 %v5556, %v6353
      %v6450 = vadd.f32 %v5557, %v6356
      %v6451 = vadd.f32 %v5558, %v6358
      %v6452 = vld [vmem:[#allocation2 + $0x19c] sm:$0x3]
      %s6453 = scalar_lea.vmem %s2, 28
      %v6454 = vld [vmem:[%s6453] sm:$0xf]
      %v6456 = vunpack.c.l.b16 %v6452
      %v6457 = vpack.c.b16 %v6456, %v6456
      %vm6458 = vsmask.f32 6400
      %v6460 = vshrl.u32 %v5840, 16
      %v6462 = vrot.slane %v6460, 1
      %v6463 = vshll.u32 %v5840, 16
      %v6465 = vrot.slane %v6463, 2
      %v6466 = vor.u32 %v6462, %v6465
      %v6468 = vshrl.u32 %v5841, 16
      %v6470 = vrot.slane %v6468, 1
      %v6471 = vshll.u32 %v5841, 16
      %v6473 = vrot.slane %v6471, 2
      %v6474 = vor.u32 %v6470, %v6473
      %v6475 = vsel %vm6458, %v6466, %v6474
      %v6477 = vshrl.u32 %v5842, 16
      %v6479 = vrot.slane %v6477, 1
      %v6480 = vshll.u32 %v5842, 16
      %v6482 = vrot.slane %v6480, 2
      %v6483 = vor.u32 %v6479, %v6482
      %v6484 = vsel %vm6458, %v6474, %v6483
      %v6486 = vshrl.u32 %v5843, 16
      %v6488 = vrot.slane %v6486, 1
      %v6489 = vshll.u32 %v5843, 16
      %v6491 = vrot.slane %v6489, 2
      %v6492 = vor.u32 %v6488, %v6491
      %v6493 = vsel %vm6458, %v6483, %v6492
      %v6495 = vshrl.u32 %v5844, 16
      %v6497 = vrot.slane %v6495, 1
      %v6498 = vshll.u32 %v5844, 16
      %v6500 = vrot.slane %v6498, 2
      %v6501 = vor.u32 %v6497, %v6500
      %v6502 = vsel %vm6458, %v6492, %v6501
      %v6504 = vshrl.u32 %v5845, 16
      %v6506 = vrot.slane %v6504, 1
      %v6507 = vshll.u32 %v5845, 16
      %v6509 = vrot.slane %v6507, 2
      %v6510 = vor.u32 %v6506, %v6509
      %v6511 = vsel %vm6458, %v6501, %v6510
      %v6513 = vshrl.u32 %v5846, 16
      %v6515 = vrot.slane %v6513, 1
      %v6516 = vshll.u32 %v5846, 16
      %v6518 = vrot.slane %v6516, 2
      %v6519 = vor.u32 %v6515, %v6518
      %v6520 = vsel %vm6458, %v6510, %v6519
      %v6522 = vshrl.u32 %v5847, 16
      %v6524 = vrot.slane %v6522, 1
      %v6525 = vshll.u32 %v5847, 16
      %v6527 = vrot.slane %v6525, 2
      %v6528 = vor.u32 %v6524, %v6527
      %v6529 = vsel %vm6458, %v6519, %v6528
      %v6531 = vshrl.u32 %v5848, 16
      %v6533 = vrot.slane %v6531, 1
      %v6534 = vshll.u32 %v5848, 16
      %v6536 = vrot.slane %v6534, 2
      %v6537 = vor.u32 %v6533, %v6536
      %v6538 = vsel %vm6458, %v6528, %v6537
      %v6540 = vshrl.u32 %v5849, 16
      %v6542 = vrot.slane %v6540, 1
      %v6543 = vshll.u32 %v5849, 16
      %v6545 = vrot.slane %v6543, 2
      %v6546 = vor.u32 %v6542, %v6545
      %v6547 = vsel %vm6458, %v6537, %v6546
      %v6549 = vshrl.u32 %v5850, 16
      %v6551 = vrot.slane %v6549, 1
      %v6552 = vshll.u32 %v5850, 16
      %v6554 = vrot.slane %v6552, 2
      %v6555 = vor.u32 %v6551, %v6554
      %v6556 = vsel %vm6458, %v6546, %v6555
      %v6558 = vshrl.u32 %v5851, 16
      %v6560 = vrot.slane %v6558, 1
      %v6561 = vshll.u32 %v5851, 16
      %v6563 = vrot.slane %v6561, 2
      %v6564 = vor.u32 %v6560, %v6563
      %v6565 = vsel %vm6458, %v6555, %v6564
      %v6567 = vshrl.u32 %v5852, 16
      %v6569 = vrot.slane %v6567, 1
      %v6570 = vshll.u32 %v5852, 16
      %v6572 = vrot.slane %v6570, 2
      %v6573 = vor.u32 %v6569, %v6572
      %v6574 = vsel %vm6458, %v6564, %v6573
      %v6576 = vshrl.u32 %v5853, 16
      %v6578 = vrot.slane %v6576, 1
      %v6579 = vshll.u32 %v5853, 16
      %v6581 = vrot.slane %v6579, 2
      %v6582 = vor.u32 %v6578, %v6581
      %v6583 = vsel %vm6458, %v6573, %v6582
      %v6585 = vshrl.u32 %v5854, 16
      %v6587 = vrot.slane %v6585, 1
      %v6588 = vshll.u32 %v5854, 16
      %v6590 = vrot.slane %v6588, 2
      %v6591 = vor.u32 %v6587, %v6590
      %v6592 = vsel %vm6458, %v6582, %v6591
      %v6594 = vshrl.u32 %v5855, 16
      %v6596 = vrot.slane %v6594, 1
      %v6597 = vshll.u32 %v5855, 16
      %v6599 = vrot.slane %v6597, 2
      %v6600 = vor.u32 %v6596, %v6599
      %v6601 = vsel %vm6458, %v6591, %v6600
      %v6603 = vshrl.u32 %v5856, 16
      %v6605 = vrot.slane %v6603, 1
      %v6606 = vshll.u32 %v5856, 16
      %v6608 = vrot.slane %v6606, 2
      %v6609 = vor.u32 %v6605, %v6608
      %v6610 = vsel %vm6458, %v6600, %v6609
      %v6612 = vshrl.u32 %v5857, 16
      %v6614 = vrot.slane %v6612, 1
      %v6615 = vshll.u32 %v5857, 16
      %v6617 = vrot.slane %v6615, 2
      %v6618 = vor.u32 %v6614, %v6617
      %v6619 = vsel %vm6458, %v6609, %v6618
      %v6621 = vshrl.u32 %v5858, 16
      %v6623 = vrot.slane %v6621, 1
      %v6624 = vshll.u32 %v5858, 16
      %v6626 = vrot.slane %v6624, 2
      %v6627 = vor.u32 %v6623, %v6626
      %v6628 = vsel %vm6458, %v6618, %v6627
      %v6630 = vshrl.u32 %v5859, 16
      %v6632 = vrot.slane %v6630, 1
      %v6633 = vshll.u32 %v5859, 16
      %v6635 = vrot.slane %v6633, 2
      %v6636 = vor.u32 %v6632, %v6635
      %v6637 = vsel %vm6458, %v6627, %v6636
      %v6639 = vshrl.u32 %v5860, 16
      %v6641 = vrot.slane %v6639, 1
      %v6642 = vshll.u32 %v5860, 16
      %v6644 = vrot.slane %v6642, 2
      %v6645 = vor.u32 %v6641, %v6644
      %v6646 = vsel %vm6458, %v6636, %v6645
      %v6648 = vshrl.u32 %v5861, 16
      %v6650 = vrot.slane %v6648, 1
      %v6651 = vshll.u32 %v5861, 16
      %v6653 = vrot.slane %v6651, 2
      %v6654 = vor.u32 %v6650, %v6653
      %v6655 = vsel %vm6458, %v6645, %v6654
      %v6657 = vshrl.u32 %v5862, 16
      %v6659 = vrot.slane %v6657, 1
      %v6660 = vshll.u32 %v5862, 16
      %v6662 = vrot.slane %v6660, 2
      %v6663 = vor.u32 %v6659, %v6662
      %v6664 = vsel %vm6458, %v6654, %v6663
      %v6666 = vshrl.u32 %v5863, 16
      %v6668 = vrot.slane %v6666, 1
      %v6669 = vshll.u32 %v5863, 16
      %v6671 = vrot.slane %v6669, 2
      %v6672 = vor.u32 %v6668, %v6671
      %v6673 = vsel %vm6458, %v6663, %v6672
      %v6675 = vshrl.u32 %v5864, 16
      %v6677 = vrot.slane %v6675, 1
      %v6678 = vshll.u32 %v5864, 16
      %v6680 = vrot.slane %v6678, 2
      %v6681 = vor.u32 %v6677, %v6680
      %v6682 = vsel %vm6458, %v6672, %v6681
      %v6684 = vshrl.u32 %v5865, 16
      %v6686 = vrot.slane %v6684, 1
      %v6687 = vshll.u32 %v5865, 16
      %v6689 = vrot.slane %v6687, 2
      %v6690 = vor.u32 %v6686, %v6689
      %v6691 = vsel %vm6458, %v6681, %v6690
      %v6693 = vshrl.u32 %v5866, 16
      %v6695 = vrot.slane %v6693, 1
      %v6696 = vshll.u32 %v5866, 16
      %v6698 = vrot.slane %v6696, 2
      %v6699 = vor.u32 %v6695, %v6698
      %v6700 = vsel %vm6458, %v6690, %v6699
      %v6702 = vshrl.u32 %v5867, 16
      %v6704 = vrot.slane %v6702, 1
      %v6705 = vshll.u32 %v5867, 16
      %v6707 = vrot.slane %v6705, 2
      %v6708 = vor.u32 %v6704, %v6707
      %v6709 = vsel %vm6458, %v6699, %v6708
      %v6711 = vshrl.u32 %v5868, 16
      %v6713 = vrot.slane %v6711, 1
      %v6714 = vshll.u32 %v5868, 16
      %v6716 = vrot.slane %v6714, 2
      %v6717 = vor.u32 %v6713, %v6716
      %v6718 = vsel %vm6458, %v6708, %v6717
      %v6720 = vshrl.u32 %v5869, 16
      %v6722 = vrot.slane %v6720, 1
      %v6723 = vshll.u32 %v5869, 16
      %v6725 = vrot.slane %v6723, 2
      %v6726 = vor.u32 %v6722, %v6725
      %v6727 = vsel %vm6458, %v6717, %v6726
      %v6729 = vshrl.u32 %v5870, 16
      %v6731 = vrot.slane %v6729, 1
      %v6732 = vshll.u32 %v5870, 16
      %v6734 = vrot.slane %v6732, 2
      %v6735 = vor.u32 %v6731, %v6734
      %v6736 = vsel %vm6458, %v6726, %v6735
      %v6738 = vshrl.u32 %v5871, 16
      %v6740 = vrot.slane %v6738, 1
      %v6741 = vshll.u32 %v5871, 16
      %v6743 = vrot.slane %v6741, 2
      %v6744 = vor.u32 %v6740, %v6743
      %v6745 = vsel %vm6458, %v6735, %v6744
      %v6747 = vshrl.u32 %v5872, 16
      %v6749 = vrot.slane %v6747, 1
      %v6750 = vshll.u32 %v5872, 16
      %v6752 = vrot.slane %v6750, 2
      %v6753 = vor.u32 %v6749, %v6752
      %v6754 = vsel %vm6458, %v6744, %v6753
      %v6756 = vshrl.u32 %v5873, 16
      %v6758 = vrot.slane %v6756, 1
      %v6759 = vshll.u32 %v5873, 16
      %v6761 = vrot.slane %v6759, 2
      %v6762 = vor.u32 %v6758, %v6761
      %v6763 = vsel %vm6458, %v6753, %v6762
      %v6765 = vshrl.u32 %v5874, 16
      %v6767 = vrot.slane %v6765, 1
      %v6768 = vshll.u32 %v5874, 16
      %v6770 = vrot.slane %v6768, 2
      %v6771 = vor.u32 %v6767, %v6770
      %v6772 = vsel %vm6458, %v6762, %v6771
      %v6774 = vshrl.u32 %v5875, 16
      %v6776 = vrot.slane %v6774, 1
      %v6777 = vshll.u32 %v5875, 16
      %v6779 = vrot.slane %v6777, 2
      %v6780 = vor.u32 %v6776, %v6779
      %v6781 = vsel %vm6458, %v6771, %v6780
      %v6783 = vshrl.u32 %v5876, 16
      %v6785 = vrot.slane %v6783, 1
      %v6786 = vshll.u32 %v5876, 16
      %v6788 = vrot.slane %v6786, 2
      %v6789 = vor.u32 %v6785, %v6788
      %v6790 = vsel %vm6458, %v6780, %v6789
      %v6792 = vshrl.u32 %v5877, 16
      %v6794 = vrot.slane %v6792, 1
      %v6795 = vshll.u32 %v5877, 16
      %v6797 = vrot.slane %v6795, 2
      %v6798 = vor.u32 %v6794, %v6797
      %v6799 = vsel %vm6458, %v6789, %v6798
      %v6801 = vshrl.u32 %v5878, 16
      %v6803 = vrot.slane %v6801, 1
      %v6804 = vshll.u32 %v5878, 16
      %v6806 = vrot.slane %v6804, 2
      %v6807 = vor.u32 %v6803, %v6806
      %v6808 = vsel %vm6458, %v6798, %v6807
      %v6810 = vshrl.u32 %v5879, 16
      %v6812 = vrot.slane %v6810, 1
      %v6813 = vshll.u32 %v5879, 16
      %v6815 = vrot.slane %v6813, 2
      %v6816 = vor.u32 %v6812, %v6815
      %v6817 = vsel %vm6458, %v6807, %v6816
      %v6819 = vshrl.u32 %v5880, 16
      %v6821 = vrot.slane %v6819, 1
      %v6822 = vshll.u32 %v5880, 16
      %v6824 = vrot.slane %v6822, 2
      %v6825 = vor.u32 %v6821, %v6824
      %v6826 = vsel %vm6458, %v6816, %v6825
      %v6828 = vshrl.u32 %v5881, 16
      %v6830 = vrot.slane %v6828, 1
      %v6831 = vshll.u32 %v5881, 16
      %v6833 = vrot.slane %v6831, 2
      %v6834 = vor.u32 %v6830, %v6833
      %v6835 = vsel %vm6458, %v6825, %v6834
      %v6837 = vshrl.u32 %v5882, 16
      %v6839 = vrot.slane %v6837, 1
      %v6840 = vshll.u32 %v5882, 16
      %v6842 = vrot.slane %v6840, 2
      %v6843 = vor.u32 %v6839, %v6842
      %v6844 = vsel %vm6458, %v6834, %v6843
      %v6846 = vshrl.u32 %v5883, 16
      %v6848 = vrot.slane %v6846, 1
      %v6849 = vshll.u32 %v5883, 16
      %v6851 = vrot.slane %v6849, 2
      %v6852 = vor.u32 %v6848, %v6851
      %v6853 = vsel %vm6458, %v6843, %v6852
      %v6855 = vshrl.u32 %v5884, 16
      %v6857 = vrot.slane %v6855, 1
      %v6858 = vshll.u32 %v5884, 16
      %v6860 = vrot.slane %v6858, 2
      %v6861 = vor.u32 %v6857, %v6860
      %v6862 = vsel %vm6458, %v6852, %v6861
      %v6864 = vshrl.u32 %v5885, 16
      %v6866 = vrot.slane %v6864, 1
      %v6867 = vshll.u32 %v5885, 16
      %v6869 = vrot.slane %v6867, 2
      %v6870 = vor.u32 %v6866, %v6869
      %v6871 = vsel %vm6458, %v6861, %v6870
      %v6873 = vshrl.u32 %v6457, 16
      %v6875 = vrot.slane %v6873, 1
      %v6876 = vshll.u32 %v6457, 16
      %v6878 = vrot.slane %v6876, 2
      %v6879 = vor.u32 %v6875, %v6878
      %v6880 = vsel %vm6458, %v6870, %v6879
      %v6882 = vsel %vm1356, %v6475, 0
      %v6885 = vsel %vm1356, %v6484, 0
      %v6888 = vsel %vm1356, %v6493, 0
      %v6891 = vsel %vm1356, %v6502, 0
      %v6894 = vsel %vm1356, %v6511, 0
      %v6897 = vsel %vm1356, %v6520, 0
      %v6900 = vsel %vm1356, %v6529, 0
      %v6903 = vsel %vm1356, %v6538, 0
      %v6906 = vsel %vm1356, %v6547, 0
      %v6909 = vsel %vm1356, %v6556, 0
      %v6912 = vsel %vm1356, %v6565, 0
      %v6915 = vsel %vm1356, %v6574, 0
      %v6918 = vsel %vm1356, %v6583, 0
      %v6921 = vsel %vm1356, %v6592, 0
      %v6924 = vsel %vm1356, %v6601, 0
      %v6927 = vsel %vm1356, %v6610, 0
      %v6930 = vsel %vm1356, %v6619, 0
      %v6933 = vsel %vm1356, %v6628, 0
      %v6936 = vsel %vm1356, %v6637, 0
      %v6939 = vsel %vm1356, %v6646, 0
      %v6942 = vsel %vm1356, %v6655, 0
      %v6945 = vsel %vm1356, %v6664, 0
      %v6948 = vsel %vm1356, %v6673, 0
      %v6951 = vsel %vm1356, %v6682, 0
      %v6954 = vsel %vm1356, %v6691, 0
      %v6957 = vsel %vm1356, %v6700, 0
      %v6960 = vsel %vm1356, %v6709, 0
      %v6963 = vsel %vm1356, %v6718, 0
      %v6966 = vsel %vm1356, %v6727, 0
      %v6969 = vsel %vm1356, %v6736, 0
      %v6972 = vsel %vm1356, %v6745, 0
      %v6975 = vsel %vm1356, %v6754, 0
      %v6978 = vsel %vm1356, %v6763, 0
      %v6981 = vsel %vm1356, %v6772, 0
      %v6984 = vsel %vm1356, %v6781, 0
      %v6987 = vsel %vm1356, %v6790, 0
      %v6990 = vsel %vm1356, %v6799, 0
      %v6993 = vsel %vm1356, %v6808, 0
      %v6996 = vsel %vm1356, %v6817, 0
      %v6999 = vsel %vm1356, %v6826, 0
      %v7002 = vsel %vm1356, %v6835, 0
      %v7005 = vsel %vm1356, %v6844, 0
      %v7008 = vsel %vm1356, %v6853, 0
      %v7011 = vsel %vm1356, %v6862, 0
      %v7014 = vsel %vm1356, %v6871, 0
      %v7017 = vsel %vm1356, %v6880, 0
      %v7020 = vsel %vm1495, %v6454, 0
      %7022 = vmatpush.bf16.msra.mxu0 0
      %7023 = vmatpush.bf16.msra.mxu0 0
      %7024 = vmatpush.bf16.msra.mxu0 0
      %7025 = vmatpush.bf16.msra.mxu0 0
      %7026 = vmatpush.bf16.msra.mxu0 0
      %7027 = vmatpush.bf16.msra.mxu0 0
      %7028 = vmatpush.bf16.msra.mxu0 0
      %7029 = vmatpush.bf16.msra.mxu0 %v7020
      %7030 = vmatmul.bf16.gmra.mxu0 %v6882
      %v7031 = vpop.f32.mrf.mxu0
      %v7032 = vadd.f32 0.0, %v7031
      %v7033 = vpop.f32.mrf.mxu0
      %v7034 = vadd.f32 0.0, %v7033
      %7035 = vmatmul.bf16.gmra.mxu0 %v6885
      %v7036 = vpop.f32.mrf.mxu0
      %v7037 = vadd.f32 0.0, %v7036
      %v7038 = vpop.f32.mrf.mxu0
      %v7039 = vadd.f32 0.0, %v7038
      %7040 = vmatmul.bf16.gmra.mxu0 %v6888
      %v7041 = vpop.f32.mrf.mxu0
      %v7042 = vadd.f32 0.0, %v7041
      %v7043 = vpop.f32.mrf.mxu0
      %v7044 = vadd.f32 0.0, %v7043
      %7045 = vmatmul.bf16.gmra.mxu0 %v6891
      %v7046 = vpop.f32.mrf.mxu0
      %v7047 = vadd.f32 0.0, %v7046
      %v7048 = vpop.f32.mrf.mxu0
      %v7049 = vadd.f32 0.0, %v7048
      %7050 = vmatmul.bf16.gmra.mxu0 %v6894
      %v7051 = vpop.f32.mrf.mxu0
      %v7052 = vadd.f32 0.0, %v7051
      %v7053 = vpop.f32.mrf.mxu0
      %v7054 = vadd.f32 0.0, %v7053
      %7055 = vmatmul.bf16.gmra.mxu0 %v6897
      %v7056 = vpop.f32.mrf.mxu0
      %v7057 = vadd.f32 0.0, %v7056
      %v7058 = vpop.f32.mrf.mxu0
      %v7059 = vadd.f32 0.0, %v7058
      %7060 = vmatmul.bf16.gmra.mxu0 %v6900
      %v7061 = vpop.f32.mrf.mxu0
      %v7062 = vadd.f32 0.0, %v7061
      %v7063 = vpop.f32.mrf.mxu0
      %v7064 = vadd.f32 0.0, %v7063
      %7065 = vmatmul.bf16.gmra.mxu0 %v6903
      %v7066 = vpop.f32.mrf.mxu0
      %v7067 = vadd.f32 0.0, %v7066
      %v7068 = vpop.f32.mrf.mxu0
      %v7069 = vadd.f32 0.0, %v7068
      %7070 = vmatmul.bf16.gmra.mxu0 %v6906
      %v7071 = vpop.f32.mrf.mxu0
      %v7072 = vadd.f32 0.0, %v7071
      %v7073 = vpop.f32.mrf.mxu0
      %v7074 = vadd.f32 0.0, %v7073
      %7075 = vmatmul.bf16.gmra.mxu0 %v6909
      %v7076 = vpop.f32.mrf.mxu0
      %v7077 = vadd.f32 0.0, %v7076
      %v7078 = vpop.f32.mrf.mxu0
      %v7079 = vadd.f32 0.0, %v7078
      %7080 = vmatmul.bf16.gmra.mxu0 %v6912
      %v7081 = vpop.f32.mrf.mxu0
      %v7082 = vadd.f32 0.0, %v7081
      %v7083 = vpop.f32.mrf.mxu0
      %v7084 = vadd.f32 0.0, %v7083
      %7085 = vmatmul.bf16.gmra.mxu0 %v6915
      %v7086 = vpop.f32.mrf.mxu0
      %v7087 = vadd.f32 0.0, %v7086
      %v7088 = vpop.f32.mrf.mxu0
      %v7089 = vadd.f32 0.0, %v7088
      %7090 = vmatmul.bf16.gmra.mxu0 %v6918
      %v7091 = vpop.f32.mrf.mxu0
      %v7092 = vadd.f32 0.0, %v7091
      %v7093 = vpop.f32.mrf.mxu0
      %v7094 = vadd.f32 0.0, %v7093
      %7095 = vmatmul.bf16.gmra.mxu0 %v6921
      %v7096 = vpop.f32.mrf.mxu0
      %v7097 = vadd.f32 0.0, %v7096
      %v7098 = vpop.f32.mrf.mxu0
      %v7099 = vadd.f32 0.0, %v7098
      %7100 = vmatmul.bf16.gmra.mxu0 %v6924
      %v7101 = vpop.f32.mrf.mxu0
      %v7102 = vadd.f32 0.0, %v7101
      %v7103 = vpop.f32.mrf.mxu0
      %v7104 = vadd.f32 0.0, %v7103
      %7105 = vmatmul.bf16.gmra.mxu0 %v6927
      %v7106 = vpop.f32.mrf.mxu0
      %v7107 = vadd.f32 0.0, %v7106
      %v7108 = vpop.f32.mrf.mxu0
      %v7109 = vadd.f32 0.0, %v7108
      %7110 = vmatmul.bf16.gmra.mxu0 %v6930
      %v7111 = vpop.f32.mrf.mxu0
      %v7112 = vadd.f32 0.0, %v7111
      %v7113 = vpop.f32.mrf.mxu0
      %v7114 = vadd.f32 0.0, %v7113
      %7115 = vmatmul.bf16.gmra.mxu0 %v6933
      %v7116 = vpop.f32.mrf.mxu0
      %v7117 = vadd.f32 0.0, %v7116
      %v7118 = vpop.f32.mrf.mxu0
      %v7119 = vadd.f32 0.0, %v7118
      %7120 = vmatmul.bf16.gmra.mxu0 %v6936
      %v7121 = vpop.f32.mrf.mxu0
      %v7122 = vadd.f32 0.0, %v7121
      %v7123 = vpop.f32.mrf.mxu0
      %v7124 = vadd.f32 0.0, %v7123
      %7125 = vmatmul.bf16.gmra.mxu0 %v6939
      %v7126 = vpop.f32.mrf.mxu0
      %v7127 = vadd.f32 0.0, %v7126
      %v7128 = vpop.f32.mrf.mxu0
      %v7129 = vadd.f32 0.0, %v7128
      %7130 = vmatmul.bf16.gmra.mxu0 %v6942
      %v7131 = vpop.f32.mrf.mxu0
      %v7132 = vadd.f32 0.0, %v7131
      %v7133 = vpop.f32.mrf.mxu0
      %v7134 = vadd.f32 0.0, %v7133
      %7135 = vmatmul.bf16.gmra.mxu0 %v6945
      %v7136 = vpop.f32.mrf.mxu0
      %v7137 = vadd.f32 0.0, %v7136
      %v7138 = vpop.f32.mrf.mxu0
      %v7139 = vadd.f32 0.0, %v7138
      %7140 = vmatmul.bf16.gmra.mxu0 %v6948
      %v7141 = vpop.f32.mrf.mxu0
      %v7142 = vadd.f32 0.0, %v7141
      %v7143 = vpop.f32.mrf.mxu0
      %v7144 = vadd.f32 0.0, %v7143
      %7145 = vmatmul.bf16.gmra.mxu0 %v6951
      %v7146 = vpop.f32.mrf.mxu0
      %v7147 = vadd.f32 0.0, %v7146
      %v7148 = vpop.f32.mrf.mxu0
      %v7149 = vadd.f32 0.0, %v7148
      %7150 = vmatmul.bf16.gmra.mxu0 %v6954
      %v7151 = vpop.f32.mrf.mxu0
      %v7152 = vadd.f32 0.0, %v7151
      %v7153 = vpop.f32.mrf.mxu0
      %v7154 = vadd.f32 0.0, %v7153
      %7155 = vmatmul.bf16.gmra.mxu0 %v6957
      %v7156 = vpop.f32.mrf.mxu0
      %v7157 = vadd.f32 0.0, %v7156
      %v7158 = vpop.f32.mrf.mxu0
      %v7159 = vadd.f32 0.0, %v7158
      %7160 = vmatmul.bf16.gmra.mxu0 %v6960
      %v7161 = vpop.f32.mrf.mxu0
      %v7162 = vadd.f32 0.0, %v7161
      %v7163 = vpop.f32.mrf.mxu0
      %v7164 = vadd.f32 0.0, %v7163
      %7165 = vmatmul.bf16.gmra.mxu0 %v6963
      %v7166 = vpop.f32.mrf.mxu0
      %v7167 = vadd.f32 0.0, %v7166
      %v7168 = vpop.f32.mrf.mxu0
      %v7169 = vadd.f32 0.0, %v7168
      %7170 = vmatmul.bf16.gmra.mxu0 %v6966
      %v7171 = vpop.f32.mrf.mxu0
      %v7172 = vadd.f32 0.0, %v7171
      %v7173 = vpop.f32.mrf.mxu0
      %v7174 = vadd.f32 0.0, %v7173
      %7175 = vmatmul.bf16.gmra.mxu0 %v6969
      %v7176 = vpop.f32.mrf.mxu0
      %v7177 = vadd.f32 0.0, %v7176
      %v7178 = vpop.f32.mrf.mxu0
      %v7179 = vadd.f32 0.0, %v7178
      %7180 = vmatmul.bf16.gmra.mxu0 %v6972
      %v7181 = vpop.f32.mrf.mxu0
      %v7182 = vadd.f32 0.0, %v7181
      %v7183 = vpop.f32.mrf.mxu0
      %v7184 = vadd.f32 0.0, %v7183
      %7185 = vmatmul.bf16.gmra.mxu0 %v6975
      %v7186 = vpop.f32.mrf.mxu0
      %v7187 = vadd.f32 0.0, %v7186
      %v7188 = vpop.f32.mrf.mxu0
      %v7189 = vadd.f32 0.0, %v7188
      %7190 = vmatmul.bf16.gmra.mxu0 %v6978
      %v7191 = vpop.f32.mrf.mxu0
      %v7192 = vadd.f32 0.0, %v7191
      %v7193 = vpop.f32.mrf.mxu0
      %v7194 = vadd.f32 0.0, %v7193
      %7195 = vmatmul.bf16.gmra.mxu0 %v6981
      %v7196 = vpop.f32.mrf.mxu0
      %v7197 = vadd.f32 0.0, %v7196
      %v7198 = vpop.f32.mrf.mxu0
      %v7199 = vadd.f32 0.0, %v7198
      %7200 = vmatmul.bf16.gmra.mxu0 %v6984
      %v7201 = vpop.f32.mrf.mxu0
      %v7202 = vadd.f32 0.0, %v7201
      %v7203 = vpop.f32.mrf.mxu0
      %v7204 = vadd.f32 0.0, %v7203
      %7205 = vmatmul.bf16.gmra.mxu0 %v6987
      %v7206 = vpop.f32.mrf.mxu0
      %v7207 = vadd.f32 0.0, %v7206
      %v7208 = vpop.f32.mrf.mxu0
      %v7209 = vadd.f32 0.0, %v7208
      %7210 = vmatmul.bf16.gmra.mxu0 %v6990
      %v7211 = vpop.f32.mrf.mxu0
      %v7212 = vadd.f32 0.0, %v7211
      %v7213 = vpop.f32.mrf.mxu0
      %v7214 = vadd.f32 0.0, %v7213
      %7215 = vmatmul.bf16.gmra.mxu0 %v6993
      %v7216 = vpop.f32.mrf.mxu0
      %v7217 = vadd.f32 0.0, %v7216
      %v7218 = vpop.f32.mrf.mxu0
      %v7219 = vadd.f32 0.0, %v7218
      %7220 = vmatmul.bf16.gmra.mxu0 %v6996
      %v7221 = vpop.f32.mrf.mxu0
      %v7222 = vadd.f32 0.0, %v7221
      %v7223 = vpop.f32.mrf.mxu0
      %v7224 = vadd.f32 0.0, %v7223
      %7225 = vmatmul.bf16.gmra.mxu0 %v6999
      %v7226 = vpop.f32.mrf.mxu0
      %v7227 = vadd.f32 0.0, %v7226
      %v7228 = vpop.f32.mrf.mxu0
      %v7229 = vadd.f32 0.0, %v7228
      %7230 = vmatmul.bf16.gmra.mxu0 %v7002
      %v7231 = vpop.f32.mrf.mxu0
      %v7232 = vadd.f32 0.0, %v7231
      %v7233 = vpop.f32.mrf.mxu0
      %v7234 = vadd.f32 0.0, %v7233
      %7235 = vmatmul.bf16.gmra.mxu0 %v7005
      %v7236 = vpop.f32.mrf.mxu0
      %v7237 = vadd.f32 0.0, %v7236
      %v7238 = vpop.f32.mrf.mxu0
      %v7239 = vadd.f32 0.0, %v7238
      %7240 = vmatmul.bf16.gmra.mxu0 %v7008
      %v7241 = vpop.f32.mrf.mxu0
      %v7242 = vadd.f32 0.0, %v7241
      %v7243 = vpop.f32.mrf.mxu0
      %v7244 = vadd.f32 0.0, %v7243
      %7245 = vmatmul.bf16.gmra.mxu0 %v7011
      %v7246 = vpop.f32.mrf.mxu0
      %v7247 = vadd.f32 0.0, %v7246
      %v7248 = vpop.f32.mrf.mxu0
      %v7249 = vadd.f32 0.0, %v7248
      %7250 = vmatmul.bf16.gmra.mxu0 %v7014
      %v7251 = vpop.f32.mrf.mxu0
      %v7252 = vadd.f32 0.0, %v7251
      %v7253 = vpop.f32.mrf.mxu0
      %v7254 = vadd.f32 0.0, %v7253
      %7255 = vmatmul.bf16.gmra.mxu0 %v7017
      %v7256 = vpop.f32.mrf.mxu0
      %v7257 = vadd.f32 0.0, %v7256
      %v7258 = vpop.f32.mrf.mxu0
      %v7259 = vadd.f32 0.0, %v7258
      %7260 = vdwg.mxu0
      %v7261 = vadd.f32 %v6360, %v7032
      %v7262 = vadd.f32 %v6361, %v7034
      %v7263 = vadd.f32 %v6362, %v7037
      %v7264 = vadd.f32 %v6363, %v7039
      %v7265 = vadd.f32 %v6364, %v7042
      %v7266 = vadd.f32 %v6365, %v7044
      %v7267 = vadd.f32 %v6366, %v7047
      %v7268 = vadd.f32 %v6367, %v7049
      %v7269 = vadd.f32 %v6368, %v7052
      %v7270 = vadd.f32 %v6369, %v7054
      %v7271 = vadd.f32 %v6370, %v7057
      %v7272 = vadd.f32 %v6371, %v7059
      %v7273 = vadd.f32 %v6372, %v7062
      %v7274 = vadd.f32 %v6373, %v7064
      %v7275 = vadd.f32 %v6374, %v7067
      %v7276 = vadd.f32 %v6375, %v7069
      %v7277 = vadd.f32 %v6376, %v7072
      %v7278 = vadd.f32 %v6377, %v7074
      %v7279 = vadd.f32 %v6378, %v7077
      %v7280 = vadd.f32 %v6379, %v7079
      %v7281 = vadd.f32 %v6380, %v7082
      %v7282 = vadd.f32 %v6381, %v7084
      %v7283 = vadd.f32 %v6382, %v7087
      %v7284 = vadd.f32 %v6383, %v7089
      %v7285 = vadd.f32 %v6384, %v7092
      %v7286 = vadd.f32 %v6385, %v7094
      %v7287 = vadd.f32 %v6386, %v7097
      %v7288 = vadd.f32 %v6387, %v7099
      %v7289 = vadd.f32 %v6388, %v7102
      %v7290 = vadd.f32 %v6389, %v7104
      %v7291 = vadd.f32 %v6390, %v7107
      %v7292 = vadd.f32 %v6391, %v7109
      %v7293 = vadd.f32 %v6392, %v7112
      %v7294 = vadd.f32 %v6393, %v7114
      %v7295 = vadd.f32 %v6394, %v7117
      %v7296 = vadd.f32 %v6395, %v7119
      %v7297 = vadd.f32 %v6396, %v7122
      %v7298 = vadd.f32 %v6397, %v7124
      %v7299 = vadd.f32 %v6398, %v7127
      %v7300 = vadd.f32 %v6399, %v7129
      %v7301 = vadd.f32 %v6400, %v7132
      %v7302 = vadd.f32 %v6401, %v7134
      %v7303 = vadd.f32 %v6402, %v7137
      %v7304 = vadd.f32 %v6403, %v7139
      %v7305 = vadd.f32 %v6404, %v7142
      %v7306 = vadd.f32 %v6405, %v7144
      %v7307 = vadd.f32 %v6406, %v7147
      %v7308 = vadd.f32 %v6407, %v7149
      %v7309 = vadd.f32 %v6408, %v7152
      %v7310 = vadd.f32 %v6409, %v7154
      %v7311 = vadd.f32 %v6410, %v7157
      %v7312 = vadd.f32 %v6411, %v7159
      %v7313 = vadd.f32 %v6412, %v7162
      %v7314 = vadd.f32 %v6413, %v7164
      %v7315 = vadd.f32 %v6414, %v7167
      %v7316 = vadd.f32 %v6415, %v7169
      %v7317 = vadd.f32 %v6416, %v7172
      %v7318 = vadd.f32 %v6417, %v7174
      %v7319 = vadd.f32 %v6418, %v7177
      %v7320 = vadd.f32 %v6419, %v7179
      %v7321 = vadd.f32 %v6420, %v7182
      %v7322 = vadd.f32 %v6421, %v7184
      %v7323 = vadd.f32 %v6422, %v7187
      %v7324 = vadd.f32 %v6423, %v7189
      %v7325 = vadd.f32 %v6424, %v7192
      %v7326 = vadd.f32 %v6425, %v7194
      %v7327 = vadd.f32 %v6426, %v7197
      %v7328 = vadd.f32 %v6427, %v7199
      %v7329 = vadd.f32 %v6428, %v7202
      %v7330 = vadd.f32 %v6429, %v7204
      %v7331 = vadd.f32 %v6430, %v7207
      %v7332 = vadd.f32 %v6431, %v7209
      %v7333 = vadd.f32 %v6432, %v7212
      %v7334 = vadd.f32 %v6433, %v7214
      %v7335 = vadd.f32 %v6434, %v7217
      %v7336 = vadd.f32 %v6435, %v7219
      %v7337 = vadd.f32 %v6436, %v7222
      %v7338 = vadd.f32 %v6437, %v7224
      %v7339 = vadd.f32 %v6438, %v7227
      %v7340 = vadd.f32 %v6439, %v7229
      %v7341 = vadd.f32 %v6440, %v7232
      %v7342 = vadd.f32 %v6441, %v7234
      %v7343 = vadd.f32 %v6442, %v7237
      %v7344 = vadd.f32 %v6443, %v7239
      %v7345 = vadd.f32 %v6444, %v7242
      %v7346 = vadd.f32 %v6445, %v7244
      %v7347 = vadd.f32 %v6446, %v7247
      %v7348 = vadd.f32 %v6447, %v7249
      %v7349 = vadd.f32 %v6448, %v7252
      %v7350 = vadd.f32 %v6449, %v7254
      %v7351 = vadd.f32 %v6450, %v7257
      %v7352 = vadd.f32 %v6451, %v7259
      %v7353 = vld [vmem:[%s3] sm:$0x1]
      %v7355 = vperm.slane %v7353, 0
      %v7357 = vadd.f32 %v7261, %v7355
      %v7358 = vadd.f32 %v7262, %v7355
      %v7359 = vadd.f32 %v7263, %v7355
      %v7360 = vadd.f32 %v7264, %v7355
      %v7361 = vadd.f32 %v7265, %v7355
      %v7362 = vadd.f32 %v7266, %v7355
      %v7363 = vadd.f32 %v7267, %v7355
      %v7364 = vadd.f32 %v7268, %v7355
      %v7365 = vadd.f32 %v7269, %v7355
      %v7366 = vadd.f32 %v7270, %v7355
      %v7367 = vadd.f32 %v7271, %v7355
      %v7368 = vadd.f32 %v7272, %v7355
      %v7369 = vadd.f32 %v7273, %v7355
      %v7370 = vadd.f32 %v7274, %v7355
      %v7371 = vadd.f32 %v7275, %v7355
      %v7372 = vadd.f32 %v7276, %v7355
      %v7373 = vadd.f32 %v7277, %v7355
      %v7374 = vadd.f32 %v7278, %v7355
      %v7375 = vadd.f32 %v7279, %v7355
      %v7376 = vadd.f32 %v7280, %v7355
      %v7377 = vadd.f32 %v7281, %v7355
      %v7378 = vadd.f32 %v7282, %v7355
      %v7379 = vadd.f32 %v7283, %v7355
      %v7380 = vadd.f32 %v7284, %v7355
      %v7381 = vadd.f32 %v7285, %v7355
      %v7382 = vadd.f32 %v7286, %v7355
      %v7383 = vadd.f32 %v7287, %v7355
      %v7384 = vadd.f32 %v7288, %v7355
      %v7385 = vadd.f32 %v7289, %v7355
      %v7386 = vadd.f32 %v7290, %v7355
      %v7387 = vadd.f32 %v7291, %v7355
      %v7388 = vadd.f32 %v7292, %v7355
      %v7389 = vadd.f32 %v7293, %v7355
      %v7390 = vadd.f32 %v7294, %v7355
      %v7391 = vadd.f32 %v7295, %v7355
      %v7392 = vadd.f32 %v7296, %v7355
      %v7393 = vadd.f32 %v7297, %v7355
      %v7394 = vadd.f32 %v7298, %v7355
      %v7395 = vadd.f32 %v7299, %v7355
      %v7396 = vadd.f32 %v7300, %v7355
      %v7397 = vadd.f32 %v7301, %v7355
      %v7398 = vadd.f32 %v7302, %v7355
      %v7399 = vadd.f32 %v7303, %v7355
      %v7400 = vadd.f32 %v7304, %v7355
      %v7401 = vadd.f32 %v7305, %v7355
      %v7402 = vadd.f32 %v7306, %v7355
      %v7403 = vadd.f32 %v7307, %v7355
      %v7404 = vadd.f32 %v7308, %v7355
      %v7405 = vadd.f32 %v7309, %v7355
      %v7406 = vadd.f32 %v7310, %v7355
      %v7407 = vadd.f32 %v7311, %v7355
      %v7408 = vadd.f32 %v7312, %v7355
      %v7409 = vadd.f32 %v7313, %v7355
      %v7410 = vadd.f32 %v7314, %v7355
      %v7411 = vadd.f32 %v7315, %v7355
      %v7412 = vadd.f32 %v7316, %v7355
      %v7413 = vadd.f32 %v7317, %v7355
      %v7414 = vadd.f32 %v7318, %v7355
      %v7415 = vadd.f32 %v7319, %v7355
      %v7416 = vadd.f32 %v7320, %v7355
      %v7417 = vadd.f32 %v7321, %v7355
      %v7418 = vadd.f32 %v7322, %v7355
      %v7419 = vadd.f32 %v7323, %v7355
      %v7420 = vadd.f32 %v7324, %v7355
      %v7421 = vadd.f32 %v7325, %v7355
      %v7422 = vadd.f32 %v7326, %v7355
      %v7423 = vadd.f32 %v7327, %v7355
      %v7424 = vadd.f32 %v7328, %v7355
      %v7425 = vadd.f32 %v7329, %v7355
      %v7426 = vadd.f32 %v7330, %v7355
      %v7427 = vadd.f32 %v7331, %v7355
      %v7428 = vadd.f32 %v7332, %v7355
      %v7429 = vadd.f32 %v7333, %v7355
      %v7430 = vadd.f32 %v7334, %v7355
      %v7431 = vadd.f32 %v7335, %v7355
      %v7432 = vadd.f32 %v7336, %v7355
      %v7433 = vadd.f32 %v7337, %v7355
      %v7434 = vadd.f32 %v7338, %v7355
      %v7435 = vadd.f32 %v7339, %v7355
      %v7436 = vadd.f32 %v7340, %v7355
      %v7437 = vadd.f32 %v7341, %v7355
      %v7438 = vadd.f32 %v7342, %v7355
      %v7439 = vadd.f32 %v7343, %v7355
      %v7440 = vadd.f32 %v7344, %v7355
      %v7441 = vadd.f32 %v7345, %v7355
      %v7442 = vadd.f32 %v7346, %v7355
      %v7443 = vadd.f32 %v7347, %v7355
      %v7444 = vadd.f32 %v7348, %v7355
      %v7445 = vadd.f32 %v7349, %v7355
      %v7446 = vadd.f32 %v7350, %v7355
      %v7447 = vadd.f32 %v7351, %v7355
      %v7448 = vadd.f32 %v7352, %v7355
      %v7449 = vmax.f32 %v7357, 0.0
      %v7450 = vmax.f32 %v7358, 0.0
      %v7451 = vmax.f32 %v7359, 0.0
      %v7452 = vmax.f32 %v7360, 0.0
      %v7453 = vmax.f32 %v7361, 0.0
      %v7454 = vmax.f32 %v7362, 0.0
      %v7455 = vmax.f32 %v7363, 0.0
      %v7456 = vmax.f32 %v7364, 0.0
      %v7457 = vmax.f32 %v7365, 0.0
      %v7458 = vmax.f32 %v7366, 0.0
      %v7459 = vmax.f32 %v7367, 0.0
      %v7460 = vmax.f32 %v7368, 0.0
      %v7461 = vmax.f32 %v7369, 0.0
      %v7462 = vmax.f32 %v7370, 0.0
      %v7463 = vmax.f32 %v7371, 0.0
      %v7464 = vmax.f32 %v7372, 0.0
      %v7465 = vmax.f32 %v7373, 0.0
      %v7466 = vmax.f32 %v7374, 0.0
      %v7467 = vmax.f32 %v7375, 0.0
      %v7468 = vmax.f32 %v7376, 0.0
      %v7469 = vmax.f32 %v7377, 0.0
      %v7470 = vmax.f32 %v7378, 0.0
      %v7471 = vmax.f32 %v7379, 0.0
      %v7472 = vmax.f32 %v7380, 0.0
      %v7473 = vmax.f32 %v7381, 0.0
      %v7474 = vmax.f32 %v7382, 0.0
      %v7475 = vmax.f32 %v7383, 0.0
      %v7476 = vmax.f32 %v7384, 0.0
      %v7477 = vmax.f32 %v7385, 0.0
      %v7478 = vmax.f32 %v7386, 0.0
      %v7479 = vmax.f32 %v7387, 0.0
      %v7480 = vmax.f32 %v7388, 0.0
      %v7481 = vmax.f32 %v7389, 0.0
      %v7482 = vmax.f32 %v7390, 0.0
      %v7483 = vmax.f32 %v7391, 0.0
      %v7484 = vmax.f32 %v7392, 0.0
      %v7485 = vmax.f32 %v7393, 0.0
      %v7486 = vmax.f32 %v7394, 0.0
      %v7487 = vmax.f32 %v7395, 0.0
      %v7488 = vmax.f32 %v7396, 0.0
      %v7489 = vmax.f32 %v7397, 0.0
      %v7490 = vmax.f32 %v7398, 0.0
      %v7491 = vmax.f32 %v7399, 0.0
      %v7492 = vmax.f32 %v7400, 0.0
      %v7493 = vmax.f32 %v7401, 0.0
      %v7494 = vmax.f32 %v7402, 0.0
      %v7495 = vmax.f32 %v7403, 0.0
      %v7496 = vmax.f32 %v7404, 0.0
      %v7497 = vmax.f32 %v7405, 0.0
      %v7498 = vmax.f32 %v7406, 0.0
      %v7499 = vmax.f32 %v7407, 0.0
      %v7500 = vmax.f32 %v7408, 0.0
      %v7501 = vmax.f32 %v7409, 0.0
      %v7502 = vmax.f32 %v7410, 0.0
      %v7503 = vmax.f32 %v7411, 0.0
      %v7504 = vmax.f32 %v7412, 0.0
      %v7505 = vmax.f32 %v7413, 0.0
      %v7506 = vmax.f32 %v7414, 0.0
      %v7507 = vmax.f32 %v7415, 0.0
      %v7508 = vmax.f32 %v7416, 0.0
      %v7509 = vmax.f32 %v7417, 0.0
      %v7510 = vmax.f32 %v7418, 0.0
      %v7511 = vmax.f32 %v7419, 0.0
      %v7512 = vmax.f32 %v7420, 0.0
      %v7513 = vmax.f32 %v7421, 0.0
      %v7514 = vmax.f32 %v7422, 0.0
      %v7515 = vmax.f32 %v7423, 0.0
      %v7516 = vmax.f32 %v7424, 0.0
      %v7517 = vmax.f32 %v7425, 0.0
      %v7518 = vmax.f32 %v7426, 0.0
      %v7519 = vmax.f32 %v7427, 0.0
      %v7520 = vmax.f32 %v7428, 0.0
      %v7521 = vmax.f32 %v7429, 0.0
      %v7522 = vmax.f32 %v7430, 0.0
      %v7523 = vmax.f32 %v7431, 0.0
      %v7524 = vmax.f32 %v7432, 0.0
      %v7525 = vmax.f32 %v7433, 0.0
      %v7526 = vmax.f32 %v7434, 0.0
      %v7527 = vmax.f32 %v7435, 0.0
      %v7528 = vmax.f32 %v7436, 0.0
      %v7529 = vmax.f32 %v7437, 0.0
      %v7530 = vmax.f32 %v7438, 0.0
      %v7531 = vmax.f32 %v7439, 0.0
      %v7532 = vmax.f32 %v7440, 0.0
      %v7533 = vmax.f32 %v7441, 0.0
      %v7534 = vmax.f32 %v7442, 0.0
      %v7535 = vmax.f32 %v7443, 0.0
      %v7536 = vmax.f32 %v7444, 0.0
      %v7537 = vmax.f32 %v7445, 0.0
      %v7538 = vmax.f32 %v7446, 0.0
      %v7539 = vmax.f32 %v7447, 0.0
      %v7540 = vmax.f32 %v7448, 0.0
      %v7541 = vpack.c.bf16 %v7450, %v7449
      %v7542 = vpack.c.bf16 %v7452, %v7451
      %v7543 = vpack.c.bf16 %v7454, %v7453
      %v7544 = vpack.c.bf16 %v7456, %v7455
      %v7545 = vpack.c.bf16 %v7458, %v7457
      %v7546 = vpack.c.bf16 %v7460, %v7459
      %v7547 = vpack.c.bf16 %v7462, %v7461
      %v7548 = vpack.c.bf16 %v7464, %v7463
      %v7549 = vpack.c.bf16 %v7466, %v7465
      %v7550 = vpack.c.bf16 %v7468, %v7467
      %v7551 = vpack.c.bf16 %v7470, %v7469
      %v7552 = vpack.c.bf16 %v7472, %v7471
      %v7553 = vpack.c.bf16 %v7474, %v7473
      %v7554 = vpack.c.bf16 %v7476, %v7475
      %v7555 = vpack.c.bf16 %v7478, %v7477
      %v7556 = vpack.c.bf16 %v7480, %v7479
      %v7557 = vpack.c.bf16 %v7482, %v7481
      %v7558 = vpack.c.bf16 %v7484, %v7483
      %v7559 = vpack.c.bf16 %v7486, %v7485
      %v7560 = vpack.c.bf16 %v7488, %v7487
      %v7561 = vpack.c.bf16 %v7490, %v7489
      %v7562 = vpack.c.bf16 %v7492, %v7491
      %v7563 = vpack.c.bf16 %v7494, %v7493
      %v7564 = vpack.c.bf16 %v7496, %v7495
      %v7565 = vpack.c.bf16 %v7498, %v7497
      %v7566 = vpack.c.bf16 %v7500, %v7499
      %v7567 = vpack.c.bf16 %v7502, %v7501
      %v7568 = vpack.c.bf16 %v7504, %v7503
      %v7569 = vpack.c.bf16 %v7506, %v7505
      %v7570 = vpack.c.bf16 %v7508, %v7507
      %v7571 = vpack.c.bf16 %v7510, %v7509
      %v7572 = vpack.c.bf16 %v7512, %v7511
      %v7573 = vpack.c.bf16 %v7514, %v7513
      %v7574 = vpack.c.bf16 %v7516, %v7515
      %v7575 = vpack.c.bf16 %v7518, %v7517
      %v7576 = vpack.c.bf16 %v7520, %v7519
      %v7577 = vpack.c.bf16 %v7522, %v7521
      %v7578 = vpack.c.bf16 %v7524, %v7523
      %v7579 = vpack.c.bf16 %v7526, %v7525
      %v7580 = vpack.c.bf16 %v7528, %v7527
      %v7581 = vpack.c.bf16 %v7530, %v7529
      %v7582 = vpack.c.bf16 %v7532, %v7531
      %v7583 = vpack.c.bf16 %v7534, %v7533
      %v7584 = vpack.c.bf16 %v7536, %v7535
      %v7585 = vpack.c.bf16 %v7538, %v7537
      %v7586 = vpack.c.bf16 %v7540, %v7539
      %v7587 = vld [vmem:[%s4] sm:$0xf]
      %v7588 = vld [vmem:[%s4 + $0x4] sm:$0xf]
      %v7589 = vld [vmem:[%s4 + $0x8] sm:$0xf]
      %v7590 = vld [vmem:[%s4 + $0xc] sm:$0xf]
      %v7591 = vld [vmem:[%s5] sm:$0x1]
      %v7593 = vperm.slane %v7591, 0
      %v7599 = vunpack.c.l.b16 %v7587
      %v7600 = vunpack.c.l.b16 %v7588
      %v7601 = vunpack.c.l.b16 %v7589
      %v7602 = vunpack.c.l.b16 %v7590
      %v7603 = vpack.c.b16 %v7600, %v7599
      %v7604 = vpack.c.b16 %v7602, %v7601
      %vm7607 = vcmask 261120
      %v7609 = vsel %vm7607, %v7541, 0
      %v7612 = vsel %vm7607, %v7542, 0
      %v7615 = vsel %vm7607, %v7543, 0
      %v7618 = vsel %vm7607, %v7544, 0
      %v7621 = vsel %vm7607, %v7545, 0
      %v7624 = vsel %vm7607, %v7546, 0
      %v7627 = vsel %vm7607, %v7547, 0
      %v7630 = vsel %vm7607, %v7548, 0
      %v7633 = vsel %vm7607, %v7549, 0
      %v7636 = vsel %vm7607, %v7550, 0
      %v7639 = vsel %vm7607, %v7551, 0
      %v7642 = vsel %vm7607, %v7552, 0
      %v7645 = vsel %vm7607, %v7553, 0
      %v7648 = vsel %vm7607, %v7554, 0
      %v7651 = vsel %vm7607, %v7555, 0
      %v7654 = vsel %vm7607, %v7556, 0
      %v7657 = vsel %vm7607, %v7557, 0
      %v7660 = vsel %vm7607, %v7558, 0
      %v7663 = vsel %vm7607, %v7559, 0
      %v7666 = vsel %vm7607, %v7560, 0
      %v7669 = vsel %vm7607, %v7561, 0
      %v7672 = vsel %vm7607, %v7562, 0
      %v7675 = vsel %vm7607, %v7563, 0
      %v7678 = vsel %vm7607, %v7564, 0
      %v7681 = vsel %vm7607, %v7565, 0
      %v7684 = vsel %vm7607, %v7566, 0
      %v7687 = vsel %vm7607, %v7567, 0
      %v7690 = vsel %vm7607, %v7568, 0
      %v7693 = vsel %vm7607, %v7569, 0
      %v7696 = vsel %vm7607, %v7570, 0
      %v7699 = vsel %vm7607, %v7571, 0
      %v7702 = vsel %vm7607, %v7572, 0
      %v7705 = vsel %vm7607, %v7573, 0
      %v7708 = vsel %vm7607, %v7574, 0
      %v7711 = vsel %vm7607, %v7575, 0
      %v7714 = vsel %vm7607, %v7576, 0
      %v7717 = vsel %vm7607, %v7577, 0
      %v7720 = vsel %vm7607, %v7578, 0
      %v7723 = vsel %vm7607, %v7579, 0
      %v7726 = vsel %vm7607, %v7580, 0
      %v7729 = vsel %vm7607, %v7581, 0
      %v7732 = vsel %vm7607, %v7582, 0
      %v7735 = vsel %vm7607, %v7583, 0
      %v7738 = vsel %vm7607, %v7584, 0
      %v7741 = vsel %vm7607, %v7585, 0
      %v7744 = vsel %vm7607, %v7586, 0
      %7746 = vmatpush.bf16.msra.mxu0 0
      %7747 = vmatpush.bf16.msra.mxu0 0
      %7748 = vmatpush.bf16.msra.mxu0 0
      %7749 = vmatpush.bf16.msra.mxu0 0
      %7750 = vmatpush.bf16.msra.mxu0 0
      %7751 = vmatpush.bf16.msra.mxu0 0
      %7752 = vmatpush.bf16.msra.mxu0 %v7604
      %7753 = vmatpush.bf16.msra.mxu0 %v7603
      %7754 = vmatmul.bf16.gmra.mxu0 %v7609
      %v7755 = vpop.f32.mrf.mxu0
      %v7756 = vadd.f32 %v7593, %v7755
      %v7757 = vpop.f32.mrf.mxu0
      %v7758 = vadd.f32 %v7593, %v7757
      %7759 = vmatmul.bf16.gmra.mxu0 %v7612
      %v7760 = vpop.f32.mrf.mxu0
      %v7761 = vadd.f32 %v7593, %v7760
      %v7762 = vpop.f32.mrf.mxu0
      %v7763 = vadd.f32 %v7593, %v7762
      %7764 = vmatmul.bf16.gmra.mxu0 %v7615
      %v7765 = vpop.f32.mrf.mxu0
      %v7766 = vadd.f32 %v7593, %v7765
      %v7767 = vpop.f32.mrf.mxu0
      %v7768 = vadd.f32 %v7593, %v7767
      %7769 = vmatmul.bf16.gmra.mxu0 %v7618
      %v7770 = vpop.f32.mrf.mxu0
      %v7771 = vadd.f32 %v7593, %v7770
      %v7772 = vpop.f32.mrf.mxu0
      %v7773 = vadd.f32 %v7593, %v7772
      %7774 = vmatmul.bf16.gmra.mxu0 %v7621
      %v7775 = vpop.f32.mrf.mxu0
      %v7776 = vadd.f32 %v7593, %v7775
      %v7777 = vpop.f32.mrf.mxu0
      %v7778 = vadd.f32 %v7593, %v7777
      %7779 = vmatmul.bf16.gmra.mxu0 %v7624
      %v7780 = vpop.f32.mrf.mxu0
      %v7781 = vadd.f32 %v7593, %v7780
      %v7782 = vpop.f32.mrf.mxu0
      %v7783 = vadd.f32 %v7593, %v7782
      %7784 = vmatmul.bf16.gmra.mxu0 %v7627
      %v7785 = vpop.f32.mrf.mxu0
      %v7786 = vadd.f32 %v7593, %v7785
      %v7787 = vpop.f32.mrf.mxu0
      %v7788 = vadd.f32 %v7593, %v7787
      %7789 = vmatmul.bf16.gmra.mxu0 %v7630
      %v7790 = vpop.f32.mrf.mxu0
      %v7791 = vadd.f32 %v7593, %v7790
      %v7792 = vpop.f32.mrf.mxu0
      %v7793 = vadd.f32 %v7593, %v7792
      %7794 = vmatmul.bf16.gmra.mxu0 %v7633
      %v7795 = vpop.f32.mrf.mxu0
      %v7796 = vadd.f32 %v7593, %v7795
      %v7797 = vpop.f32.mrf.mxu0
      %v7798 = vadd.f32 %v7593, %v7797
      %7799 = vmatmul.bf16.gmra.mxu0 %v7636
      %v7800 = vpop.f32.mrf.mxu0
      %v7801 = vadd.f32 %v7593, %v7800
      %v7802 = vpop.f32.mrf.mxu0
      %v7803 = vadd.f32 %v7593, %v7802
      %7804 = vmatmul.bf16.gmra.mxu0 %v7639
      %v7805 = vpop.f32.mrf.mxu0
      %v7806 = vadd.f32 %v7593, %v7805
      %v7807 = vpop.f32.mrf.mxu0
      %v7808 = vadd.f32 %v7593, %v7807
      %7809 = vmatmul.bf16.gmra.mxu0 %v7642
      %v7810 = vpop.f32.mrf.mxu0
      %v7811 = vadd.f32 %v7593, %v7810
      %v7812 = vpop.f32.mrf.mxu0
      %v7813 = vadd.f32 %v7593, %v7812
      %7814 = vmatmul.bf16.gmra.mxu0 %v7645
      %v7815 = vpop.f32.mrf.mxu0
      %v7816 = vadd.f32 %v7593, %v7815
      %v7817 = vpop.f32.mrf.mxu0
      %v7818 = vadd.f32 %v7593, %v7817
      %7819 = vmatmul.bf16.gmra.mxu0 %v7648
      %v7820 = vpop.f32.mrf.mxu0
      %v7821 = vadd.f32 %v7593, %v7820
      %v7822 = vpop.f32.mrf.mxu0
      %v7823 = vadd.f32 %v7593, %v7822
      %7824 = vmatmul.bf16.gmra.mxu0 %v7651
      %v7825 = vpop.f32.mrf.mxu0
      %v7826 = vadd.f32 %v7593, %v7825
      %v7827 = vpop.f32.mrf.mxu0
      %v7828 = vadd.f32 %v7593, %v7827
      %7829 = vmatmul.bf16.gmra.mxu0 %v7654
      %v7830 = vpop.f32.mrf.mxu0
      %v7831 = vadd.f32 %v7593, %v7830
      %v7832 = vpop.f32.mrf.mxu0
      %v7833 = vadd.f32 %v7593, %v7832
      %7834 = vmatmul.bf16.gmra.mxu0 %v7657
      %v7835 = vpop.f32.mrf.mxu0
      %v7836 = vadd.f32 %v7593, %v7835
      %v7837 = vpop.f32.mrf.mxu0
      %v7838 = vadd.f32 %v7593, %v7837
      %7839 = vmatmul.bf16.gmra.mxu0 %v7660
      %v7840 = vpop.f32.mrf.mxu0
      %v7841 = vadd.f32 %v7593, %v7840
      %v7842 = vpop.f32.mrf.mxu0
      %v7843 = vadd.f32 %v7593, %v7842
      %7844 = vmatmul.bf16.gmra.mxu0 %v7663
      %v7845 = vpop.f32.mrf.mxu0
      %v7846 = vadd.f32 %v7593, %v7845
      %v7847 = vpop.f32.mrf.mxu0
      %v7848 = vadd.f32 %v7593, %v7847
      %7849 = vmatmul.bf16.gmra.mxu0 %v7666
      %v7850 = vpop.f32.mrf.mxu0
      %v7851 = vadd.f32 %v7593, %v7850
      %v7852 = vpop.f32.mrf.mxu0
      %v7853 = vadd.f32 %v7593, %v7852
      %7854 = vmatmul.bf16.gmra.mxu0 %v7669
      %v7855 = vpop.f32.mrf.mxu0
      %v7856 = vadd.f32 %v7593, %v7855
      %v7857 = vpop.f32.mrf.mxu0
      %v7858 = vadd.f32 %v7593, %v7857
      %7859 = vmatmul.bf16.gmra.mxu0 %v7672
      %v7860 = vpop.f32.mrf.mxu0
      %v7861 = vadd.f32 %v7593, %v7860
      %v7862 = vpop.f32.mrf.mxu0
      %v7863 = vadd.f32 %v7593, %v7862
      %7864 = vmatmul.bf16.gmra.mxu0 %v7675
      %v7865 = vpop.f32.mrf.mxu0
      %v7866 = vadd.f32 %v7593, %v7865
      %v7867 = vpop.f32.mrf.mxu0
      %v7868 = vadd.f32 %v7593, %v7867
      %7869 = vmatmul.bf16.gmra.mxu0 %v7678
      %v7870 = vpop.f32.mrf.mxu0
      %v7871 = vadd.f32 %v7593, %v7870
      %v7872 = vpop.f32.mrf.mxu0
      %v7873 = vadd.f32 %v7593, %v7872
      %7874 = vmatmul.bf16.gmra.mxu0 %v7681
      %v7875 = vpop.f32.mrf.mxu0
      %v7876 = vadd.f32 %v7593, %v7875
      %v7877 = vpop.f32.mrf.mxu0
      %v7878 = vadd.f32 %v7593, %v7877
      %7879 = vmatmul.bf16.gmra.mxu0 %v7684
      %v7880 = vpop.f32.mrf.mxu0
      %v7881 = vadd.f32 %v7593, %v7880
      %v7882 = vpop.f32.mrf.mxu0
      %v7883 = vadd.f32 %v7593, %v7882
      %7884 = vmatmul.bf16.gmra.mxu0 %v7687
      %v7885 = vpop.f32.mrf.mxu0
      %v7886 = vadd.f32 %v7593, %v7885
      %v7887 = vpop.f32.mrf.mxu0
      %v7888 = vadd.f32 %v7593, %v7887
      %7889 = vmatmul.bf16.gmra.mxu0 %v7690
      %v7890 = vpop.f32.mrf.mxu0
      %v7891 = vadd.f32 %v7593, %v7890
      %v7892 = vpop.f32.mrf.mxu0
      %v7893 = vadd.f32 %v7593, %v7892
      %7894 = vmatmul.bf16.gmra.mxu0 %v7693
      %v7895 = vpop.f32.mrf.mxu0
      %v7896 = vadd.f32 %v7593, %v7895
      %v7897 = vpop.f32.mrf.mxu0
      %v7898 = vadd.f32 %v7593, %v7897
      %7899 = vmatmul.bf16.gmra.mxu0 %v7696
      %v7900 = vpop.f32.mrf.mxu0
      %v7901 = vadd.f32 %v7593, %v7900
      %v7902 = vpop.f32.mrf.mxu0
      %v7903 = vadd.f32 %v7593, %v7902
      %7904 = vmatmul.bf16.gmra.mxu0 %v7699
      %v7905 = vpop.f32.mrf.mxu0
      %v7906 = vadd.f32 %v7593, %v7905
      %v7907 = vpop.f32.mrf.mxu0
      %v7908 = vadd.f32 %v7593, %v7907
      %7909 = vmatmul.bf16.gmra.mxu0 %v7702
      %v7910 = vpop.f32.mrf.mxu0
      %v7911 = vadd.f32 %v7593, %v7910
      %v7912 = vpop.f32.mrf.mxu0
      %v7913 = vadd.f32 %v7593, %v7912
      %7914 = vmatmul.bf16.gmra.mxu0 %v7705
      %v7915 = vpop.f32.mrf.mxu0
      %v7916 = vadd.f32 %v7593, %v7915
      %v7917 = vpop.f32.mrf.mxu0
      %v7918 = vadd.f32 %v7593, %v7917
      %7919 = vmatmul.bf16.gmra.mxu0 %v7708
      %v7920 = vpop.f32.mrf.mxu0
      %v7921 = vadd.f32 %v7593, %v7920
      %v7922 = vpop.f32.mrf.mxu0
      %v7923 = vadd.f32 %v7593, %v7922
      %7924 = vmatmul.bf16.gmra.mxu0 %v7711
      %v7925 = vpop.f32.mrf.mxu0
      %v7926 = vadd.f32 %v7593, %v7925
      %v7927 = vpop.f32.mrf.mxu0
      %v7928 = vadd.f32 %v7593, %v7927
      %7929 = vmatmul.bf16.gmra.mxu0 %v7714
      %v7930 = vpop.f32.mrf.mxu0
      %v7931 = vadd.f32 %v7593, %v7930
      %v7932 = vpop.f32.mrf.mxu0
      %v7933 = vadd.f32 %v7593, %v7932
      %7934 = vmatmul.bf16.gmra.mxu0 %v7717
      %v7935 = vpop.f32.mrf.mxu0
      %v7936 = vadd.f32 %v7593, %v7935
      %v7937 = vpop.f32.mrf.mxu0
      %v7938 = vadd.f32 %v7593, %v7937
      %7939 = vmatmul.bf16.gmra.mxu0 %v7720
      %v7940 = vpop.f32.mrf.mxu0
      %v7941 = vadd.f32 %v7593, %v7940
      %v7942 = vpop.f32.mrf.mxu0
      %v7943 = vadd.f32 %v7593, %v7942
      %7944 = vmatmul.bf16.gmra.mxu0 %v7723
      %v7945 = vpop.f32.mrf.mxu0
      %v7946 = vadd.f32 %v7593, %v7945
      %v7947 = vpop.f32.mrf.mxu0
      %v7948 = vadd.f32 %v7593, %v7947
      %7949 = vmatmul.bf16.gmra.mxu0 %v7726
      %v7950 = vpop.f32.mrf.mxu0
      %v7951 = vadd.f32 %v7593, %v7950
      %v7952 = vpop.f32.mrf.mxu0
      %v7953 = vadd.f32 %v7593, %v7952
      %7954 = vmatmul.bf16.gmra.mxu0 %v7729
      %v7955 = vpop.f32.mrf.mxu0
      %v7956 = vadd.f32 %v7593, %v7955
      %v7957 = vpop.f32.mrf.mxu0
      %v7958 = vadd.f32 %v7593, %v7957
      %7959 = vmatmul.bf16.gmra.mxu0 %v7732
      %v7960 = vpop.f32.mrf.mxu0
      %v7961 = vadd.f32 %v7593, %v7960
      %v7962 = vpop.f32.mrf.mxu0
      %v7963 = vadd.f32 %v7593, %v7962
      %7964 = vmatmul.bf16.gmra.mxu0 %v7735
      %v7965 = vpop.f32.mrf.mxu0
      %v7966 = vadd.f32 %v7593, %v7965
      %v7967 = vpop.f32.mrf.mxu0
      %v7968 = vadd.f32 %v7593, %v7967
      %7969 = vmatmul.bf16.gmra.mxu0 %v7738
      %v7970 = vpop.f32.mrf.mxu0
      %v7971 = vadd.f32 %v7593, %v7970
      %v7972 = vpop.f32.mrf.mxu0
      %v7973 = vadd.f32 %v7593, %v7972
      %7974 = vmatmul.bf16.gmra.mxu0 %v7741
      %v7975 = vpop.f32.mrf.mxu0
      %v7976 = vadd.f32 %v7593, %v7975
      %v7977 = vpop.f32.mrf.mxu0
      %v7978 = vadd.f32 %v7593, %v7977
      %7979 = vmatmul.bf16.gmra.mxu0 %v7744
      %v7980 = vpop.f32.mrf.mxu0
      %v7981 = vadd.f32 %v7593, %v7980
      %v7982 = vpop.f32.mrf.mxu0
      %v7983 = vadd.f32 %v7593, %v7982
      %7984 = vdwg.mxu0
      %v7985 = vmax.f32 %v7756, 0.0
      %v7986 = vmax.f32 %v7758, 0.0
      %v7987 = vmax.f32 %v7761, 0.0
      %v7988 = vmax.f32 %v7763, 0.0
      %v7989 = vmax.f32 %v7766, 0.0
      %v7990 = vmax.f32 %v7768, 0.0
      %v7991 = vmax.f32 %v7771, 0.0
      %v7992 = vmax.f32 %v7773, 0.0
      %v7993 = vmax.f32 %v7776, 0.0
      %v7994 = vmax.f32 %v7778, 0.0
      %v7995 = vmax.f32 %v7781, 0.0
      %v7996 = vmax.f32 %v7783, 0.0
      %v7997 = vmax.f32 %v7786, 0.0
      %v7998 = vmax.f32 %v7788, 0.0
      %v7999 = vmax.f32 %v7791, 0.0
      %v8000 = vmax.f32 %v7793, 0.0
      %v8001 = vmax.f32 %v7796, 0.0
      %v8002 = vmax.f32 %v7798, 0.0
      %v8003 = vmax.f32 %v7801, 0.0
      %v8004 = vmax.f32 %v7803, 0.0
      %v8005 = vmax.f32 %v7806, 0.0
      %v8006 = vmax.f32 %v7808, 0.0
      %v8007 = vmax.f32 %v7811, 0.0
      %v8008 = vmax.f32 %v7813, 0.0
      %v8009 = vmax.f32 %v7816, 0.0
      %v8010 = vmax.f32 %v7818, 0.0
      %v8011 = vmax.f32 %v7821, 0.0
      %v8012 = vmax.f32 %v7823, 0.0
      %v8013 = vmax.f32 %v7826, 0.0
      %v8014 = vmax.f32 %v7828, 0.0
      %v8015 = vmax.f32 %v7831, 0.0
      %v8016 = vmax.f32 %v7833, 0.0
      %v8017 = vmax.f32 %v7836, 0.0
      %v8018 = vmax.f32 %v7838, 0.0
      %v8019 = vmax.f32 %v7841, 0.0
      %v8020 = vmax.f32 %v7843, 0.0
      %v8021 = vmax.f32 %v7846, 0.0
      %v8022 = vmax.f32 %v7848, 0.0
      %v8023 = vmax.f32 %v7851, 0.0
      %v8024 = vmax.f32 %v7853, 0.0
      %v8025 = vmax.f32 %v7856, 0.0
      %v8026 = vmax.f32 %v7858, 0.0
      %v8027 = vmax.f32 %v7861, 0.0
      %v8028 = vmax.f32 %v7863, 0.0
      %v8029 = vmax.f32 %v7866, 0.0
      %v8030 = vmax.f32 %v7868, 0.0
      %v8031 = vmax.f32 %v7871, 0.0
      %v8032 = vmax.f32 %v7873, 0.0
      %v8033 = vmax.f32 %v7876, 0.0
      %v8034 = vmax.f32 %v7878, 0.0
      %v8035 = vmax.f32 %v7881, 0.0
      %v8036 = vmax.f32 %v7883, 0.0
      %v8037 = vmax.f32 %v7886, 0.0
      %v8038 = vmax.f32 %v7888, 0.0
      %v8039 = vmax.f32 %v7891, 0.0
      %v8040 = vmax.f32 %v7893, 0.0
      %v8041 = vmax.f32 %v7896, 0.0
      %v8042 = vmax.f32 %v7898, 0.0
      %v8043 = vmax.f32 %v7901, 0.0
      %v8044 = vmax.f32 %v7903, 0.0
      %v8045 = vmax.f32 %v7906, 0.0
      %v8046 = vmax.f32 %v7908, 0.0
      %v8047 = vmax.f32 %v7911, 0.0
      %v8048 = vmax.f32 %v7913, 0.0
      %v8049 = vmax.f32 %v7916, 0.0
      %v8050 = vmax.f32 %v7918, 0.0
      %v8051 = vmax.f32 %v7921, 0.0
      %v8052 = vmax.f32 %v7923, 0.0
      %v8053 = vmax.f32 %v7926, 0.0
      %v8054 = vmax.f32 %v7928, 0.0
      %v8055 = vmax.f32 %v7931, 0.0
      %v8056 = vmax.f32 %v7933, 0.0
      %v8057 = vmax.f32 %v7936, 0.0
      %v8058 = vmax.f32 %v7938, 0.0
      %v8059 = vmax.f32 %v7941, 0.0
      %v8060 = vmax.f32 %v7943, 0.0
      %v8061 = vmax.f32 %v7946, 0.0
      %v8062 = vmax.f32 %v7948, 0.0
      %v8063 = vmax.f32 %v7951, 0.0
      %v8064 = vmax.f32 %v7953, 0.0
      %v8065 = vmax.f32 %v7956, 0.0
      %v8066 = vmax.f32 %v7958, 0.0
      %v8067 = vmax.f32 %v7961, 0.0
      %v8068 = vmax.f32 %v7963, 0.0
      %v8069 = vmax.f32 %v7966, 0.0
      %v8070 = vmax.f32 %v7968, 0.0
      %v8071 = vmax.f32 %v7971, 0.0
      %v8072 = vmax.f32 %v7973, 0.0
      %v8073 = vmax.f32 %v7976, 0.0
      %v8074 = vmax.f32 %v7978, 0.0
      %v8075 = vmax.f32 %v7981, 0.0
      %v8076 = vmax.f32 %v7983, 0.0
      %vm8077 = vcmask 195584
      %8078 = vst.msk [vmem:[%s282] sm:$0xff] %vm8077, %v7985
      %8079 = vst.msk [vmem:[%s282 + $0x8] sm:$0xff] %vm8077, %v7986
      %8080 = vst.msk [vmem:[%s282 + $0x10] sm:$0xff] %vm8077, %v7987
      %8081 = vst.msk [vmem:[%s282 + $0x18] sm:$0xff] %vm8077, %v7988
      %8082 = vst.msk [vmem:[%s282 + $0x20] sm:$0xff] %vm8077, %v7989
      %8083 = vst.msk [vmem:[%s282 + $0x28] sm:$0xff] %vm8077, %v7990
      %8084 = vst.msk [vmem:[%s282 + $0x30] sm:$0xff] %vm8077, %v7991
      %8085 = vst.msk [vmem:[%s282 + $0x38] sm:$0xff] %vm8077, %v7992
      %8086 = vst.msk [vmem:[%s282 + $0x40] sm:$0xff] %vm8077, %v7993
      %8087 = vst.msk [vmem:[%s282 + $0x48] sm:$0xff] %vm8077, %v7994
      %8088 = vst.msk [vmem:[%s282 + $0x50] sm:$0xff] %vm8077, %v7995
      %8089 = vst.msk [vmem:[%s282 + $0x58] sm:$0xff] %vm8077, %v7996
      %8090 = vst.msk [vmem:[%s282 + $0x60] sm:$0xff] %vm8077, %v7997
      %8091 = vst.msk [vmem:[%s282 + $0x68] sm:$0xff] %vm8077, %v7998
      %8092 = vst.msk [vmem:[%s282 + $0x70] sm:$0xff] %vm8077, %v7999
      %8093 = vst.msk [vmem:[%s282 + $0x78] sm:$0xff] %vm8077, %v8000
      %8094 = vst.msk [vmem:[%s282 + $0x80] sm:$0xff] %vm8077, %v8001
      %8095 = vst.msk [vmem:[%s282 + $0x88] sm:$0xff] %vm8077, %v8002
      %8096 = vst.msk [vmem:[%s282 + $0x90] sm:$0xff] %vm8077, %v8003
      %8097 = vst.msk [vmem:[%s282 + $0x98] sm:$0xff] %vm8077, %v8004
      %8098 = vst.msk [vmem:[%s282 + $0xa0] sm:$0xff] %vm8077, %v8005
      %8099 = vst.msk [vmem:[%s282 + $0xa8] sm:$0xff] %vm8077, %v8006
      %8100 = vst.msk [vmem:[%s282 + $0xb0] sm:$0xff] %vm8077, %v8007
      %8101 = vst.msk [vmem:[%s282 + $0xb8] sm:$0xff] %vm8077, %v8008
      %8102 = vst.msk [vmem:[%s282 + $0xc0] sm:$0xff] %vm8077, %v8009
      %8103 = vst.msk [vmem:[%s282 + $0xc8] sm:$0xff] %vm8077, %v8010
      %8104 = vst.msk [vmem:[%s282 + $0xd0] sm:$0xff] %vm8077, %v8011
      %8105 = vst.msk [vmem:[%s282 + $0xd8] sm:$0xff] %vm8077, %v8012
      %8106 = vst.msk [vmem:[%s282 + $0xe0] sm:$0xff] %vm8077, %v8013
      %8107 = vst.msk [vmem:[%s282 + $0xe8] sm:$0xff] %vm8077, %v8014
      %8108 = vst.msk [vmem:[%s282 + $0xf0] sm:$0xff] %vm8077, %v8015
      %8109 = vst.msk [vmem:[%s282 + $0xf8] sm:$0xff] %vm8077, %v8016
      %8110 = vst.msk [vmem:[%s282 + $0x100] sm:$0xff] %vm8077, %v8017
      %8111 = vst.msk [vmem:[%s282 + $0x108] sm:$0xff] %vm8077, %v8018
      %8112 = vst.msk [vmem:[%s282 + $0x110] sm:$0xff] %vm8077, %v8019
      %8113 = vst.msk [vmem:[%s282 + $0x118] sm:$0xff] %vm8077, %v8020
      %8114 = vst.msk [vmem:[%s282 + $0x120] sm:$0xff] %vm8077, %v8021
      %8115 = vst.msk [vmem:[%s282 + $0x128] sm:$0xff] %vm8077, %v8022
      %8116 = vst.msk [vmem:[%s282 + $0x130] sm:$0xff] %vm8077, %v8023
      %8117 = vst.msk [vmem:[%s282 + $0x138] sm:$0xff] %vm8077, %v8024
      %8118 = vst.msk [vmem:[%s282 + $0x140] sm:$0xff] %vm8077, %v8025
      %8119 = vst.msk [vmem:[%s282 + $0x148] sm:$0xff] %vm8077, %v8026
      %8120 = vst.msk [vmem:[%s282 + $0x150] sm:$0xff] %vm8077, %v8027
      %8121 = vst.msk [vmem:[%s282 + $0x158] sm:$0xff] %vm8077, %v8028
      %8122 = vst.msk [vmem:[%s282 + $0x160] sm:$0xff] %vm8077, %v8029
      %8123 = vst.msk [vmem:[%s282 + $0x168] sm:$0xff] %vm8077, %v8030
      %8124 = vst.msk [vmem:[%s282 + $0x170] sm:$0xff] %vm8077, %v8031
      %8125 = vst.msk [vmem:[%s282 + $0x178] sm:$0xff] %vm8077, %v8032
      %8126 = vst.msk [vmem:[%s282 + $0x180] sm:$0xff] %vm8077, %v8033
      %8127 = vst.msk [vmem:[%s282 + $0x188] sm:$0xff] %vm8077, %v8034
      %8128 = vst.msk [vmem:[%s282 + $0x190] sm:$0xff] %vm8077, %v8035
      %8129 = vst.msk [vmem:[%s282 + $0x198] sm:$0xff] %vm8077, %v8036
      %8130 = vst.msk [vmem:[%s282 + $0x1a0] sm:$0xff] %vm8077, %v8037
      %8131 = vst.msk [vmem:[%s282 + $0x1a8] sm:$0xff] %vm8077, %v8038
      %8132 = vst.msk [vmem:[%s282 + $0x1b0] sm:$0xff] %vm8077, %v8039
      %8133 = vst.msk [vmem:[%s282 + $0x1b8] sm:$0xff] %vm8077, %v8040
      %8134 = vst.msk [vmem:[%s282 + $0x1c0] sm:$0xff] %vm8077, %v8041
      %8135 = vst.msk [vmem:[%s282 + $0x1c8] sm:$0xff] %vm8077, %v8042
      %8136 = vst.msk [vmem:[%s282 + $0x1d0] sm:$0xff] %vm8077, %v8043
      %8137 = vst.msk [vmem:[%s282 + $0x1d8] sm:$0xff] %vm8077, %v8044
      %8138 = vst.msk [vmem:[%s282 + $0x1e0] sm:$0xff] %vm8077, %v8045
      %8139 = vst.msk [vmem:[%s282 + $0x1e8] sm:$0xff] %vm8077, %v8046
      %8140 = vst.msk [vmem:[%s282 + $0x1f0] sm:$0xff] %vm8077, %v8047
      %8141 = vst.msk [vmem:[%s282 + $0x1f8] sm:$0xff] %vm8077, %v8048
      %8142 = vst.msk [vmem:[%s282 + $0x200] sm:$0xff] %vm8077, %v8049
      %8143 = vst.msk [vmem:[%s282 + $0x208] sm:$0xff] %vm8077, %v8050
      %8144 = vst.msk [vmem:[%s282 + $0x210] sm:$0xff] %vm8077, %v8051
      %8145 = vst.msk [vmem:[%s282 + $0x218] sm:$0xff] %vm8077, %v8052
      %8146 = vst.msk [vmem:[%s282 + $0x220] sm:$0xff] %vm8077, %v8053
      %8147 = vst.msk [vmem:[%s282 + $0x228] sm:$0xff] %vm8077, %v8054
      %8148 = vst.msk [vmem:[%s282 + $0x230] sm:$0xff] %vm8077, %v8055
      %8149 = vst.msk [vmem:[%s282 + $0x238] sm:$0xff] %vm8077, %v8056
      %8150 = vst.msk [vmem:[%s282 + $0x240] sm:$0xff] %vm8077, %v8057
      %8151 = vst.msk [vmem:[%s282 + $0x248] sm:$0xff] %vm8077, %v8058
      %8152 = vst.msk [vmem:[%s282 + $0x250] sm:$0xff] %vm8077, %v8059
      %8153 = vst.msk [vmem:[%s282 + $0x258] sm:$0xff] %vm8077, %v8060
      %8154 = vst.msk [vmem:[%s282 + $0x260] sm:$0xff] %vm8077, %v8061
      %8155 = vst.msk [vmem:[%s282 + $0x268] sm:$0xff] %vm8077, %v8062
      %8156 = vst.msk [vmem:[%s282 + $0x270] sm:$0xff] %vm8077, %v8063
      %8157 = vst.msk [vmem:[%s282 + $0x278] sm:$0xff] %vm8077, %v8064
      %8158 = vst.msk [vmem:[%s282 + $0x280] sm:$0xff] %vm8077, %v8065
      %8159 = vst.msk [vmem:[%s282 + $0x288] sm:$0xff] %vm8077, %v8066
      %8160 = vst.msk [vmem:[%s282 + $0x290] sm:$0xff] %vm8077, %v8067
      %8161 = vst.msk [vmem:[%s282 + $0x298] sm:$0xff] %vm8077, %v8068
      %8162 = vst.msk [vmem:[%s282 + $0x2a0] sm:$0xff] %vm8077, %v8069
      %8163 = vst.msk [vmem:[%s282 + $0x2a8] sm:$0xff] %vm8077, %v8070
      %8164 = vst.msk [vmem:[%s282 + $0x2b0] sm:$0xff] %vm8077, %v8071
      %8165 = vst.msk [vmem:[%s282 + $0x2b8] sm:$0xff] %vm8077, %v8072
      %8166 = vst.msk [vmem:[%s282 + $0x2c0] sm:$0xff] %vm8077, %v8073
      %8167 = vst.msk [vmem:[%s282 + $0x2c8] sm:$0xff] %vm8077, %v8074
      %8168 = vst.msk [vmem:[%s282 + $0x2d0] sm:$0xff] %vm8077, %v8075
      %8169 = vst.msk [vmem:[%s282 + $0x2d8] sm:$0xff] %vm8077, %v8076
      %s8170 = smul.u32 92, %s17
      %p8171 = scmp.lt.s32.totalorder %s8170, 183
      %s8172 = scalar_select %p8171, %s8170, 183
      %s8173 = smul.addr %s8172, 8
      %s8174 = scalar_lea.vmem %s6, %s8173
      // Predicated region
      $region45: #{_lambda_.3} parent=43 // pred_check
        %p8175 = pneg %p173
      $region46: #{_lambda_.3} parent=43 // pred_check_branch
        %8177 = sbr.rel (%p8175) target = $region48
      $region47: #{_lambda_.3} parent=43 // pred_region
        %s8178 = smul.u32 92, %s17
      $region48: #{_lambda_.3} parent=43 // pred_fallthru
        _
    $region44: #{_lambda_.3} parent=5 // pred_fallthru
      _
    %p8179 = scmp.le.s32.totalorder 2, %s12
    // Predicated region
    $region49: #{_lambda_.3} parent=5 // pred_check
      %p8180 = pneg %p8179
    $region50: #{_lambda_.3} parent=5 // pred_check_branch
      %8182 = sbr.rel (%p8180) target = $region52
    $region51: #{_lambda_.3} parent=5 // pred_region
      %s8183 = ssub.s32 %s12, 2
      // Predicated region
      $region53: #{_lambda_.3} parent=51 // pred_check
        %p8184 = pneg %p179
      $region54: #{_lambda_.3} parent=51 // pred_check_branch
        %8186 = sbr.rel (%p8184) target = $region56
      $region55: #{_lambda_.3} parent=51 // pred_region
        %s8187 = smul.u32 92, %s18
        %p8188 = scmp.lt.s32.totalorder %s8187, 183
        %s8189 = scalar_select %p8188, %s8187, 183
        %s8190 = smul.addr %s8189, 8
        %s8191 = scalar_lea.vmem %s6, %s8190
      $region56: #{_lambda_.3} parent=51 // pred_fallthru
        _
    $region52: #{_lambda_.3} parent=5 // pred_fallthru
      _
  $region6: #{_lambda_.3} parent=0 // loop_footer
    %s16 = sadd.s32 1, %s12
  $region7: #{_lambda_.3} parent=0 // loop_footer_branch
    %11 = sbr.rel target = $region3
  $region8: #{_lambda_.3} parent=0 // loop_exit
    _

</llo_original>
